<compile_context>
chip_gen: v7x
topology: tpu7x:2x2x1
jax: 0.10.0
libtpu: 0.0.40
codegen_flags: <defaults>
</compile_context>

<pallas_src>
import jax
import jax.numpy as jnp
import numpy as np
from jax import lax
from jax.experimental import pallas as pl
from jax.experimental.pallas import tpu as pltpu

KSIZE = 3
# (kind, C_in, C_out, stride, pad, output_padding, activation) — mirrors the PyTorch module.
LAYER_CFG = (
    ("conv",    3, 16, 2, 1, 0, "relu"),
    ("conv",   16, 32, 2, 1, 0, "relu"),
    ("conv",   32, 64, 2, 1, 0, "relu"),
    ("deconv", 64, 32, 2, 1, 1, "relu"),
    ("deconv", 32, 16, 2, 1, 1, "relu"),
    ("deconv", 16,  3, 2, 1, 1, "sigmoid"),
)
LAYER_NAMES = ("e1", "e2", "e3", "d1", "d2", "d3")


# ----------------------------------------------------------------------------
# Static geometry helpers (host side, numpy only).
# ----------------------------------------------------------------------------
def _spatial_sizes(h, w):
    """Output (H, W) after each layer."""
    sizes = []
    for kind, _ci, _co, s, p, op, _a in LAYER_CFG:
        if kind == "conv":
            h = (h + 2 * p - KSIZE) // s + 1
            w = (w + 2 * p - KSIZE) // s + 1
        else:
            h = (h - 1) * s - 2 * p + KSIZE + op
            w = (w - 1) * s - 2 * p + KSIZE + op
        sizes.append((h, w))
    return sizes


def build_gather_matrices(h, w):
    """Per-layer, per-IMAGE 0/1 matrices GT[t, p_in, p_out]: input pixel p_in feeds
    output pixel p_out through kernel tap t = di*K+dj.  Encodes stride / zero
    padding / output_padding and the ConvTranspose2d index relation
    (oh = ih*s - p + di), so no in-kernel padding, dilation or im2col is needed.
    Pixel index = row*W + col (per image); the batch is handled by the grid."""
    gathers = []
    h_i, w_i = h, w
    for (kind, _ci, _co, s, p, _op, _a), (h_o, w_o) in zip(LAYER_CFG, _spatial_sizes(h, w)):
        gt = np.zeros((KSIZE * KSIZE, h_i * w_i, h_o * w_o), np.float32)
        for di in range(KSIZE):
            for dj in range(KSIZE):
                t = di * KSIZE + dj
                for oh in range(h_o):
                    for ow in range(w_o):
                        if kind == "conv":
                            ih, iw = oh * s + di - p, ow * s + dj - p
                        else:  # transpose conv: oh = ih*s - p + di
                            if (oh + p - di) % s or (ow + p - dj) % s:
                                continue
                            ih, iw = (oh + p - di) // s, (ow + p - dj) // s
                        if 0 <= ih < h_i and 0 <= iw < w_i:
                            gt[t, ih * w_i + iw, oh * w_o + ow] = 1.0
        gathers.append(jnp.asarray(gt, dtype=jnp.bfloat16))  # 0/1: exact in bf16
        h_i, w_i = h_o, w_o
    return tuple(gathers)


# ----------------------------------------------------------------------------
# The fused Pallas kernel: all 6 layers for ONE image, VMEM/vreg-resident.
# ----------------------------------------------------------------------------
def _autoencoder_kernel(*refs):
    """refs = (x, g1, w1, b1, ..., g6, w6, b6, out)

    x   : (1, C_in0, HW0)      f32   one image, pixels on the lane axis
    g_i : (9, HW_in, HW_out)   bf16  per-image 0/1 tap-gather matrices
    w_i : (9*C_out, C_in) f32  merged tap weights (transposed), or
          (9, C_out, C_in) f32 for the C_out=3 final layer
    b_i : (C_out, 1)           f32
    out : (1, 3, HW_final)     f32   lane-dense
    """
    x_ref, out_ref = refs[0], refs[-1]
    h = x_ref[0]                                   # (C_in0, HW0)
    n_taps = KSIZE * KSIZE
    for li, (_kind, _cin, c_out, _s, _p, _op, act) in enumerate(LAYER_CFG):
        g_ref, w_ref, b_ref = refs[1 + 3 * li:4 + 3 * li]
        acc = None
        if c_out % 8 == 0:
            # One 9x-taller W-stage matmul per layer, then sublane-aligned slices.
            q_all = jnp.dot(w_ref[...], h, preferred_element_type=jnp.float32)
            q_all = q_all.astype(jnp.bfloat16)     # rounds q only; G is exact 0/1
            for t in range(n_taps):                # unrolled: 9 bf16 gather matmuls
                q_t = q_all[t * c_out:(t + 1) * c_out, :]
                part = jnp.dot(q_t, g_ref[t], preferred_element_type=jnp.float32)
                acc = part if acc is None else acc + part
        else:
            # Final layer (C_out=3): per-tap path, slices would not be sublane-aligned.
            for t in range(n_taps):
                q_t = jnp.dot(w_ref[t], h, preferred_element_type=jnp.float32)
                q_t = q_t.astype(jnp.bfloat16)
                part = jnp.dot(q_t, g_ref[t], preferred_element_type=jnp.float32)
                acc = part if acc is None else acc + part
        acc = acc + b_ref[...]
        h = jnp.maximum(acc, 0.0) if act == "relu" else jax.nn.sigmoid(acc)
    out_ref[0] = h.astype(out_ref.dtype)


def _replicated_spec(shape):
    nd = len(shape)
    return pl.BlockSpec(shape, lambda b, _nd=nd: (0,) * _nd)


def _cost_estimate(n, h, w, inputs, out_bytes):
    flops = 0
    h_i, w_i = h, w
    for (_kind, c_i, c_o, *_), (h_o, w_o) in zip(LAYER_CFG, _spatial_sizes(h, w)):
        m_in, m_out = h_i * w_i, h_o * w_o
        flops += n * 2 * (KSIZE * KSIZE) * c_o * (c_i * m_in + m_in * m_out)
        h_i, w_i = h_o, w_o
    h_f, w_f = _spatial_sizes(h, w)[-1]
    transcend = n * LAYER_CFG[-1][2] * h_f * w_f          # final sigmoid
    bytes_acc = out_bytes + sum(int(a.size) * int(a.dtype.itemsize) for a in inputs)
    return pl.CostEstimate(flops=int(flops), transcendentals=int(transcend),
                           bytes_accessed=int(bytes_acc))


def autoencoder_forward(x_nchw, params, gathers):
    """NCHW float32 in -> NCHW float32 out, matching the PyTorch Autoencoder."""
    n, c_in, h, w = x_nchw.shape
    # (N, C, H, W) -> (N, C, H*W): per-image pixels on lanes, batch on the grid.
    x = x_nchw.reshape(n, c_in, h * w)

    inputs = [x]
    for (kind, c_i, c_o, *_), name, gt in zip(LAYER_CFG, LAYER_NAMES, gathers):
        wgt, bias = params[name + "_w"], params[name + "_b"]
        if kind == "conv":   # Conv2d weight (C_out, C_in, kh, kw) -> (kh*kw, C_out, C_in)
            wt = jnp.transpose(wgt, (2, 3, 0, 1)).reshape(KSIZE * KSIZE, c_o, c_i)
        else:                # ConvTranspose2d weight (C_in, C_out, kh, kw) -> (kh*kw, C_out, C_in)
            wt = jnp.transpose(wgt, (2, 3, 1, 0)).reshape(KSIZE * KSIZE, c_o, c_i)
        if c_o % 8 == 0:     # merged-tap weight stack for the one-matmul W stage
            wt = wt.reshape(KSIZE * KSIZE * c_o, c_i)
        inputs += [gt, wt, bias.reshape(c_o, 1)]

    c_out_f = LAYER_CFG[-1][2]
    h_f, w_f = _spatial_sizes(h, w)[-1]
    m_out_f = h_f * w_f

    in_specs = [pl.BlockSpec((1, c_in, h * w), lambda b: (b, 0, 0))]
    in_specs += [_replicated_spec(a.shape) for a in inputs[1:]]

    out = pl.pallas_call(
        _autoencoder_kernel,
        out_shape=jax.ShapeDtypeStruct((n, c_out_f, m_out_f), jnp.float32),
        grid=(n,),
        in_specs=in_specs,
        out_specs=pl.BlockSpec((1, c_out_f, m_out_f), lambda b: (b, 0, 0)),
        compiler_params=pltpu.CompilerParams(
            dimension_semantics=("parallel",),         # v7x: 2 TCs split the batch
            vmem_limit_bytes=32 * 1024 * 1024),
        cost_estimate=_cost_estimate(n, h, w, inputs, n * c_out_f * m_out_f * 4),
    )(*inputs)

    return out.reshape(n, c_out_f, h_f, w_f)


# ----------------------------------------------------------------------------
# Parameters (PyTorch layout conventions) and a pure-XLA reference.
# ----------------------------------------------------------------------------
def make_params(key):
    ks = jax.random.split(key, 12)
    def w(k, shape, fan_in):
        return (jax.random.normal(k, shape, jnp.float32) * (fan_in ** -0.5)).astype(jnp.float32)
    def b(k, m):
        return (jax.random.normal(k, (m,), jnp.float32) * 0.01).astype(jnp.float32)
    return {
        # Conv2d weights: (C_out, C_in, kh, kw)
        "e1_w": w(ks[0], (16, 3, 3, 3), 3 * 9),   "e1_b": b(ks[1], 16),
        "e2_w": w(ks[2], (32, 16, 3, 3), 16 * 9), "e2_b": b(ks[3], 32),
        "e3_w": w(ks[4], (64, 32, 3, 3), 32 * 9), "e3_b": b(ks[5], 64),
        # ConvTranspose2d weights: (C_in, C_out, kh, kw)
        "d1_w": w(ks[6], (64, 32, 3, 3), 64 * 9), "d1_b": b(ks[7], 32),
        "d2_w": w(ks[8], (32, 16, 3, 3), 32 * 9), "d2_b": b(ks[9], 16),
        "d3_w": w(ks[10], (16, 3, 3, 3), 16 * 9), "d3_b": b(ks[11], 3),
    }


def _ref_forward(x, p):
    dn = ("NCHW", "OIHW", "NCHW")
    hp = lax.Precision.HIGHEST
    def conv(x, w, b):
        y = lax.conv_general_dilated(x, w, (2, 2), ((1, 1), (1, 1)),
                                     dimension_numbers=dn, precision=hp)
        return jnp.maximum(y + b[None, :, None, None], 0.0)
    def deconv(x, w_t, b, act):
        w = jnp.transpose(w_t[:, :, ::-1, ::-1], (1, 0, 2, 3))  # -> OIHW, flipped
        y = lax.conv_general_dilated(x, w, (1, 1), ((1, 2), (1, 2)),
                                     lhs_dilation=(2, 2), dimension_numbers=dn,
                                     precision=hp)
        y = y + b[None, :, None, None]
        return jnp.maximum(y, 0.0) if act == "relu" else jax.nn.sigmoid(y)
    x = conv(x, p["e1_w"], p["e1_b"])
    x = conv(x, p["e2_w"], p["e2_b"])
    x = conv(x, p["e3_w"], p["e3_b"])
    x = deconv(x, p["d1_w"], p["d1_b"], "relu")
    x = deconv(x, p["d2_w"], p["d2_b"], "relu")
    x = deconv(x, p["d3_w"], p["d3_b"], "sigmoid")
    return x


if __name__ == "__main__":
    key = jax.random.PRNGKey(0)
    k_x, k_p = jax.random.split(key)
    x = jax.random.uniform(k_x, (2, 3, 16, 16), jnp.float32)  # NCHW, like PyTorch
    params = make_params(k_p)
    gathers = build_gather_matrices(16, 16)

    fwd = jax.jit(autoencoder_forward)
    out = jax.block_until_ready(fwd(x, params, gathers))
    assert out.shape == (2, 3, 16, 16), out.shape

    ref = jax.block_until_ready(jax.jit(_ref_forward)(x, params))
    max_err = float(jnp.max(jnp.abs(out - ref)))
    # bf16 is only used for the exact 0/1 gather matrices and the small per-tap
    # intermediate q; all accumulation is f32, so error stays ~1e-3 on a
    # sigmoid-compressed output in [0, 1].
    assert jnp.allclose(out, ref, atol=5e-3, rtol=5e-3), max_err

    print("KERNEL_OK")
</pallas_src>

<mosaic_0001>
module attributes {stable_mosaic.version = 11 : i64} {
  func.func @_autoencoder_kernel(%arg0: i32, %arg1: memref<1x3x256xf32, #tpu.memory_space<vmem>>, %arg2: memref<9x256x64xbf16, #tpu.memory_space<vmem>>, %arg3: memref<144x3xf32, #tpu.memory_space<vmem>>, %arg4: memref<16x1xf32, #tpu.memory_space<vmem>>, %arg5: memref<9x64x16xbf16, #tpu.memory_space<vmem>>, %arg6: memref<288x16xf32, #tpu.memory_space<vmem>>, %arg7: memref<32x1xf32, #tpu.memory_space<vmem>>, %arg8: memref<9x16x4xbf16, #tpu.memory_space<vmem>>, %arg9: memref<576x32xf32, #tpu.memory_space<vmem>>, %arg10: memref<64x1xf32, #tpu.memory_space<vmem>>, %arg11: memref<9x4x16xbf16, #tpu.memory_space<vmem>>, %arg12: memref<288x64xf32, #tpu.memory_space<vmem>>, %arg13: memref<32x1xf32, #tpu.memory_space<vmem>>, %arg14: memref<9x16x64xbf16, #tpu.memory_space<vmem>>, %arg15: memref<144x32xf32, #tpu.memory_space<vmem>>, %arg16: memref<16x1xf32, #tpu.memory_space<vmem>>, %arg17: memref<9x64x256xbf16, #tpu.memory_space<vmem>>, %arg18: memref<9x3x16xf32, #tpu.memory_space<vmem>>, %arg19: memref<3x1xf32, #tpu.memory_space<vmem>>, %arg20: memref<1x3x256xf32, #tpu.memory_space<vmem>>) attributes {dimension_semantics = [#tpu.dimension_semantics<parallel>], iteration_bounds = array<i64: 2>, scalar_prefetch = 0 : i64, scratch_operands = 0 : i64, tpu.core_type = #tpu.core_type<tc>, window_params = [{transform_indices = @transform_0, window_bounds = array<i64: 1, 3, 256>}, {pipeline_mode = #tpu.pipeline_mode<synchronous>, transform_indices = @transform_1, window_bounds = array<i64: 9, 256, 64>}, {pipeline_mode = #tpu.pipeline_mode<synchronous>, transform_indices = @transform_2, window_bounds = array<i64: 144, 3>}, {pipeline_mode = #tpu.pipeline_mode<synchronous>, transform_indices = @transform_3, window_bounds = array<i64: 16, 1>}, {pipeline_mode = #tpu.pipeline_mode<synchronous>, transform_indices = @transform_4, window_bounds = array<i64: 9, 64, 16>}, {pipeline_mode = #tpu.pipeline_mode<synchronous>, transform_indices = @transform_5, window_bounds = array<i64: 288, 16>}, {pipeline_mode = #tpu.pipeline_mode<synchronous>, transform_indices = @transform_6, window_bounds = array<i64: 32, 1>}, {pipeline_mode = #tpu.pipeline_mode<synchronous>, transform_indices = @transform_7, window_bounds = array<i64: 9, 16, 4>}, {pipeline_mode = #tpu.pipeline_mode<synchronous>, transform_indices = @transform_8, window_bounds = array<i64: 576, 32>}, {pipeline_mode = #tpu.pipeline_mode<synchronous>, transform_indices = @transform_9, window_bounds = array<i64: 64, 1>}, {pipeline_mode = #tpu.pipeline_mode<synchronous>, transform_indices = @transform_10, window_bounds = array<i64: 9, 4, 16>}, {pipeline_mode = #tpu.pipeline_mode<synchronous>, transform_indices = @transform_11, window_bounds = array<i64: 288, 64>}, {pipeline_mode = #tpu.pipeline_mode<synchronous>, transform_indices = @transform_12, window_bounds = array<i64: 32, 1>}, {pipeline_mode = #tpu.pipeline_mode<synchronous>, transform_indices = @transform_13, window_bounds = array<i64: 9, 16, 64>}, {pipeline_mode = #tpu.pipeline_mode<synchronous>, transform_indices = @transform_14, window_bounds = array<i64: 144, 32>}, {pipeline_mode = #tpu.pipeline_mode<synchronous>, transform_indices = @transform_15, window_bounds = array<i64: 16, 1>}, {pipeline_mode = #tpu.pipeline_mode<synchronous>, transform_indices = @transform_16, window_bounds = array<i64: 9, 64, 256>}, {pipeline_mode = #tpu.pipeline_mode<synchronous>, transform_indices = @transform_17, window_bounds = array<i64: 9, 3, 16>}, {pipeline_mode = #tpu.pipeline_mode<synchronous>, transform_indices = @transform_18, window_bounds = array<i64: 3, 1>}, {transform_indices = @transform_19, window_bounds = array<i64: 1, 3, 256>}]} {
    %c0 = arith.constant 0 : index
    %c0_0 = arith.constant 0 : index
    %c0_1 = arith.constant 0 : index
    %0 = vector.load %arg1[%c0, %c0_0, %c0_1] : memref<1x3x256xf32, #tpu.memory_space<vmem>>, vector<1x3x256xf32>
    %1 = vector.shape_cast %0 : vector<1x3x256xf32> to vector<3x256xf32>
    %c0_2 = arith.constant 0 : index
    %c0_3 = arith.constant 0 : index
    %2 = vector.load %arg3[%c0_2, %c0_3] : memref<144x3xf32, #tpu.memory_space<vmem>>, vector<144x3xf32>
    %cst = arith.constant dense<0.000000e+00> : vector<144x256xf32>
    %3 = tpu.matmul %2, %1, %cst {dimension_numbers = #tpu.dot_dimension_numbers<[1], [0], [0], [1], [0, 0, 1, 1], [], []>} : vector<144x3xf32>, vector<3x256xf32>, vector<144x256xf32> -> vector<144x256xf32>
    %4 = arith.truncf %3 : vector<144x256xf32> to vector<144x256xbf16>
    %5 = vector.extract_strided_slice %4 {offsets = [0, 0], sizes = [16, 256], strides = [1, 1]} : vector<144x256xbf16> to vector<16x256xbf16>
    %c0_4 = arith.constant 0 : index
    %c0_5 = arith.constant 0 : index
    %c0_6 = arith.constant 0 : index
    %6 = vector.load %arg2[%c0_4, %c0_5, %c0_6] : memref<9x256x64xbf16, #tpu.memory_space<vmem>>, vector<1x256x64xbf16>
    %7 = vector.shape_cast %6 : vector<1x256x64xbf16> to vector<256x64xbf16>
    %cst_7 = arith.constant dense<0.000000e+00> : vector<16x64xf32>
    %8 = tpu.matmul %5, %7, %cst_7 {dimension_numbers = #tpu.dot_dimension_numbers<[1], [0], [0], [1], [0, 0, 1, 1], [], []>} : vector<16x256xbf16>, vector<256x64xbf16>, vector<16x64xf32> -> vector<16x64xf32>
    %9 = vector.extract_strided_slice %4 {offsets = [16, 0], sizes = [16, 256], strides = [1, 1]} : vector<144x256xbf16> to vector<16x256xbf16>
    %c1 = arith.constant 1 : index
    %c0_8 = arith.constant 0 : index
    %c0_9 = arith.constant 0 : index
    %10 = vector.load %arg2[%c1, %c0_8, %c0_9] : memref<9x256x64xbf16, #tpu.memory_space<vmem>>, vector<1x256x64xbf16>
    %11 = vector.shape_cast %10 : vector<1x256x64xbf16> to vector<256x64xbf16>
    %cst_10 = arith.constant dense<0.000000e+00> : vector<16x64xf32>
    %12 = tpu.matmul %9, %11, %cst_10 {dimension_numbers = #tpu.dot_dimension_numbers<[1], [0], [0], [1], [0, 0, 1, 1], [], []>} : vector<16x256xbf16>, vector<256x64xbf16>, vector<16x64xf32> -> vector<16x64xf32>
    %13 = arith.addf %8, %12 : vector<16x64xf32>
    %14 = vector.extract_strided_slice %4 {offsets = [32, 0], sizes = [16, 256], strides = [1, 1]} : vector<144x256xbf16> to vector<16x256xbf16>
    %c2 = arith.constant 2 : index
    %c0_11 = arith.constant 0 : index
    %c0_12 = arith.constant 0 : index
    %15 = vector.load %arg2[%c2, %c0_11, %c0_12] : memref<9x256x64xbf16, #tpu.memory_space<vmem>>, vector<1x256x64xbf16>
    %16 = vector.shape_cast %15 : vector<1x256x64xbf16> to vector<256x64xbf16>
    %cst_13 = arith.constant dense<0.000000e+00> : vector<16x64xf32>
    %17 = tpu.matmul %14, %16, %cst_13 {dimension_numbers = #tpu.dot_dimension_numbers<[1], [0], [0], [1], [0, 0, 1, 1], [], []>} : vector<16x256xbf16>, vector<256x64xbf16>, vector<16x64xf32> -> vector<16x64xf32>
    %18 = arith.addf %13, %17 : vector<16x64xf32>
    %19 = vector.extract_strided_slice %4 {offsets = [48, 0], sizes = [16, 256], strides = [1, 1]} : vector<144x256xbf16> to vector<16x256xbf16>
    %c3 = arith.constant 3 : index
    %c0_14 = arith.constant 0 : index
    %c0_15 = arith.constant 0 : index
    %20 = vector.load %arg2[%c3, %c0_14, %c0_15] : memref<9x256x64xbf16, #tpu.memory_space<vmem>>, vector<1x256x64xbf16>
    %21 = vector.shape_cast %20 : vector<1x256x64xbf16> to vector<256x64xbf16>
    %cst_16 = arith.constant dense<0.000000e+00> : vector<16x64xf32>
    %22 = tpu.matmul %19, %21, %cst_16 {dimension_numbers = #tpu.dot_dimension_numbers<[1], [0], [0], [1], [0, 0, 1, 1], [], []>} : vector<16x256xbf16>, vector<256x64xbf16>, vector<16x64xf32> -> vector<16x64xf32>
    %23 = arith.addf %18, %22 : vector<16x64xf32>
    %24 = vector.extract_strided_slice %4 {offsets = [64, 0], sizes = [16, 256], strides = [1, 1]} : vector<144x256xbf16> to vector<16x256xbf16>
    %c4 = arith.constant 4 : index
    %c0_17 = arith.constant 0 : index
    %c0_18 = arith.constant 0 : index
    %25 = vector.load %arg2[%c4, %c0_17, %c0_18] : memref<9x256x64xbf16, #tpu.memory_space<vmem>>, vector<1x256x64xbf16>
    %26 = vector.shape_cast %25 : vector<1x256x64xbf16> to vector<256x64xbf16>
    %cst_19 = arith.constant dense<0.000000e+00> : vector<16x64xf32>
    %27 = tpu.matmul %24, %26, %cst_19 {dimension_numbers = #tpu.dot_dimension_numbers<[1], [0], [0], [1], [0, 0, 1, 1], [], []>} : vector<16x256xbf16>, vector<256x64xbf16>, vector<16x64xf32> -> vector<16x64xf32>
    %28 = arith.addf %23, %27 : vector<16x64xf32>
    %29 = vector.extract_strided_slice %4 {offsets = [80, 0], sizes = [16, 256], strides = [1, 1]} : vector<144x256xbf16> to vector<16x256xbf16>
    %c5 = arith.constant 5 : index
    %c0_20 = arith.constant 0 : index
    %c0_21 = arith.constant 0 : index
    %30 = vector.load %arg2[%c5, %c0_20, %c0_21] : memref<9x256x64xbf16, #tpu.memory_space<vmem>>, vector<1x256x64xbf16>
    %31 = vector.shape_cast %30 : vector<1x256x64xbf16> to vector<256x64xbf16>
    %cst_22 = arith.constant dense<0.000000e+00> : vector<16x64xf32>
    %32 = tpu.matmul %29, %31, %cst_22 {dimension_numbers = #tpu.dot_dimension_numbers<[1], [0], [0], [1], [0, 0, 1, 1], [], []>} : vector<16x256xbf16>, vector<256x64xbf16>, vector<16x64xf32> -> vector<16x64xf32>
    %33 = arith.addf %28, %32 : vector<16x64xf32>
    %34 = vector.extract_strided_slice %4 {offsets = [96, 0], sizes = [16, 256], strides = [1, 1]} : vector<144x256xbf16> to vector<16x256xbf16>
    %c6 = arith.constant 6 : index
    %c0_23 = arith.constant 0 : index
    %c0_24 = arith.constant 0 : index
    %35 = vector.load %arg2[%c6, %c0_23, %c0_24] : memref<9x256x64xbf16, #tpu.memory_space<vmem>>, vector<1x256x64xbf16>
    %36 = vector.shape_cast %35 : vector<1x256x64xbf16> to vector<256x64xbf16>
    %cst_25 = arith.constant dense<0.000000e+00> : vector<16x64xf32>
    %37 = tpu.matmul %34, %36, %cst_25 {dimension_numbers = #tpu.dot_dimension_numbers<[1], [0], [0], [1], [0, 0, 1, 1], [], []>} : vector<16x256xbf16>, vector<256x64xbf16>, vector<16x64xf32> -> vector<16x64xf32>
    %38 = arith.addf %33, %37 : vector<16x64xf32>
    %39 = vector.extract_strided_slice %4 {offsets = [112, 0], sizes = [16, 256], strides = [1, 1]} : vector<144x256xbf16> to vector<16x256xbf16>
    %c7 = arith.constant 7 : index
    %c0_26 = arith.constant 0 : index
    %c0_27 = arith.constant 0 : index
    %40 = vector.load %arg2[%c7, %c0_26, %c0_27] : memref<9x256x64xbf16, #tpu.memory_space<vmem>>, vector<1x256x64xbf16>
    %41 = vector.shape_cast %40 : vector<1x256x64xbf16> to vector<256x64xbf16>
    %cst_28 = arith.constant dense<0.000000e+00> : vector<16x64xf32>
    %42 = tpu.matmul %39, %41, %cst_28 {dimension_numbers = #tpu.dot_dimension_numbers<[1], [0], [0], [1], [0, 0, 1, 1], [], []>} : vector<16x256xbf16>, vector<256x64xbf16>, vector<16x64xf32> -> vector<16x64xf32>
    %43 = arith.addf %38, %42 : vector<16x64xf32>
    %44 = vector.extract_strided_slice %4 {offsets = [128, 0], sizes = [16, 256], strides = [1, 1]} : vector<144x256xbf16> to vector<16x256xbf16>
    %c8 = arith.constant 8 : index
    %c0_29 = arith.constant 0 : index
    %c0_30 = arith.constant 0 : index
    %45 = vector.load %arg2[%c8, %c0_29, %c0_30] : memref<9x256x64xbf16, #tpu.memory_space<vmem>>, vector<1x256x64xbf16>
    %46 = vector.shape_cast %45 : vector<1x256x64xbf16> to vector<256x64xbf16>
    %cst_31 = arith.constant dense<0.000000e+00> : vector<16x64xf32>
    %47 = tpu.matmul %44, %46, %cst_31 {dimension_numbers = #tpu.dot_dimension_numbers<[1], [0], [0], [1], [0, 0, 1, 1], [], []>} : vector<16x256xbf16>, vector<256x64xbf16>, vector<16x64xf32> -> vector<16x64xf32>
    %48 = arith.addf %43, %47 : vector<16x64xf32>
    %c0_32 = arith.constant 0 : index
    %c0_33 = arith.constant 0 : index
    %49 = vector.load %arg4[%c0_32, %c0_33] : memref<16x1xf32, #tpu.memory_space<vmem>>, vector<16x1xf32>
    %50 = vector.broadcast %49 : vector<16x1xf32> to vector<16x64xf32>
    %51 = arith.addf %48, %50 : vector<16x64xf32>
    %cst_34 = arith.constant 0.000000e+00 : f32
    %52 = vector.broadcast %cst_34 : f32 to vector<16x64xf32>
    %53 = arith.maximumf %51, %52 : vector<16x64xf32>
    %c0_35 = arith.constant 0 : index
    %c0_36 = arith.constant 0 : index
    %54 = vector.load %arg6[%c0_35, %c0_36] : memref<288x16xf32, #tpu.memory_space<vmem>>, vector<288x16xf32>
    %cst_37 = arith.constant dense<0.000000e+00> : vector<288x64xf32>
    %55 = tpu.matmul %54, %53, %cst_37 {dimension_numbers = #tpu.dot_dimension_numbers<[1], [0], [0], [1], [0, 0, 1, 1], [], []>} : vector<288x16xf32>, vector<16x64xf32>, vector<288x64xf32> -> vector<288x64xf32>
    %56 = arith.truncf %55 : vector<288x64xf32> to vector<288x64xbf16>
    %57 = vector.extract_strided_slice %56 {offsets = [0, 0], sizes = [32, 64], strides = [1, 1]} : vector<288x64xbf16> to vector<32x64xbf16>
    %c0_38 = arith.constant 0 : index
    %c0_39 = arith.constant 0 : index
    %c0_40 = arith.constant 0 : index
    %58 = vector.load %arg5[%c0_38, %c0_39, %c0_40] : memref<9x64x16xbf16, #tpu.memory_space<vmem>>, vector<1x64x16xbf16>
    %59 = vector.shape_cast %58 : vector<1x64x16xbf16> to vector<64x16xbf16>
    %cst_41 = arith.constant dense<0.000000e+00> : vector<32x16xf32>
    %60 = tpu.matmul %57, %59, %cst_41 {dimension_numbers = #tpu.dot_dimension_numbers<[1], [0], [0], [1], [0, 0, 1, 1], [], []>} : vector<32x64xbf16>, vector<64x16xbf16>, vector<32x16xf32> -> vector<32x16xf32>
    %61 = vector.extract_strided_slice %56 {offsets = [32, 0], sizes = [32, 64], strides = [1, 1]} : vector<288x64xbf16> to vector<32x64xbf16>
    %c1_42 = arith.constant 1 : index
    %c0_43 = arith.constant 0 : index
    %c0_44 = arith.constant 0 : index
    %62 = vector.load %arg5[%c1_42, %c0_43, %c0_44] : memref<9x64x16xbf16, #tpu.memory_space<vmem>>, vector<1x64x16xbf16>
    %63 = vector.shape_cast %62 : vector<1x64x16xbf16> to vector<64x16xbf16>
    %cst_45 = arith.constant dense<0.000000e+00> : vector<32x16xf32>
    %64 = tpu.matmul %61, %63, %cst_45 {dimension_numbers = #tpu.dot_dimension_numbers<[1], [0], [0], [1], [0, 0, 1, 1], [], []>} : vector<32x64xbf16>, vector<64x16xbf16>, vector<32x16xf32> -> vector<32x16xf32>
    %65 = arith.addf %60, %64 : vector<32x16xf32>
    %66 = vector.extract_strided_slice %56 {offsets = [64, 0], sizes = [32, 64], strides = [1, 1]} : vector<288x64xbf16> to vector<32x64xbf16>
    %c2_46 = arith.constant 2 : index
    %c0_47 = arith.constant 0 : index
    %c0_48 = arith.constant 0 : index
    %67 = vector.load %arg5[%c2_46, %c0_47, %c0_48] : memref<9x64x16xbf16, #tpu.memory_space<vmem>>, vector<1x64x16xbf16>
    %68 = vector.shape_cast %67 : vector<1x64x16xbf16> to vector<64x16xbf16>
    %cst_49 = arith.constant dense<0.000000e+00> : vector<32x16xf32>
    %69 = tpu.matmul %66, %68, %cst_49 {dimension_numbers = #tpu.dot_dimension_numbers<[1], [0], [0], [1], [0, 0, 1, 1], [], []>} : vector<32x64xbf16>, vector<64x16xbf16>, vector<32x16xf32> -> vector<32x16xf32>
    %70 = arith.addf %65, %69 : vector<32x16xf32>
    %71 = vector.extract_strided_slice %56 {offsets = [96, 0], sizes = [32, 64], strides = [1, 1]} : vector<288x64xbf16> to vector<32x64xbf16>
    %c3_50 = arith.constant 3 : index
    %c0_51 = arith.constant 0 : index
    %c0_52 = arith.constant 0 : index
    %72 = vector.load %arg5[%c3_50, %c0_51, %c0_52] : memref<9x64x16xbf16, #tpu.memory_space<vmem>>, vector<1x64x16xbf16>
    %73 = vector.shape_cast %72 : vector<1x64x16xbf16> to vector<64x16xbf16>
    %cst_53 = arith.constant dense<0.000000e+00> : vector<32x16xf32>
    %74 = tpu.matmul %71, %73, %cst_53 {dimension_numbers = #tpu.dot_dimension_numbers<[1], [0], [0], [1], [0, 0, 1, 1], [], []>} : vector<32x64xbf16>, vector<64x16xbf16>, vector<32x16xf32> -> vector<32x16xf32>
    %75 = arith.addf %70, %74 : vector<32x16xf32>
    %76 = vector.extract_strided_slice %56 {offsets = [128, 0], sizes = [32, 64], strides = [1, 1]} : vector<288x64xbf16> to vector<32x64xbf16>
    %c4_54 = arith.constant 4 : index
    %c0_55 = arith.constant 0 : index
    %c0_56 = arith.constant 0 : index
    %77 = vector.load %arg5[%c4_54, %c0_55, %c0_56] : memref<9x64x16xbf16, #tpu.memory_space<vmem>>, vector<1x64x16xbf16>
    %78 = vector.shape_cast %77 : vector<1x64x16xbf16> to vector<64x16xbf16>
    %cst_57 = arith.constant dense<0.000000e+00> : vector<32x16xf32>
    %79 = tpu.matmul %76, %78, %cst_57 {dimension_numbers = #tpu.dot_dimension_numbers<[1], [0], [0], [1], [0, 0, 1, 1], [], []>} : vector<32x64xbf16>, vector<64x16xbf16>, vector<32x16xf32> -> vector<32x16xf32>
    %80 = arith.addf %75, %79 : vector<32x16xf32>
    %81 = vector.extract_strided_slice %56 {offsets = [160, 0], sizes = [32, 64], strides = [1, 1]} : vector<288x64xbf16> to vector<32x64xbf16>
    %c5_58 = arith.constant 5 : index
    %c0_59 = arith.constant 0 : index
    %c0_60 = arith.constant 0 : index
    %82 = vector.load %arg5[%c5_58, %c0_59, %c0_60] : memref<9x64x16xbf16, #tpu.memory_space<vmem>>, vector<1x64x16xbf16>
    %83 = vector.shape_cast %82 : vector<1x64x16xbf16> to vector<64x16xbf16>
    %cst_61 = arith.constant dense<0.000000e+00> : vector<32x16xf32>
    %84 = tpu.matmul %81, %83, %cst_61 {dimension_numbers = #tpu.dot_dimension_numbers<[1], [0], [0], [1], [0, 0, 1, 1], [], []>} : vector<32x64xbf16>, vector<64x16xbf16>, vector<32x16xf32> -> vector<32x16xf32>
    %85 = arith.addf %80, %84 : vector<32x16xf32>
    %86 = vector.extract_strided_slice %56 {offsets = [192, 0], sizes = [32, 64], strides = [1, 1]} : vector<288x64xbf16> to vector<32x64xbf16>
    %c6_62 = arith.constant 6 : index
    %c0_63 = arith.constant 0 : index
    %c0_64 = arith.constant 0 : index
    %87 = vector.load %arg5[%c6_62, %c0_63, %c0_64] : memref<9x64x16xbf16, #tpu.memory_space<vmem>>, vector<1x64x16xbf16>
    %88 = vector.shape_cast %87 : vector<1x64x16xbf16> to vector<64x16xbf16>
    %cst_65 = arith.constant dense<0.000000e+00> : vector<32x16xf32>
    %89 = tpu.matmul %86, %88, %cst_65 {dimension_numbers = #tpu.dot_dimension_numbers<[1], [0], [0], [1], [0, 0, 1, 1], [], []>} : vector<32x64xbf16>, vector<64x16xbf16>, vector<32x16xf32> -> vector<32x16xf32>
    %90 = arith.addf %85, %89 : vector<32x16xf32>
    %91 = vector.extract_strided_slice %56 {offsets = [224, 0], sizes = [32, 64], strides = [1, 1]} : vector<288x64xbf16> to vector<32x64xbf16>
    %c7_66 = arith.constant 7 : index
    %c0_67 = arith.constant 0 : index
    %c0_68 = arith.constant 0 : index
    %92 = vector.load %arg5[%c7_66, %c0_67, %c0_68] : memref<9x64x16xbf16, #tpu.memory_space<vmem>>, vector<1x64x16xbf16>
    %93 = vector.shape_cast %92 : vector<1x64x16xbf16> to vector<64x16xbf16>
    %cst_69 = arith.constant dense<0.000000e+00> : vector<32x16xf32>
    %94 = tpu.matmul %91, %93, %cst_69 {dimension_numbers = #tpu.dot_dimension_numbers<[1], [0], [0], [1], [0, 0, 1, 1], [], []>} : vector<32x64xbf16>, vector<64x16xbf16>, vector<32x16xf32> -> vector<32x16xf32>
    %95 = arith.addf %90, %94 : vector<32x16xf32>
    %96 = vector.extract_strided_slice %56 {offsets = [256, 0], sizes = [32, 64], strides = [1, 1]} : vector<288x64xbf16> to vector<32x64xbf16>
    %c8_70 = arith.constant 8 : index
    %c0_71 = arith.constant 0 : index
    %c0_72 = arith.constant 0 : index
    %97 = vector.load %arg5[%c8_70, %c0_71, %c0_72] : memref<9x64x16xbf16, #tpu.memory_space<vmem>>, vector<1x64x16xbf16>
    %98 = vector.shape_cast %97 : vector<1x64x16xbf16> to vector<64x16xbf16>
    %cst_73 = arith.constant dense<0.000000e+00> : vector<32x16xf32>
    %99 = tpu.matmul %96, %98, %cst_73 {dimension_numbers = #tpu.dot_dimension_numbers<[1], [0], [0], [1], [0, 0, 1, 1], [], []>} : vector<32x64xbf16>, vector<64x16xbf16>, vector<32x16xf32> -> vector<32x16xf32>
    %100 = arith.addf %95, %99 : vector<32x16xf32>
    %c0_74 = arith.constant 0 : index
    %c0_75 = arith.constant 0 : index
    %101 = vector.load %arg7[%c0_74, %c0_75] : memref<32x1xf32, #tpu.memory_space<vmem>>, vector<32x1xf32>
    %102 = vector.broadcast %101 : vector<32x1xf32> to vector<32x16xf32>
    %103 = arith.addf %100, %102 : vector<32x16xf32>
    %cst_76 = arith.constant 0.000000e+00 : f32
    %104 = vector.broadcast %cst_76 : f32 to vector<32x16xf32>
    %105 = arith.maximumf %103, %104 : vector<32x16xf32>
    %c0_77 = arith.constant 0 : index
    %c0_78 = arith.constant 0 : index
    %106 = vector.load %arg9[%c0_77, %c0_78] : memref<576x32xf32, #tpu.memory_space<vmem>>, vector<576x32xf32>
    %cst_79 = arith.constant dense<0.000000e+00> : vector<576x16xf32>
    %107 = tpu.matmul %106, %105, %cst_79 {dimension_numbers = #tpu.dot_dimension_numbers<[1], [0], [0], [1], [0, 0, 1, 1], [], []>} : vector<576x32xf32>, vector<32x16xf32>, vector<576x16xf32> -> vector<576x16xf32>
    %108 = arith.truncf %107 : vector<576x16xf32> to vector<576x16xbf16>
    %109 = vector.extract_strided_slice %108 {offsets = [0, 0], sizes = [64, 16], strides = [1, 1]} : vector<576x16xbf16> to vector<64x16xbf16>
    %c0_80 = arith.constant 0 : index
    %c0_81 = arith.constant 0 : index
    %c0_82 = arith.constant 0 : index
    %110 = vector.load %arg8[%c0_80, %c0_81, %c0_82] : memref<9x16x4xbf16, #tpu.memory_space<vmem>>, vector<1x16x4xbf16>
    %111 = vector.shape_cast %110 : vector<1x16x4xbf16> to vector<16x4xbf16>
    %cst_83 = arith.constant dense<0.000000e+00> : vector<64x4xf32>
    %112 = tpu.matmul %109, %111, %cst_83 {dimension_numbers = #tpu.dot_dimension_numbers<[1], [0], [0], [1], [0, 0, 1, 1], [], []>} : vector<64x16xbf16>, vector<16x4xbf16>, vector<64x4xf32> -> vector<64x4xf32>
    %113 = vector.extract_strided_slice %108 {offsets = [64, 0], sizes = [64, 16], strides = [1, 1]} : vector<576x16xbf16> to vector<64x16xbf16>
    %c1_84 = arith.constant 1 : index
    %c0_85 = arith.constant 0 : index
    %c0_86 = arith.constant 0 : index
    %114 = vector.load %arg8[%c1_84, %c0_85, %c0_86] : memref<9x16x4xbf16, #tpu.memory_space<vmem>>, vector<1x16x4xbf16>
    %115 = vector.shape_cast %114 : vector<1x16x4xbf16> to vector<16x4xbf16>
    %cst_87 = arith.constant dense<0.000000e+00> : vector<64x4xf32>
    %116 = tpu.matmul %113, %115, %cst_87 {dimension_numbers = #tpu.dot_dimension_numbers<[1], [0], [0], [1], [0, 0, 1, 1], [], []>} : vector<64x16xbf16>, vector<16x4xbf16>, vector<64x4xf32> -> vector<64x4xf32>
    %117 = arith.addf %112, %116 : vector<64x4xf32>
    %118 = vector.extract_strided_slice %108 {offsets = [128, 0], sizes = [64, 16], strides = [1, 1]} : vector<576x16xbf16> to vector<64x16xbf16>
    %c2_88 = arith.constant 2 : index
    %c0_89 = arith.constant 0 : index
    %c0_90 = arith.constant 0 : index
    %119 = vector.load %arg8[%c2_88, %c0_89, %c0_90] : memref<9x16x4xbf16, #tpu.memory_space<vmem>>, vector<1x16x4xbf16>
    %120 = vector.shape_cast %119 : vector<1x16x4xbf16> to vector<16x4xbf16>
    %cst_91 = arith.constant dense<0.000000e+00> : vector<64x4xf32>
    %121 = tpu.matmul %118, %120, %cst_91 {dimension_numbers = #tpu.dot_dimension_numbers<[1], [0], [0], [1], [0, 0, 1, 1], [], []>} : vector<64x16xbf16>, vector<16x4xbf16>, vector<64x4xf32> -> vector<64x4xf32>
    %122 = arith.addf %117, %121 : vector<64x4xf32>
    %123 = vector.extract_strided_slice %108 {offsets = [192, 0], sizes = [64, 16], strides = [1, 1]} : vector<576x16xbf16> to vector<64x16xbf16>
    %c3_92 = arith.constant 3 : index
    %c0_93 = arith.constant 0 : index
    %c0_94 = arith.constant 0 : index
    %124 = vector.load %arg8[%c3_92, %c0_93, %c0_94] : memref<9x16x4xbf16, #tpu.memory_space<vmem>>, vector<1x16x4xbf16>
    %125 = vector.shape_cast %124 : vector<1x16x4xbf16> to vector<16x4xbf16>
    %cst_95 = arith.constant dense<0.000000e+00> : vector<64x4xf32>
    %126 = tpu.matmul %123, %125, %cst_95 {dimension_numbers = #tpu.dot_dimension_numbers<[1], [0], [0], [1], [0, 0, 1, 1], [], []>} : vector<64x16xbf16>, vector<16x4xbf16>, vector<64x4xf32> -> vector<64x4xf32>
    %127 = arith.addf %122, %126 : vector<64x4xf32>
    %128 = vector.extract_strided_slice %108 {offsets = [256, 0], sizes = [64, 16], strides = [1, 1]} : vector<576x16xbf16> to vector<64x16xbf16>
    %c4_96 = arith.constant 4 : index
    %c0_97 = arith.constant 0 : index
    %c0_98 = arith.constant 0 : index
    %129 = vector.load %arg8[%c4_96, %c0_97, %c0_98] : memref<9x16x4xbf16, #tpu.memory_space<vmem>>, vector<1x16x4xbf16>
    %130 = vector.shape_cast %129 : vector<1x16x4xbf16> to vector<16x4xbf16>
    %cst_99 = arith.constant dense<0.000000e+00> : vector<64x4xf32>
    %131 = tpu.matmul %128, %130, %cst_99 {dimension_numbers = #tpu.dot_dimension_numbers<[1], [0], [0], [1], [0, 0, 1, 1], [], []>} : vector<64x16xbf16>, vector<16x4xbf16>, vector<64x4xf32> -> vector<64x4xf32>
    %132 = arith.addf %127, %131 : vector<64x4xf32>
    %133 = vector.extract_strided_slice %108 {offsets = [320, 0], sizes = [64, 16], strides = [1, 1]} : vector<576x16xbf16> to vector<64x16xbf16>
    %c5_100 = arith.constant 5 : index
    %c0_101 = arith.constant 0 : index
    %c0_102 = arith.constant 0 : index
    %134 = vector.load %arg8[%c5_100, %c0_101, %c0_102] : memref<9x16x4xbf16, #tpu.memory_space<vmem>>, vector<1x16x4xbf16>
    %135 = vector.shape_cast %134 : vector<1x16x4xbf16> to vector<16x4xbf16>
    %cst_103 = arith.constant dense<0.000000e+00> : vector<64x4xf32>
    %136 = tpu.matmul %133, %135, %cst_103 {dimension_numbers = #tpu.dot_dimension_numbers<[1], [0], [0], [1], [0, 0, 1, 1], [], []>} : vector<64x16xbf16>, vector<16x4xbf16>, vector<64x4xf32> -> vector<64x4xf32>
    %137 = arith.addf %132, %136 : vector<64x4xf32>
    %138 = vector.extract_strided_slice %108 {offsets = [384, 0], sizes = [64, 16], strides = [1, 1]} : vector<576x16xbf16> to vector<64x16xbf16>
    %c6_104 = arith.constant 6 : index
    %c0_105 = arith.constant 0 : index
    %c0_106 = arith.constant 0 : index
    %139 = vector.load %arg8[%c6_104, %c0_105, %c0_106] : memref<9x16x4xbf16, #tpu.memory_space<vmem>>, vector<1x16x4xbf16>
    %140 = vector.shape_cast %139 : vector<1x16x4xbf16> to vector<16x4xbf16>
    %cst_107 = arith.constant dense<0.000000e+00> : vector<64x4xf32>
    %141 = tpu.matmul %138, %140, %cst_107 {dimension_numbers = #tpu.dot_dimension_numbers<[1], [0], [0], [1], [0, 0, 1, 1], [], []>} : vector<64x16xbf16>, vector<16x4xbf16>, vector<64x4xf32> -> vector<64x4xf32>
    %142 = arith.addf %137, %141 : vector<64x4xf32>
    %143 = vector.extract_strided_slice %108 {offsets = [448, 0], sizes = [64, 16], strides = [1, 1]} : vector<576x16xbf16> to vector<64x16xbf16>
    %c7_108 = arith.constant 7 : index
    %c0_109 = arith.constant 0 : index
    %c0_110 = arith.constant 0 : index
    %144 = vector.load %arg8[%c7_108, %c0_109, %c0_110] : memref<9x16x4xbf16, #tpu.memory_space<vmem>>, vector<1x16x4xbf16>
    %145 = vector.shape_cast %144 : vector<1x16x4xbf16> to vector<16x4xbf16>
    %cst_111 = arith.constant dense<0.000000e+00> : vector<64x4xf32>
    %146 = tpu.matmul %143, %145, %cst_111 {dimension_numbers = #tpu.dot_dimension_numbers<[1], [0], [0], [1], [0, 0, 1, 1], [], []>} : vector<64x16xbf16>, vector<16x4xbf16>, vector<64x4xf32> -> vector<64x4xf32>
    %147 = arith.addf %142, %146 : vector<64x4xf32>
    %148 = vector.extract_strided_slice %108 {offsets = [512, 0], sizes = [64, 16], strides = [1, 1]} : vector<576x16xbf16> to vector<64x16xbf16>
    %c8_112 = arith.constant 8 : index
    %c0_113 = arith.constant 0 : index
    %c0_114 = arith.constant 0 : index
    %149 = vector.load %arg8[%c8_112, %c0_113, %c0_114] : memref<9x16x4xbf16, #tpu.memory_space<vmem>>, vector<1x16x4xbf16>
    %150 = vector.shape_cast %149 : vector<1x16x4xbf16> to vector<16x4xbf16>
    %cst_115 = arith.constant dense<0.000000e+00> : vector<64x4xf32>
    %151 = tpu.matmul %148, %150, %cst_115 {dimension_numbers = #tpu.dot_dimension_numbers<[1], [0], [0], [1], [0, 0, 1, 1], [], []>} : vector<64x16xbf16>, vector<16x4xbf16>, vector<64x4xf32> -> vector<64x4xf32>
    %152 = arith.addf %147, %151 : vector<64x4xf32>
    %c0_116 = arith.constant 0 : index
    %c0_117 = arith.constant 0 : index
    %153 = vector.load %arg10[%c0_116, %c0_117] : memref<64x1xf32, #tpu.memory_space<vmem>>, vector<64x1xf32>
    %154 = vector.broadcast %153 : vector<64x1xf32> to vector<64x4xf32>
    %155 = arith.addf %152, %154 : vector<64x4xf32>
    %cst_118 = arith.constant 0.000000e+00 : f32
    %156 = vector.broadcast %cst_118 : f32 to vector<64x4xf32>
    %157 = arith.maximumf %155, %156 : vector<64x4xf32>
    %c0_119 = arith.constant 0 : index
    %c0_120 = arith.constant 0 : index
    %158 = vector.load %arg12[%c0_119, %c0_120] : memref<288x64xf32, #tpu.memory_space<vmem>>, vector<288x64xf32>
    %cst_121 = arith.constant dense<0.000000e+00> : vector<288x4xf32>
    %159 = tpu.matmul %158, %157, %cst_121 {dimension_numbers = #tpu.dot_dimension_numbers<[1], [0], [0], [1], [0, 0, 1, 1], [], []>} : vector<288x64xf32>, vector<64x4xf32>, vector<288x4xf32> -> vector<288x4xf32>
    %160 = arith.truncf %159 : vector<288x4xf32> to vector<288x4xbf16>
    %161 = vector.extract_strided_slice %160 {offsets = [0, 0], sizes = [32, 4], strides = [1, 1]} : vector<288x4xbf16> to vector<32x4xbf16>
    %c0_122 = arith.constant 0 : index
    %c0_123 = arith.constant 0 : index
    %c0_124 = arith.constant 0 : index
    %162 = vector.load %arg11[%c0_122, %c0_123, %c0_124] : memref<9x4x16xbf16, #tpu.memory_space<vmem>>, vector<1x4x16xbf16>
    %163 = vector.shape_cast %162 : vector<1x4x16xbf16> to vector<4x16xbf16>
    %cst_125 = arith.constant dense<0.000000e+00> : vector<32x16xf32>
    %164 = tpu.matmul %161, %163, %cst_125 {dimension_numbers = #tpu.dot_dimension_numbers<[1], [0], [0], [1], [0, 0, 1, 1], [], []>} : vector<32x4xbf16>, vector<4x16xbf16>, vector<32x16xf32> -> vector<32x16xf32>
    %165 = vector.extract_strided_slice %160 {offsets = [32, 0], sizes = [32, 4], strides = [1, 1]} : vector<288x4xbf16> to vector<32x4xbf16>
    %c1_126 = arith.constant 1 : index
    %c0_127 = arith.constant 0 : index
    %c0_128 = arith.constant 0 : index
    %166 = vector.load %arg11[%c1_126, %c0_127, %c0_128] : memref<9x4x16xbf16, #tpu.memory_space<vmem>>, vector<1x4x16xbf16>
    %167 = vector.shape_cast %166 : vector<1x4x16xbf16> to vector<4x16xbf16>
    %cst_129 = arith.constant dense<0.000000e+00> : vector<32x16xf32>
    %168 = tpu.matmul %165, %167, %cst_129 {dimension_numbers = #tpu.dot_dimension_numbers<[1], [0], [0], [1], [0, 0, 1, 1], [], []>} : vector<32x4xbf16>, vector<4x16xbf16>, vector<32x16xf32> -> vector<32x16xf32>
    %169 = arith.addf %164, %168 : vector<32x16xf32>
    %170 = vector.extract_strided_slice %160 {offsets = [64, 0], sizes = [32, 4], strides = [1, 1]} : vector<288x4xbf16> to vector<32x4xbf16>
    %c2_130 = arith.constant 2 : index
    %c0_131 = arith.constant 0 : index
    %c0_132 = arith.constant 0 : index
    %171 = vector.load %arg11[%c2_130, %c0_131, %c0_132] : memref<9x4x16xbf16, #tpu.memory_space<vmem>>, vector<1x4x16xbf16>
    %172 = vector.shape_cast %171 : vector<1x4x16xbf16> to vector<4x16xbf16>
    %cst_133 = arith.constant dense<0.000000e+00> : vector<32x16xf32>
    %173 = tpu.matmul %170, %172, %cst_133 {dimension_numbers = #tpu.dot_dimension_numbers<[1], [0], [0], [1], [0, 0, 1, 1], [], []>} : vector<32x4xbf16>, vector<4x16xbf16>, vector<32x16xf32> -> vector<32x16xf32>
    %174 = arith.addf %169, %173 : vector<32x16xf32>
    %175 = vector.extract_strided_slice %160 {offsets = [96, 0], sizes = [32, 4], strides = [1, 1]} : vector<288x4xbf16> to vector<32x4xbf16>
    %c3_134 = arith.constant 3 : index
    %c0_135 = arith.constant 0 : index
    %c0_136 = arith.constant 0 : index
    %176 = vector.load %arg11[%c3_134, %c0_135, %c0_136] : memref<9x4x16xbf16, #tpu.memory_space<vmem>>, vector<1x4x16xbf16>
    %177 = vector.shape_cast %176 : vector<1x4x16xbf16> to vector<4x16xbf16>
    %cst_137 = arith.constant dense<0.000000e+00> : vector<32x16xf32>
    %178 = tpu.matmul %175, %177, %cst_137 {dimension_numbers = #tpu.dot_dimension_numbers<[1], [0], [0], [1], [0, 0, 1, 1], [], []>} : vector<32x4xbf16>, vector<4x16xbf16>, vector<32x16xf32> -> vector<32x16xf32>
    %179 = arith.addf %174, %178 : vector<32x16xf32>
    %180 = vector.extract_strided_slice %160 {offsets = [128, 0], sizes = [32, 4], strides = [1, 1]} : vector<288x4xbf16> to vector<32x4xbf16>
    %c4_138 = arith.constant 4 : index
    %c0_139 = arith.constant 0 : index
    %c0_140 = arith.constant 0 : index
    %181 = vector.load %arg11[%c4_138, %c0_139, %c0_140] : memref<9x4x16xbf16, #tpu.memory_space<vmem>>, vector<1x4x16xbf16>
    %182 = vector.shape_cast %181 : vector<1x4x16xbf16> to vector<4x16xbf16>
    %cst_141 = arith.constant dense<0.000000e+00> : vector<32x16xf32>
    %183 = tpu.matmul %180, %182, %cst_141 {dimension_numbers = #tpu.dot_dimension_numbers<[1], [0], [0], [1], [0, 0, 1, 1], [], []>} : vector<32x4xbf16>, vector<4x16xbf16>, vector<32x16xf32> -> vector<32x16xf32>
    %184 = arith.addf %179, %183 : vector<32x16xf32>
    %185 = vector.extract_strided_slice %160 {offsets = [160, 0], sizes = [32, 4], strides = [1, 1]} : vector<288x4xbf16> to vector<32x4xbf16>
    %c5_142 = arith.constant 5 : index
    %c0_143 = arith.constant 0 : index
    %c0_144 = arith.constant 0 : index
    %186 = vector.load %arg11[%c5_142, %c0_143, %c0_144] : memref<9x4x16xbf16, #tpu.memory_space<vmem>>, vector<1x4x16xbf16>
    %187 = vector.shape_cast %186 : vector<1x4x16xbf16> to vector<4x16xbf16>
    %cst_145 = arith.constant dense<0.000000e+00> : vector<32x16xf32>
    %188 = tpu.matmul %185, %187, %cst_145 {dimension_numbers = #tpu.dot_dimension_numbers<[1], [0], [0], [1], [0, 0, 1, 1], [], []>} : vector<32x4xbf16>, vector<4x16xbf16>, vector<32x16xf32> -> vector<32x16xf32>
    %189 = arith.addf %184, %188 : vector<32x16xf32>
    %190 = vector.extract_strided_slice %160 {offsets = [192, 0], sizes = [32, 4], strides = [1, 1]} : vector<288x4xbf16> to vector<32x4xbf16>
    %c6_146 = arith.constant 6 : index
    %c0_147 = arith.constant 0 : index
    %c0_148 = arith.constant 0 : index
    %191 = vector.load %arg11[%c6_146, %c0_147, %c0_148] : memref<9x4x16xbf16, #tpu.memory_space<vmem>>, vector<1x4x16xbf16>
    %192 = vector.shape_cast %191 : vector<1x4x16xbf16> to vector<4x16xbf16>
    %cst_149 = arith.constant dense<0.000000e+00> : vector<32x16xf32>
    %193 = tpu.matmul %190, %192, %cst_149 {dimension_numbers = #tpu.dot_dimension_numbers<[1], [0], [0], [1], [0, 0, 1, 1], [], []>} : vector<32x4xbf16>, vector<4x16xbf16>, vector<32x16xf32> -> vector<32x16xf32>
    %194 = arith.addf %189, %193 : vector<32x16xf32>
    %195 = vector.extract_strided_slice %160 {offsets = [224, 0], sizes = [32, 4], strides = [1, 1]} : vector<288x4xbf16> to vector<32x4xbf16>
    %c7_150 = arith.constant 7 : index
    %c0_151 = arith.constant 0 : index
    %c0_152 = arith.constant 0 : index
    %196 = vector.load %arg11[%c7_150, %c0_151, %c0_152] : memref<9x4x16xbf16, #tpu.memory_space<vmem>>, vector<1x4x16xbf16>
    %197 = vector.shape_cast %196 : vector<1x4x16xbf16> to vector<4x16xbf16>
    %cst_153 = arith.constant dense<0.000000e+00> : vector<32x16xf32>
    %198 = tpu.matmul %195, %197, %cst_153 {dimension_numbers = #tpu.dot_dimension_numbers<[1], [0], [0], [1], [0, 0, 1, 1], [], []>} : vector<32x4xbf16>, vector<4x16xbf16>, vector<32x16xf32> -> vector<32x16xf32>
    %199 = arith.addf %194, %198 : vector<32x16xf32>
    %200 = vector.extract_strided_slice %160 {offsets = [256, 0], sizes = [32, 4], strides = [1, 1]} : vector<288x4xbf16> to vector<32x4xbf16>
    %c8_154 = arith.constant 8 : index
    %c0_155 = arith.constant 0 : index
    %c0_156 = arith.constant 0 : index
    %201 = vector.load %arg11[%c8_154, %c0_155, %c0_156] : memref<9x4x16xbf16, #tpu.memory_space<vmem>>, vector<1x4x16xbf16>
    %202 = vector.shape_cast %201 : vector<1x4x16xbf16> to vector<4x16xbf16>
    %cst_157 = arith.constant dense<0.000000e+00> : vector<32x16xf32>
    %203 = tpu.matmul %200, %202, %cst_157 {dimension_numbers = #tpu.dot_dimension_numbers<[1], [0], [0], [1], [0, 0, 1, 1], [], []>} : vector<32x4xbf16>, vector<4x16xbf16>, vector<32x16xf32> -> vector<32x16xf32>
    %204 = arith.addf %199, %203 : vector<32x16xf32>
    %c0_158 = arith.constant 0 : index
    %c0_159 = arith.constant 0 : index
    %205 = vector.load %arg13[%c0_158, %c0_159] : memref<32x1xf32, #tpu.memory_space<vmem>>, vector<32x1xf32>
    %206 = vector.broadcast %205 : vector<32x1xf32> to vector<32x16xf32>
    %207 = arith.addf %204, %206 : vector<32x16xf32>
    %cst_160 = arith.constant 0.000000e+00 : f32
    %208 = vector.broadcast %cst_160 : f32 to vector<32x16xf32>
    %209 = arith.maximumf %207, %208 : vector<32x16xf32>
    %c0_161 = arith.constant 0 : index
    %c0_162 = arith.constant 0 : index
    %210 = vector.load %arg15[%c0_161, %c0_162] : memref<144x32xf32, #tpu.memory_space<vmem>>, vector<144x32xf32>
    %cst_163 = arith.constant dense<0.000000e+00> : vector<144x16xf32>
    %211 = tpu.matmul %210, %209, %cst_163 {dimension_numbers = #tpu.dot_dimension_numbers<[1], [0], [0], [1], [0, 0, 1, 1], [], []>} : vector<144x32xf32>, vector<32x16xf32>, vector<144x16xf32> -> vector<144x16xf32>
    %212 = arith.truncf %211 : vector<144x16xf32> to vector<144x16xbf16>
    %213 = vector.extract_strided_slice %212 {offsets = [0, 0], sizes = [16, 16], strides = [1, 1]} : vector<144x16xbf16> to vector<16x16xbf16>
    %c0_164 = arith.constant 0 : index
    %c0_165 = arith.constant 0 : index
    %c0_166 = arith.constant 0 : index
    %214 = vector.load %arg14[%c0_164, %c0_165, %c0_166] : memref<9x16x64xbf16, #tpu.memory_space<vmem>>, vector<1x16x64xbf16>
    %215 = vector.shape_cast %214 : vector<1x16x64xbf16> to vector<16x64xbf16>
    %cst_167 = arith.constant dense<0.000000e+00> : vector<16x64xf32>
    %216 = tpu.matmul %213, %215, %cst_167 {dimension_numbers = #tpu.dot_dimension_numbers<[1], [0], [0], [1], [0, 0, 1, 1], [], []>} : vector<16x16xbf16>, vector<16x64xbf16>, vector<16x64xf32> -> vector<16x64xf32>
    %217 = vector.extract_strided_slice %212 {offsets = [16, 0], sizes = [16, 16], strides = [1, 1]} : vector<144x16xbf16> to vector<16x16xbf16>
    %c1_168 = arith.constant 1 : index
    %c0_169 = arith.constant 0 : index
    %c0_170 = arith.constant 0 : index
    %218 = vector.load %arg14[%c1_168, %c0_169, %c0_170] : memref<9x16x64xbf16, #tpu.memory_space<vmem>>, vector<1x16x64xbf16>
    %219 = vector.shape_cast %218 : vector<1x16x64xbf16> to vector<16x64xbf16>
    %cst_171 = arith.constant dense<0.000000e+00> : vector<16x64xf32>
    %220 = tpu.matmul %217, %219, %cst_171 {dimension_numbers = #tpu.dot_dimension_numbers<[1], [0], [0], [1], [0, 0, 1, 1], [], []>} : vector<16x16xbf16>, vector<16x64xbf16>, vector<16x64xf32> -> vector<16x64xf32>
    %221 = arith.addf %216, %220 : vector<16x64xf32>
    %222 = vector.extract_strided_slice %212 {offsets = [32, 0], sizes = [16, 16], strides = [1, 1]} : vector<144x16xbf16> to vector<16x16xbf16>
    %c2_172 = arith.constant 2 : index
    %c0_173 = arith.constant 0 : index
    %c0_174 = arith.constant 0 : index
    %223 = vector.load %arg14[%c2_172, %c0_173, %c0_174] : memref<9x16x64xbf16, #tpu.memory_space<vmem>>, vector<1x16x64xbf16>
    %224 = vector.shape_cast %223 : vector<1x16x64xbf16> to vector<16x64xbf16>
    %cst_175 = arith.constant dense<0.000000e+00> : vector<16x64xf32>
    %225 = tpu.matmul %222, %224, %cst_175 {dimension_numbers = #tpu.dot_dimension_numbers<[1], [0], [0], [1], [0, 0, 1, 1], [], []>} : vector<16x16xbf16>, vector<16x64xbf16>, vector<16x64xf32> -> vector<16x64xf32>
    %226 = arith.addf %221, %225 : vector<16x64xf32>
    %227 = vector.extract_strided_slice %212 {offsets = [48, 0], sizes = [16, 16], strides = [1, 1]} : vector<144x16xbf16> to vector<16x16xbf16>
    %c3_176 = arith.constant 3 : index
    %c0_177 = arith.constant 0 : index
    %c0_178 = arith.constant 0 : index
    %228 = vector.load %arg14[%c3_176, %c0_177, %c0_178] : memref<9x16x64xbf16, #tpu.memory_space<vmem>>, vector<1x16x64xbf16>
    %229 = vector.shape_cast %228 : vector<1x16x64xbf16> to vector<16x64xbf16>
    %cst_179 = arith.constant dense<0.000000e+00> : vector<16x64xf32>
    %230 = tpu.matmul %227, %229, %cst_179 {dimension_numbers = #tpu.dot_dimension_numbers<[1], [0], [0], [1], [0, 0, 1, 1], [], []>} : vector<16x16xbf16>, vector<16x64xbf16>, vector<16x64xf32> -> vector<16x64xf32>
    %231 = arith.addf %226, %230 : vector<16x64xf32>
    %232 = vector.extract_strided_slice %212 {offsets = [64, 0], sizes = [16, 16], strides = [1, 1]} : vector<144x16xbf16> to vector<16x16xbf16>
    %c4_180 = arith.constant 4 : index
    %c0_181 = arith.constant 0 : index
    %c0_182 = arith.constant 0 : index
    %233 = vector.load %arg14[%c4_180, %c0_181, %c0_182] : memref<9x16x64xbf16, #tpu.memory_space<vmem>>, vector<1x16x64xbf16>
    %234 = vector.shape_cast %233 : vector<1x16x64xbf16> to vector<16x64xbf16>
    %cst_183 = arith.constant dense<0.000000e+00> : vector<16x64xf32>
    %235 = tpu.matmul %232, %234, %cst_183 {dimension_numbers = #tpu.dot_dimension_numbers<[1], [0], [0], [1], [0, 0, 1, 1], [], []>} : vector<16x16xbf16>, vector<16x64xbf16>, vector<16x64xf32> -> vector<16x64xf32>
    %236 = arith.addf %231, %235 : vector<16x64xf32>
    %237 = vector.extract_strided_slice %212 {offsets = [80, 0], sizes = [16, 16], strides = [1, 1]} : vector<144x16xbf16> to vector<16x16xbf16>
    %c5_184 = arith.constant 5 : index
    %c0_185 = arith.constant 0 : index
    %c0_186 = arith.constant 0 : index
    %238 = vector.load %arg14[%c5_184, %c0_185, %c0_186] : memref<9x16x64xbf16, #tpu.memory_space<vmem>>, vector<1x16x64xbf16>
    %239 = vector.shape_cast %238 : vector<1x16x64xbf16> to vector<16x64xbf16>
    %cst_187 = arith.constant dense<0.000000e+00> : vector<16x64xf32>
    %240 = tpu.matmul %237, %239, %cst_187 {dimension_numbers = #tpu.dot_dimension_numbers<[1], [0], [0], [1], [0, 0, 1, 1], [], []>} : vector<16x16xbf16>, vector<16x64xbf16>, vector<16x64xf32> -> vector<16x64xf32>
    %241 = arith.addf %236, %240 : vector<16x64xf32>
    %242 = vector.extract_strided_slice %212 {offsets = [96, 0], sizes = [16, 16], strides = [1, 1]} : vector<144x16xbf16> to vector<16x16xbf16>
    %c6_188 = arith.constant 6 : index
    %c0_189 = arith.constant 0 : index
    %c0_190 = arith.constant 0 : index
    %243 = vector.load %arg14[%c6_188, %c0_189, %c0_190] : memref<9x16x64xbf16, #tpu.memory_space<vmem>>, vector<1x16x64xbf16>
    %244 = vector.shape_cast %243 : vector<1x16x64xbf16> to vector<16x64xbf16>
    %cst_191 = arith.constant dense<0.000000e+00> : vector<16x64xf32>
    %245 = tpu.matmul %242, %244, %cst_191 {dimension_numbers = #tpu.dot_dimension_numbers<[1], [0], [0], [1], [0, 0, 1, 1], [], []>} : vector<16x16xbf16>, vector<16x64xbf16>, vector<16x64xf32> -> vector<16x64xf32>
    %246 = arith.addf %241, %245 : vector<16x64xf32>
    %247 = vector.extract_strided_slice %212 {offsets = [112, 0], sizes = [16, 16], strides = [1, 1]} : vector<144x16xbf16> to vector<16x16xbf16>
    %c7_192 = arith.constant 7 : index
    %c0_193 = arith.constant 0 : index
    %c0_194 = arith.constant 0 : index
    %248 = vector.load %arg14[%c7_192, %c0_193, %c0_194] : memref<9x16x64xbf16, #tpu.memory_space<vmem>>, vector<1x16x64xbf16>
    %249 = vector.shape_cast %248 : vector<1x16x64xbf16> to vector<16x64xbf16>
    %cst_195 = arith.constant dense<0.000000e+00> : vector<16x64xf32>
    %250 = tpu.matmul %247, %249, %cst_195 {dimension_numbers = #tpu.dot_dimension_numbers<[1], [0], [0], [1], [0, 0, 1, 1], [], []>} : vector<16x16xbf16>, vector<16x64xbf16>, vector<16x64xf32> -> vector<16x64xf32>
    %251 = arith.addf %246, %250 : vector<16x64xf32>
    %252 = vector.extract_strided_slice %212 {offsets = [128, 0], sizes = [16, 16], strides = [1, 1]} : vector<144x16xbf16> to vector<16x16xbf16>
    %c8_196 = arith.constant 8 : index
    %c0_197 = arith.constant 0 : index
    %c0_198 = arith.constant 0 : index
    %253 = vector.load %arg14[%c8_196, %c0_197, %c0_198] : memref<9x16x64xbf16, #tpu.memory_space<vmem>>, vector<1x16x64xbf16>
    %254 = vector.shape_cast %253 : vector<1x16x64xbf16> to vector<16x64xbf16>
    %cst_199 = arith.constant dense<0.000000e+00> : vector<16x64xf32>
    %255 = tpu.matmul %252, %254, %cst_199 {dimension_numbers = #tpu.dot_dimension_numbers<[1], [0], [0], [1], [0, 0, 1, 1], [], []>} : vector<16x16xbf16>, vector<16x64xbf16>, vector<16x64xf32> -> vector<16x64xf32>
    %256 = arith.addf %251, %255 : vector<16x64xf32>
    %c0_200 = arith.constant 0 : index
    %c0_201 = arith.constant 0 : index
    %257 = vector.load %arg16[%c0_200, %c0_201] : memref<16x1xf32, #tpu.memory_space<vmem>>, vector<16x1xf32>
    %258 = vector.broadcast %257 : vector<16x1xf32> to vector<16x64xf32>
    %259 = arith.addf %256, %258 : vector<16x64xf32>
    %cst_202 = arith.constant 0.000000e+00 : f32
    %260 = vector.broadcast %cst_202 : f32 to vector<16x64xf32>
    %261 = arith.maximumf %259, %260 : vector<16x64xf32>
    %c0_203 = arith.constant 0 : index
    %c0_204 = arith.constant 0 : index
    %c0_205 = arith.constant 0 : index
    %262 = vector.load %arg18[%c0_203, %c0_204, %c0_205] : memref<9x3x16xf32, #tpu.memory_space<vmem>>, vector<1x3x16xf32>
    %263 = vector.shape_cast %262 : vector<1x3x16xf32> to vector<3x16xf32>
    %cst_206 = arith.constant dense<0.000000e+00> : vector<3x64xf32>
    %264 = tpu.matmul %263, %261, %cst_206 {dimension_numbers = #tpu.dot_dimension_numbers<[1], [0], [0], [1], [0, 0, 1, 1], [], []>} : vector<3x16xf32>, vector<16x64xf32>, vector<3x64xf32> -> vector<3x64xf32>
    %265 = arith.truncf %264 : vector<3x64xf32> to vector<3x64xbf16>
    %c0_207 = arith.constant 0 : index
    %c0_208 = arith.constant 0 : index
    %c0_209 = arith.constant 0 : index
    %266 = vector.load %arg17[%c0_207, %c0_208, %c0_209] : memref<9x64x256xbf16, #tpu.memory_space<vmem>>, vector<1x64x256xbf16>
    %267 = vector.shape_cast %266 : vector<1x64x256xbf16> to vector<64x256xbf16>
    %cst_210 = arith.constant dense<0.000000e+00> : vector<3x256xf32>
    %268 = tpu.matmul %265, %267, %cst_210 {dimension_numbers = #tpu.dot_dimension_numbers<[1], [0], [0], [1], [0, 0, 1, 1], [], []>} : vector<3x64xbf16>, vector<64x256xbf16>, vector<3x256xf32> -> vector<3x256xf32>
    %c1_211 = arith.constant 1 : index
    %c0_212 = arith.constant 0 : index
    %c0_213 = arith.constant 0 : index
    %269 = vector.load %arg18[%c1_211, %c0_212, %c0_213] : memref<9x3x16xf32, #tpu.memory_space<vmem>>, vector<1x3x16xf32>
    %270 = vector.shape_cast %269 : vector<1x3x16xf32> to vector<3x16xf32>
    %cst_214 = arith.constant dense<0.000000e+00> : vector<3x64xf32>
    %271 = tpu.matmul %270, %261, %cst_214 {dimension_numbers = #tpu.dot_dimension_numbers<[1], [0], [0], [1], [0, 0, 1, 1], [], []>} : vector<3x16xf32>, vector<16x64xf32>, vector<3x64xf32> -> vector<3x64xf32>
    %272 = arith.truncf %271 : vector<3x64xf32> to vector<3x64xbf16>
    %c1_215 = arith.constant 1 : index
    %c0_216 = arith.constant 0 : index
    %c0_217 = arith.constant 0 : index
    %273 = vector.load %arg17[%c1_215, %c0_216, %c0_217] : memref<9x64x256xbf16, #tpu.memory_space<vmem>>, vector<1x64x256xbf16>
    %274 = vector.shape_cast %273 : vector<1x64x256xbf16> to vector<64x256xbf16>
    %cst_218 = arith.constant dense<0.000000e+00> : vector<3x256xf32>
    %275 = tpu.matmul %272, %274, %cst_218 {dimension_numbers = #tpu.dot_dimension_numbers<[1], [0], [0], [1], [0, 0, 1, 1], [], []>} : vector<3x64xbf16>, vector<64x256xbf16>, vector<3x256xf32> -> vector<3x256xf32>
    %276 = arith.addf %268, %275 : vector<3x256xf32>
    %c2_219 = arith.constant 2 : index
    %c0_220 = arith.constant 0 : index
    %c0_221 = arith.constant 0 : index
    %277 = vector.load %arg18[%c2_219, %c0_220, %c0_221] : memref<9x3x16xf32, #tpu.memory_space<vmem>>, vector<1x3x16xf32>
    %278 = vector.shape_cast %277 : vector<1x3x16xf32> to vector<3x16xf32>
    %cst_222 = arith.constant dense<0.000000e+00> : vector<3x64xf32>
    %279 = tpu.matmul %278, %261, %cst_222 {dimension_numbers = #tpu.dot_dimension_numbers<[1], [0], [0], [1], [0, 0, 1, 1], [], []>} : vector<3x16xf32>, vector<16x64xf32>, vector<3x64xf32> -> vector<3x64xf32>
    %280 = arith.truncf %279 : vector<3x64xf32> to vector<3x64xbf16>
    %c2_223 = arith.constant 2 : index
    %c0_224 = arith.constant 0 : index
    %c0_225 = arith.constant 0 : index
    %281 = vector.load %arg17[%c2_223, %c0_224, %c0_225] : memref<9x64x256xbf16, #tpu.memory_space<vmem>>, vector<1x64x256xbf16>
    %282 = vector.shape_cast %281 : vector<1x64x256xbf16> to vector<64x256xbf16>
    %cst_226 = arith.constant dense<0.000000e+00> : vector<3x256xf32>
    %283 = tpu.matmul %280, %282, %cst_226 {dimension_numbers = #tpu.dot_dimension_numbers<[1], [0], [0], [1], [0, 0, 1, 1], [], []>} : vector<3x64xbf16>, vector<64x256xbf16>, vector<3x256xf32> -> vector<3x256xf32>
    %284 = arith.addf %276, %283 : vector<3x256xf32>
    %c3_227 = arith.constant 3 : index
    %c0_228 = arith.constant 0 : index
    %c0_229 = arith.constant 0 : index
    %285 = vector.load %arg18[%c3_227, %c0_228, %c0_229] : memref<9x3x16xf32, #tpu.memory_space<vmem>>, vector<1x3x16xf32>
    %286 = vector.shape_cast %285 : vector<1x3x16xf32> to vector<3x16xf32>
    %cst_230 = arith.constant dense<0.000000e+00> : vector<3x64xf32>
    %287 = tpu.matmul %286, %261, %cst_230 {dimension_numbers = #tpu.dot_dimension_numbers<[1], [0], [0], [1], [0, 0, 1, 1], [], []>} : vector<3x16xf32>, vector<16x64xf32>, vector<3x64xf32> -> vector<3x64xf32>
    %288 = arith.truncf %287 : vector<3x64xf32> to vector<3x64xbf16>
    %c3_231 = arith.constant 3 : index
    %c0_232 = arith.constant 0 : index
    %c0_233 = arith.constant 0 : index
    %289 = vector.load %arg17[%c3_231, %c0_232, %c0_233] : memref<9x64x256xbf16, #tpu.memory_space<vmem>>, vector<1x64x256xbf16>
    %290 = vector.shape_cast %289 : vector<1x64x256xbf16> to vector<64x256xbf16>
    %cst_234 = arith.constant dense<0.000000e+00> : vector<3x256xf32>
    %291 = tpu.matmul %288, %290, %cst_234 {dimension_numbers = #tpu.dot_dimension_numbers<[1], [0], [0], [1], [0, 0, 1, 1], [], []>} : vector<3x64xbf16>, vector<64x256xbf16>, vector<3x256xf32> -> vector<3x256xf32>
    %292 = arith.addf %284, %291 : vector<3x256xf32>
    %c4_235 = arith.constant 4 : index
    %c0_236 = arith.constant 0 : index
    %c0_237 = arith.constant 0 : index
    %293 = vector.load %arg18[%c4_235, %c0_236, %c0_237] : memref<9x3x16xf32, #tpu.memory_space<vmem>>, vector<1x3x16xf32>
    %294 = vector.shape_cast %293 : vector<1x3x16xf32> to vector<3x16xf32>
    %cst_238 = arith.constant dense<0.000000e+00> : vector<3x64xf32>
    %295 = tpu.matmul %294, %261, %cst_238 {dimension_numbers = #tpu.dot_dimension_numbers<[1], [0], [0], [1], [0, 0, 1, 1], [], []>} : vector<3x16xf32>, vector<16x64xf32>, vector<3x64xf32> -> vector<3x64xf32>
    %296 = arith.truncf %295 : vector<3x64xf32> to vector<3x64xbf16>
    %c4_239 = arith.constant 4 : index
    %c0_240 = arith.constant 0 : index
    %c0_241 = arith.constant 0 : index
    %297 = vector.load %arg17[%c4_239, %c0_240, %c0_241] : memref<9x64x256xbf16, #tpu.memory_space<vmem>>, vector<1x64x256xbf16>
    %298 = vector.shape_cast %297 : vector<1x64x256xbf16> to vector<64x256xbf16>
    %cst_242 = arith.constant dense<0.000000e+00> : vector<3x256xf32>
    %299 = tpu.matmul %296, %298, %cst_242 {dimension_numbers = #tpu.dot_dimension_numbers<[1], [0], [0], [1], [0, 0, 1, 1], [], []>} : vector<3x64xbf16>, vector<64x256xbf16>, vector<3x256xf32> -> vector<3x256xf32>
    %300 = arith.addf %292, %299 : vector<3x256xf32>
    %c5_243 = arith.constant 5 : index
    %c0_244 = arith.constant 0 : index
    %c0_245 = arith.constant 0 : index
    %301 = vector.load %arg18[%c5_243, %c0_244, %c0_245] : memref<9x3x16xf32, #tpu.memory_space<vmem>>, vector<1x3x16xf32>
    %302 = vector.shape_cast %301 : vector<1x3x16xf32> to vector<3x16xf32>
    %cst_246 = arith.constant dense<0.000000e+00> : vector<3x64xf32>
    %303 = tpu.matmul %302, %261, %cst_246 {dimension_numbers = #tpu.dot_dimension_numbers<[1], [0], [0], [1], [0, 0, 1, 1], [], []>} : vector<3x16xf32>, vector<16x64xf32>, vector<3x64xf32> -> vector<3x64xf32>
    %304 = arith.truncf %303 : vector<3x64xf32> to vector<3x64xbf16>
    %c5_247 = arith.constant 5 : index
    %c0_248 = arith.constant 0 : index
    %c0_249 = arith.constant 0 : index
    %305 = vector.load %arg17[%c5_247, %c0_248, %c0_249] : memref<9x64x256xbf16, #tpu.memory_space<vmem>>, vector<1x64x256xbf16>
    %306 = vector.shape_cast %305 : vector<1x64x256xbf16> to vector<64x256xbf16>
    %cst_250 = arith.constant dense<0.000000e+00> : vector<3x256xf32>
    %307 = tpu.matmul %304, %306, %cst_250 {dimension_numbers = #tpu.dot_dimension_numbers<[1], [0], [0], [1], [0, 0, 1, 1], [], []>} : vector<3x64xbf16>, vector<64x256xbf16>, vector<3x256xf32> -> vector<3x256xf32>
    %308 = arith.addf %300, %307 : vector<3x256xf32>
    %c6_251 = arith.constant 6 : index
    %c0_252 = arith.constant 0 : index
    %c0_253 = arith.constant 0 : index
    %309 = vector.load %arg18[%c6_251, %c0_252, %c0_253] : memref<9x3x16xf32, #tpu.memory_space<vmem>>, vector<1x3x16xf32>
    %310 = vector.shape_cast %309 : vector<1x3x16xf32> to vector<3x16xf32>
    %cst_254 = arith.constant dense<0.000000e+00> : vector<3x64xf32>
    %311 = tpu.matmul %310, %261, %cst_254 {dimension_numbers = #tpu.dot_dimension_numbers<[1], [0], [0], [1], [0, 0, 1, 1], [], []>} : vector<3x16xf32>, vector<16x64xf32>, vector<3x64xf32> -> vector<3x64xf32>
    %312 = arith.truncf %311 : vector<3x64xf32> to vector<3x64xbf16>
    %c6_255 = arith.constant 6 : index
    %c0_256 = arith.constant 0 : index
    %c0_257 = arith.constant 0 : index
    %313 = vector.load %arg17[%c6_255, %c0_256, %c0_257] : memref<9x64x256xbf16, #tpu.memory_space<vmem>>, vector<1x64x256xbf16>
    %314 = vector.shape_cast %313 : vector<1x64x256xbf16> to vector<64x256xbf16>
    %cst_258 = arith.constant dense<0.000000e+00> : vector<3x256xf32>
    %315 = tpu.matmul %312, %314, %cst_258 {dimension_numbers = #tpu.dot_dimension_numbers<[1], [0], [0], [1], [0, 0, 1, 1], [], []>} : vector<3x64xbf16>, vector<64x256xbf16>, vector<3x256xf32> -> vector<3x256xf32>
    %316 = arith.addf %308, %315 : vector<3x256xf32>
    %c7_259 = arith.constant 7 : index
    %c0_260 = arith.constant 0 : index
    %c0_261 = arith.constant 0 : index
    %317 = vector.load %arg18[%c7_259, %c0_260, %c0_261] : memref<9x3x16xf32, #tpu.memory_space<vmem>>, vector<1x3x16xf32>
    %318 = vector.shape_cast %317 : vector<1x3x16xf32> to vector<3x16xf32>
    %cst_262 = arith.constant dense<0.000000e+00> : vector<3x64xf32>
    %319 = tpu.matmul %318, %261, %cst_262 {dimension_numbers = #tpu.dot_dimension_numbers<[1], [0], [0], [1], [0, 0, 1, 1], [], []>} : vector<3x16xf32>, vector<16x64xf32>, vector<3x64xf32> -> vector<3x64xf32>
    %320 = arith.truncf %319 : vector<3x64xf32> to vector<3x64xbf16>
    %c7_263 = arith.constant 7 : index
    %c0_264 = arith.constant 0 : index
    %c0_265 = arith.constant 0 : index
    %321 = vector.load %arg17[%c7_263, %c0_264, %c0_265] : memref<9x64x256xbf16, #tpu.memory_space<vmem>>, vector<1x64x256xbf16>
    %322 = vector.shape_cast %321 : vector<1x64x256xbf16> to vector<64x256xbf16>
    %cst_266 = arith.constant dense<0.000000e+00> : vector<3x256xf32>
    %323 = tpu.matmul %320, %322, %cst_266 {dimension_numbers = #tpu.dot_dimension_numbers<[1], [0], [0], [1], [0, 0, 1, 1], [], []>} : vector<3x64xbf16>, vector<64x256xbf16>, vector<3x256xf32> -> vector<3x256xf32>
    %324 = arith.addf %316, %323 : vector<3x256xf32>
    %c8_267 = arith.constant 8 : index
    %c0_268 = arith.constant 0 : index
    %c0_269 = arith.constant 0 : index
    %325 = vector.load %arg18[%c8_267, %c0_268, %c0_269] : memref<9x3x16xf32, #tpu.memory_space<vmem>>, vector<1x3x16xf32>
    %326 = vector.shape_cast %325 : vector<1x3x16xf32> to vector<3x16xf32>
    %cst_270 = arith.constant dense<0.000000e+00> : vector<3x64xf32>
    %327 = tpu.matmul %326, %261, %cst_270 {dimension_numbers = #tpu.dot_dimension_numbers<[1], [0], [0], [1], [0, 0, 1, 1], [], []>} : vector<3x16xf32>, vector<16x64xf32>, vector<3x64xf32> -> vector<3x64xf32>
    %328 = arith.truncf %327 : vector<3x64xf32> to vector<3x64xbf16>
    %c8_271 = arith.constant 8 : index
    %c0_272 = arith.constant 0 : index
    %c0_273 = arith.constant 0 : index
    %329 = vector.load %arg17[%c8_271, %c0_272, %c0_273] : memref<9x64x256xbf16, #tpu.memory_space<vmem>>, vector<1x64x256xbf16>
    %330 = vector.shape_cast %329 : vector<1x64x256xbf16> to vector<64x256xbf16>
    %cst_274 = arith.constant dense<0.000000e+00> : vector<3x256xf32>
    %331 = tpu.matmul %328, %330, %cst_274 {dimension_numbers = #tpu.dot_dimension_numbers<[1], [0], [0], [1], [0, 0, 1, 1], [], []>} : vector<3x64xbf16>, vector<64x256xbf16>, vector<3x256xf32> -> vector<3x256xf32>
    %332 = arith.addf %324, %331 : vector<3x256xf32>
    %c0_275 = arith.constant 0 : index
    %c0_276 = arith.constant 0 : index
    %333 = vector.load %arg19[%c0_275, %c0_276] : memref<3x1xf32, #tpu.memory_space<vmem>>, vector<3x1xf32>
    %334 = vector.broadcast %333 : vector<3x1xf32> to vector<3x256xf32>
    %335 = arith.addf %332, %334 : vector<3x256xf32>
    %336 = arith.negf %335 : vector<3x256xf32>
    %337 = math.exp %336 : vector<3x256xf32>
    %cst_277 = arith.constant 1.000000e+00 : f32
    %338 = vector.broadcast %cst_277 : f32 to vector<3x256xf32>
    %339 = arith.addf %338, %337 : vector<3x256xf32>
    %340 = arith.divf %338, %339 : vector<3x256xf32>
    %c0_278 = arith.constant 0 : index
    %c0_279 = arith.constant 0 : index
    %c0_280 = arith.constant 0 : index
    %341 = vector.load %arg20[%c0_278, %c0_279, %c0_280] : memref<1x3x256xf32, #tpu.memory_space<vmem>>, vector<1x3x256xf32>
    %342 = vector.shape_cast %341 : vector<1x3x256xf32> to vector<3x256xf32>
    %343 = vector.shape_cast %340 : vector<3x256xf32> to vector<1x3x256xf32>
    tpu.vector_store %arg20[%c0_278, %c0_279, %c0_280], %343 {strides = array<i32>} : memref<1x3x256xf32, #tpu.memory_space<vmem>>, vector<1x3x256xf32>,
    return
  }
  func.func @transform_0(%arg0: i32) -> (i32, i32, i32) {
    %c0_i32 = arith.constant 0 : i32
    %c0_i32_0 = arith.constant 0 : i32
    %c0_i32_1 = arith.constant 0 : i32
    return %arg0, %c0_i32, %c0_i32_0 : i32, i32, i32
  }
  func.func @transform_1(%arg0: i32) -> (i32, i32, i32) {
    %c0_i32 = arith.constant 0 : i32
    %c0_i32_0 = arith.constant 0 : i32
    %c0_i32_1 = arith.constant 0 : i32
    %c0_i32_2 = arith.constant 0 : i32
    return %c0_i32, %c0_i32_0, %c0_i32_1 : i32, i32, i32
  }
  func.func @transform_2(%arg0: i32) -> (i32, i32) {
    %c0_i32 = arith.constant 0 : i32
    %c0_i32_0 = arith.constant 0 : i32
    %c0_i32_1 = arith.constant 0 : i32
    return %c0_i32, %c0_i32_0 : i32, i32
  }
  func.func @transform_3(%arg0: i32) -> (i32, i32) {
    %c0_i32 = arith.constant 0 : i32
    %c0_i32_0 = arith.constant 0 : i32
    %c0_i32_1 = arith.constant 0 : i32
    return %c0_i32, %c0_i32_0 : i32, i32
  }
  func.func @transform_4(%arg0: i32) -> (i32, i32, i32) {
    %c0_i32 = arith.constant 0 : i32
    %c0_i32_0 = arith.constant 0 : i32
    %c0_i32_1 = arith.constant 0 : i32
    %c0_i32_2 = arith.constant 0 : i32
    return %c0_i32, %c0_i32_0, %c0_i32_1 : i32, i32, i32
  }
  func.func @transform_5(%arg0: i32) -> (i32, i32) {
    %c0_i32 = arith.constant 0 : i32
    %c0_i32_0 = arith.constant 0 : i32
    %c0_i32_1 = arith.constant 0 : i32
    return %c0_i32, %c0_i32_0 : i32, i32
  }
  func.func @transform_6(%arg0: i32) -> (i32, i32) {
    %c0_i32 = arith.constant 0 : i32
    %c0_i32_0 = arith.constant 0 : i32
    %c0_i32_1 = arith.constant 0 : i32
    return %c0_i32, %c0_i32_0 : i32, i32
  }
  func.func @transform_7(%arg0: i32) -> (i32, i32, i32) {
    %c0_i32 = arith.constant 0 : i32
    %c0_i32_0 = arith.constant 0 : i32
    %c0_i32_1 = arith.constant 0 : i32
    %c0_i32_2 = arith.constant 0 : i32
    return %c0_i32, %c0_i32_0, %c0_i32_1 : i32, i32, i32
  }
  func.func @transform_8(%arg0: i32) -> (i32, i32) {
    %c0_i32 = arith.constant 0 : i32
    %c0_i32_0 = arith.constant 0 : i32
    %c0_i32_1 = arith.constant 0 : i32
    return %c0_i32, %c0_i32_0 : i32, i32
  }
  func.func @transform_9(%arg0: i32) -> (i32, i32) {
    %c0_i32 = arith.constant 0 : i32
    %c0_i32_0 = arith.constant 0 : i32
    %c0_i32_1 = arith.constant 0 : i32
    return %c0_i32, %c0_i32_0 : i32, i32
  }
  func.func @transform_10(%arg0: i32) -> (i32, i32, i32) {
    %c0_i32 = arith.constant 0 : i32
    %c0_i32_0 = arith.constant 0 : i32
    %c0_i32_1 = arith.constant 0 : i32
    %c0_i32_2 = arith.constant 0 : i32
    return %c0_i32, %c0_i32_0, %c0_i32_1 : i32, i32, i32
  }
  func.func @transform_11(%arg0: i32) -> (i32, i32) {
    %c0_i32 = arith.constant 0 : i32
    %c0_i32_0 = arith.constant 0 : i32
    %c0_i32_1 = arith.constant 0 : i32
    return %c0_i32, %c0_i32_0 : i32, i32
  }
  func.func @transform_12(%arg0: i32) -> (i32, i32) {
    %c0_i32 = arith.constant 0 : i32
    %c0_i32_0 = arith.constant 0 : i32
    %c0_i32_1 = arith.constant 0 : i32
    return %c0_i32, %c0_i32_0 : i32, i32
  }
  func.func @transform_13(%arg0: i32) -> (i32, i32, i32) {
    %c0_i32 = arith.constant 0 : i32
    %c0_i32_0 = arith.constant 0 : i32
    %c0_i32_1 = arith.constant 0 : i32
    %c0_i32_2 = arith.constant 0 : i32
    return %c0_i32, %c0_i32_0, %c0_i32_1 : i32, i32, i32
  }
  func.func @transform_14(%arg0: i32) -> (i32, i32) {
    %c0_i32 = arith.constant 0 : i32
    %c0_i32_0 = arith.constant 0 : i32
    %c0_i32_1 = arith.constant 0 : i32
    return %c0_i32, %c0_i32_0 : i32, i32
  }
  func.func @transform_15(%arg0: i32) -> (i32, i32) {
    %c0_i32 = arith.constant 0 : i32
    %c0_i32_0 = arith.constant 0 : i32
    %c0_i32_1 = arith.constant 0 : i32
    return %c0_i32, %c0_i32_0 : i32, i32
  }
  func.func @transform_16(%arg0: i32) -> (i32, i32, i32) {
    %c0_i32 = arith.constant 0 : i32
    %c0_i32_0 = arith.constant 0 : i32
    %c0_i32_1 = arith.constant 0 : i32
    %c0_i32_2 = arith.constant 0 : i32
    return %c0_i32, %c0_i32_0, %c0_i32_1 : i32, i32, i32
  }
  func.func @transform_17(%arg0: i32) -> (i32, i32, i32) {
    %c0_i32 = arith.constant 0 : i32
    %c0_i32_0 = arith.constant 0 : i32
    %c0_i32_1 = arith.constant 0 : i32
    %c0_i32_2 = arith.constant 0 : i32
    return %c0_i32, %c0_i32_0, %c0_i32_1 : i32, i32, i32
  }
  func.func @transform_18(%arg0: i32) -> (i32, i32) {
    %c0_i32 = arith.constant 0 : i32
    %c0_i32_0 = arith.constant 0 : i32
    %c0_i32_1 = arith.constant 0 : i32
    return %c0_i32, %c0_i32_0 : i32, i32
  }
  func.func @transform_19(%arg0: i32) -> (i32, i32, i32) {
    %c0_i32 = arith.constant 0 : i32
    %c0_i32_0 = arith.constant 0 : i32
    %c0_i32_1 = arith.constant 0 : i32
    return %arg0, %c0_i32, %c0_i32_0 : i32, i32, i32
  }
}

</mosaic_0001>

<llo_original>
// kernel: autoencoder_forward.1
$region0: #{autoencoder_forward.1}
  #allocation0 [shape = 'u32[]', space=smem, size = 0x4, offset = 0x4, fixed_abs, tag = 'smem constant byte address 0x4 - core index']
  #allocation1 [shape = 'u32[144,128]{1,0:T(1,128)}', space=vmem, size = 0x12000, scoped, tag = 'internal scratch']
  %s0 = inlined_call_operand.vmem [shape: f32[2,3,256], index: 0, kind: input, shape index: {}]
  %s1 = inlined_call_operand.vmem [shape: bf16[9,256,64], index: 1, kind: input, shape index: {}]
  %s2 = inlined_call_operand.vmem [shape: f32[144,3], index: 2, kind: input, shape index: {}]
  %s3 = inlined_call_operand.vmem [shape: f32[16,1], index: 3, kind: input, shape index: {}]
  %s4 = inlined_call_operand.vmem [shape: bf16[9,64,16], index: 4, kind: input, shape index: {}]
  %s5 = inlined_call_operand.vmem [shape: f32[288,16], index: 5, kind: input, shape index: {}]
  %s6 = inlined_call_operand.vmem [shape: f32[32,1], index: 6, kind: input, shape index: {}]
  %s7 = inlined_call_operand.vmem [shape: bf16[9,16,4], index: 7, kind: input, shape index: {}]
  %s8 = inlined_call_operand.vmem [shape: f32[576,32], index: 8, kind: input, shape index: {}]
  %s9 = inlined_call_operand.vmem [shape: f32[64,1], index: 9, kind: input, shape index: {}]
  %s10 = inlined_call_operand.vmem [shape: bf16[9,4,16], index: 10, kind: input, shape index: {}]
  %s11 = inlined_call_operand.vmem [shape: f32[288,64], index: 11, kind: input, shape index: {}]
  %s12 = inlined_call_operand.vmem [shape: f32[32,1], index: 12, kind: input, shape index: {}]
  %s13 = inlined_call_operand.vmem [shape: bf16[9,16,64], index: 13, kind: input, shape index: {}]
  %s14 = inlined_call_operand.vmem [shape: f32[144,32], index: 14, kind: input, shape index: {}]
  %s15 = inlined_call_operand.vmem [shape: f32[16,1], index: 15, kind: input, shape index: {}]
  %s16 = inlined_call_operand.vmem [shape: bf16[9,64,256], index: 16, kind: input, shape index: {}]
  %s17 = inlined_call_operand.vmem [shape: f32[9,3,16], index: 17, kind: input, shape index: {}]
  %s18 = inlined_call_operand.vmem [shape: f32[3,1], index: 18, kind: input, shape index: {}]
  %s19 = inlined_call_operand.vmem [shape: f32[2,3,256], index: 19, kind: output, shape index: {}]
  %s20 = sld [smem:[#allocation0]]
  $region109: #{autoencoder_forward.1} parent=0
    _
  %s22 = ssub.s32 1, %s20
  %s23 = scalar_select 0, %s22, %s20
  loop: start=0, step=1, limit=4
  $region2: #{autoencoder_forward.1} parent=0 // loop_pre_header
    _
  $region3: #{autoencoder_forward.1} parent=0 // loop_header
    %s25 = sphi 0, %s29
    %p26 = scmp.ge.s32.totalorder %s25, 4
    %s35 = sphi 0, %s37
    %s38 = sphi 0, %s35
    %s39 = sphi 0, %s38
    %s55 = sphi 0, %s39
    %s59 = sphi 0, %s59
    %s61 = sphi 0, %s59
    %s62 = sphi 0, %s61
    %s76 = sphi 0, %s62
    %s80 = sphi 0, %s80
    %s82 = sphi 0, %s80
    %s83 = sphi 0, %s82
    %s97 = sphi 0, %s83
    %s101 = sphi 0, %s101
    %s103 = sphi 0, %s101
    %s104 = sphi 0, %s103
    %s118 = sphi 0, %s104
    %s122 = sphi 0, %s122
    %s124 = sphi 0, %s122
    %s125 = sphi 0, %s124
    %s139 = sphi 0, %s125
    %s143 = sphi 0, %s143
    %s145 = sphi 0, %s143
    %s146 = sphi 0, %s145
    %s160 = sphi 0, %s146
    %s164 = sphi 0, %s164
    %s166 = sphi 0, %s164
    %s167 = sphi 0, %s166
    %s181 = sphi 0, %s167
    %s185 = sphi 0, %s185
    %s187 = sphi 0, %s185
    %s188 = sphi 0, %s187
    %s202 = sphi 0, %s188
    %s206 = sphi 0, %s206
    %s208 = sphi 0, %s206
    %s209 = sphi 0, %s208
    %s223 = sphi 0, %s209
    %s227 = sphi 0, %s227
    %s229 = sphi 0, %s227
    %s230 = sphi 0, %s229
    %s244 = sphi 0, %s230
    %s248 = sphi 0, %s248
    %s250 = sphi 0, %s248
    %s251 = sphi 0, %s250
    %s265 = sphi 0, %s251
    %s269 = sphi 0, %s269
    %s271 = sphi 0, %s269
    %s272 = sphi 0, %s271
    %s286 = sphi 0, %s272
    %s290 = sphi 0, %s290
    %s292 = sphi 0, %s290
    %s293 = sphi 0, %s292
    %s307 = sphi 0, %s293
    %s311 = sphi 0, %s311
    %s313 = sphi 0, %s311
    %s314 = sphi 0, %s313
    %s328 = sphi 0, %s314
    %s332 = sphi 0, %s332
    %s334 = sphi 0, %s332
    %s335 = sphi 0, %s334
    %s349 = sphi 0, %s335
    %s353 = sphi 0, %s353
    %s355 = sphi 0, %s353
    %s356 = sphi 0, %s355
    %s370 = sphi 0, %s356
    %s374 = sphi 0, %s374
    %s376 = sphi 0, %s374
    %s377 = sphi 0, %s376
    %s391 = sphi 0, %s377
    %s395 = sphi 0, %s395
    %s397 = sphi 0, %s395
    %s398 = sphi 0, %s397
    %s412 = sphi 0, %s398
    %s416 = sphi 0, %s416
    %s418 = sphi 0, %s416
    %s419 = sphi 0, %s418
    %s433 = sphi 0, %s419
    %s439 = sphi 0, %s441
    %s442 = sphi 0, %s439
    %s443 = sphi 0, %s442
    %s459 = sphi 0, %s443
  $region4: #{autoencoder_forward.1} parent=0 // loop_header_branch
    %28 = sbr.rel (%p26) target = $region8
  $region5: #{autoencoder_forward.1} parent=0 // loop_body
    %s30 = ssub.s32 %s25, 1
    %s31 = ssub.s32 %s25, 2
    %s32 = sadd.s32 %s25, 1
    %s33 = ssub.s32 %s25, %s32
    %p34 = scmp.eq.s32.totalorder %s33, 0
    %s36 = sadd.s32 %s35, 1
    %s37 = scalar_select %p34, %s35, %s36
    %p40 = pneg %p34
    %p41 = scmp.eq.s32.totalorder %s25, 1
    %p42 = por %p40, %p41
    %p43 = scmp.ne.s32.totalorder %s35, %s38
    %p44 = scmp.eq.s32.totalorder %s25, 0
    %p45 = por %p43, %p44
    %p46 = scmp.ne.s32.totalorder %s35, %s38
    %p47 = scmp.eq.s32.totalorder %s30, 1
    %p48 = por %p46, %p47
    %p49 = scmp.ne.s32.totalorder %s38, %s39
    %p50 = scmp.eq.s32.totalorder %s30, 0
    %p51 = por %p49, %p50
    %p52 = scmp.ne.s32.totalorder %s38, %s39
    %p53 = scmp.eq.s32.totalorder %s31, 1
    %p54 = por %p52, %p53
    %p56 = scmp.ne.s32.totalorder %s39, %s55
    %p57 = scmp.eq.s32.totalorder %s31, 0
    %p58 = por %p56, %p57
    %s60 = sadd.s32 %s59, 1
    %p63 = scmp.eq.s32.totalorder %s25, 1
    %p64 = scmp.ne.s32.totalorder %s59, %s61
    %p65 = scmp.eq.s32.totalorder %s25, 0
    %p66 = por %p64, %p65
    %p67 = scmp.ne.s32.totalorder %s59, %s61
    %p68 = scmp.eq.s32.totalorder %s30, 1
    %p69 = por %p67, %p68
    %p70 = scmp.ne.s32.totalorder %s61, %s62
    %p71 = scmp.eq.s32.totalorder %s30, 0
    %p72 = por %p70, %p71
    %p73 = scmp.ne.s32.totalorder %s61, %s62
    %p74 = scmp.eq.s32.totalorder %s31, 1
    %p75 = por %p73, %p74
    %p77 = scmp.ne.s32.totalorder %s62, %s76
    %p78 = scmp.eq.s32.totalorder %s31, 0
    %p79 = por %p77, %p78
    %s81 = sadd.s32 %s80, 1
    %p84 = scmp.eq.s32.totalorder %s25, 1
    %p85 = scmp.ne.s32.totalorder %s80, %s82
    %p86 = scmp.eq.s32.totalorder %s25, 0
    %p87 = por %p85, %p86
    %p88 = scmp.ne.s32.totalorder %s80, %s82
    %p89 = scmp.eq.s32.totalorder %s30, 1
    %p90 = por %p88, %p89
    %p91 = scmp.ne.s32.totalorder %s82, %s83
    %p92 = scmp.eq.s32.totalorder %s30, 0
    %p93 = por %p91, %p92
    %p94 = scmp.ne.s32.totalorder %s82, %s83
    %p95 = scmp.eq.s32.totalorder %s31, 1
    %p96 = por %p94, %p95
    %p98 = scmp.ne.s32.totalorder %s83, %s97
    %p99 = scmp.eq.s32.totalorder %s31, 0
    %p100 = por %p98, %p99
    %s102 = sadd.s32 %s101, 1
    %p105 = scmp.eq.s32.totalorder %s25, 1
    %p106 = scmp.ne.s32.totalorder %s101, %s103
    %p107 = scmp.eq.s32.totalorder %s25, 0
    %p108 = por %p106, %p107
    %p109 = scmp.ne.s32.totalorder %s101, %s103
    %p110 = scmp.eq.s32.totalorder %s30, 1
    %p111 = por %p109, %p110
    %p112 = scmp.ne.s32.totalorder %s103, %s104
    %p113 = scmp.eq.s32.totalorder %s30, 0
    %p114 = por %p112, %p113
    %p115 = scmp.ne.s32.totalorder %s103, %s104
    %p116 = scmp.eq.s32.totalorder %s31, 1
    %p117 = por %p115, %p116
    %p119 = scmp.ne.s32.totalorder %s104, %s118
    %p120 = scmp.eq.s32.totalorder %s31, 0
    %p121 = por %p119, %p120
    %s123 = sadd.s32 %s122, 1
    %p126 = scmp.eq.s32.totalorder %s25, 1
    %p127 = scmp.ne.s32.totalorder %s122, %s124
    %p128 = scmp.eq.s32.totalorder %s25, 0
    %p129 = por %p127, %p128
    %p130 = scmp.ne.s32.totalorder %s122, %s124
    %p131 = scmp.eq.s32.totalorder %s30, 1
    %p132 = por %p130, %p131
    %p133 = scmp.ne.s32.totalorder %s124, %s125
    %p134 = scmp.eq.s32.totalorder %s30, 0
    %p135 = por %p133, %p134
    %p136 = scmp.ne.s32.totalorder %s124, %s125
    %p137 = scmp.eq.s32.totalorder %s31, 1
    %p138 = por %p136, %p137
    %p140 = scmp.ne.s32.totalorder %s125, %s139
    %p141 = scmp.eq.s32.totalorder %s31, 0
    %p142 = por %p140, %p141
    %s144 = sadd.s32 %s143, 1
    %p147 = scmp.eq.s32.totalorder %s25, 1
    %p148 = scmp.ne.s32.totalorder %s143, %s145
    %p149 = scmp.eq.s32.totalorder %s25, 0
    %p150 = por %p148, %p149
    %p151 = scmp.ne.s32.totalorder %s143, %s145
    %p152 = scmp.eq.s32.totalorder %s30, 1
    %p153 = por %p151, %p152
    %p154 = scmp.ne.s32.totalorder %s145, %s146
    %p155 = scmp.eq.s32.totalorder %s30, 0
    %p156 = por %p154, %p155
    %p157 = scmp.ne.s32.totalorder %s145, %s146
    %p158 = scmp.eq.s32.totalorder %s31, 1
    %p159 = por %p157, %p158
    %p161 = scmp.ne.s32.totalorder %s146, %s160
    %p162 = scmp.eq.s32.totalorder %s31, 0
    %p163 = por %p161, %p162
    %s165 = sadd.s32 %s164, 1
    %p168 = scmp.eq.s32.totalorder %s25, 1
    %p169 = scmp.ne.s32.totalorder %s164, %s166
    %p170 = scmp.eq.s32.totalorder %s25, 0
    %p171 = por %p169, %p170
    %p172 = scmp.ne.s32.totalorder %s164, %s166
    %p173 = scmp.eq.s32.totalorder %s30, 1
    %p174 = por %p172, %p173
    %p175 = scmp.ne.s32.totalorder %s166, %s167
    %p176 = scmp.eq.s32.totalorder %s30, 0
    %p177 = por %p175, %p176
    %p178 = scmp.ne.s32.totalorder %s166, %s167
    %p179 = scmp.eq.s32.totalorder %s31, 1
    %p180 = por %p178, %p179
    %p182 = scmp.ne.s32.totalorder %s167, %s181
    %p183 = scmp.eq.s32.totalorder %s31, 0
    %p184 = por %p182, %p183
    %s186 = sadd.s32 %s185, 1
    %p189 = scmp.eq.s32.totalorder %s25, 1
    %p190 = scmp.ne.s32.totalorder %s185, %s187
    %p191 = scmp.eq.s32.totalorder %s25, 0
    %p192 = por %p190, %p191
    %p193 = scmp.ne.s32.totalorder %s185, %s187
    %p194 = scmp.eq.s32.totalorder %s30, 1
    %p195 = por %p193, %p194
    %p196 = scmp.ne.s32.totalorder %s187, %s188
    %p197 = scmp.eq.s32.totalorder %s30, 0
    %p198 = por %p196, %p197
    %p199 = scmp.ne.s32.totalorder %s187, %s188
    %p200 = scmp.eq.s32.totalorder %s31, 1
    %p201 = por %p199, %p200
    %p203 = scmp.ne.s32.totalorder %s188, %s202
    %p204 = scmp.eq.s32.totalorder %s31, 0
    %p205 = por %p203, %p204
    %s207 = sadd.s32 %s206, 1
    %p210 = scmp.eq.s32.totalorder %s25, 1
    %p211 = scmp.ne.s32.totalorder %s206, %s208
    %p212 = scmp.eq.s32.totalorder %s25, 0
    %p213 = por %p211, %p212
    %p214 = scmp.ne.s32.totalorder %s206, %s208
    %p215 = scmp.eq.s32.totalorder %s30, 1
    %p216 = por %p214, %p215
    %p217 = scmp.ne.s32.totalorder %s208, %s209
    %p218 = scmp.eq.s32.totalorder %s30, 0
    %p219 = por %p217, %p218
    %p220 = scmp.ne.s32.totalorder %s208, %s209
    %p221 = scmp.eq.s32.totalorder %s31, 1
    %p222 = por %p220, %p221
    %p224 = scmp.ne.s32.totalorder %s209, %s223
    %p225 = scmp.eq.s32.totalorder %s31, 0
    %p226 = por %p224, %p225
    %s228 = sadd.s32 %s227, 1
    %p231 = scmp.eq.s32.totalorder %s25, 1
    %p232 = scmp.ne.s32.totalorder %s227, %s229
    %p233 = scmp.eq.s32.totalorder %s25, 0
    %p234 = por %p232, %p233
    %p235 = scmp.ne.s32.totalorder %s227, %s229
    %p236 = scmp.eq.s32.totalorder %s30, 1
    %p237 = por %p235, %p236
    %p238 = scmp.ne.s32.totalorder %s229, %s230
    %p239 = scmp.eq.s32.totalorder %s30, 0
    %p240 = por %p238, %p239
    %p241 = scmp.ne.s32.totalorder %s229, %s230
    %p242 = scmp.eq.s32.totalorder %s31, 1
    %p243 = por %p241, %p242
    %p245 = scmp.ne.s32.totalorder %s230, %s244
    %p246 = scmp.eq.s32.totalorder %s31, 0
    %p247 = por %p245, %p246
    %s249 = sadd.s32 %s248, 1
    %p252 = scmp.eq.s32.totalorder %s25, 1
    %p253 = scmp.ne.s32.totalorder %s248, %s250
    %p254 = scmp.eq.s32.totalorder %s25, 0
    %p255 = por %p253, %p254
    %p256 = scmp.ne.s32.totalorder %s248, %s250
    %p257 = scmp.eq.s32.totalorder %s30, 1
    %p258 = por %p256, %p257
    %p259 = scmp.ne.s32.totalorder %s250, %s251
    %p260 = scmp.eq.s32.totalorder %s30, 0
    %p261 = por %p259, %p260
    %p262 = scmp.ne.s32.totalorder %s250, %s251
    %p263 = scmp.eq.s32.totalorder %s31, 1
    %p264 = por %p262, %p263
    %p266 = scmp.ne.s32.totalorder %s251, %s265
    %p267 = scmp.eq.s32.totalorder %s31, 0
    %p268 = por %p266, %p267
    %s270 = sadd.s32 %s269, 1
    %p273 = scmp.eq.s32.totalorder %s25, 1
    %p274 = scmp.ne.s32.totalorder %s269, %s271
    %p275 = scmp.eq.s32.totalorder %s25, 0
    %p276 = por %p274, %p275
    %p277 = scmp.ne.s32.totalorder %s269, %s271
    %p278 = scmp.eq.s32.totalorder %s30, 1
    %p279 = por %p277, %p278
    %p280 = scmp.ne.s32.totalorder %s271, %s272
    %p281 = scmp.eq.s32.totalorder %s30, 0
    %p282 = por %p280, %p281
    %p283 = scmp.ne.s32.totalorder %s271, %s272
    %p284 = scmp.eq.s32.totalorder %s31, 1
    %p285 = por %p283, %p284
    %p287 = scmp.ne.s32.totalorder %s272, %s286
    %p288 = scmp.eq.s32.totalorder %s31, 0
    %p289 = por %p287, %p288
    %s291 = sadd.s32 %s290, 1
    %p294 = scmp.eq.s32.totalorder %s25, 1
    %p295 = scmp.ne.s32.totalorder %s290, %s292
    %p296 = scmp.eq.s32.totalorder %s25, 0
    %p297 = por %p295, %p296
    %p298 = scmp.ne.s32.totalorder %s290, %s292
    %p299 = scmp.eq.s32.totalorder %s30, 1
    %p300 = por %p298, %p299
    %p301 = scmp.ne.s32.totalorder %s292, %s293
    %p302 = scmp.eq.s32.totalorder %s30, 0
    %p303 = por %p301, %p302
    %p304 = scmp.ne.s32.totalorder %s292, %s293
    %p305 = scmp.eq.s32.totalorder %s31, 1
    %p306 = por %p304, %p305
    %p308 = scmp.ne.s32.totalorder %s293, %s307
    %p309 = scmp.eq.s32.totalorder %s31, 0
    %p310 = por %p308, %p309
    %s312 = sadd.s32 %s311, 1
    %p315 = scmp.eq.s32.totalorder %s25, 1
    %p316 = scmp.ne.s32.totalorder %s311, %s313
    %p317 = scmp.eq.s32.totalorder %s25, 0
    %p318 = por %p316, %p317
    %p319 = scmp.ne.s32.totalorder %s311, %s313
    %p320 = scmp.eq.s32.totalorder %s30, 1
    %p321 = por %p319, %p320
    %p322 = scmp.ne.s32.totalorder %s313, %s314
    %p323 = scmp.eq.s32.totalorder %s30, 0
    %p324 = por %p322, %p323
    %p325 = scmp.ne.s32.totalorder %s313, %s314
    %p326 = scmp.eq.s32.totalorder %s31, 1
    %p327 = por %p325, %p326
    %p329 = scmp.ne.s32.totalorder %s314, %s328
    %p330 = scmp.eq.s32.totalorder %s31, 0
    %p331 = por %p329, %p330
    %s333 = sadd.s32 %s332, 1
    %p336 = scmp.eq.s32.totalorder %s25, 1
    %p337 = scmp.ne.s32.totalorder %s332, %s334
    %p338 = scmp.eq.s32.totalorder %s25, 0
    %p339 = por %p337, %p338
    %p340 = scmp.ne.s32.totalorder %s332, %s334
    %p341 = scmp.eq.s32.totalorder %s30, 1
    %p342 = por %p340, %p341
    %p343 = scmp.ne.s32.totalorder %s334, %s335
    %p344 = scmp.eq.s32.totalorder %s30, 0
    %p345 = por %p343, %p344
    %p346 = scmp.ne.s32.totalorder %s334, %s335
    %p347 = scmp.eq.s32.totalorder %s31, 1
    %p348 = por %p346, %p347
    %p350 = scmp.ne.s32.totalorder %s335, %s349
    %p351 = scmp.eq.s32.totalorder %s31, 0
    %p352 = por %p350, %p351
    %s354 = sadd.s32 %s353, 1
    %p357 = scmp.eq.s32.totalorder %s25, 1
    %p358 = scmp.ne.s32.totalorder %s353, %s355
    %p359 = scmp.eq.s32.totalorder %s25, 0
    %p360 = por %p358, %p359
    %p361 = scmp.ne.s32.totalorder %s353, %s355
    %p362 = scmp.eq.s32.totalorder %s30, 1
    %p363 = por %p361, %p362
    %p364 = scmp.ne.s32.totalorder %s355, %s356
    %p365 = scmp.eq.s32.totalorder %s30, 0
    %p366 = por %p364, %p365
    %p367 = scmp.ne.s32.totalorder %s355, %s356
    %p368 = scmp.eq.s32.totalorder %s31, 1
    %p369 = por %p367, %p368
    %p371 = scmp.ne.s32.totalorder %s356, %s370
    %p372 = scmp.eq.s32.totalorder %s31, 0
    %p373 = por %p371, %p372
    %s375 = sadd.s32 %s374, 1
    %p378 = scmp.eq.s32.totalorder %s25, 1
    %p379 = scmp.ne.s32.totalorder %s374, %s376
    %p380 = scmp.eq.s32.totalorder %s25, 0
    %p381 = por %p379, %p380
    %p382 = scmp.ne.s32.totalorder %s374, %s376
    %p383 = scmp.eq.s32.totalorder %s30, 1
    %p384 = por %p382, %p383
    %p385 = scmp.ne.s32.totalorder %s376, %s377
    %p386 = scmp.eq.s32.totalorder %s30, 0
    %p387 = por %p385, %p386
    %p388 = scmp.ne.s32.totalorder %s376, %s377
    %p389 = scmp.eq.s32.totalorder %s31, 1
    %p390 = por %p388, %p389
    %p392 = scmp.ne.s32.totalorder %s377, %s391
    %p393 = scmp.eq.s32.totalorder %s31, 0
    %p394 = por %p392, %p393
    %s396 = sadd.s32 %s395, 1
    %p399 = scmp.eq.s32.totalorder %s25, 1
    %p400 = scmp.ne.s32.totalorder %s395, %s397
    %p401 = scmp.eq.s32.totalorder %s25, 0
    %p402 = por %p400, %p401
    %p403 = scmp.ne.s32.totalorder %s395, %s397
    %p404 = scmp.eq.s32.totalorder %s30, 1
    %p405 = por %p403, %p404
    %p406 = scmp.ne.s32.totalorder %s397, %s398
    %p407 = scmp.eq.s32.totalorder %s30, 0
    %p408 = por %p406, %p407
    %p409 = scmp.ne.s32.totalorder %s397, %s398
    %p410 = scmp.eq.s32.totalorder %s31, 1
    %p411 = por %p409, %p410
    %p413 = scmp.ne.s32.totalorder %s398, %s412
    %p414 = scmp.eq.s32.totalorder %s31, 0
    %p415 = por %p413, %p414
    %s417 = sadd.s32 %s416, 1
    %p420 = scmp.eq.s32.totalorder %s25, 1
    %p421 = scmp.ne.s32.totalorder %s416, %s418
    %p422 = scmp.eq.s32.totalorder %s25, 0
    %p423 = por %p421, %p422
    %p424 = scmp.ne.s32.totalorder %s416, %s418
    %p425 = scmp.eq.s32.totalorder %s30, 1
    %p426 = por %p424, %p425
    %p427 = scmp.ne.s32.totalorder %s418, %s419
    %p428 = scmp.eq.s32.totalorder %s30, 0
    %p429 = por %p427, %p428
    %p430 = scmp.ne.s32.totalorder %s418, %s419
    %p431 = scmp.eq.s32.totalorder %s31, 1
    %p432 = por %p430, %p431
    %p434 = scmp.ne.s32.totalorder %s419, %s433
    %p435 = scmp.eq.s32.totalorder %s31, 0
    %p436 = por %p434, %p435
    %s437 = ssub.s32 %s25, %s32
    %p438 = scmp.eq.s32.totalorder %s437, 0
    %s440 = sadd.s32 %s439, 1
    %s441 = scalar_select %p438, %s439, %s440
    %p444 = pneg %p438
    %p445 = scmp.eq.s32.totalorder %s25, 1
    %p446 = por %p444, %p445
    %p447 = scmp.ne.s32.totalorder %s439, %s442
    %p448 = scmp.eq.s32.totalorder %s25, 0
    %p449 = por %p447, %p448
    %p450 = scmp.ne.s32.totalorder %s439, %s442
    %p451 = scmp.eq.s32.totalorder %s30, 1
    %p452 = por %p450, %p451
    %p453 = scmp.ne.s32.totalorder %s442, %s443
    %p454 = scmp.eq.s32.totalorder %s30, 0
    %p455 = por %p453, %p454
    %p456 = scmp.ne.s32.totalorder %s442, %s443
    %p457 = scmp.eq.s32.totalorder %s31, 1
    %p458 = por %p456, %p457
    %p460 = scmp.ne.s32.totalorder %s443, %s459
    %p461 = scmp.eq.s32.totalorder %s31, 0
    %p462 = por %p460, %p461
    %p463 = scmp.le.s32.totalorder 1, %s25
    %p464 = scmp.lt.s32.totalorder %s25, 3
    %p465 = pnand %p463, %p464
    %p466 = pneg %p465
    // Predicated region
    $region9: #{autoencoder_forward.1} parent=5 // pred_check
      _
    $region10: #{autoencoder_forward.1} parent=5 // pred_check_branch
      %468 = sbr.rel (%p465) target = $region12
    $region11: #{autoencoder_forward.1} parent=5 // pred_region
      %s469 = ssub.s32 %s25, 1
      // Predicated region
      $region13: #{autoencoder_forward.1} parent=11 // pred_check
        %p470 = pneg %p72
      $region14: #{autoencoder_forward.1} parent=11 // pred_check_branch
        %472 = sbr.rel (%p470) target = $region16
      $region15: #{autoencoder_forward.1} parent=11 // pred_region
        _
      $region16: #{autoencoder_forward.1} parent=11 // pred_fallthru
        _
      // Predicated region
      $region17: #{autoencoder_forward.1} parent=11 // pred_check
        %p473 = pneg %p93
      $region18: #{autoencoder_forward.1} parent=11 // pred_check_branch
        %475 = sbr.rel (%p473) target = $region20
      $region19: #{autoencoder_forward.1} parent=11 // pred_region
        _
      $region20: #{autoencoder_forward.1} parent=11 // pred_fallthru
        _
      // Predicated region
      $region21: #{autoencoder_forward.1} parent=11 // pred_check
        %p476 = pneg %p114
      $region22: #{autoencoder_forward.1} parent=11 // pred_check_branch
        %478 = sbr.rel (%p476) target = $region24
      $region23: #{autoencoder_forward.1} parent=11 // pred_region
        _
      $region24: #{autoencoder_forward.1} parent=11 // pred_fallthru
        _
      // Predicated region
      $region25: #{autoencoder_forward.1} parent=11 // pred_check
        %p479 = pneg %p135
      $region26: #{autoencoder_forward.1} parent=11 // pred_check_branch
        %481 = sbr.rel (%p479) target = $region28
      $region27: #{autoencoder_forward.1} parent=11 // pred_region
        _
      $region28: #{autoencoder_forward.1} parent=11 // pred_fallthru
        _
      // Predicated region
      $region29: #{autoencoder_forward.1} parent=11 // pred_check
        %p482 = pneg %p156
      $region30: #{autoencoder_forward.1} parent=11 // pred_check_branch
        %484 = sbr.rel (%p482) target = $region32
      $region31: #{autoencoder_forward.1} parent=11 // pred_region
        _
      $region32: #{autoencoder_forward.1} parent=11 // pred_fallthru
        _
      // Predicated region
      $region33: #{autoencoder_forward.1} parent=11 // pred_check
        %p485 = pneg %p177
      $region34: #{autoencoder_forward.1} parent=11 // pred_check_branch
        %487 = sbr.rel (%p485) target = $region36
      $region35: #{autoencoder_forward.1} parent=11 // pred_region
        _
      $region36: #{autoencoder_forward.1} parent=11 // pred_fallthru
        _
      // Predicated region
      $region37: #{autoencoder_forward.1} parent=11 // pred_check
        %p488 = pneg %p198
      $region38: #{autoencoder_forward.1} parent=11 // pred_check_branch
        %490 = sbr.rel (%p488) target = $region40
      $region39: #{autoencoder_forward.1} parent=11 // pred_region
        _
      $region40: #{autoencoder_forward.1} parent=11 // pred_fallthru
        _
      // Predicated region
      $region41: #{autoencoder_forward.1} parent=11 // pred_check
        %p491 = pneg %p219
      $region42: #{autoencoder_forward.1} parent=11 // pred_check_branch
        %493 = sbr.rel (%p491) target = $region44
      $region43: #{autoencoder_forward.1} parent=11 // pred_region
        _
      $region44: #{autoencoder_forward.1} parent=11 // pred_fallthru
        _
      // Predicated region
      $region45: #{autoencoder_forward.1} parent=11 // pred_check
        %p494 = pneg %p240
      $region46: #{autoencoder_forward.1} parent=11 // pred_check_branch
        %496 = sbr.rel (%p494) target = $region48
      $region47: #{autoencoder_forward.1} parent=11 // pred_region
        _
      $region48: #{autoencoder_forward.1} parent=11 // pred_fallthru
        _
      // Predicated region
      $region49: #{autoencoder_forward.1} parent=11 // pred_check
        %p497 = pneg %p261
      $region50: #{autoencoder_forward.1} parent=11 // pred_check_branch
        %499 = sbr.rel (%p497) target = $region52
      $region51: #{autoencoder_forward.1} parent=11 // pred_region
        _
      $region52: #{autoencoder_forward.1} parent=11 // pred_fallthru
        _
      // Predicated region
      $region53: #{autoencoder_forward.1} parent=11 // pred_check
        %p500 = pneg %p282
      $region54: #{autoencoder_forward.1} parent=11 // pred_check_branch
        %502 = sbr.rel (%p500) target = $region56
      $region55: #{autoencoder_forward.1} parent=11 // pred_region
        _
      $region56: #{autoencoder_forward.1} parent=11 // pred_fallthru
        _
      // Predicated region
      $region57: #{autoencoder_forward.1} parent=11 // pred_check
        %p503 = pneg %p303
      $region58: #{autoencoder_forward.1} parent=11 // pred_check_branch
        %505 = sbr.rel (%p503) target = $region60
      $region59: #{autoencoder_forward.1} parent=11 // pred_region
        _
      $region60: #{autoencoder_forward.1} parent=11 // pred_fallthru
        _
      // Predicated region
      $region61: #{autoencoder_forward.1} parent=11 // pred_check
        %p506 = pneg %p324
      $region62: #{autoencoder_forward.1} parent=11 // pred_check_branch
        %508 = sbr.rel (%p506) target = $region64
      $region63: #{autoencoder_forward.1} parent=11 // pred_region
        _
      $region64: #{autoencoder_forward.1} parent=11 // pred_fallthru
        _
      // Predicated region
      $region65: #{autoencoder_forward.1} parent=11 // pred_check
        %p509 = pneg %p345
      $region66: #{autoencoder_forward.1} parent=11 // pred_check_branch
        %511 = sbr.rel (%p509) target = $region68
      $region67: #{autoencoder_forward.1} parent=11 // pred_region
        _
      $region68: #{autoencoder_forward.1} parent=11 // pred_fallthru
        _
      // Predicated region
      $region69: #{autoencoder_forward.1} parent=11 // pred_check
        %p512 = pneg %p366
      $region70: #{autoencoder_forward.1} parent=11 // pred_check_branch
        %514 = sbr.rel (%p512) target = $region72
      $region71: #{autoencoder_forward.1} parent=11 // pred_region
        _
      $region72: #{autoencoder_forward.1} parent=11 // pred_fallthru
        _
      // Predicated region
      $region73: #{autoencoder_forward.1} parent=11 // pred_check
        %p515 = pneg %p387
      $region74: #{autoencoder_forward.1} parent=11 // pred_check_branch
        %517 = sbr.rel (%p515) target = $region76
      $region75: #{autoencoder_forward.1} parent=11 // pred_region
        _
      $region76: #{autoencoder_forward.1} parent=11 // pred_fallthru
        _
      // Predicated region
      $region77: #{autoencoder_forward.1} parent=11 // pred_check
        %p518 = pneg %p408
      $region78: #{autoencoder_forward.1} parent=11 // pred_check_branch
        %520 = sbr.rel (%p518) target = $region80
      $region79: #{autoencoder_forward.1} parent=11 // pred_region
        _
      $region80: #{autoencoder_forward.1} parent=11 // pred_fallthru
        _
      // Predicated region
      $region81: #{autoencoder_forward.1} parent=11 // pred_check
        %p521 = pneg %p429
      $region82: #{autoencoder_forward.1} parent=11 // pred_check_branch
        %523 = sbr.rel (%p521) target = $region84
      $region83: #{autoencoder_forward.1} parent=11 // pred_region
        _
      $region84: #{autoencoder_forward.1} parent=11 // pred_fallthru
        _
    $region12: #{autoencoder_forward.1} parent=5 // pred_fallthru
      _
    %p524 = scmp.lt.s32.totalorder %s25, 2
    // Predicated region
    $region85: #{autoencoder_forward.1} parent=5 // pred_check
      %p525 = pneg %p524
    $region86: #{autoencoder_forward.1} parent=5 // pred_check_branch
      %527 = sbr.rel (%p525) target = $region88
    $region87: #{autoencoder_forward.1} parent=5 // pred_region
      // Predicated region
      $region89: #{autoencoder_forward.1} parent=87 // pred_check
        %p528 = pneg %p45
      $region90: #{autoencoder_forward.1} parent=87 // pred_check_branch
        %530 = sbr.rel (%p528) target = $region92
      $region91: #{autoencoder_forward.1} parent=87 // pred_region
        %p531 = scmp.lt.s32.totalorder %s25, 1
        %s532 = scalar_select %p531, %s25, 1
        %s533 = smul.addr %s532, 2
        %s534 = smul.addr %s533, 4
        %s535 = scalar_lea.vmem %s0, %s534
      $region92: #{autoencoder_forward.1} parent=87 // pred_fallthru
        _
    $region88: #{autoencoder_forward.1} parent=5 // pred_fallthru
      _
    %p536 = scmp.le.s32.totalorder 1, %s25
    %p537 = scmp.lt.s32.totalorder %s25, 3
    %p538 = pnand %p536, %p537
    %p539 = pneg %p538
    // Predicated region
    $region93: #{autoencoder_forward.1} parent=5 // pred_check
      _
    $region94: #{autoencoder_forward.1} parent=5 // pred_check_branch
      %541 = sbr.rel (%p538) target = $region96
    $region95: #{autoencoder_forward.1} parent=5 // pred_region
      %s542 = ssub.s32 %s25, 1
      %p543 = scmp.lt.s32.totalorder %s30, 1
      %s544 = scalar_select %p543, %s30, 1
      %s545 = smul.addr %s544, 2
      %s546 = smul.addr %s545, 4
      %s547 = scalar_lea.vmem %s0, %s546
      %p548 = pneg %p51
      %p549 = pneg %p48
      %p550 = pneg %p72
      %p551 = pneg %p69
      %p552 = pneg %p93
      %p553 = pneg %p90
      %p554 = pneg %p114
      %p555 = pneg %p111
      %p556 = pneg %p135
      %p557 = pneg %p132
      %p558 = pneg %p156
      %p559 = pneg %p153
      %p560 = pneg %p177
      %p561 = pneg %p174
      %p562 = pneg %p198
      %p563 = pneg %p195
      %p564 = pneg %p219
      %p565 = pneg %p216
      %p566 = pneg %p240
      %p567 = pneg %p237
      %p568 = pneg %p261
      %p569 = pneg %p258
      %p570 = pneg %p282
      %p571 = pneg %p279
      %p572 = pneg %p303
      %p573 = pneg %p300
      %p574 = pneg %p324
      %p575 = pneg %p321
      %p576 = pneg %p345
      %p577 = pneg %p342
      %p578 = pneg %p366
      %p579 = pneg %p363
      %p580 = pneg %p387
      %p581 = pneg %p384
      %p582 = pneg %p408
      %p583 = pneg %p405
      %p584 = pneg %p429
      %p585 = pneg %p426
      %p586 = pneg %p455
      %p587 = pneg %p452
      %p588 = scmp.lt.s32.totalorder %s30, 1
      %s589 = scalar_select %p588, %s30, 1
      %s590 = smul.addr %s589, 2
      %s591 = smul.addr %s590, 4
      %s592 = scalar_lea.vmem %s19, %s591
      %p593 = scmp.lt.s32.totalorder %s30, 1
      %s594 = scalar_select %p593, %s30, 1
      %s595 = smul.addr %s594, 2
      %s596 = smul.addr %s595, 4
      %s597 = scalar_lea.vmem %s0, %s596
      %p598 = scmp.lt.s32.totalorder %s30, 1
      %s599 = scalar_select %p598, %s30, 1
      %s600 = smul.addr %s599, 2
      %s601 = smul.addr %s600, 4
      %s602 = scalar_lea.vmem %s19, %s601
      %v604 = vld [vmem:[%s597] sm:$0x77]
      %v605 = vld [vmem:[%s2] sm:$0xff]
      %v606 = vld [vmem:[%s2 + $0x8] sm:$0xff]
      %v607 = vld [vmem:[%s2 + $0x10] sm:$0xff]
      %v608 = vld [vmem:[%s2 + $0x18] sm:$0xff]
      %v609 = vld [vmem:[%s2 + $0x20] sm:$0xff]
      %v610 = vld [vmem:[%s2 + $0x28] sm:$0xff]
      %v611 = vld [vmem:[%s2 + $0x30] sm:$0xff]
      %v612 = vld [vmem:[%s2 + $0x38] sm:$0xff]
      %v613 = vld [vmem:[%s2 + $0x40] sm:$0xff]
      %v614 = vld [vmem:[%s2 + $0x48] sm:$0xff]
      %v615 = vld [vmem:[%s2 + $0x50] sm:$0xff]
      %v616 = vld [vmem:[%s2 + $0x58] sm:$0xff]
      %v617 = vld [vmem:[%s2 + $0x60] sm:$0xff]
      %v618 = vld [vmem:[%s2 + $0x68] sm:$0xff]
      %v619 = vld [vmem:[%s2 + $0x70] sm:$0xff]
      %v620 = vld [vmem:[%s2 + $0x78] sm:$0xff]
      %v621 = vld [vmem:[%s2 + $0x80] sm:$0xff]
      %v622 = vld [vmem:[%s2 + $0x88] sm:$0xff]
      %v624 = vcombine.high %v604, %v604
      %vm625 = vcmask 23552
      %v627 = vsel %vm625, %v605, 0
      %v630 = vsel %vm625, %v606, 0
      %v633 = vsel %vm625, %v607, 0
      %v636 = vsel %vm625, %v608, 0
      %v639 = vsel %vm625, %v609, 0
      %v642 = vsel %vm625, %v610, 0
      %v645 = vsel %vm625, %v611, 0
      %v648 = vsel %vm625, %v612, 0
      %v651 = vsel %vm625, %v613, 0
      %v654 = vsel %vm625, %v614, 0
      %v657 = vsel %vm625, %v615, 0
      %v660 = vsel %vm625, %v616, 0
      %v663 = vsel %vm625, %v617, 0
      %v666 = vsel %vm625, %v618, 0
      %v669 = vsel %vm625, %v619, 0
      %v672 = vsel %vm625, %v620, 0
      %v675 = vsel %vm625, %v621, 0
      %v678 = vsel %vm625, %v622, 0
      %vm680 = vcmask 1042432
      %v681 = vsel %vm680, %v604, 0
      %v683 = vsel %vm680, %v624, 0
      %685 = vmatprep.subr.mxu0 %v683
      %686 = vmatpush1.msra.mxu0 %v681
      %687 = vmatprep.subr.mxu0 0.0
      %688 = vmatpush1.msra.mxu0 0.0
      %689 = vmatprep.subr.mxu0 0.0
      %690 = vmatpush1.msra.mxu0 0.0
      %691 = vmatprep.subr.mxu0 0.0
      %692 = vmatpush1.msra.mxu0 0.0
      %693 = vmatprep.subr.mxu0 0.0
      %694 = vmatpush1.msra.mxu0 0.0
      %695 = vmatprep.subr.mxu0 0.0
      %696 = vmatpush1.msra.mxu0 0.0
      %697 = vmatprep.subr.mxu0 0.0
      %698 = vmatpush1.msra.mxu0 0.0
      %699 = vmatprep.subr.mxu0 0.0
      %700 = vmatpush1.msra.mxu0 0.0
      %701 = vmatprep.subr.mxu0 0.0
      %702 = vmatpush1.msra.mxu0 0.0
      %703 = vmatprep.subr.mxu0 0.0
      %704 = vmatpush1.msra.mxu0 0.0
      %705 = vmatprep.subr.mxu0 0.0
      %706 = vmatpush1.msra.mxu0 0.0
      %707 = vmatprep.subr.mxu0 0.0
      %708 = vmatpush1.msra.mxu0 0.0
      %709 = vmatprep.subr.mxu0 0.0
      %710 = vmatpush1.msra.mxu0 0.0
      %711 = vmatprep.subr.mxu0 0.0
      %712 = vmatpush1.msra.mxu0 0.0
      %713 = vmatprep.subr.mxu0 0.0
      %714 = vmatpush1.msra.mxu0 0.0
      %715 = vmatprep.subr.mxu0 0.0
      %716 = vmatpush1.msra.mxu0 0.0
      %717 = vmatprep.subr.mxu0 0.0
      %718 = vmatpush1.msra.mxu0 0.0
      %719 = vmatprep.subr.mxu0 0.0
      %720 = vmatpush1.msra.mxu0 0.0
      %721 = vmatprep.subr.mxu0 0.0
      %722 = vmatpush1.msra.mxu0 0.0
      %723 = vmatprep.subr.mxu0 0.0
      %724 = vmatpush1.msra.mxu0 0.0
      %725 = vmatprep.subr.mxu0 0.0
      %726 = vmatpush1.msra.mxu0 0.0
      %727 = vmatprep.subr.mxu0 0.0
      %728 = vmatpush1.msra.mxu0 0.0
      %729 = vmatprep.subr.mxu0 0.0
      %730 = vmatpush1.msra.mxu0 0.0
      %731 = vmatprep.subr.mxu0 0.0
      %732 = vmatpush1.msra.mxu0 0.0
      %733 = vmatprep.subr.mxu0 0.0
      %734 = vmatpush1.msra.mxu0 0.0
      %735 = vmatprep.subr.mxu0 0.0
      %736 = vmatpush1.msra.mxu0 0.0
      %737 = vmatprep.subr.mxu0 0.0
      %738 = vmatpush1.msra.mxu0 0.0
      %739 = vmatprep.subr.mxu0 0.0
      %740 = vmatpush1.msra.mxu0 0.0
      %741 = vmatprep.subr.mxu0 0.0
      %742 = vmatpush1.msra.mxu0 0.0
      %743 = vmatprep.subr.mxu0 0.0
      %744 = vmatpush1.msra.mxu0 0.0
      %745 = vmatprep.subr.mxu0 0.0
      %746 = vmatpush1.msra.mxu0 0.0
      %747 = vmatprep.subr.mxu0 0.0
      %748 = vmatpush1.msra.mxu0 0.0
      %749 = vmatprep.mubr.f32.mxu0 0.0
      %750 = vmatmul.mubr.f32.gmra.mrb[0].mxu0 %v627
      %v751 = vpop.f32.mrb[0].mxu0
      %v752 = vadd.f32 0.0, %v751
      %v753 = vpop.f32.mrb[0].mxu0
      %v754 = vadd.f32 0.0, %v753
      %755 = vmatprep.mubr.f32.mxu0 0.0
      %756 = vmatmul.mubr.f32.gmra.mrb[0].mxu0 %v630
      %v757 = vpop.f32.mrb[0].mxu0
      %v758 = vadd.f32 0.0, %v757
      %v759 = vpop.f32.mrb[0].mxu0
      %v760 = vadd.f32 0.0, %v759
      %761 = vmatprep.mubr.f32.mxu0 0.0
      %762 = vmatmul.mubr.f32.gmra.mrb[0].mxu0 %v633
      %v763 = vpop.f32.mrb[0].mxu0
      %v764 = vadd.f32 0.0, %v763
      %v765 = vpop.f32.mrb[0].mxu0
      %v766 = vadd.f32 0.0, %v765
      %767 = vmatprep.mubr.f32.mxu0 0.0
      %768 = vmatmul.mubr.f32.gmra.mrb[0].mxu0 %v636
      %v769 = vpop.f32.mrb[0].mxu0
      %v770 = vadd.f32 0.0, %v769
      %v771 = vpop.f32.mrb[0].mxu0
      %v772 = vadd.f32 0.0, %v771
      %773 = vmatprep.mubr.f32.mxu0 0.0
      %774 = vmatmul.mubr.f32.gmra.mrb[0].mxu0 %v639
      %v775 = vpop.f32.mrb[0].mxu0
      %v776 = vadd.f32 0.0, %v775
      %v777 = vpop.f32.mrb[0].mxu0
      %v778 = vadd.f32 0.0, %v777
      %779 = vmatprep.mubr.f32.mxu0 0.0
      %780 = vmatmul.mubr.f32.gmra.mrb[0].mxu0 %v642
      %v781 = vpop.f32.mrb[0].mxu0
      %v782 = vadd.f32 0.0, %v781
      %v783 = vpop.f32.mrb[0].mxu0
      %v784 = vadd.f32 0.0, %v783
      %785 = vmatprep.mubr.f32.mxu0 0.0
      %786 = vmatmul.mubr.f32.gmra.mrb[0].mxu0 %v645
      %v787 = vpop.f32.mrb[0].mxu0
      %v788 = vadd.f32 0.0, %v787
      %v789 = vpop.f32.mrb[0].mxu0
      %v790 = vadd.f32 0.0, %v789
      %791 = vmatprep.mubr.f32.mxu0 0.0
      %792 = vmatmul.mubr.f32.gmra.mrb[0].mxu0 %v648
      %v793 = vpop.f32.mrb[0].mxu0
      %v794 = vadd.f32 0.0, %v793
      %v795 = vpop.f32.mrb[0].mxu0
      %v796 = vadd.f32 0.0, %v795
      %797 = vmatprep.mubr.f32.mxu0 0.0
      %798 = vmatmul.mubr.f32.gmra.mrb[0].mxu0 %v651
      %v799 = vpop.f32.mrb[0].mxu0
      %v800 = vadd.f32 0.0, %v799
      %v801 = vpop.f32.mrb[0].mxu0
      %v802 = vadd.f32 0.0, %v801
      %803 = vmatprep.mubr.f32.mxu0 0.0
      %804 = vmatmul.mubr.f32.gmra.mrb[0].mxu0 %v654
      %v805 = vpop.f32.mrb[0].mxu0
      %v806 = vadd.f32 0.0, %v805
      %v807 = vpop.f32.mrb[0].mxu0
      %v808 = vadd.f32 0.0, %v807
      %809 = vmatprep.mubr.f32.mxu0 0.0
      %810 = vmatmul.mubr.f32.gmra.mrb[0].mxu0 %v657
      %v811 = vpop.f32.mrb[0].mxu0
      %v812 = vadd.f32 0.0, %v811
      %v813 = vpop.f32.mrb[0].mxu0
      %v814 = vadd.f32 0.0, %v813
      %815 = vmatprep.mubr.f32.mxu0 0.0
      %816 = vmatmul.mubr.f32.gmra.mrb[0].mxu0 %v660
      %v817 = vpop.f32.mrb[0].mxu0
      %v818 = vadd.f32 0.0, %v817
      %v819 = vpop.f32.mrb[0].mxu0
      %v820 = vadd.f32 0.0, %v819
      %821 = vmatprep.mubr.f32.mxu0 0.0
      %822 = vmatmul.mubr.f32.gmra.mrb[0].mxu0 %v663
      %v823 = vpop.f32.mrb[0].mxu0
      %v824 = vadd.f32 0.0, %v823
      %v825 = vpop.f32.mrb[0].mxu0
      %v826 = vadd.f32 0.0, %v825
      %827 = vmatprep.mubr.f32.mxu0 0.0
      %828 = vmatmul.mubr.f32.gmra.mrb[0].mxu0 %v666
      %v829 = vpop.f32.mrb[0].mxu0
      %v830 = vadd.f32 0.0, %v829
      %v831 = vpop.f32.mrb[0].mxu0
      %v832 = vadd.f32 0.0, %v831
      %833 = vmatprep.mubr.f32.mxu0 0.0
      %834 = vmatmul.mubr.f32.gmra.mrb[0].mxu0 %v669
      %v835 = vpop.f32.mrb[0].mxu0
      %v836 = vadd.f32 0.0, %v835
      %v837 = vpop.f32.mrb[0].mxu0
      %v838 = vadd.f32 0.0, %v837
      %839 = vmatprep.mubr.f32.mxu0 0.0
      %840 = vmatmul.mubr.f32.gmra.mrb[0].mxu0 %v672
      %v841 = vpop.f32.mrb[0].mxu0
      %v842 = vadd.f32 0.0, %v841
      %v843 = vpop.f32.mrb[0].mxu0
      %v844 = vadd.f32 0.0, %v843
      %845 = vmatprep.mubr.f32.mxu0 0.0
      %846 = vmatmul.mubr.f32.gmra.mrb[0].mxu0 %v675
      %v847 = vpop.f32.mrb[0].mxu0
      %v848 = vadd.f32 0.0, %v847
      %v849 = vpop.f32.mrb[0].mxu0
      %v850 = vadd.f32 0.0, %v849
      %851 = vmatprep.mubr.f32.mxu0 0.0
      %852 = vmatmul.mubr.f32.gmra.mrb[0].mxu0 %v678
      %v853 = vpop.f32.mrb[0].mxu0
      %v854 = vadd.f32 0.0, %v853
      %v855 = vpop.f32.mrb[0].mxu0
      %v856 = vadd.f32 0.0, %v855
      %857 = vdwg.mxu0
      %v858 = vpack.c.bf16 %v758, %v752
      %v859 = vpack.c.bf16 %v760, %v754
      %v860 = vpack.c.bf16 %v770, %v764
      %v861 = vpack.c.bf16 %v772, %v766
      %v862 = vpack.c.bf16 %v782, %v776
      %v863 = vpack.c.bf16 %v784, %v778
      %v864 = vpack.c.bf16 %v794, %v788
      %v865 = vpack.c.bf16 %v796, %v790
      %v866 = vpack.c.bf16 %v806, %v800
      %v867 = vpack.c.bf16 %v808, %v802
      %v868 = vpack.c.bf16 %v818, %v812
      %v869 = vpack.c.bf16 %v820, %v814
      %v870 = vpack.c.bf16 %v830, %v824
      %v871 = vpack.c.bf16 %v832, %v826
      %v872 = vpack.c.bf16 %v842, %v836
      %v873 = vpack.c.bf16 %v844, %v838
      %v874 = vpack.c.bf16 %v854, %v848
      %v875 = vpack.c.bf16 %v856, %v850
      %v876 = vld [vmem:[%s1] sm:$0xf]
      %v877 = vld [vmem:[%s1 + $0x4] sm:$0xf]
      %v878 = vld [vmem:[%s1 + $0x8] sm:$0xf]
      %v879 = vld [vmem:[%s1 + $0xc] sm:$0xf]
      %v880 = vld [vmem:[%s1 + $0x10] sm:$0xf]
      %v881 = vld [vmem:[%s1 + $0x14] sm:$0xf]
      %v882 = vld [vmem:[%s1 + $0x18] sm:$0xf]
      %v883 = vld [vmem:[%s1 + $0x1c] sm:$0xf]
      %v884 = vld [vmem:[%s1 + $0x20] sm:$0xf]
      %v885 = vld [vmem:[%s1 + $0x24] sm:$0xf]
      %v886 = vld [vmem:[%s1 + $0x28] sm:$0xf]
      %v887 = vld [vmem:[%s1 + $0x2c] sm:$0xf]
      %v888 = vld [vmem:[%s1 + $0x30] sm:$0xf]
      %v889 = vld [vmem:[%s1 + $0x34] sm:$0xf]
      %v890 = vld [vmem:[%s1 + $0x38] sm:$0xf]
      %v891 = vld [vmem:[%s1 + $0x3c] sm:$0xf]
      %v892 = vld [vmem:[%s1 + $0x40] sm:$0xf]
      %v893 = vld [vmem:[%s1 + $0x44] sm:$0xf]
      %v894 = vld [vmem:[%s1 + $0x48] sm:$0xf]
      %v895 = vld [vmem:[%s1 + $0x4c] sm:$0xf]
      %v896 = vld [vmem:[%s1 + $0x50] sm:$0xf]
      %v897 = vld [vmem:[%s1 + $0x54] sm:$0xf]
      %v898 = vld [vmem:[%s1 + $0x58] sm:$0xf]
      %v899 = vld [vmem:[%s1 + $0x5c] sm:$0xf]
      %v900 = vld [vmem:[%s1 + $0x60] sm:$0xf]
      %v901 = vld [vmem:[%s1 + $0x64] sm:$0xf]
      %v902 = vld [vmem:[%s1 + $0x68] sm:$0xf]
      %v903 = vld [vmem:[%s1 + $0x6c] sm:$0xf]
      %v904 = vld [vmem:[%s1 + $0x70] sm:$0xf]
      %v905 = vld [vmem:[%s1 + $0x74] sm:$0xf]
      %v906 = vld [vmem:[%s1 + $0x78] sm:$0xf]
      %v907 = vld [vmem:[%s1 + $0x7c] sm:$0xf]
      %s908 = scalar_lea.vmem %s1, 128
      %v909 = vld [vmem:[%s908] sm:$0xf]
      %v910 = vld [vmem:[%s908 + $0x4] sm:$0xf]
      %v911 = vld [vmem:[%s908 + $0x8] sm:$0xf]
      %v912 = vld [vmem:[%s908 + $0xc] sm:$0xf]
      %v913 = vld [vmem:[%s908 + $0x10] sm:$0xf]
      %v914 = vld [vmem:[%s908 + $0x14] sm:$0xf]
      %v915 = vld [vmem:[%s908 + $0x18] sm:$0xf]
      %v916 = vld [vmem:[%s908 + $0x1c] sm:$0xf]
      %v917 = vld [vmem:[%s908 + $0x20] sm:$0xf]
      %v918 = vld [vmem:[%s908 + $0x24] sm:$0xf]
      %v919 = vld [vmem:[%s908 + $0x28] sm:$0xf]
      %v920 = vld [vmem:[%s908 + $0x2c] sm:$0xf]
      %v921 = vld [vmem:[%s908 + $0x30] sm:$0xf]
      %v922 = vld [vmem:[%s908 + $0x34] sm:$0xf]
      %v923 = vld [vmem:[%s908 + $0x38] sm:$0xf]
      %v924 = vld [vmem:[%s908 + $0x3c] sm:$0xf]
      %v925 = vld [vmem:[%s908 + $0x40] sm:$0xf]
      %v926 = vld [vmem:[%s908 + $0x44] sm:$0xf]
      %v927 = vld [vmem:[%s908 + $0x48] sm:$0xf]
      %v928 = vld [vmem:[%s908 + $0x4c] sm:$0xf]
      %v929 = vld [vmem:[%s908 + $0x50] sm:$0xf]
      %v930 = vld [vmem:[%s908 + $0x54] sm:$0xf]
      %v931 = vld [vmem:[%s908 + $0x58] sm:$0xf]
      %v932 = vld [vmem:[%s908 + $0x5c] sm:$0xf]
      %v933 = vld [vmem:[%s908 + $0x60] sm:$0xf]
      %v934 = vld [vmem:[%s908 + $0x64] sm:$0xf]
      %v935 = vld [vmem:[%s908 + $0x68] sm:$0xf]
      %v936 = vld [vmem:[%s908 + $0x6c] sm:$0xf]
      %v937 = vld [vmem:[%s908 + $0x70] sm:$0xf]
      %v938 = vld [vmem:[%s908 + $0x74] sm:$0xf]
      %v939 = vld [vmem:[%s908 + $0x78] sm:$0xf]
      %v940 = vld [vmem:[%s908 + $0x7c] sm:$0xf]
      %v973 = vunpack.c.l.b16 %v909
      %v974 = vunpack.c.l.b16 %v910
      %v975 = vunpack.c.l.b16 %v911
      %v976 = vunpack.c.l.b16 %v912
      %v977 = vunpack.c.l.b16 %v913
      %v978 = vunpack.c.l.b16 %v914
      %v979 = vunpack.c.l.b16 %v915
      %v980 = vunpack.c.l.b16 %v916
      %v981 = vunpack.c.l.b16 %v917
      %v982 = vunpack.c.l.b16 %v918
      %v983 = vunpack.c.l.b16 %v919
      %v984 = vunpack.c.l.b16 %v920
      %v985 = vunpack.c.l.b16 %v921
      %v986 = vunpack.c.l.b16 %v922
      %v987 = vunpack.c.l.b16 %v923
      %v988 = vunpack.c.l.b16 %v924
      %v989 = vunpack.c.l.b16 %v925
      %v990 = vunpack.c.l.b16 %v926
      %v991 = vunpack.c.l.b16 %v927
      %v992 = vunpack.c.l.b16 %v928
      %v993 = vunpack.c.l.b16 %v929
      %v994 = vunpack.c.l.b16 %v930
      %v995 = vunpack.c.l.b16 %v931
      %v996 = vunpack.c.l.b16 %v932
      %v997 = vunpack.c.l.b16 %v933
      %v998 = vunpack.c.l.b16 %v934
      %v999 = vunpack.c.l.b16 %v935
      %v1000 = vunpack.c.l.b16 %v936
      %v1001 = vunpack.c.l.b16 %v937
      %v1002 = vunpack.c.l.b16 %v938
      %v1003 = vunpack.c.l.b16 %v939
      %v1004 = vunpack.c.l.b16 %v940
      %v1005 = vpack.c.b16 %v974, %v973
      %v1006 = vpack.c.b16 %v976, %v975
      %v1007 = vpack.c.b16 %v978, %v977
      %v1008 = vpack.c.b16 %v980, %v979
      %v1009 = vpack.c.b16 %v982, %v981
      %v1010 = vpack.c.b16 %v984, %v983
      %v1011 = vpack.c.b16 %v986, %v985
      %v1012 = vpack.c.b16 %v988, %v987
      %v1013 = vpack.c.b16 %v990, %v989
      %v1014 = vpack.c.b16 %v992, %v991
      %v1015 = vpack.c.b16 %v994, %v993
      %v1016 = vpack.c.b16 %v996, %v995
      %v1017 = vpack.c.b16 %v998, %v997
      %v1018 = vpack.c.b16 %v1000, %v999
      %v1019 = vpack.c.b16 %v1002, %v1001
      %v1020 = vpack.c.b16 %v1004, %v1003
      %1037 = vmatprep.subr.bf16.mxu0 0
      %1038 = vmatpush1.bf16.msra.mxu0 %v1005
      %1039 = vmatprep.subr.bf16.mxu0 0
      %1040 = vmatpush1.bf16.msra.mxu0 %v1006
      %1041 = vmatprep.subr.bf16.mxu0 0
      %1042 = vmatpush1.bf16.msra.mxu0 %v1007
      %1043 = vmatprep.subr.bf16.mxu0 0
      %1044 = vmatpush1.bf16.msra.mxu0 %v1008
      %1045 = vmatprep.subr.bf16.mxu0 0
      %1046 = vmatpush1.bf16.msra.mxu0 %v1009
      %1047 = vmatprep.subr.bf16.mxu0 0
      %1048 = vmatpush1.bf16.msra.mxu0 %v1010
      %1049 = vmatprep.subr.bf16.mxu0 0
      %1050 = vmatpush1.bf16.msra.mxu0 %v1011
      %1051 = vmatprep.subr.bf16.mxu0 0
      %1052 = vmatpush1.bf16.msra.mxu0 %v1012
      %1053 = vmatprep.subr.bf16.mxu0 0
      %1054 = vmatpush1.bf16.msra.mxu0 %v1013
      %1055 = vmatprep.subr.bf16.mxu0 0
      %1056 = vmatpush1.bf16.msra.mxu0 %v1014
      %1057 = vmatprep.subr.bf16.mxu0 0
      %1058 = vmatpush1.bf16.msra.mxu0 %v1015
      %1059 = vmatprep.subr.bf16.mxu0 0
      %1060 = vmatpush1.bf16.msra.mxu0 %v1016
      %1061 = vmatprep.subr.bf16.mxu0 0
      %1062 = vmatpush1.bf16.msra.mxu0 %v1017
      %1063 = vmatprep.subr.bf16.mxu0 0
      %1064 = vmatpush1.bf16.msra.mxu0 %v1018
      %1065 = vmatprep.subr.bf16.mxu0 0
      %1066 = vmatpush1.bf16.msra.mxu0 %v1019
      %1067 = vmatprep.subr.bf16.mxu0 0
      %1068 = vmatpush1.bf16.msra.mxu0 %v1020
      %1069 = vmatprep.mubr.bf16.mxu0 %v861
      %1070 = vmatmul.mubr.bf16.gmra.mrb[0].mxu0 %v860
      %v1071 = vpop.f32.mrb[0].mxu0
      %v1072 = vadd.f32 0.0, %v1071
      %v1073 = vpop.f32.mrb[0].mxu0
      %v1074 = vpop.f32.mrb[0].mxu0
      %v1075 = vadd.f32 0.0, %v1074
      %v1076 = vpop.f32.mrb[0].mxu0
      %1077 = vdwg.mxu0
      %v1110 = vunpack.c.l.b16 %v876
      %v1111 = vunpack.c.l.b16 %v877
      %v1112 = vunpack.c.l.b16 %v878
      %v1113 = vunpack.c.l.b16 %v879
      %v1114 = vunpack.c.l.b16 %v880
      %v1115 = vunpack.c.l.b16 %v881
      %v1116 = vunpack.c.l.b16 %v882
      %v1117 = vunpack.c.l.b16 %v883
      %v1118 = vunpack.c.l.b16 %v884
      %v1119 = vunpack.c.l.b16 %v885
      %v1120 = vunpack.c.l.b16 %v886
      %v1121 = vunpack.c.l.b16 %v887
      %v1122 = vunpack.c.l.b16 %v888
      %v1123 = vunpack.c.l.b16 %v889
      %v1124 = vunpack.c.l.b16 %v890
      %v1125 = vunpack.c.l.b16 %v891
      %v1126 = vunpack.c.l.b16 %v892
      %v1127 = vunpack.c.l.b16 %v893
      %v1128 = vunpack.c.l.b16 %v894
      %v1129 = vunpack.c.l.b16 %v895
      %v1130 = vunpack.c.l.b16 %v896
      %v1131 = vunpack.c.l.b16 %v897
      %v1132 = vunpack.c.l.b16 %v898
      %v1133 = vunpack.c.l.b16 %v899
      %v1134 = vunpack.c.l.b16 %v900
      %v1135 = vunpack.c.l.b16 %v901
      %v1136 = vunpack.c.l.b16 %v902
      %v1137 = vunpack.c.l.b16 %v903
      %v1138 = vunpack.c.l.b16 %v904
      %v1139 = vunpack.c.l.b16 %v905
      %v1140 = vunpack.c.l.b16 %v906
      %v1141 = vunpack.c.l.b16 %v907
      %v1142 = vpack.c.b16 %v1111, %v1110
      %v1143 = vpack.c.b16 %v1113, %v1112
      %v1144 = vpack.c.b16 %v1115, %v1114
      %v1145 = vpack.c.b16 %v1117, %v1116
      %v1146 = vpack.c.b16 %v1119, %v1118
      %v1147 = vpack.c.b16 %v1121, %v1120
      %v1148 = vpack.c.b16 %v1123, %v1122
      %v1149 = vpack.c.b16 %v1125, %v1124
      %v1150 = vpack.c.b16 %v1127, %v1126
      %v1151 = vpack.c.b16 %v1129, %v1128
      %v1152 = vpack.c.b16 %v1131, %v1130
      %v1153 = vpack.c.b16 %v1133, %v1132
      %v1154 = vpack.c.b16 %v1135, %v1134
      %v1155 = vpack.c.b16 %v1137, %v1136
      %v1156 = vpack.c.b16 %v1139, %v1138
      %v1157 = vpack.c.b16 %v1141, %v1140
      %1174 = vmatprep.subr.bf16.mxu0 0
      %1175 = vmatpush1.bf16.msra.mxu0 %v1142
      %1176 = vmatprep.subr.bf16.mxu0 0
      %1177 = vmatpush1.bf16.msra.mxu0 %v1143
      %1178 = vmatprep.subr.bf16.mxu0 0
      %1179 = vmatpush1.bf16.msra.mxu0 %v1144
      %1180 = vmatprep.subr.bf16.mxu0 0
      %1181 = vmatpush1.bf16.msra.mxu0 %v1145
      %1182 = vmatprep.subr.bf16.mxu0 0
      %1183 = vmatpush1.bf16.msra.mxu0 %v1146
      %1184 = vmatprep.subr.bf16.mxu0 0
      %1185 = vmatpush1.bf16.msra.mxu0 %v1147
      %1186 = vmatprep.subr.bf16.mxu0 0
      %1187 = vmatpush1.bf16.msra.mxu0 %v1148
      %1188 = vmatprep.subr.bf16.mxu0 0
      %1189 = vmatpush1.bf16.msra.mxu0 %v1149
      %1190 = vmatprep.subr.bf16.mxu0 0
      %1191 = vmatpush1.bf16.msra.mxu0 %v1150
      %1192 = vmatprep.subr.bf16.mxu0 0
      %1193 = vmatpush1.bf16.msra.mxu0 %v1151
      %1194 = vmatprep.subr.bf16.mxu0 0
      %1195 = vmatpush1.bf16.msra.mxu0 %v1152
      %1196 = vmatprep.subr.bf16.mxu0 0
      %1197 = vmatpush1.bf16.msra.mxu0 %v1153
      %1198 = vmatprep.subr.bf16.mxu0 0
      %1199 = vmatpush1.bf16.msra.mxu0 %v1154
      %1200 = vmatprep.subr.bf16.mxu0 0
      %1201 = vmatpush1.bf16.msra.mxu0 %v1155
      %1202 = vmatprep.subr.bf16.mxu0 0
      %1203 = vmatpush1.bf16.msra.mxu0 %v1156
      %1204 = vmatprep.subr.bf16.mxu0 0
      %1205 = vmatpush1.bf16.msra.mxu0 %v1157
      %1206 = vmatprep.mubr.bf16.mxu0 %v859
      %1207 = vmatmul.mubr.bf16.gmra.mrb[0].mxu0 %v858
      %v1208 = vpop.f32.mrb[0].mxu0
      %v1209 = vadd.f32 %v1072, %v1208
      %v1210 = vpop.f32.mrb[0].mxu0
      %v1211 = vpop.f32.mrb[0].mxu0
      %v1212 = vadd.f32 %v1075, %v1211
      %v1213 = vpop.f32.mrb[0].mxu0
      %1214 = vdwg.mxu0
      %s1215 = scalar_lea.vmem %s1, 256
      %v1216 = vld [vmem:[%s1215] sm:$0xf]
      %v1217 = vld [vmem:[%s1215 + $0x4] sm:$0xf]
      %v1218 = vld [vmem:[%s1215 + $0x8] sm:$0xf]
      %v1219 = vld [vmem:[%s1215 + $0xc] sm:$0xf]
      %v1220 = vld [vmem:[%s1215 + $0x10] sm:$0xf]
      %v1221 = vld [vmem:[%s1215 + $0x14] sm:$0xf]
      %v1222 = vld [vmem:[%s1215 + $0x18] sm:$0xf]
      %v1223 = vld [vmem:[%s1215 + $0x1c] sm:$0xf]
      %v1224 = vld [vmem:[%s1215 + $0x20] sm:$0xf]
      %v1225 = vld [vmem:[%s1215 + $0x24] sm:$0xf]
      %v1226 = vld [vmem:[%s1215 + $0x28] sm:$0xf]
      %v1227 = vld [vmem:[%s1215 + $0x2c] sm:$0xf]
      %v1228 = vld [vmem:[%s1215 + $0x30] sm:$0xf]
      %v1229 = vld [vmem:[%s1215 + $0x34] sm:$0xf]
      %v1230 = vld [vmem:[%s1215 + $0x38] sm:$0xf]
      %v1231 = vld [vmem:[%s1215 + $0x3c] sm:$0xf]
      %v1232 = vld [vmem:[%s1215 + $0x40] sm:$0xf]
      %v1233 = vld [vmem:[%s1215 + $0x44] sm:$0xf]
      %v1234 = vld [vmem:[%s1215 + $0x48] sm:$0xf]
      %v1235 = vld [vmem:[%s1215 + $0x4c] sm:$0xf]
      %v1236 = vld [vmem:[%s1215 + $0x50] sm:$0xf]
      %v1237 = vld [vmem:[%s1215 + $0x54] sm:$0xf]
      %v1238 = vld [vmem:[%s1215 + $0x58] sm:$0xf]
      %v1239 = vld [vmem:[%s1215 + $0x5c] sm:$0xf]
      %v1240 = vld [vmem:[%s1215 + $0x60] sm:$0xf]
      %v1241 = vld [vmem:[%s1215 + $0x64] sm:$0xf]
      %v1242 = vld [vmem:[%s1215 + $0x68] sm:$0xf]
      %v1243 = vld [vmem:[%s1215 + $0x6c] sm:$0xf]
      %v1244 = vld [vmem:[%s1215 + $0x70] sm:$0xf]
      %v1245 = vld [vmem:[%s1215 + $0x74] sm:$0xf]
      %v1246 = vld [vmem:[%s1215 + $0x78] sm:$0xf]
      %v1247 = vld [vmem:[%s1215 + $0x7c] sm:$0xf]
      %v1280 = vunpack.c.l.b16 %v1216
      %v1281 = vunpack.c.l.b16 %v1217
      %v1282 = vunpack.c.l.b16 %v1218
      %v1283 = vunpack.c.l.b16 %v1219
      %v1284 = vunpack.c.l.b16 %v1220
      %v1285 = vunpack.c.l.b16 %v1221
      %v1286 = vunpack.c.l.b16 %v1222
      %v1287 = vunpack.c.l.b16 %v1223
      %v1288 = vunpack.c.l.b16 %v1224
      %v1289 = vunpack.c.l.b16 %v1225
      %v1290 = vunpack.c.l.b16 %v1226
      %v1291 = vunpack.c.l.b16 %v1227
      %v1292 = vunpack.c.l.b16 %v1228
      %v1293 = vunpack.c.l.b16 %v1229
      %v1294 = vunpack.c.l.b16 %v1230
      %v1295 = vunpack.c.l.b16 %v1231
      %v1296 = vunpack.c.l.b16 %v1232
      %v1297 = vunpack.c.l.b16 %v1233
      %v1298 = vunpack.c.l.b16 %v1234
      %v1299 = vunpack.c.l.b16 %v1235
      %v1300 = vunpack.c.l.b16 %v1236
      %v1301 = vunpack.c.l.b16 %v1237
      %v1302 = vunpack.c.l.b16 %v1238
      %v1303 = vunpack.c.l.b16 %v1239
      %v1304 = vunpack.c.l.b16 %v1240
      %v1305 = vunpack.c.l.b16 %v1241
      %v1306 = vunpack.c.l.b16 %v1242
      %v1307 = vunpack.c.l.b16 %v1243
      %v1308 = vunpack.c.l.b16 %v1244
      %v1309 = vunpack.c.l.b16 %v1245
      %v1310 = vunpack.c.l.b16 %v1246
      %v1311 = vunpack.c.l.b16 %v1247
      %v1312 = vpack.c.b16 %v1281, %v1280
      %v1313 = vpack.c.b16 %v1283, %v1282
      %v1314 = vpack.c.b16 %v1285, %v1284
      %v1315 = vpack.c.b16 %v1287, %v1286
      %v1316 = vpack.c.b16 %v1289, %v1288
      %v1317 = vpack.c.b16 %v1291, %v1290
      %v1318 = vpack.c.b16 %v1293, %v1292
      %v1319 = vpack.c.b16 %v1295, %v1294
      %v1320 = vpack.c.b16 %v1297, %v1296
      %v1321 = vpack.c.b16 %v1299, %v1298
      %v1322 = vpack.c.b16 %v1301, %v1300
      %v1323 = vpack.c.b16 %v1303, %v1302
      %v1324 = vpack.c.b16 %v1305, %v1304
      %v1325 = vpack.c.b16 %v1307, %v1306
      %v1326 = vpack.c.b16 %v1309, %v1308
      %v1327 = vpack.c.b16 %v1311, %v1310
      %1344 = vmatprep.subr.bf16.mxu0 0
      %1345 = vmatpush1.bf16.msra.mxu0 %v1312
      %1346 = vmatprep.subr.bf16.mxu0 0
      %1347 = vmatpush1.bf16.msra.mxu0 %v1313
      %1348 = vmatprep.subr.bf16.mxu0 0
      %1349 = vmatpush1.bf16.msra.mxu0 %v1314
      %1350 = vmatprep.subr.bf16.mxu0 0
      %1351 = vmatpush1.bf16.msra.mxu0 %v1315
      %1352 = vmatprep.subr.bf16.mxu0 0
      %1353 = vmatpush1.bf16.msra.mxu0 %v1316
      %1354 = vmatprep.subr.bf16.mxu0 0
      %1355 = vmatpush1.bf16.msra.mxu0 %v1317
      %1356 = vmatprep.subr.bf16.mxu0 0
      %1357 = vmatpush1.bf16.msra.mxu0 %v1318
      %1358 = vmatprep.subr.bf16.mxu0 0
      %1359 = vmatpush1.bf16.msra.mxu0 %v1319
      %1360 = vmatprep.subr.bf16.mxu0 0
      %1361 = vmatpush1.bf16.msra.mxu0 %v1320
      %1362 = vmatprep.subr.bf16.mxu0 0
      %1363 = vmatpush1.bf16.msra.mxu0 %v1321
      %1364 = vmatprep.subr.bf16.mxu0 0
      %1365 = vmatpush1.bf16.msra.mxu0 %v1322
      %1366 = vmatprep.subr.bf16.mxu0 0
      %1367 = vmatpush1.bf16.msra.mxu0 %v1323
      %1368 = vmatprep.subr.bf16.mxu0 0
      %1369 = vmatpush1.bf16.msra.mxu0 %v1324
      %1370 = vmatprep.subr.bf16.mxu0 0
      %1371 = vmatpush1.bf16.msra.mxu0 %v1325
      %1372 = vmatprep.subr.bf16.mxu0 0
      %1373 = vmatpush1.bf16.msra.mxu0 %v1326
      %1374 = vmatprep.subr.bf16.mxu0 0
      %1375 = vmatpush1.bf16.msra.mxu0 %v1327
      %1376 = vmatprep.mubr.bf16.mxu0 %v863
      %1377 = vmatmul.mubr.bf16.gmra.mrb[0].mxu0 %v862
      %v1378 = vpop.f32.mrb[0].mxu0
      %v1379 = vadd.f32 0.0, %v1378
      %v1380 = vpop.f32.mrb[0].mxu0
      %v1381 = vpop.f32.mrb[0].mxu0
      %v1382 = vadd.f32 0.0, %v1381
      %v1383 = vpop.f32.mrb[0].mxu0
      %1384 = vdwg.mxu0
      %v1385 = vadd.f32 %v1209, %v1379
      %v1386 = vadd.f32 %v1212, %v1382
      %s1387 = scalar_lea.vmem %s1, 384
      %v1388 = vld [vmem:[%s1387] sm:$0xf]
      %v1389 = vld [vmem:[%s1387 + $0x4] sm:$0xf]
      %v1390 = vld [vmem:[%s1387 + $0x8] sm:$0xf]
      %v1391 = vld [vmem:[%s1387 + $0xc] sm:$0xf]
      %v1392 = vld [vmem:[%s1387 + $0x10] sm:$0xf]
      %v1393 = vld [vmem:[%s1387 + $0x14] sm:$0xf]
      %v1394 = vld [vmem:[%s1387 + $0x18] sm:$0xf]
      %v1395 = vld [vmem:[%s1387 + $0x1c] sm:$0xf]
      %v1396 = vld [vmem:[%s1387 + $0x20] sm:$0xf]
      %v1397 = vld [vmem:[%s1387 + $0x24] sm:$0xf]
      %v1398 = vld [vmem:[%s1387 + $0x28] sm:$0xf]
      %v1399 = vld [vmem:[%s1387 + $0x2c] sm:$0xf]
      %v1400 = vld [vmem:[%s1387 + $0x30] sm:$0xf]
      %v1401 = vld [vmem:[%s1387 + $0x34] sm:$0xf]
      %v1402 = vld [vmem:[%s1387 + $0x38] sm:$0xf]
      %v1403 = vld [vmem:[%s1387 + $0x3c] sm:$0xf]
      %v1404 = vld [vmem:[%s1387 + $0x40] sm:$0xf]
      %v1405 = vld [vmem:[%s1387 + $0x44] sm:$0xf]
      %v1406 = vld [vmem:[%s1387 + $0x48] sm:$0xf]
      %v1407 = vld [vmem:[%s1387 + $0x4c] sm:$0xf]
      %v1408 = vld [vmem:[%s1387 + $0x50] sm:$0xf]
      %v1409 = vld [vmem:[%s1387 + $0x54] sm:$0xf]
      %v1410 = vld [vmem:[%s1387 + $0x58] sm:$0xf]
      %v1411 = vld [vmem:[%s1387 + $0x5c] sm:$0xf]
      %v1412 = vld [vmem:[%s1387 + $0x60] sm:$0xf]
      %v1413 = vld [vmem:[%s1387 + $0x64] sm:$0xf]
      %v1414 = vld [vmem:[%s1387 + $0x68] sm:$0xf]
      %v1415 = vld [vmem:[%s1387 + $0x6c] sm:$0xf]
      %v1416 = vld [vmem:[%s1387 + $0x70] sm:$0xf]
      %v1417 = vld [vmem:[%s1387 + $0x74] sm:$0xf]
      %v1418 = vld [vmem:[%s1387 + $0x78] sm:$0xf]
      %v1419 = vld [vmem:[%s1387 + $0x7c] sm:$0xf]
      %v1452 = vunpack.c.l.b16 %v1388
      %v1453 = vunpack.c.l.b16 %v1389
      %v1454 = vunpack.c.l.b16 %v1390
      %v1455 = vunpack.c.l.b16 %v1391
      %v1456 = vunpack.c.l.b16 %v1392
      %v1457 = vunpack.c.l.b16 %v1393
      %v1458 = vunpack.c.l.b16 %v1394
      %v1459 = vunpack.c.l.b16 %v1395
      %v1460 = vunpack.c.l.b16 %v1396
      %v1461 = vunpack.c.l.b16 %v1397
      %v1462 = vunpack.c.l.b16 %v1398
      %v1463 = vunpack.c.l.b16 %v1399
      %v1464 = vunpack.c.l.b16 %v1400
      %v1465 = vunpack.c.l.b16 %v1401
      %v1466 = vunpack.c.l.b16 %v1402
      %v1467 = vunpack.c.l.b16 %v1403
      %v1468 = vunpack.c.l.b16 %v1404
      %v1469 = vunpack.c.l.b16 %v1405
      %v1470 = vunpack.c.l.b16 %v1406
      %v1471 = vunpack.c.l.b16 %v1407
      %v1472 = vunpack.c.l.b16 %v1408
      %v1473 = vunpack.c.l.b16 %v1409
      %v1474 = vunpack.c.l.b16 %v1410
      %v1475 = vunpack.c.l.b16 %v1411
      %v1476 = vunpack.c.l.b16 %v1412
      %v1477 = vunpack.c.l.b16 %v1413
      %v1478 = vunpack.c.l.b16 %v1414
      %v1479 = vunpack.c.l.b16 %v1415
      %v1480 = vunpack.c.l.b16 %v1416
      %v1481 = vunpack.c.l.b16 %v1417
      %v1482 = vunpack.c.l.b16 %v1418
      %v1483 = vunpack.c.l.b16 %v1419
      %v1484 = vpack.c.b16 %v1453, %v1452
      %v1485 = vpack.c.b16 %v1455, %v1454
      %v1486 = vpack.c.b16 %v1457, %v1456
      %v1487 = vpack.c.b16 %v1459, %v1458
      %v1488 = vpack.c.b16 %v1461, %v1460
      %v1489 = vpack.c.b16 %v1463, %v1462
      %v1490 = vpack.c.b16 %v1465, %v1464
      %v1491 = vpack.c.b16 %v1467, %v1466
      %v1492 = vpack.c.b16 %v1469, %v1468
      %v1493 = vpack.c.b16 %v1471, %v1470
      %v1494 = vpack.c.b16 %v1473, %v1472
      %v1495 = vpack.c.b16 %v1475, %v1474
      %v1496 = vpack.c.b16 %v1477, %v1476
      %v1497 = vpack.c.b16 %v1479, %v1478
      %v1498 = vpack.c.b16 %v1481, %v1480
      %v1499 = vpack.c.b16 %v1483, %v1482
      %1516 = vmatprep.subr.bf16.mxu0 0
      %1517 = vmatpush1.bf16.msra.mxu0 %v1484
      %1518 = vmatprep.subr.bf16.mxu0 0
      %1519 = vmatpush1.bf16.msra.mxu0 %v1485
      %1520 = vmatprep.subr.bf16.mxu0 0
      %1521 = vmatpush1.bf16.msra.mxu0 %v1486
      %1522 = vmatprep.subr.bf16.mxu0 0
      %1523 = vmatpush1.bf16.msra.mxu0 %v1487
      %1524 = vmatprep.subr.bf16.mxu0 0
      %1525 = vmatpush1.bf16.msra.mxu0 %v1488
      %1526 = vmatprep.subr.bf16.mxu0 0
      %1527 = vmatpush1.bf16.msra.mxu0 %v1489
      %1528 = vmatprep.subr.bf16.mxu0 0
      %1529 = vmatpush1.bf16.msra.mxu0 %v1490
      %1530 = vmatprep.subr.bf16.mxu0 0
      %1531 = vmatpush1.bf16.msra.mxu0 %v1491
      %1532 = vmatprep.subr.bf16.mxu0 0
      %1533 = vmatpush1.bf16.msra.mxu0 %v1492
      %1534 = vmatprep.subr.bf16.mxu0 0
      %1535 = vmatpush1.bf16.msra.mxu0 %v1493
      %1536 = vmatprep.subr.bf16.mxu0 0
      %1537 = vmatpush1.bf16.msra.mxu0 %v1494
      %1538 = vmatprep.subr.bf16.mxu0 0
      %1539 = vmatpush1.bf16.msra.mxu0 %v1495
      %1540 = vmatprep.subr.bf16.mxu0 0
      %1541 = vmatpush1.bf16.msra.mxu0 %v1496
      %1542 = vmatprep.subr.bf16.mxu0 0
      %1543 = vmatpush1.bf16.msra.mxu0 %v1497
      %1544 = vmatprep.subr.bf16.mxu0 0
      %1545 = vmatpush1.bf16.msra.mxu0 %v1498
      %1546 = vmatprep.subr.bf16.mxu0 0
      %1547 = vmatpush1.bf16.msra.mxu0 %v1499
      %1548 = vmatprep.mubr.bf16.mxu0 %v865
      %1549 = vmatmul.mubr.bf16.gmra.mrb[0].mxu0 %v864
      %v1550 = vpop.f32.mrb[0].mxu0
      %v1551 = vadd.f32 0.0, %v1550
      %v1552 = vpop.f32.mrb[0].mxu0
      %v1553 = vpop.f32.mrb[0].mxu0
      %v1554 = vadd.f32 0.0, %v1553
      %v1555 = vpop.f32.mrb[0].mxu0
      %1556 = vdwg.mxu0
      %v1557 = vadd.f32 %v1385, %v1551
      %v1558 = vadd.f32 %v1386, %v1554
      %s1559 = scalar_lea.vmem %s1, 512
      %v1560 = vld [vmem:[%s1559] sm:$0xf]
      %v1561 = vld [vmem:[%s1559 + $0x4] sm:$0xf]
      %v1562 = vld [vmem:[%s1559 + $0x8] sm:$0xf]
      %v1563 = vld [vmem:[%s1559 + $0xc] sm:$0xf]
      %v1564 = vld [vmem:[%s1559 + $0x10] sm:$0xf]
      %v1565 = vld [vmem:[%s1559 + $0x14] sm:$0xf]
      %v1566 = vld [vmem:[%s1559 + $0x18] sm:$0xf]
      %v1567 = vld [vmem:[%s1559 + $0x1c] sm:$0xf]
      %v1568 = vld [vmem:[%s1559 + $0x20] sm:$0xf]
      %v1569 = vld [vmem:[%s1559 + $0x24] sm:$0xf]
      %v1570 = vld [vmem:[%s1559 + $0x28] sm:$0xf]
      %v1571 = vld [vmem:[%s1559 + $0x2c] sm:$0xf]
      %v1572 = vld [vmem:[%s1559 + $0x30] sm:$0xf]
      %v1573 = vld [vmem:[%s1559 + $0x34] sm:$0xf]
      %v1574 = vld [vmem:[%s1559 + $0x38] sm:$0xf]
      %v1575 = vld [vmem:[%s1559 + $0x3c] sm:$0xf]
      %v1576 = vld [vmem:[%s1559 + $0x40] sm:$0xf]
      %v1577 = vld [vmem:[%s1559 + $0x44] sm:$0xf]
      %v1578 = vld [vmem:[%s1559 + $0x48] sm:$0xf]
      %v1579 = vld [vmem:[%s1559 + $0x4c] sm:$0xf]
      %v1580 = vld [vmem:[%s1559 + $0x50] sm:$0xf]
      %v1581 = vld [vmem:[%s1559 + $0x54] sm:$0xf]
      %v1582 = vld [vmem:[%s1559 + $0x58] sm:$0xf]
      %v1583 = vld [vmem:[%s1559 + $0x5c] sm:$0xf]
      %v1584 = vld [vmem:[%s1559 + $0x60] sm:$0xf]
      %v1585 = vld [vmem:[%s1559 + $0x64] sm:$0xf]
      %v1586 = vld [vmem:[%s1559 + $0x68] sm:$0xf]
      %v1587 = vld [vmem:[%s1559 + $0x6c] sm:$0xf]
      %v1588 = vld [vmem:[%s1559 + $0x70] sm:$0xf]
      %v1589 = vld [vmem:[%s1559 + $0x74] sm:$0xf]
      %v1590 = vld [vmem:[%s1559 + $0x78] sm:$0xf]
      %v1591 = vld [vmem:[%s1559 + $0x7c] sm:$0xf]
      %v1624 = vunpack.c.l.b16 %v1560
      %v1625 = vunpack.c.l.b16 %v1561
      %v1626 = vunpack.c.l.b16 %v1562
      %v1627 = vunpack.c.l.b16 %v1563
      %v1628 = vunpack.c.l.b16 %v1564
      %v1629 = vunpack.c.l.b16 %v1565
      %v1630 = vunpack.c.l.b16 %v1566
      %v1631 = vunpack.c.l.b16 %v1567
      %v1632 = vunpack.c.l.b16 %v1568
      %v1633 = vunpack.c.l.b16 %v1569
      %v1634 = vunpack.c.l.b16 %v1570
      %v1635 = vunpack.c.l.b16 %v1571
      %v1636 = vunpack.c.l.b16 %v1572
      %v1637 = vunpack.c.l.b16 %v1573
      %v1638 = vunpack.c.l.b16 %v1574
      %v1639 = vunpack.c.l.b16 %v1575
      %v1640 = vunpack.c.l.b16 %v1576
      %v1641 = vunpack.c.l.b16 %v1577
      %v1642 = vunpack.c.l.b16 %v1578
      %v1643 = vunpack.c.l.b16 %v1579
      %v1644 = vunpack.c.l.b16 %v1580
      %v1645 = vunpack.c.l.b16 %v1581
      %v1646 = vunpack.c.l.b16 %v1582
      %v1647 = vunpack.c.l.b16 %v1583
      %v1648 = vunpack.c.l.b16 %v1584
      %v1649 = vunpack.c.l.b16 %v1585
      %v1650 = vunpack.c.l.b16 %v1586
      %v1651 = vunpack.c.l.b16 %v1587
      %v1652 = vunpack.c.l.b16 %v1588
      %v1653 = vunpack.c.l.b16 %v1589
      %v1654 = vunpack.c.l.b16 %v1590
      %v1655 = vunpack.c.l.b16 %v1591
      %v1656 = vpack.c.b16 %v1625, %v1624
      %v1657 = vpack.c.b16 %v1627, %v1626
      %v1658 = vpack.c.b16 %v1629, %v1628
      %v1659 = vpack.c.b16 %v1631, %v1630
      %v1660 = vpack.c.b16 %v1633, %v1632
      %v1661 = vpack.c.b16 %v1635, %v1634
      %v1662 = vpack.c.b16 %v1637, %v1636
      %v1663 = vpack.c.b16 %v1639, %v1638
      %v1664 = vpack.c.b16 %v1641, %v1640
      %v1665 = vpack.c.b16 %v1643, %v1642
      %v1666 = vpack.c.b16 %v1645, %v1644
      %v1667 = vpack.c.b16 %v1647, %v1646
      %v1668 = vpack.c.b16 %v1649, %v1648
      %v1669 = vpack.c.b16 %v1651, %v1650
      %v1670 = vpack.c.b16 %v1653, %v1652
      %v1671 = vpack.c.b16 %v1655, %v1654
      %1688 = vmatprep.subr.bf16.mxu0 0
      %1689 = vmatpush1.bf16.msra.mxu0 %v1656
      %1690 = vmatprep.subr.bf16.mxu0 0
      %1691 = vmatpush1.bf16.msra.mxu0 %v1657
      %1692 = vmatprep.subr.bf16.mxu0 0
      %1693 = vmatpush1.bf16.msra.mxu0 %v1658
      %1694 = vmatprep.subr.bf16.mxu0 0
      %1695 = vmatpush1.bf16.msra.mxu0 %v1659
      %1696 = vmatprep.subr.bf16.mxu0 0
      %1697 = vmatpush1.bf16.msra.mxu0 %v1660
      %1698 = vmatprep.subr.bf16.mxu0 0
      %1699 = vmatpush1.bf16.msra.mxu0 %v1661
      %1700 = vmatprep.subr.bf16.mxu0 0
      %1701 = vmatpush1.bf16.msra.mxu0 %v1662
      %1702 = vmatprep.subr.bf16.mxu0 0
      %1703 = vmatpush1.bf16.msra.mxu0 %v1663
      %1704 = vmatprep.subr.bf16.mxu0 0
      %1705 = vmatpush1.bf16.msra.mxu0 %v1664
      %1706 = vmatprep.subr.bf16.mxu0 0
      %1707 = vmatpush1.bf16.msra.mxu0 %v1665
      %1708 = vmatprep.subr.bf16.mxu0 0
      %1709 = vmatpush1.bf16.msra.mxu0 %v1666
      %1710 = vmatprep.subr.bf16.mxu0 0
      %1711 = vmatpush1.bf16.msra.mxu0 %v1667
      %1712 = vmatprep.subr.bf16.mxu0 0
      %1713 = vmatpush1.bf16.msra.mxu0 %v1668
      %1714 = vmatprep.subr.bf16.mxu0 0
      %1715 = vmatpush1.bf16.msra.mxu0 %v1669
      %1716 = vmatprep.subr.bf16.mxu0 0
      %1717 = vmatpush1.bf16.msra.mxu0 %v1670
      %1718 = vmatprep.subr.bf16.mxu0 0
      %1719 = vmatpush1.bf16.msra.mxu0 %v1671
      %1720 = vmatprep.mubr.bf16.mxu0 %v867
      %1721 = vmatmul.mubr.bf16.gmra.mrb[0].mxu0 %v866
      %v1722 = vpop.f32.mrb[0].mxu0
      %v1723 = vadd.f32 0.0, %v1722
      %v1724 = vpop.f32.mrb[0].mxu0
      %v1725 = vpop.f32.mrb[0].mxu0
      %v1726 = vadd.f32 0.0, %v1725
      %v1727 = vpop.f32.mrb[0].mxu0
      %1728 = vdwg.mxu0
      %v1729 = vadd.f32 %v1557, %v1723
      %v1730 = vadd.f32 %v1558, %v1726
      %s1731 = scalar_lea.vmem %s1, 640
      %v1732 = vld [vmem:[%s1731] sm:$0xf]
      %v1733 = vld [vmem:[%s1731 + $0x4] sm:$0xf]
      %v1734 = vld [vmem:[%s1731 + $0x8] sm:$0xf]
      %v1735 = vld [vmem:[%s1731 + $0xc] sm:$0xf]
      %v1736 = vld [vmem:[%s1731 + $0x10] sm:$0xf]
      %v1737 = vld [vmem:[%s1731 + $0x14] sm:$0xf]
      %v1738 = vld [vmem:[%s1731 + $0x18] sm:$0xf]
      %v1739 = vld [vmem:[%s1731 + $0x1c] sm:$0xf]
      %v1740 = vld [vmem:[%s1731 + $0x20] sm:$0xf]
      %v1741 = vld [vmem:[%s1731 + $0x24] sm:$0xf]
      %v1742 = vld [vmem:[%s1731 + $0x28] sm:$0xf]
      %v1743 = vld [vmem:[%s1731 + $0x2c] sm:$0xf]
      %v1744 = vld [vmem:[%s1731 + $0x30] sm:$0xf]
      %v1745 = vld [vmem:[%s1731 + $0x34] sm:$0xf]
      %v1746 = vld [vmem:[%s1731 + $0x38] sm:$0xf]
      %v1747 = vld [vmem:[%s1731 + $0x3c] sm:$0xf]
      %v1748 = vld [vmem:[%s1731 + $0x40] sm:$0xf]
      %v1749 = vld [vmem:[%s1731 + $0x44] sm:$0xf]
      %v1750 = vld [vmem:[%s1731 + $0x48] sm:$0xf]
      %v1751 = vld [vmem:[%s1731 + $0x4c] sm:$0xf]
      %v1752 = vld [vmem:[%s1731 + $0x50] sm:$0xf]
      %v1753 = vld [vmem:[%s1731 + $0x54] sm:$0xf]
      %v1754 = vld [vmem:[%s1731 + $0x58] sm:$0xf]
      %v1755 = vld [vmem:[%s1731 + $0x5c] sm:$0xf]
      %v1756 = vld [vmem:[%s1731 + $0x60] sm:$0xf]
      %v1757 = vld [vmem:[%s1731 + $0x64] sm:$0xf]
      %v1758 = vld [vmem:[%s1731 + $0x68] sm:$0xf]
      %v1759 = vld [vmem:[%s1731 + $0x6c] sm:$0xf]
      %v1760 = vld [vmem:[%s1731 + $0x70] sm:$0xf]
      %v1761 = vld [vmem:[%s1731 + $0x74] sm:$0xf]
      %v1762 = vld [vmem:[%s1731 + $0x78] sm:$0xf]
      %v1763 = vld [vmem:[%s1731 + $0x7c] sm:$0xf]
      %v1796 = vunpack.c.l.b16 %v1732
      %v1797 = vunpack.c.l.b16 %v1733
      %v1798 = vunpack.c.l.b16 %v1734
      %v1799 = vunpack.c.l.b16 %v1735
      %v1800 = vunpack.c.l.b16 %v1736
      %v1801 = vunpack.c.l.b16 %v1737
      %v1802 = vunpack.c.l.b16 %v1738
      %v1803 = vunpack.c.l.b16 %v1739
      %v1804 = vunpack.c.l.b16 %v1740
      %v1805 = vunpack.c.l.b16 %v1741
      %v1806 = vunpack.c.l.b16 %v1742
      %v1807 = vunpack.c.l.b16 %v1743
      %v1808 = vunpack.c.l.b16 %v1744
      %v1809 = vunpack.c.l.b16 %v1745
      %v1810 = vunpack.c.l.b16 %v1746
      %v1811 = vunpack.c.l.b16 %v1747
      %v1812 = vunpack.c.l.b16 %v1748
      %v1813 = vunpack.c.l.b16 %v1749
      %v1814 = vunpack.c.l.b16 %v1750
      %v1815 = vunpack.c.l.b16 %v1751
      %v1816 = vunpack.c.l.b16 %v1752
      %v1817 = vunpack.c.l.b16 %v1753
      %v1818 = vunpack.c.l.b16 %v1754
      %v1819 = vunpack.c.l.b16 %v1755
      %v1820 = vunpack.c.l.b16 %v1756
      %v1821 = vunpack.c.l.b16 %v1757
      %v1822 = vunpack.c.l.b16 %v1758
      %v1823 = vunpack.c.l.b16 %v1759
      %v1824 = vunpack.c.l.b16 %v1760
      %v1825 = vunpack.c.l.b16 %v1761
      %v1826 = vunpack.c.l.b16 %v1762
      %v1827 = vunpack.c.l.b16 %v1763
      %v1828 = vpack.c.b16 %v1797, %v1796
      %v1829 = vpack.c.b16 %v1799, %v1798
      %v1830 = vpack.c.b16 %v1801, %v1800
      %v1831 = vpack.c.b16 %v1803, %v1802
      %v1832 = vpack.c.b16 %v1805, %v1804
      %v1833 = vpack.c.b16 %v1807, %v1806
      %v1834 = vpack.c.b16 %v1809, %v1808
      %v1835 = vpack.c.b16 %v1811, %v1810
      %v1836 = vpack.c.b16 %v1813, %v1812
      %v1837 = vpack.c.b16 %v1815, %v1814
      %v1838 = vpack.c.b16 %v1817, %v1816
      %v1839 = vpack.c.b16 %v1819, %v1818
      %v1840 = vpack.c.b16 %v1821, %v1820
      %v1841 = vpack.c.b16 %v1823, %v1822
      %v1842 = vpack.c.b16 %v1825, %v1824
      %v1843 = vpack.c.b16 %v1827, %v1826
      %1860 = vmatprep.subr.bf16.mxu0 0
      %1861 = vmatpush1.bf16.msra.mxu0 %v1828
      %1862 = vmatprep.subr.bf16.mxu0 0
      %1863 = vmatpush1.bf16.msra.mxu0 %v1829
      %1864 = vmatprep.subr.bf16.mxu0 0
      %1865 = vmatpush1.bf16.msra.mxu0 %v1830
      %1866 = vmatprep.subr.bf16.mxu0 0
      %1867 = vmatpush1.bf16.msra.mxu0 %v1831
      %1868 = vmatprep.subr.bf16.mxu0 0
      %1869 = vmatpush1.bf16.msra.mxu0 %v1832
      %1870 = vmatprep.subr.bf16.mxu0 0
      %1871 = vmatpush1.bf16.msra.mxu0 %v1833
      %1872 = vmatprep.subr.bf16.mxu0 0
      %1873 = vmatpush1.bf16.msra.mxu0 %v1834
      %1874 = vmatprep.subr.bf16.mxu0 0
      %1875 = vmatpush1.bf16.msra.mxu0 %v1835
      %1876 = vmatprep.subr.bf16.mxu0 0
      %1877 = vmatpush1.bf16.msra.mxu0 %v1836
      %1878 = vmatprep.subr.bf16.mxu0 0
      %1879 = vmatpush1.bf16.msra.mxu0 %v1837
      %1880 = vmatprep.subr.bf16.mxu0 0
      %1881 = vmatpush1.bf16.msra.mxu0 %v1838
      %1882 = vmatprep.subr.bf16.mxu0 0
      %1883 = vmatpush1.bf16.msra.mxu0 %v1839
      %1884 = vmatprep.subr.bf16.mxu0 0
      %1885 = vmatpush1.bf16.msra.mxu0 %v1840
      %1886 = vmatprep.subr.bf16.mxu0 0
      %1887 = vmatpush1.bf16.msra.mxu0 %v1841
      %1888 = vmatprep.subr.bf16.mxu0 0
      %1889 = vmatpush1.bf16.msra.mxu0 %v1842
      %1890 = vmatprep.subr.bf16.mxu0 0
      %1891 = vmatpush1.bf16.msra.mxu0 %v1843
      %1892 = vmatprep.mubr.bf16.mxu0 %v869
      %1893 = vmatmul.mubr.bf16.gmra.mrb[0].mxu0 %v868
      %v1894 = vpop.f32.mrb[0].mxu0
      %v1895 = vadd.f32 0.0, %v1894
      %v1896 = vpop.f32.mrb[0].mxu0
      %v1897 = vpop.f32.mrb[0].mxu0
      %v1898 = vadd.f32 0.0, %v1897
      %v1899 = vpop.f32.mrb[0].mxu0
      %1900 = vdwg.mxu0
      %v1901 = vadd.f32 %v1729, %v1895
      %v1902 = vadd.f32 %v1730, %v1898
      %s1903 = scalar_lea.vmem %s1, 768
      %v1904 = vld [vmem:[%s1903] sm:$0xf]
      %v1905 = vld [vmem:[%s1903 + $0x4] sm:$0xf]
      %v1906 = vld [vmem:[%s1903 + $0x8] sm:$0xf]
      %v1907 = vld [vmem:[%s1903 + $0xc] sm:$0xf]
      %v1908 = vld [vmem:[%s1903 + $0x10] sm:$0xf]
      %v1909 = vld [vmem:[%s1903 + $0x14] sm:$0xf]
      %v1910 = vld [vmem:[%s1903 + $0x18] sm:$0xf]
      %v1911 = vld [vmem:[%s1903 + $0x1c] sm:$0xf]
      %v1912 = vld [vmem:[%s1903 + $0x20] sm:$0xf]
      %v1913 = vld [vmem:[%s1903 + $0x24] sm:$0xf]
      %v1914 = vld [vmem:[%s1903 + $0x28] sm:$0xf]
      %v1915 = vld [vmem:[%s1903 + $0x2c] sm:$0xf]
      %v1916 = vld [vmem:[%s1903 + $0x30] sm:$0xf]
      %v1917 = vld [vmem:[%s1903 + $0x34] sm:$0xf]
      %v1918 = vld [vmem:[%s1903 + $0x38] sm:$0xf]
      %v1919 = vld [vmem:[%s1903 + $0x3c] sm:$0xf]
      %v1920 = vld [vmem:[%s1903 + $0x40] sm:$0xf]
      %v1921 = vld [vmem:[%s1903 + $0x44] sm:$0xf]
      %v1922 = vld [vmem:[%s1903 + $0x48] sm:$0xf]
      %v1923 = vld [vmem:[%s1903 + $0x4c] sm:$0xf]
      %v1924 = vld [vmem:[%s1903 + $0x50] sm:$0xf]
      %v1925 = vld [vmem:[%s1903 + $0x54] sm:$0xf]
      %v1926 = vld [vmem:[%s1903 + $0x58] sm:$0xf]
      %v1927 = vld [vmem:[%s1903 + $0x5c] sm:$0xf]
      %v1928 = vld [vmem:[%s1903 + $0x60] sm:$0xf]
      %v1929 = vld [vmem:[%s1903 + $0x64] sm:$0xf]
      %v1930 = vld [vmem:[%s1903 + $0x68] sm:$0xf]
      %v1931 = vld [vmem:[%s1903 + $0x6c] sm:$0xf]
      %v1932 = vld [vmem:[%s1903 + $0x70] sm:$0xf]
      %v1933 = vld [vmem:[%s1903 + $0x74] sm:$0xf]
      %v1934 = vld [vmem:[%s1903 + $0x78] sm:$0xf]
      %v1935 = vld [vmem:[%s1903 + $0x7c] sm:$0xf]
      %v1968 = vunpack.c.l.b16 %v1904
      %v1969 = vunpack.c.l.b16 %v1905
      %v1970 = vunpack.c.l.b16 %v1906
      %v1971 = vunpack.c.l.b16 %v1907
      %v1972 = vunpack.c.l.b16 %v1908
      %v1973 = vunpack.c.l.b16 %v1909
      %v1974 = vunpack.c.l.b16 %v1910
      %v1975 = vunpack.c.l.b16 %v1911
      %v1976 = vunpack.c.l.b16 %v1912
      %v1977 = vunpack.c.l.b16 %v1913
      %v1978 = vunpack.c.l.b16 %v1914
      %v1979 = vunpack.c.l.b16 %v1915
      %v1980 = vunpack.c.l.b16 %v1916
      %v1981 = vunpack.c.l.b16 %v1917
      %v1982 = vunpack.c.l.b16 %v1918
      %v1983 = vunpack.c.l.b16 %v1919
      %v1984 = vunpack.c.l.b16 %v1920
      %v1985 = vunpack.c.l.b16 %v1921
      %v1986 = vunpack.c.l.b16 %v1922
      %v1987 = vunpack.c.l.b16 %v1923
      %v1988 = vunpack.c.l.b16 %v1924
      %v1989 = vunpack.c.l.b16 %v1925
      %v1990 = vunpack.c.l.b16 %v1926
      %v1991 = vunpack.c.l.b16 %v1927
      %v1992 = vunpack.c.l.b16 %v1928
      %v1993 = vunpack.c.l.b16 %v1929
      %v1994 = vunpack.c.l.b16 %v1930
      %v1995 = vunpack.c.l.b16 %v1931
      %v1996 = vunpack.c.l.b16 %v1932
      %v1997 = vunpack.c.l.b16 %v1933
      %v1998 = vunpack.c.l.b16 %v1934
      %v1999 = vunpack.c.l.b16 %v1935
      %v2000 = vpack.c.b16 %v1969, %v1968
      %v2001 = vpack.c.b16 %v1971, %v1970
      %v2002 = vpack.c.b16 %v1973, %v1972
      %v2003 = vpack.c.b16 %v1975, %v1974
      %v2004 = vpack.c.b16 %v1977, %v1976
      %v2005 = vpack.c.b16 %v1979, %v1978
      %v2006 = vpack.c.b16 %v1981, %v1980
      %v2007 = vpack.c.b16 %v1983, %v1982
      %v2008 = vpack.c.b16 %v1985, %v1984
      %v2009 = vpack.c.b16 %v1987, %v1986
      %v2010 = vpack.c.b16 %v1989, %v1988
      %v2011 = vpack.c.b16 %v1991, %v1990
      %v2012 = vpack.c.b16 %v1993, %v1992
      %v2013 = vpack.c.b16 %v1995, %v1994
      %v2014 = vpack.c.b16 %v1997, %v1996
      %v2015 = vpack.c.b16 %v1999, %v1998
      %2032 = vmatprep.subr.bf16.mxu0 0
      %2033 = vmatpush1.bf16.msra.mxu0 %v2000
      %2034 = vmatprep.subr.bf16.mxu0 0
      %2035 = vmatpush1.bf16.msra.mxu0 %v2001
      %2036 = vmatprep.subr.bf16.mxu0 0
      %2037 = vmatpush1.bf16.msra.mxu0 %v2002
      %2038 = vmatprep.subr.bf16.mxu0 0
      %2039 = vmatpush1.bf16.msra.mxu0 %v2003
      %2040 = vmatprep.subr.bf16.mxu0 0
      %2041 = vmatpush1.bf16.msra.mxu0 %v2004
      %2042 = vmatprep.subr.bf16.mxu0 0
      %2043 = vmatpush1.bf16.msra.mxu0 %v2005
      %2044 = vmatprep.subr.bf16.mxu0 0
      %2045 = vmatpush1.bf16.msra.mxu0 %v2006
      %2046 = vmatprep.subr.bf16.mxu0 0
      %2047 = vmatpush1.bf16.msra.mxu0 %v2007
      %2048 = vmatprep.subr.bf16.mxu0 0
      %2049 = vmatpush1.bf16.msra.mxu0 %v2008
      %2050 = vmatprep.subr.bf16.mxu0 0
      %2051 = vmatpush1.bf16.msra.mxu0 %v2009
      %2052 = vmatprep.subr.bf16.mxu0 0
      %2053 = vmatpush1.bf16.msra.mxu0 %v2010
      %2054 = vmatprep.subr.bf16.mxu0 0
      %2055 = vmatpush1.bf16.msra.mxu0 %v2011
      %2056 = vmatprep.subr.bf16.mxu0 0
      %2057 = vmatpush1.bf16.msra.mxu0 %v2012
      %2058 = vmatprep.subr.bf16.mxu0 0
      %2059 = vmatpush1.bf16.msra.mxu0 %v2013
      %2060 = vmatprep.subr.bf16.mxu0 0
      %2061 = vmatpush1.bf16.msra.mxu0 %v2014
      %2062 = vmatprep.subr.bf16.mxu0 0
      %2063 = vmatpush1.bf16.msra.mxu0 %v2015
      %2064 = vmatprep.mubr.bf16.mxu0 %v871
      %2065 = vmatmul.mubr.bf16.gmra.mrb[0].mxu0 %v870
      %v2066 = vpop.f32.mrb[0].mxu0
      %v2067 = vadd.f32 0.0, %v2066
      %v2068 = vpop.f32.mrb[0].mxu0
      %v2069 = vpop.f32.mrb[0].mxu0
      %v2070 = vadd.f32 0.0, %v2069
      %v2071 = vpop.f32.mrb[0].mxu0
      %2072 = vdwg.mxu0
      %v2073 = vadd.f32 %v1901, %v2067
      %v2074 = vadd.f32 %v1902, %v2070
      %s2075 = scalar_lea.vmem %s1, 896
      %v2076 = vld [vmem:[%s2075] sm:$0xf]
      %v2077 = vld [vmem:[%s2075 + $0x4] sm:$0xf]
      %v2078 = vld [vmem:[%s2075 + $0x8] sm:$0xf]
      %v2079 = vld [vmem:[%s2075 + $0xc] sm:$0xf]
      %v2080 = vld [vmem:[%s2075 + $0x10] sm:$0xf]
      %v2081 = vld [vmem:[%s2075 + $0x14] sm:$0xf]
      %v2082 = vld [vmem:[%s2075 + $0x18] sm:$0xf]
      %v2083 = vld [vmem:[%s2075 + $0x1c] sm:$0xf]
      %v2084 = vld [vmem:[%s2075 + $0x20] sm:$0xf]
      %v2085 = vld [vmem:[%s2075 + $0x24] sm:$0xf]
      %v2086 = vld [vmem:[%s2075 + $0x28] sm:$0xf]
      %v2087 = vld [vmem:[%s2075 + $0x2c] sm:$0xf]
      %v2088 = vld [vmem:[%s2075 + $0x30] sm:$0xf]
      %v2089 = vld [vmem:[%s2075 + $0x34] sm:$0xf]
      %v2090 = vld [vmem:[%s2075 + $0x38] sm:$0xf]
      %v2091 = vld [vmem:[%s2075 + $0x3c] sm:$0xf]
      %v2092 = vld [vmem:[%s2075 + $0x40] sm:$0xf]
      %v2093 = vld [vmem:[%s2075 + $0x44] sm:$0xf]
      %v2094 = vld [vmem:[%s2075 + $0x48] sm:$0xf]
      %v2095 = vld [vmem:[%s2075 + $0x4c] sm:$0xf]
      %v2096 = vld [vmem:[%s2075 + $0x50] sm:$0xf]
      %v2097 = vld [vmem:[%s2075 + $0x54] sm:$0xf]
      %v2098 = vld [vmem:[%s2075 + $0x58] sm:$0xf]
      %v2099 = vld [vmem:[%s2075 + $0x5c] sm:$0xf]
      %v2100 = vld [vmem:[%s2075 + $0x60] sm:$0xf]
      %v2101 = vld [vmem:[%s2075 + $0x64] sm:$0xf]
      %v2102 = vld [vmem:[%s2075 + $0x68] sm:$0xf]
      %v2103 = vld [vmem:[%s2075 + $0x6c] sm:$0xf]
      %v2104 = vld [vmem:[%s2075 + $0x70] sm:$0xf]
      %v2105 = vld [vmem:[%s2075 + $0x74] sm:$0xf]
      %v2106 = vld [vmem:[%s2075 + $0x78] sm:$0xf]
      %v2107 = vld [vmem:[%s2075 + $0x7c] sm:$0xf]
      %v2140 = vunpack.c.l.b16 %v2076
      %v2141 = vunpack.c.l.b16 %v2077
      %v2142 = vunpack.c.l.b16 %v2078
      %v2143 = vunpack.c.l.b16 %v2079
      %v2144 = vunpack.c.l.b16 %v2080
      %v2145 = vunpack.c.l.b16 %v2081
      %v2146 = vunpack.c.l.b16 %v2082
      %v2147 = vunpack.c.l.b16 %v2083
      %v2148 = vunpack.c.l.b16 %v2084
      %v2149 = vunpack.c.l.b16 %v2085
      %v2150 = vunpack.c.l.b16 %v2086
      %v2151 = vunpack.c.l.b16 %v2087
      %v2152 = vunpack.c.l.b16 %v2088
      %v2153 = vunpack.c.l.b16 %v2089
      %v2154 = vunpack.c.l.b16 %v2090
      %v2155 = vunpack.c.l.b16 %v2091
      %v2156 = vunpack.c.l.b16 %v2092
      %v2157 = vunpack.c.l.b16 %v2093
      %v2158 = vunpack.c.l.b16 %v2094
      %v2159 = vunpack.c.l.b16 %v2095
      %v2160 = vunpack.c.l.b16 %v2096
      %v2161 = vunpack.c.l.b16 %v2097
      %v2162 = vunpack.c.l.b16 %v2098
      %v2163 = vunpack.c.l.b16 %v2099
      %v2164 = vunpack.c.l.b16 %v2100
      %v2165 = vunpack.c.l.b16 %v2101
      %v2166 = vunpack.c.l.b16 %v2102
      %v2167 = vunpack.c.l.b16 %v2103
      %v2168 = vunpack.c.l.b16 %v2104
      %v2169 = vunpack.c.l.b16 %v2105
      %v2170 = vunpack.c.l.b16 %v2106
      %v2171 = vunpack.c.l.b16 %v2107
      %v2172 = vpack.c.b16 %v2141, %v2140
      %v2173 = vpack.c.b16 %v2143, %v2142
      %v2174 = vpack.c.b16 %v2145, %v2144
      %v2175 = vpack.c.b16 %v2147, %v2146
      %v2176 = vpack.c.b16 %v2149, %v2148
      %v2177 = vpack.c.b16 %v2151, %v2150
      %v2178 = vpack.c.b16 %v2153, %v2152
      %v2179 = vpack.c.b16 %v2155, %v2154
      %v2180 = vpack.c.b16 %v2157, %v2156
      %v2181 = vpack.c.b16 %v2159, %v2158
      %v2182 = vpack.c.b16 %v2161, %v2160
      %v2183 = vpack.c.b16 %v2163, %v2162
      %v2184 = vpack.c.b16 %v2165, %v2164
      %v2185 = vpack.c.b16 %v2167, %v2166
      %v2186 = vpack.c.b16 %v2169, %v2168
      %v2187 = vpack.c.b16 %v2171, %v2170
      %2204 = vmatprep.subr.bf16.mxu0 0
      %2205 = vmatpush1.bf16.msra.mxu0 %v2172
      %2206 = vmatprep.subr.bf16.mxu0 0
      %2207 = vmatpush1.bf16.msra.mxu0 %v2173
      %2208 = vmatprep.subr.bf16.mxu0 0
      %2209 = vmatpush1.bf16.msra.mxu0 %v2174
      %2210 = vmatprep.subr.bf16.mxu0 0
      %2211 = vmatpush1.bf16.msra.mxu0 %v2175
      %2212 = vmatprep.subr.bf16.mxu0 0
      %2213 = vmatpush1.bf16.msra.mxu0 %v2176
      %2214 = vmatprep.subr.bf16.mxu0 0
      %2215 = vmatpush1.bf16.msra.mxu0 %v2177
      %2216 = vmatprep.subr.bf16.mxu0 0
      %2217 = vmatpush1.bf16.msra.mxu0 %v2178
      %2218 = vmatprep.subr.bf16.mxu0 0
      %2219 = vmatpush1.bf16.msra.mxu0 %v2179
      %2220 = vmatprep.subr.bf16.mxu0 0
      %2221 = vmatpush1.bf16.msra.mxu0 %v2180
      %2222 = vmatprep.subr.bf16.mxu0 0
      %2223 = vmatpush1.bf16.msra.mxu0 %v2181
      %2224 = vmatprep.subr.bf16.mxu0 0
      %2225 = vmatpush1.bf16.msra.mxu0 %v2182
      %2226 = vmatprep.subr.bf16.mxu0 0
      %2227 = vmatpush1.bf16.msra.mxu0 %v2183
      %2228 = vmatprep.subr.bf16.mxu0 0
      %2229 = vmatpush1.bf16.msra.mxu0 %v2184
      %2230 = vmatprep.subr.bf16.mxu0 0
      %2231 = vmatpush1.bf16.msra.mxu0 %v2185
      %2232 = vmatprep.subr.bf16.mxu0 0
      %2233 = vmatpush1.bf16.msra.mxu0 %v2186
      %2234 = vmatprep.subr.bf16.mxu0 0
      %2235 = vmatpush1.bf16.msra.mxu0 %v2187
      %2236 = vmatprep.mubr.bf16.mxu0 %v873
      %2237 = vmatmul.mubr.bf16.gmra.mrb[0].mxu0 %v872
      %v2238 = vpop.f32.mrb[0].mxu0
      %v2239 = vadd.f32 0.0, %v2238
      %v2240 = vpop.f32.mrb[0].mxu0
      %v2241 = vpop.f32.mrb[0].mxu0
      %v2242 = vadd.f32 0.0, %v2241
      %v2243 = vpop.f32.mrb[0].mxu0
      %2244 = vdwg.mxu0
      %v2245 = vadd.f32 %v2073, %v2239
      %v2246 = vadd.f32 %v2074, %v2242
      %s2247 = scalar_lea.vmem %s1, 1024
      %v2248 = vld [vmem:[%s2247] sm:$0xf]
      %v2249 = vld [vmem:[%s2247 + $0x4] sm:$0xf]
      %v2250 = vld [vmem:[%s2247 + $0x8] sm:$0xf]
      %v2251 = vld [vmem:[%s2247 + $0xc] sm:$0xf]
      %v2252 = vld [vmem:[%s2247 + $0x10] sm:$0xf]
      %v2253 = vld [vmem:[%s2247 + $0x14] sm:$0xf]
      %v2254 = vld [vmem:[%s2247 + $0x18] sm:$0xf]
      %v2255 = vld [vmem:[%s2247 + $0x1c] sm:$0xf]
      %v2256 = vld [vmem:[%s2247 + $0x20] sm:$0xf]
      %v2257 = vld [vmem:[%s2247 + $0x24] sm:$0xf]
      %v2258 = vld [vmem:[%s2247 + $0x28] sm:$0xf]
      %v2259 = vld [vmem:[%s2247 + $0x2c] sm:$0xf]
      %v2260 = vld [vmem:[%s2247 + $0x30] sm:$0xf]
      %v2261 = vld [vmem:[%s2247 + $0x34] sm:$0xf]
      %v2262 = vld [vmem:[%s2247 + $0x38] sm:$0xf]
      %v2263 = vld [vmem:[%s2247 + $0x3c] sm:$0xf]
      %v2264 = vld [vmem:[%s2247 + $0x40] sm:$0xf]
      %v2265 = vld [vmem:[%s2247 + $0x44] sm:$0xf]
      %v2266 = vld [vmem:[%s2247 + $0x48] sm:$0xf]
      %v2267 = vld [vmem:[%s2247 + $0x4c] sm:$0xf]
      %v2268 = vld [vmem:[%s2247 + $0x50] sm:$0xf]
      %v2269 = vld [vmem:[%s2247 + $0x54] sm:$0xf]
      %v2270 = vld [vmem:[%s2247 + $0x58] sm:$0xf]
      %v2271 = vld [vmem:[%s2247 + $0x5c] sm:$0xf]
      %v2272 = vld [vmem:[%s2247 + $0x60] sm:$0xf]
      %v2273 = vld [vmem:[%s2247 + $0x64] sm:$0xf]
      %v2274 = vld [vmem:[%s2247 + $0x68] sm:$0xf]
      %v2275 = vld [vmem:[%s2247 + $0x6c] sm:$0xf]
      %v2276 = vld [vmem:[%s2247 + $0x70] sm:$0xf]
      %v2277 = vld [vmem:[%s2247 + $0x74] sm:$0xf]
      %v2278 = vld [vmem:[%s2247 + $0x78] sm:$0xf]
      %v2279 = vld [vmem:[%s2247 + $0x7c] sm:$0xf]
      %v2312 = vunpack.c.l.b16 %v2248
      %v2313 = vunpack.c.l.b16 %v2249
      %v2314 = vunpack.c.l.b16 %v2250
      %v2315 = vunpack.c.l.b16 %v2251
      %v2316 = vunpack.c.l.b16 %v2252
      %v2317 = vunpack.c.l.b16 %v2253
      %v2318 = vunpack.c.l.b16 %v2254
      %v2319 = vunpack.c.l.b16 %v2255
      %v2320 = vunpack.c.l.b16 %v2256
      %v2321 = vunpack.c.l.b16 %v2257
      %v2322 = vunpack.c.l.b16 %v2258
      %v2323 = vunpack.c.l.b16 %v2259
      %v2324 = vunpack.c.l.b16 %v2260
      %v2325 = vunpack.c.l.b16 %v2261
      %v2326 = vunpack.c.l.b16 %v2262
      %v2327 = vunpack.c.l.b16 %v2263
      %v2328 = vunpack.c.l.b16 %v2264
      %v2329 = vunpack.c.l.b16 %v2265
      %v2330 = vunpack.c.l.b16 %v2266
      %v2331 = vunpack.c.l.b16 %v2267
      %v2332 = vunpack.c.l.b16 %v2268
      %v2333 = vunpack.c.l.b16 %v2269
      %v2334 = vunpack.c.l.b16 %v2270
      %v2335 = vunpack.c.l.b16 %v2271
      %v2336 = vunpack.c.l.b16 %v2272
      %v2337 = vunpack.c.l.b16 %v2273
      %v2338 = vunpack.c.l.b16 %v2274
      %v2339 = vunpack.c.l.b16 %v2275
      %v2340 = vunpack.c.l.b16 %v2276
      %v2341 = vunpack.c.l.b16 %v2277
      %v2342 = vunpack.c.l.b16 %v2278
      %v2343 = vunpack.c.l.b16 %v2279
      %v2344 = vpack.c.b16 %v2313, %v2312
      %v2345 = vpack.c.b16 %v2315, %v2314
      %v2346 = vpack.c.b16 %v2317, %v2316
      %v2347 = vpack.c.b16 %v2319, %v2318
      %v2348 = vpack.c.b16 %v2321, %v2320
      %v2349 = vpack.c.b16 %v2323, %v2322
      %v2350 = vpack.c.b16 %v2325, %v2324
      %v2351 = vpack.c.b16 %v2327, %v2326
      %v2352 = vpack.c.b16 %v2329, %v2328
      %v2353 = vpack.c.b16 %v2331, %v2330
      %v2354 = vpack.c.b16 %v2333, %v2332
      %v2355 = vpack.c.b16 %v2335, %v2334
      %v2356 = vpack.c.b16 %v2337, %v2336
      %v2357 = vpack.c.b16 %v2339, %v2338
      %v2358 = vpack.c.b16 %v2341, %v2340
      %v2359 = vpack.c.b16 %v2343, %v2342
      %2376 = vmatprep.subr.bf16.mxu0 0
      %2377 = vmatpush1.bf16.msra.mxu0 %v2344
      %2378 = vmatprep.subr.bf16.mxu0 0
      %2379 = vmatpush1.bf16.msra.mxu0 %v2345
      %2380 = vmatprep.subr.bf16.mxu0 0
      %2381 = vmatpush1.bf16.msra.mxu0 %v2346
      %2382 = vmatprep.subr.bf16.mxu0 0
      %2383 = vmatpush1.bf16.msra.mxu0 %v2347
      %2384 = vmatprep.subr.bf16.mxu0 0
      %2385 = vmatpush1.bf16.msra.mxu0 %v2348
      %2386 = vmatprep.subr.bf16.mxu0 0
      %2387 = vmatpush1.bf16.msra.mxu0 %v2349
      %2388 = vmatprep.subr.bf16.mxu0 0
      %2389 = vmatpush1.bf16.msra.mxu0 %v2350
      %2390 = vmatprep.subr.bf16.mxu0 0
      %2391 = vmatpush1.bf16.msra.mxu0 %v2351
      %2392 = vmatprep.subr.bf16.mxu0 0
      %2393 = vmatpush1.bf16.msra.mxu0 %v2352
      %2394 = vmatprep.subr.bf16.mxu0 0
      %2395 = vmatpush1.bf16.msra.mxu0 %v2353
      %2396 = vmatprep.subr.bf16.mxu0 0
      %2397 = vmatpush1.bf16.msra.mxu0 %v2354
      %2398 = vmatprep.subr.bf16.mxu0 0
      %2399 = vmatpush1.bf16.msra.mxu0 %v2355
      %2400 = vmatprep.subr.bf16.mxu0 0
      %2401 = vmatpush1.bf16.msra.mxu0 %v2356
      %2402 = vmatprep.subr.bf16.mxu0 0
      %2403 = vmatpush1.bf16.msra.mxu0 %v2357
      %2404 = vmatprep.subr.bf16.mxu0 0
      %2405 = vmatpush1.bf16.msra.mxu0 %v2358
      %2406 = vmatprep.subr.bf16.mxu0 0
      %2407 = vmatpush1.bf16.msra.mxu0 %v2359
      %2408 = vmatprep.mubr.bf16.mxu0 %v875
      %2409 = vmatmul.mubr.bf16.gmra.mrb[0].mxu0 %v874
      %v2410 = vpop.f32.mrb[0].mxu0
      %v2411 = vadd.f32 0.0, %v2410
      %v2412 = vpop.f32.mrb[0].mxu0
      %v2413 = vpop.f32.mrb[0].mxu0
      %v2414 = vadd.f32 0.0, %v2413
      %v2415 = vpop.f32.mrb[0].mxu0
      %2416 = vdwg.mxu0
      %v2417 = vadd.f32 %v2245, %v2411
      %v2418 = vadd.f32 %v2246, %v2414
      %v2419 = vld [vmem:[%s3] sm:$0xff]
      %v2420 = vld [vmem:[%s3 + $0x8] sm:$0xff]
      %2422 = vset.pattern.permute.xlu0 0
      %2423 = vperm.xlu0 %2422, %v2419
      %v2424 = vpop.permute.xlu0 %2423
      %2427 = vset.pattern.permute.xlu0 0
      %2428 = vperm.xlu0 %2427, %v2420
      %v2429 = vpop.permute.xlu0 %2428
      %v2431 = vadd.f32 %v2417, %v2424
      %v2432 = vadd.f32 %v2418, %v2429
      %v2433 = vmax.f32 %v2431, 0.0
      %v2434 = vmax.f32 %v2432, 0.0
      %v2435 = vld [vmem:[%s5] sm:$0xff]
      %v2436 = vld [vmem:[%s5 + $0x8] sm:$0xff]
      %v2437 = vld [vmem:[%s5 + $0x10] sm:$0xff]
      %v2438 = vld [vmem:[%s5 + $0x18] sm:$0xff]
      %v2439 = vld [vmem:[%s5 + $0x20] sm:$0xff]
      %v2440 = vld [vmem:[%s5 + $0x28] sm:$0xff]
      %v2441 = vld [vmem:[%s5 + $0x30] sm:$0xff]
      %v2442 = vld [vmem:[%s5 + $0x38] sm:$0xff]
      %v2443 = vld [vmem:[%s5 + $0x40] sm:$0xff]
      %v2444 = vld [vmem:[%s5 + $0x48] sm:$0xff]
      %v2445 = vld [vmem:[%s5 + $0x50] sm:$0xff]
      %v2446 = vld [vmem:[%s5 + $0x58] sm:$0xff]
      %v2447 = vld [vmem:[%s5 + $0x60] sm:$0xff]
      %v2448 = vld [vmem:[%s5 + $0x68] sm:$0xff]
      %v2449 = vld [vmem:[%s5 + $0x70] sm:$0xff]
      %v2450 = vld [vmem:[%s5 + $0x78] sm:$0xff]
      %v2451 = vld [vmem:[%s5 + $0x80] sm:$0xff]
      %v2452 = vld [vmem:[%s5 + $0x88] sm:$0xff]
      %v2453 = vld [vmem:[%s5 + $0x90] sm:$0xff]
      %v2454 = vld [vmem:[%s5 + $0x98] sm:$0xff]
      %v2455 = vld [vmem:[%s5 + $0xa0] sm:$0xff]
      %v2456 = vld [vmem:[%s5 + $0xa8] sm:$0xff]
      %v2457 = vld [vmem:[%s5 + $0xb0] sm:$0xff]
      %v2458 = vld [vmem:[%s5 + $0xb8] sm:$0xff]
      %v2459 = vld [vmem:[%s5 + $0xc0] sm:$0xff]
      %v2460 = vld [vmem:[%s5 + $0xc8] sm:$0xff]
      %v2461 = vld [vmem:[%s5 + $0xd0] sm:$0xff]
      %v2462 = vld [vmem:[%s5 + $0xd8] sm:$0xff]
      %v2463 = vld [vmem:[%s5 + $0xe0] sm:$0xff]
      %v2464 = vld [vmem:[%s5 + $0xe8] sm:$0xff]
      %v2465 = vld [vmem:[%s5 + $0xf0] sm:$0xff]
      %v2466 = vld [vmem:[%s5 + $0xf8] sm:$0xff]
      %v2467 = vld [vmem:[%s5 + $0x100] sm:$0xff]
      %v2468 = vld [vmem:[%s5 + $0x108] sm:$0xff]
      %v2469 = vld [vmem:[%s5 + $0x110] sm:$0xff]
      %v2470 = vld [vmem:[%s5 + $0x118] sm:$0xff]
      %vm2471 = vcmask 130048
      %v2473 = vsel %vm2471, %v2435, 0
      %v2476 = vsel %vm2471, %v2436, 0
      %v2479 = vsel %vm2471, %v2437, 0
      %v2482 = vsel %vm2471, %v2438, 0
      %v2485 = vsel %vm2471, %v2439, 0
      %v2488 = vsel %vm2471, %v2440, 0
      %v2491 = vsel %vm2471, %v2441, 0
      %v2494 = vsel %vm2471, %v2442, 0
      %v2497 = vsel %vm2471, %v2443, 0
      %v2500 = vsel %vm2471, %v2444, 0
      %v2503 = vsel %vm2471, %v2445, 0
      %v2506 = vsel %vm2471, %v2446, 0
      %v2509 = vsel %vm2471, %v2447, 0
      %v2512 = vsel %vm2471, %v2448, 0
      %v2515 = vsel %vm2471, %v2449, 0
      %v2518 = vsel %vm2471, %v2450, 0
      %v2521 = vsel %vm2471, %v2451, 0
      %v2524 = vsel %vm2471, %v2452, 0
      %v2527 = vsel %vm2471, %v2453, 0
      %v2530 = vsel %vm2471, %v2454, 0
      %v2533 = vsel %vm2471, %v2455, 0
      %v2536 = vsel %vm2471, %v2456, 0
      %v2539 = vsel %vm2471, %v2457, 0
      %v2542 = vsel %vm2471, %v2458, 0
      %v2545 = vsel %vm2471, %v2459, 0
      %v2548 = vsel %vm2471, %v2460, 0
      %v2551 = vsel %vm2471, %v2461, 0
      %v2554 = vsel %vm2471, %v2462, 0
      %v2557 = vsel %vm2471, %v2463, 0
      %v2560 = vsel %vm2471, %v2464, 0
      %v2563 = vsel %vm2471, %v2465, 0
      %v2566 = vsel %vm2471, %v2466, 0
      %v2569 = vsel %vm2471, %v2467, 0
      %v2572 = vsel %vm2471, %v2468, 0
      %v2575 = vsel %vm2471, %v2469, 0
      %v2578 = vsel %vm2471, %v2470, 0
      %2580 = vmatprep.subr.mxu0 0.0
      %2581 = vmatpush1.msra.mxu0 %v2433
      %2582 = vmatprep.subr.mxu0 0.0
      %2583 = vmatpush1.msra.mxu0 %v2434
      %2584 = vmatprep.subr.mxu0 0.0
      %2585 = vmatpush1.msra.mxu0 0.0
      %2586 = vmatprep.subr.mxu0 0.0
      %2587 = vmatpush1.msra.mxu0 0.0
      %2588 = vmatprep.subr.mxu0 0.0
      %2589 = vmatpush1.msra.mxu0 0.0
      %2590 = vmatprep.subr.mxu0 0.0
      %2591 = vmatpush1.msra.mxu0 0.0
      %2592 = vmatprep.subr.mxu0 0.0
      %2593 = vmatpush1.msra.mxu0 0.0
      %2594 = vmatprep.subr.mxu0 0.0
      %2595 = vmatpush1.msra.mxu0 0.0
      %2596 = vmatprep.subr.mxu0 0.0
      %2597 = vmatpush1.msra.mxu0 0.0
      %2598 = vmatprep.subr.mxu0 0.0
      %2599 = vmatpush1.msra.mxu0 0.0
      %2600 = vmatprep.subr.mxu0 0.0
      %2601 = vmatpush1.msra.mxu0 0.0
      %2602 = vmatprep.subr.mxu0 0.0
      %2603 = vmatpush1.msra.mxu0 0.0
      %2604 = vmatprep.subr.mxu0 0.0
      %2605 = vmatpush1.msra.mxu0 0.0
      %2606 = vmatprep.subr.mxu0 0.0
      %2607 = vmatpush1.msra.mxu0 0.0
      %2608 = vmatprep.subr.mxu0 0.0
      %2609 = vmatpush1.msra.mxu0 0.0
      %2610 = vmatprep.subr.mxu0 0.0
      %2611 = vmatpush1.msra.mxu0 0.0
      %2612 = vmatprep.subr.mxu0 0.0
      %2613 = vmatpush1.msra.mxu0 0.0
      %2614 = vmatprep.subr.mxu0 0.0
      %2615 = vmatpush1.msra.mxu0 0.0
      %2616 = vmatprep.subr.mxu0 0.0
      %2617 = vmatpush1.msra.mxu0 0.0
      %2618 = vmatprep.subr.mxu0 0.0
      %2619 = vmatpush1.msra.mxu0 0.0
      %2620 = vmatprep.subr.mxu0 0.0
      %2621 = vmatpush1.msra.mxu0 0.0
      %2622 = vmatprep.subr.mxu0 0.0
      %2623 = vmatpush1.msra.mxu0 0.0
      %2624 = vmatprep.subr.mxu0 0.0
      %2625 = vmatpush1.msra.mxu0 0.0
      %2626 = vmatprep.subr.mxu0 0.0
      %2627 = vmatpush1.msra.mxu0 0.0
      %2628 = vmatprep.subr.mxu0 0.0
      %2629 = vmatpush1.msra.mxu0 0.0
      %2630 = vmatprep.subr.mxu0 0.0
      %2631 = vmatpush1.msra.mxu0 0.0
      %2632 = vmatprep.subr.mxu0 0.0
      %2633 = vmatpush1.msra.mxu0 0.0
      %2634 = vmatprep.subr.mxu0 0.0
      %2635 = vmatpush1.msra.mxu0 0.0
      %2636 = vmatprep.subr.mxu0 0.0
      %2637 = vmatpush1.msra.mxu0 0.0
      %2638 = vmatprep.subr.mxu0 0.0
      %2639 = vmatpush1.msra.mxu0 0.0
      %2640 = vmatprep.subr.mxu0 0.0
      %2641 = vmatpush1.msra.mxu0 0.0
      %2642 = vmatprep.subr.mxu0 0.0
      %2643 = vmatpush1.msra.mxu0 0.0
      %2644 = vmatprep.mubr.f32.mxu0 0.0
      %2645 = vmatmul.mubr.f32.gmra.mrb[0].mxu0 %v2473
      %v2646 = vpop.f32.mrb[0].mxu0
      %v2647 = vadd.f32 0.0, %v2646
      %v2648 = vpop.f32.mrb[0].mxu0
      %2649 = vmatprep.mubr.f32.mxu0 0.0
      %2650 = vmatmul.mubr.f32.gmra.mrb[0].mxu0 %v2476
      %v2651 = vpop.f32.mrb[0].mxu0
      %v2652 = vadd.f32 0.0, %v2651
      %v2653 = vpop.f32.mrb[0].mxu0
      %2654 = vmatprep.mubr.f32.mxu0 0.0
      %2655 = vmatmul.mubr.f32.gmra.mrb[0].mxu0 %v2479
      %v2656 = vpop.f32.mrb[0].mxu0
      %v2657 = vadd.f32 0.0, %v2656
      %v2658 = vpop.f32.mrb[0].mxu0
      %2659 = vmatprep.mubr.f32.mxu0 0.0
      %2660 = vmatmul.mubr.f32.gmra.mrb[0].mxu0 %v2482
      %v2661 = vpop.f32.mrb[0].mxu0
      %v2662 = vadd.f32 0.0, %v2661
      %v2663 = vpop.f32.mrb[0].mxu0
      %2664 = vmatprep.mubr.f32.mxu0 0.0
      %2665 = vmatmul.mubr.f32.gmra.mrb[0].mxu0 %v2485
      %v2666 = vpop.f32.mrb[0].mxu0
      %v2667 = vadd.f32 0.0, %v2666
      %v2668 = vpop.f32.mrb[0].mxu0
      %2669 = vmatprep.mubr.f32.mxu0 0.0
      %2670 = vmatmul.mubr.f32.gmra.mrb[0].mxu0 %v2488
      %v2671 = vpop.f32.mrb[0].mxu0
      %v2672 = vadd.f32 0.0, %v2671
      %v2673 = vpop.f32.mrb[0].mxu0
      %2674 = vmatprep.mubr.f32.mxu0 0.0
      %2675 = vmatmul.mubr.f32.gmra.mrb[0].mxu0 %v2491
      %v2676 = vpop.f32.mrb[0].mxu0
      %v2677 = vadd.f32 0.0, %v2676
      %v2678 = vpop.f32.mrb[0].mxu0
      %2679 = vmatprep.mubr.f32.mxu0 0.0
      %2680 = vmatmul.mubr.f32.gmra.mrb[0].mxu0 %v2494
      %v2681 = vpop.f32.mrb[0].mxu0
      %v2682 = vadd.f32 0.0, %v2681
      %v2683 = vpop.f32.mrb[0].mxu0
      %2684 = vmatprep.mubr.f32.mxu0 0.0
      %2685 = vmatmul.mubr.f32.gmra.mrb[0].mxu0 %v2497
      %v2686 = vpop.f32.mrb[0].mxu0
      %v2687 = vadd.f32 0.0, %v2686
      %v2688 = vpop.f32.mrb[0].mxu0
      %2689 = vmatprep.mubr.f32.mxu0 0.0
      %2690 = vmatmul.mubr.f32.gmra.mrb[0].mxu0 %v2500
      %v2691 = vpop.f32.mrb[0].mxu0
      %v2692 = vadd.f32 0.0, %v2691
      %v2693 = vpop.f32.mrb[0].mxu0
      %2694 = vmatprep.mubr.f32.mxu0 0.0
      %2695 = vmatmul.mubr.f32.gmra.mrb[0].mxu0 %v2503
      %v2696 = vpop.f32.mrb[0].mxu0
      %v2697 = vadd.f32 0.0, %v2696
      %v2698 = vpop.f32.mrb[0].mxu0
      %2699 = vmatprep.mubr.f32.mxu0 0.0
      %2700 = vmatmul.mubr.f32.gmra.mrb[0].mxu0 %v2506
      %v2701 = vpop.f32.mrb[0].mxu0
      %v2702 = vadd.f32 0.0, %v2701
      %v2703 = vpop.f32.mrb[0].mxu0
      %2704 = vmatprep.mubr.f32.mxu0 0.0
      %2705 = vmatmul.mubr.f32.gmra.mrb[0].mxu0 %v2509
      %v2706 = vpop.f32.mrb[0].mxu0
      %v2707 = vadd.f32 0.0, %v2706
      %v2708 = vpop.f32.mrb[0].mxu0
      %2709 = vmatprep.mubr.f32.mxu0 0.0
      %2710 = vmatmul.mubr.f32.gmra.mrb[0].mxu0 %v2512
      %v2711 = vpop.f32.mrb[0].mxu0
      %v2712 = vadd.f32 0.0, %v2711
      %v2713 = vpop.f32.mrb[0].mxu0
      %2714 = vmatprep.mubr.f32.mxu0 0.0
      %2715 = vmatmul.mubr.f32.gmra.mrb[0].mxu0 %v2515
      %v2716 = vpop.f32.mrb[0].mxu0
      %v2717 = vadd.f32 0.0, %v2716
      %v2718 = vpop.f32.mrb[0].mxu0
      %2719 = vmatprep.mubr.f32.mxu0 0.0
      %2720 = vmatmul.mubr.f32.gmra.mrb[0].mxu0 %v2518
      %v2721 = vpop.f32.mrb[0].mxu0
      %v2722 = vadd.f32 0.0, %v2721
      %v2723 = vpop.f32.mrb[0].mxu0
      %2724 = vmatprep.mubr.f32.mxu0 0.0
      %2725 = vmatmul.mubr.f32.gmra.mrb[0].mxu0 %v2521
      %v2726 = vpop.f32.mrb[0].mxu0
      %v2727 = vadd.f32 0.0, %v2726
      %v2728 = vpop.f32.mrb[0].mxu0
      %2729 = vmatprep.mubr.f32.mxu0 0.0
      %2730 = vmatmul.mubr.f32.gmra.mrb[0].mxu0 %v2524
      %v2731 = vpop.f32.mrb[0].mxu0
      %v2732 = vadd.f32 0.0, %v2731
      %v2733 = vpop.f32.mrb[0].mxu0
      %2734 = vmatprep.mubr.f32.mxu0 0.0
      %2735 = vmatmul.mubr.f32.gmra.mrb[0].mxu0 %v2527
      %v2736 = vpop.f32.mrb[0].mxu0
      %v2737 = vadd.f32 0.0, %v2736
      %v2738 = vpop.f32.mrb[0].mxu0
      %2739 = vmatprep.mubr.f32.mxu0 0.0
      %2740 = vmatmul.mubr.f32.gmra.mrb[0].mxu0 %v2530
      %v2741 = vpop.f32.mrb[0].mxu0
      %v2742 = vadd.f32 0.0, %v2741
      %v2743 = vpop.f32.mrb[0].mxu0
      %2744 = vmatprep.mubr.f32.mxu0 0.0
      %2745 = vmatmul.mubr.f32.gmra.mrb[0].mxu0 %v2533
      %v2746 = vpop.f32.mrb[0].mxu0
      %v2747 = vadd.f32 0.0, %v2746
      %v2748 = vpop.f32.mrb[0].mxu0
      %2749 = vmatprep.mubr.f32.mxu0 0.0
      %2750 = vmatmul.mubr.f32.gmra.mrb[0].mxu0 %v2536
      %v2751 = vpop.f32.mrb[0].mxu0
      %v2752 = vadd.f32 0.0, %v2751
      %v2753 = vpop.f32.mrb[0].mxu0
      %2754 = vmatprep.mubr.f32.mxu0 0.0
      %2755 = vmatmul.mubr.f32.gmra.mrb[0].mxu0 %v2539
      %v2756 = vpop.f32.mrb[0].mxu0
      %v2757 = vadd.f32 0.0, %v2756
      %v2758 = vpop.f32.mrb[0].mxu0
      %2759 = vmatprep.mubr.f32.mxu0 0.0
      %2760 = vmatmul.mubr.f32.gmra.mrb[0].mxu0 %v2542
      %v2761 = vpop.f32.mrb[0].mxu0
      %v2762 = vadd.f32 0.0, %v2761
      %v2763 = vpop.f32.mrb[0].mxu0
      %2764 = vmatprep.mubr.f32.mxu0 0.0
      %2765 = vmatmul.mubr.f32.gmra.mrb[0].mxu0 %v2545
      %v2766 = vpop.f32.mrb[0].mxu0
      %v2767 = vadd.f32 0.0, %v2766
      %v2768 = vpop.f32.mrb[0].mxu0
      %2769 = vmatprep.mubr.f32.mxu0 0.0
      %2770 = vmatmul.mubr.f32.gmra.mrb[0].mxu0 %v2548
      %v2771 = vpop.f32.mrb[0].mxu0
      %v2772 = vadd.f32 0.0, %v2771
      %v2773 = vpop.f32.mrb[0].mxu0
      %2774 = vmatprep.mubr.f32.mxu0 0.0
      %2775 = vmatmul.mubr.f32.gmra.mrb[0].mxu0 %v2551
      %v2776 = vpop.f32.mrb[0].mxu0
      %v2777 = vadd.f32 0.0, %v2776
      %v2778 = vpop.f32.mrb[0].mxu0
      %2779 = vmatprep.mubr.f32.mxu0 0.0
      %2780 = vmatmul.mubr.f32.gmra.mrb[0].mxu0 %v2554
      %v2781 = vpop.f32.mrb[0].mxu0
      %v2782 = vadd.f32 0.0, %v2781
      %v2783 = vpop.f32.mrb[0].mxu0
      %2784 = vmatprep.mubr.f32.mxu0 0.0
      %2785 = vmatmul.mubr.f32.gmra.mrb[0].mxu0 %v2557
      %v2786 = vpop.f32.mrb[0].mxu0
      %v2787 = vadd.f32 0.0, %v2786
      %v2788 = vpop.f32.mrb[0].mxu0
      %2789 = vmatprep.mubr.f32.mxu0 0.0
      %2790 = vmatmul.mubr.f32.gmra.mrb[0].mxu0 %v2560
      %v2791 = vpop.f32.mrb[0].mxu0
      %v2792 = vadd.f32 0.0, %v2791
      %v2793 = vpop.f32.mrb[0].mxu0
      %2794 = vmatprep.mubr.f32.mxu0 0.0
      %2795 = vmatmul.mubr.f32.gmra.mrb[0].mxu0 %v2563
      %v2796 = vpop.f32.mrb[0].mxu0
      %v2797 = vadd.f32 0.0, %v2796
      %v2798 = vpop.f32.mrb[0].mxu0
      %2799 = vmatprep.mubr.f32.mxu0 0.0
      %2800 = vmatmul.mubr.f32.gmra.mrb[0].mxu0 %v2566
      %v2801 = vpop.f32.mrb[0].mxu0
      %v2802 = vadd.f32 0.0, %v2801
      %v2803 = vpop.f32.mrb[0].mxu0
      %2804 = vmatprep.mubr.f32.mxu0 0.0
      %2805 = vmatmul.mubr.f32.gmra.mrb[0].mxu0 %v2569
      %v2806 = vpop.f32.mrb[0].mxu0
      %v2807 = vadd.f32 0.0, %v2806
      %v2808 = vpop.f32.mrb[0].mxu0
      %2809 = vmatprep.mubr.f32.mxu0 0.0
      %2810 = vmatmul.mubr.f32.gmra.mrb[0].mxu0 %v2572
      %v2811 = vpop.f32.mrb[0].mxu0
      %v2812 = vadd.f32 0.0, %v2811
      %v2813 = vpop.f32.mrb[0].mxu0
      %2814 = vmatprep.mubr.f32.mxu0 0.0
      %2815 = vmatmul.mubr.f32.gmra.mrb[0].mxu0 %v2575
      %v2816 = vpop.f32.mrb[0].mxu0
      %v2817 = vadd.f32 0.0, %v2816
      %v2818 = vpop.f32.mrb[0].mxu0
      %2819 = vmatprep.mubr.f32.mxu0 0.0
      %2820 = vmatmul.mubr.f32.gmra.mrb[0].mxu0 %v2578
      %v2821 = vpop.f32.mrb[0].mxu0
      %v2822 = vadd.f32 0.0, %v2821
      %v2823 = vpop.f32.mrb[0].mxu0
      %2824 = vdwg.mxu0
      %v2825 = vpack.c.bf16 %v2652, %v2647
      %v2826 = vpack.c.bf16 %v2662, %v2657
      %v2827 = vpack.c.bf16 %v2672, %v2667
      %v2828 = vpack.c.bf16 %v2682, %v2677
      %v2829 = vpack.c.bf16 %v2692, %v2687
      %v2830 = vpack.c.bf16 %v2702, %v2697
      %v2831 = vpack.c.bf16 %v2712, %v2707
      %v2832 = vpack.c.bf16 %v2722, %v2717
      %v2833 = vpack.c.bf16 %v2732, %v2727
      %v2834 = vpack.c.bf16 %v2742, %v2737
      %v2835 = vpack.c.bf16 %v2752, %v2747
      %v2836 = vpack.c.bf16 %v2762, %v2757
      %v2837 = vpack.c.bf16 %v2772, %v2767
      %v2838 = vpack.c.bf16 %v2782, %v2777
      %v2839 = vpack.c.bf16 %v2792, %v2787
      %v2840 = vpack.c.bf16 %v2802, %v2797
      %v2841 = vpack.c.bf16 %v2812, %v2807
      %v2842 = vpack.c.bf16 %v2822, %v2817
      %v2843 = vld [vmem:[%s4] sm:$0xf]
      %v2844 = vld [vmem:[%s4 + $0x4] sm:$0xf]
      %v2845 = vld [vmem:[%s4 + $0x8] sm:$0xf]
      %v2846 = vld [vmem:[%s4 + $0xc] sm:$0xf]
      %v2847 = vld [vmem:[%s4 + $0x10] sm:$0xf]
      %v2848 = vld [vmem:[%s4 + $0x14] sm:$0xf]
      %v2849 = vld [vmem:[%s4 + $0x18] sm:$0xf]
      %v2850 = vld [vmem:[%s4 + $0x1c] sm:$0xf]
      %s2851 = scalar_lea.vmem %s4, 32
      %v2852 = vld [vmem:[%s2851] sm:$0xf]
      %v2853 = vld [vmem:[%s2851 + $0x4] sm:$0xf]
      %v2854 = vld [vmem:[%s2851 + $0x8] sm:$0xf]
      %v2855 = vld [vmem:[%s2851 + $0xc] sm:$0xf]
      %v2856 = vld [vmem:[%s2851 + $0x10] sm:$0xf]
      %v2857 = vld [vmem:[%s2851 + $0x14] sm:$0xf]
      %v2858 = vld [vmem:[%s2851 + $0x18] sm:$0xf]
      %v2859 = vld [vmem:[%s2851 + $0x1c] sm:$0xf]
      %v2868 = vunpack.c.l.b16 %v2852
      %v2869 = vunpack.c.l.b16 %v2853
      %v2870 = vunpack.c.l.b16 %v2854
      %v2871 = vunpack.c.l.b16 %v2855
      %v2872 = vunpack.c.l.b16 %v2856
      %v2873 = vunpack.c.l.b16 %v2857
      %v2874 = vunpack.c.l.b16 %v2858
      %v2875 = vunpack.c.l.b16 %v2859
      %v2876 = vpack.c.b16 %v2869, %v2868
      %v2877 = vpack.c.b16 %v2871, %v2870
      %v2878 = vpack.c.b16 %v2873, %v2872
      %v2879 = vpack.c.b16 %v2875, %v2874
      %vm2884 = vcmask 523264
      %v2886 = vsel %vm2884, %v2827, 0
      %v2889 = vsel %vm2884, %v2828, 0
      %2891 = vmatprep.subr.bf16.mxu0 0
      %2892 = vmatpush1.bf16.msra.mxu0 %v2876
      %2893 = vmatprep.subr.bf16.mxu0 0
      %2894 = vmatpush1.bf16.msra.mxu0 %v2877
      %2895 = vmatprep.subr.bf16.mxu0 0
      %2896 = vmatpush1.bf16.msra.mxu0 %v2878
      %2897 = vmatprep.subr.bf16.mxu0 0
      %2898 = vmatpush1.bf16.msra.mxu0 %v2879
      %2899 = vmatprep.subr.bf16.mxu0 0
      %2900 = vmatpush1.bf16.msra.mxu0 0
      %2901 = vmatprep.subr.bf16.mxu0 0
      %2902 = vmatpush1.bf16.msra.mxu0 0
      %2903 = vmatprep.subr.bf16.mxu0 0
      %2904 = vmatpush1.bf16.msra.mxu0 0
      %2905 = vmatprep.subr.bf16.mxu0 0
      %2906 = vmatpush1.bf16.msra.mxu0 0
      %2907 = vmatprep.subr.bf16.mxu0 0
      %2908 = vmatpush1.bf16.msra.mxu0 0
      %2909 = vmatprep.subr.bf16.mxu0 0
      %2910 = vmatpush1.bf16.msra.mxu0 0
      %2911 = vmatprep.subr.bf16.mxu0 0
      %2912 = vmatpush1.bf16.msra.mxu0 0
      %2913 = vmatprep.subr.bf16.mxu0 0
      %2914 = vmatpush1.bf16.msra.mxu0 0
      %2915 = vmatprep.subr.bf16.mxu0 0
      %2916 = vmatpush1.bf16.msra.mxu0 0
      %2917 = vmatprep.subr.bf16.mxu0 0
      %2918 = vmatpush1.bf16.msra.mxu0 0
      %2919 = vmatprep.subr.bf16.mxu0 0
      %2920 = vmatpush1.bf16.msra.mxu0 0
      %2921 = vmatprep.subr.bf16.mxu0 0
      %2922 = vmatpush1.bf16.msra.mxu0 0
      %2923 = vmatprep.mubr.bf16.mxu0 0
      %2924 = vmatmul.mubr.bf16.gmra.mrb[0].mxu0 %v2886
      %v2925 = vpop.f32.mrb[0].mxu0
      %v2926 = vadd.f32 0.0, %v2925
      %v2927 = vpop.f32.mrb[0].mxu0
      %v2928 = vpop.f32.mrb[0].mxu0
      %v2929 = vadd.f32 0.0, %v2928
      %v2930 = vpop.f32.mrb[0].mxu0
      %2931 = vmatprep.mubr.bf16.mxu0 0
      %2932 = vmatmul.mubr.bf16.gmra.mrb[0].mxu0 %v2889
      %v2933 = vpop.f32.mrb[0].mxu0
      %v2934 = vadd.f32 0.0, %v2933
      %v2935 = vpop.f32.mrb[0].mxu0
      %v2936 = vpop.f32.mrb[0].mxu0
      %v2937 = vadd.f32 0.0, %v2936
      %v2938 = vpop.f32.mrb[0].mxu0
      %2939 = vdwg.mxu0
      %v2948 = vunpack.c.l.b16 %v2843
      %v2949 = vunpack.c.l.b16 %v2844
      %v2950 = vunpack.c.l.b16 %v2845
      %v2951 = vunpack.c.l.b16 %v2846
      %v2952 = vunpack.c.l.b16 %v2847
      %v2953 = vunpack.c.l.b16 %v2848
      %v2954 = vunpack.c.l.b16 %v2849
      %v2955 = vunpack.c.l.b16 %v2850
      %v2956 = vpack.c.b16 %v2949, %v2948
      %v2957 = vpack.c.b16 %v2951, %v2950
      %v2958 = vpack.c.b16 %v2953, %v2952
      %v2959 = vpack.c.b16 %v2955, %v2954
      %v2965 = vsel %vm2884, %v2825, 0
      %v2968 = vsel %vm2884, %v2826, 0
      %2970 = vmatprep.subr.bf16.mxu0 0
      %2971 = vmatpush1.bf16.msra.mxu0 %v2956
      %2972 = vmatprep.subr.bf16.mxu0 0
      %2973 = vmatpush1.bf16.msra.mxu0 %v2957
      %2974 = vmatprep.subr.bf16.mxu0 0
      %2975 = vmatpush1.bf16.msra.mxu0 %v2958
      %2976 = vmatprep.subr.bf16.mxu0 0
      %2977 = vmatpush1.bf16.msra.mxu0 %v2959
      %2978 = vmatprep.subr.bf16.mxu0 0
      %2979 = vmatpush1.bf16.msra.mxu0 0
      %2980 = vmatprep.subr.bf16.mxu0 0
      %2981 = vmatpush1.bf16.msra.mxu0 0
      %2982 = vmatprep.subr.bf16.mxu0 0
      %2983 = vmatpush1.bf16.msra.mxu0 0
      %2984 = vmatprep.subr.bf16.mxu0 0
      %2985 = vmatpush1.bf16.msra.mxu0 0
      %2986 = vmatprep.subr.bf16.mxu0 0
      %2987 = vmatpush1.bf16.msra.mxu0 0
      %2988 = vmatprep.subr.bf16.mxu0 0
      %2989 = vmatpush1.bf16.msra.mxu0 0
      %2990 = vmatprep.subr.bf16.mxu0 0
      %2991 = vmatpush1.bf16.msra.mxu0 0
      %2992 = vmatprep.subr.bf16.mxu0 0
      %2993 = vmatpush1.bf16.msra.mxu0 0
      %2994 = vmatprep.subr.bf16.mxu0 0
      %2995 = vmatpush1.bf16.msra.mxu0 0
      %2996 = vmatprep.subr.bf16.mxu0 0
      %2997 = vmatpush1.bf16.msra.mxu0 0
      %2998 = vmatprep.subr.bf16.mxu0 0
      %2999 = vmatpush1.bf16.msra.mxu0 0
      %3000 = vmatprep.subr.bf16.mxu0 0
      %3001 = vmatpush1.bf16.msra.mxu0 0
      %3002 = vmatprep.mubr.bf16.mxu0 0
      %3003 = vmatmul.mubr.bf16.gmra.mrb[0].mxu0 %v2965
      %v3004 = vpop.f32.mrb[0].mxu0
      %v3005 = vadd.f32 %v2926, %v3004
      %v3006 = vpop.f32.mrb[0].mxu0
      %v3007 = vpop.f32.mrb[0].mxu0
      %v3008 = vadd.f32 %v2929, %v3007
      %v3009 = vpop.f32.mrb[0].mxu0
      %3010 = vmatprep.mubr.bf16.mxu0 0
      %3011 = vmatmul.mubr.bf16.gmra.mrb[0].mxu0 %v2968
      %v3012 = vpop.f32.mrb[0].mxu0
      %v3013 = vadd.f32 %v2934, %v3012
      %v3014 = vpop.f32.mrb[0].mxu0
      %v3015 = vpop.f32.mrb[0].mxu0
      %v3016 = vadd.f32 %v2937, %v3015
      %v3017 = vpop.f32.mrb[0].mxu0
      %3018 = vdwg.mxu0
      %s3019 = scalar_lea.vmem %s4, 64
      %v3020 = vld [vmem:[%s3019] sm:$0xf]
      %v3021 = vld [vmem:[%s3019 + $0x4] sm:$0xf]
      %v3022 = vld [vmem:[%s3019 + $0x8] sm:$0xf]
      %v3023 = vld [vmem:[%s3019 + $0xc] sm:$0xf]
      %v3024 = vld [vmem:[%s3019 + $0x10] sm:$0xf]
      %v3025 = vld [vmem:[%s3019 + $0x14] sm:$0xf]
      %v3026 = vld [vmem:[%s3019 + $0x18] sm:$0xf]
      %v3027 = vld [vmem:[%s3019 + $0x1c] sm:$0xf]
      %v3036 = vunpack.c.l.b16 %v3020
      %v3037 = vunpack.c.l.b16 %v3021
      %v3038 = vunpack.c.l.b16 %v3022
      %v3039 = vunpack.c.l.b16 %v3023
      %v3040 = vunpack.c.l.b16 %v3024
      %v3041 = vunpack.c.l.b16 %v3025
      %v3042 = vunpack.c.l.b16 %v3026
      %v3043 = vunpack.c.l.b16 %v3027
      %v3044 = vpack.c.b16 %v3037, %v3036
      %v3045 = vpack.c.b16 %v3039, %v3038
      %v3046 = vpack.c.b16 %v3041, %v3040
      %v3047 = vpack.c.b16 %v3043, %v3042
      %v3053 = vsel %vm2884, %v2829, 0
      %v3056 = vsel %vm2884, %v2830, 0
      %3058 = vmatprep.subr.bf16.mxu0 0
      %3059 = vmatpush1.bf16.msra.mxu0 %v3044
      %3060 = vmatprep.subr.bf16.mxu0 0
      %3061 = vmatpush1.bf16.msra.mxu0 %v3045
      %3062 = vmatprep.subr.bf16.mxu0 0
      %3063 = vmatpush1.bf16.msra.mxu0 %v3046
      %3064 = vmatprep.subr.bf16.mxu0 0
      %3065 = vmatpush1.bf16.msra.mxu0 %v3047
      %3066 = vmatprep.subr.bf16.mxu0 0
      %3067 = vmatpush1.bf16.msra.mxu0 0
      %3068 = vmatprep.subr.bf16.mxu0 0
      %3069 = vmatpush1.bf16.msra.mxu0 0
      %3070 = vmatprep.subr.bf16.mxu0 0
      %3071 = vmatpush1.bf16.msra.mxu0 0
      %3072 = vmatprep.subr.bf16.mxu0 0
      %3073 = vmatpush1.bf16.msra.mxu0 0
      %3074 = vmatprep.subr.bf16.mxu0 0
      %3075 = vmatpush1.bf16.msra.mxu0 0
      %3076 = vmatprep.subr.bf16.mxu0 0
      %3077 = vmatpush1.bf16.msra.mxu0 0
      %3078 = vmatprep.subr.bf16.mxu0 0
      %3079 = vmatpush1.bf16.msra.mxu0 0
      %3080 = vmatprep.subr.bf16.mxu0 0
      %3081 = vmatpush1.bf16.msra.mxu0 0
      %3082 = vmatprep.subr.bf16.mxu0 0
      %3083 = vmatpush1.bf16.msra.mxu0 0
      %3084 = vmatprep.subr.bf16.mxu0 0
      %3085 = vmatpush1.bf16.msra.mxu0 0
      %3086 = vmatprep.subr.bf16.mxu0 0
      %3087 = vmatpush1.bf16.msra.mxu0 0
      %3088 = vmatprep.subr.bf16.mxu0 0
      %3089 = vmatpush1.bf16.msra.mxu0 0
      %3090 = vmatprep.mubr.bf16.mxu0 0
      %3091 = vmatmul.mubr.bf16.gmra.mrb[0].mxu0 %v3053
      %v3092 = vpop.f32.mrb[0].mxu0
      %v3093 = vadd.f32 0.0, %v3092
      %v3094 = vpop.f32.mrb[0].mxu0
      %v3095 = vpop.f32.mrb[0].mxu0
      %v3096 = vadd.f32 0.0, %v3095
      %v3097 = vpop.f32.mrb[0].mxu0
      %3098 = vmatprep.mubr.bf16.mxu0 0
      %3099 = vmatmul.mubr.bf16.gmra.mrb[0].mxu0 %v3056
      %v3100 = vpop.f32.mrb[0].mxu0
      %v3101 = vadd.f32 0.0, %v3100
      %v3102 = vpop.f32.mrb[0].mxu0
      %v3103 = vpop.f32.mrb[0].mxu0
      %v3104 = vadd.f32 0.0, %v3103
      %v3105 = vpop.f32.mrb[0].mxu0
      %3106 = vdwg.mxu0
      %v3107 = vadd.f32 %v3005, %v3093
      %v3108 = vadd.f32 %v3008, %v3096
      %v3109 = vadd.f32 %v3013, %v3101
      %v3110 = vadd.f32 %v3016, %v3104
      %s3111 = scalar_lea.vmem %s4, 96
      %v3112 = vld [vmem:[%s3111] sm:$0xf]
      %v3113 = vld [vmem:[%s3111 + $0x4] sm:$0xf]
      %v3114 = vld [vmem:[%s3111 + $0x8] sm:$0xf]
      %v3115 = vld [vmem:[%s3111 + $0xc] sm:$0xf]
      %v3116 = vld [vmem:[%s3111 + $0x10] sm:$0xf]
      %v3117 = vld [vmem:[%s3111 + $0x14] sm:$0xf]
      %v3118 = vld [vmem:[%s3111 + $0x18] sm:$0xf]
      %v3119 = vld [vmem:[%s3111 + $0x1c] sm:$0xf]
      %v3128 = vunpack.c.l.b16 %v3112
      %v3129 = vunpack.c.l.b16 %v3113
      %v3130 = vunpack.c.l.b16 %v3114
      %v3131 = vunpack.c.l.b16 %v3115
      %v3132 = vunpack.c.l.b16 %v3116
      %v3133 = vunpack.c.l.b16 %v3117
      %v3134 = vunpack.c.l.b16 %v3118
      %v3135 = vunpack.c.l.b16 %v3119
      %v3136 = vpack.c.b16 %v3129, %v3128
      %v3137 = vpack.c.b16 %v3131, %v3130
      %v3138 = vpack.c.b16 %v3133, %v3132
      %v3139 = vpack.c.b16 %v3135, %v3134
      %v3145 = vsel %vm2884, %v2831, 0
      %v3148 = vsel %vm2884, %v2832, 0
      %3150 = vmatprep.subr.bf16.mxu0 0
      %3151 = vmatpush1.bf16.msra.mxu0 %v3136
      %3152 = vmatprep.subr.bf16.mxu0 0
      %3153 = vmatpush1.bf16.msra.mxu0 %v3137
      %3154 = vmatprep.subr.bf16.mxu0 0
      %3155 = vmatpush1.bf16.msra.mxu0 %v3138
      %3156 = vmatprep.subr.bf16.mxu0 0
      %3157 = vmatpush1.bf16.msra.mxu0 %v3139
      %3158 = vmatprep.subr.bf16.mxu0 0
      %3159 = vmatpush1.bf16.msra.mxu0 0
      %3160 = vmatprep.subr.bf16.mxu0 0
      %3161 = vmatpush1.bf16.msra.mxu0 0
      %3162 = vmatprep.subr.bf16.mxu0 0
      %3163 = vmatpush1.bf16.msra.mxu0 0
      %3164 = vmatprep.subr.bf16.mxu0 0
      %3165 = vmatpush1.bf16.msra.mxu0 0
      %3166 = vmatprep.subr.bf16.mxu0 0
      %3167 = vmatpush1.bf16.msra.mxu0 0
      %3168 = vmatprep.subr.bf16.mxu0 0
      %3169 = vmatpush1.bf16.msra.mxu0 0
      %3170 = vmatprep.subr.bf16.mxu0 0
      %3171 = vmatpush1.bf16.msra.mxu0 0
      %3172 = vmatprep.subr.bf16.mxu0 0
      %3173 = vmatpush1.bf16.msra.mxu0 0
      %3174 = vmatprep.subr.bf16.mxu0 0
      %3175 = vmatpush1.bf16.msra.mxu0 0
      %3176 = vmatprep.subr.bf16.mxu0 0
      %3177 = vmatpush1.bf16.msra.mxu0 0
      %3178 = vmatprep.subr.bf16.mxu0 0
      %3179 = vmatpush1.bf16.msra.mxu0 0
      %3180 = vmatprep.subr.bf16.mxu0 0
      %3181 = vmatpush1.bf16.msra.mxu0 0
      %3182 = vmatprep.mubr.bf16.mxu0 0
      %3183 = vmatmul.mubr.bf16.gmra.mrb[0].mxu0 %v3145
      %v3184 = vpop.f32.mrb[0].mxu0
      %v3185 = vadd.f32 0.0, %v3184
      %v3186 = vpop.f32.mrb[0].mxu0
      %v3187 = vpop.f32.mrb[0].mxu0
      %v3188 = vadd.f32 0.0, %v3187
      %v3189 = vpop.f32.mrb[0].mxu0
      %3190 = vmatprep.mubr.bf16.mxu0 0
      %3191 = vmatmul.mubr.bf16.gmra.mrb[0].mxu0 %v3148
      %v3192 = vpop.f32.mrb[0].mxu0
      %v3193 = vadd.f32 0.0, %v3192
      %v3194 = vpop.f32.mrb[0].mxu0
      %v3195 = vpop.f32.mrb[0].mxu0
      %v3196 = vadd.f32 0.0, %v3195
      %v3197 = vpop.f32.mrb[0].mxu0
      %3198 = vdwg.mxu0
      %v3199 = vadd.f32 %v3107, %v3185
      %v3200 = vadd.f32 %v3108, %v3188
      %v3201 = vadd.f32 %v3109, %v3193
      %v3202 = vadd.f32 %v3110, %v3196
      %s3203 = scalar_lea.vmem %s4, 128
      %v3204 = vld [vmem:[%s3203] sm:$0xf]
      %v3205 = vld [vmem:[%s3203 + $0x4] sm:$0xf]
      %v3206 = vld [vmem:[%s3203 + $0x8] sm:$0xf]
      %v3207 = vld [vmem:[%s3203 + $0xc] sm:$0xf]
      %v3208 = vld [vmem:[%s3203 + $0x10] sm:$0xf]
      %v3209 = vld [vmem:[%s3203 + $0x14] sm:$0xf]
      %v3210 = vld [vmem:[%s3203 + $0x18] sm:$0xf]
      %v3211 = vld [vmem:[%s3203 + $0x1c] sm:$0xf]
      %v3220 = vunpack.c.l.b16 %v3204
      %v3221 = vunpack.c.l.b16 %v3205
      %v3222 = vunpack.c.l.b16 %v3206
      %v3223 = vunpack.c.l.b16 %v3207
      %v3224 = vunpack.c.l.b16 %v3208
      %v3225 = vunpack.c.l.b16 %v3209
      %v3226 = vunpack.c.l.b16 %v3210
      %v3227 = vunpack.c.l.b16 %v3211
      %v3228 = vpack.c.b16 %v3221, %v3220
      %v3229 = vpack.c.b16 %v3223, %v3222
      %v3230 = vpack.c.b16 %v3225, %v3224
      %v3231 = vpack.c.b16 %v3227, %v3226
      %v3237 = vsel %vm2884, %v2833, 0
      %v3240 = vsel %vm2884, %v2834, 0
      %3242 = vmatprep.subr.bf16.mxu0 0
      %3243 = vmatpush1.bf16.msra.mxu0 %v3228
      %3244 = vmatprep.subr.bf16.mxu0 0
      %3245 = vmatpush1.bf16.msra.mxu0 %v3229
      %3246 = vmatprep.subr.bf16.mxu0 0
      %3247 = vmatpush1.bf16.msra.mxu0 %v3230
      %3248 = vmatprep.subr.bf16.mxu0 0
      %3249 = vmatpush1.bf16.msra.mxu0 %v3231
      %3250 = vmatprep.subr.bf16.mxu0 0
      %3251 = vmatpush1.bf16.msra.mxu0 0
      %3252 = vmatprep.subr.bf16.mxu0 0
      %3253 = vmatpush1.bf16.msra.mxu0 0
      %3254 = vmatprep.subr.bf16.mxu0 0
      %3255 = vmatpush1.bf16.msra.mxu0 0
      %3256 = vmatprep.subr.bf16.mxu0 0
      %3257 = vmatpush1.bf16.msra.mxu0 0
      %3258 = vmatprep.subr.bf16.mxu0 0
      %3259 = vmatpush1.bf16.msra.mxu0 0
      %3260 = vmatprep.subr.bf16.mxu0 0
      %3261 = vmatpush1.bf16.msra.mxu0 0
      %3262 = vmatprep.subr.bf16.mxu0 0
      %3263 = vmatpush1.bf16.msra.mxu0 0
      %3264 = vmatprep.subr.bf16.mxu0 0
      %3265 = vmatpush1.bf16.msra.mxu0 0
      %3266 = vmatprep.subr.bf16.mxu0 0
      %3267 = vmatpush1.bf16.msra.mxu0 0
      %3268 = vmatprep.subr.bf16.mxu0 0
      %3269 = vmatpush1.bf16.msra.mxu0 0
      %3270 = vmatprep.subr.bf16.mxu0 0
      %3271 = vmatpush1.bf16.msra.mxu0 0
      %3272 = vmatprep.subr.bf16.mxu0 0
      %3273 = vmatpush1.bf16.msra.mxu0 0
      %3274 = vmatprep.mubr.bf16.mxu0 0
      %3275 = vmatmul.mubr.bf16.gmra.mrb[0].mxu0 %v3237
      %v3276 = vpop.f32.mrb[0].mxu0
      %v3277 = vadd.f32 0.0, %v3276
      %v3278 = vpop.f32.mrb[0].mxu0
      %v3279 = vpop.f32.mrb[0].mxu0
      %v3280 = vadd.f32 0.0, %v3279
      %v3281 = vpop.f32.mrb[0].mxu0
      %3282 = vmatprep.mubr.bf16.mxu0 0
      %3283 = vmatmul.mubr.bf16.gmra.mrb[0].mxu0 %v3240
      %v3284 = vpop.f32.mrb[0].mxu0
      %v3285 = vadd.f32 0.0, %v3284
      %v3286 = vpop.f32.mrb[0].mxu0
      %v3287 = vpop.f32.mrb[0].mxu0
      %v3288 = vadd.f32 0.0, %v3287
      %v3289 = vpop.f32.mrb[0].mxu0
      %3290 = vdwg.mxu0
      %v3291 = vadd.f32 %v3199, %v3277
      %v3292 = vadd.f32 %v3200, %v3280
      %v3293 = vadd.f32 %v3201, %v3285
      %v3294 = vadd.f32 %v3202, %v3288
      %s3295 = scalar_lea.vmem %s4, 160
      %v3296 = vld [vmem:[%s3295] sm:$0xf]
      %v3297 = vld [vmem:[%s3295 + $0x4] sm:$0xf]
      %v3298 = vld [vmem:[%s3295 + $0x8] sm:$0xf]
      %v3299 = vld [vmem:[%s3295 + $0xc] sm:$0xf]
      %v3300 = vld [vmem:[%s3295 + $0x10] sm:$0xf]
      %v3301 = vld [vmem:[%s3295 + $0x14] sm:$0xf]
      %v3302 = vld [vmem:[%s3295 + $0x18] sm:$0xf]
      %v3303 = vld [vmem:[%s3295 + $0x1c] sm:$0xf]
      %v3312 = vunpack.c.l.b16 %v3296
      %v3313 = vunpack.c.l.b16 %v3297
      %v3314 = vunpack.c.l.b16 %v3298
      %v3315 = vunpack.c.l.b16 %v3299
      %v3316 = vunpack.c.l.b16 %v3300
      %v3317 = vunpack.c.l.b16 %v3301
      %v3318 = vunpack.c.l.b16 %v3302
      %v3319 = vunpack.c.l.b16 %v3303
      %v3320 = vpack.c.b16 %v3313, %v3312
      %v3321 = vpack.c.b16 %v3315, %v3314
      %v3322 = vpack.c.b16 %v3317, %v3316
      %v3323 = vpack.c.b16 %v3319, %v3318
      %v3329 = vsel %vm2884, %v2835, 0
      %v3332 = vsel %vm2884, %v2836, 0
      %3334 = vmatprep.subr.bf16.mxu0 0
      %3335 = vmatpush1.bf16.msra.mxu0 %v3320
      %3336 = vmatprep.subr.bf16.mxu0 0
      %3337 = vmatpush1.bf16.msra.mxu0 %v3321
      %3338 = vmatprep.subr.bf16.mxu0 0
      %3339 = vmatpush1.bf16.msra.mxu0 %v3322
      %3340 = vmatprep.subr.bf16.mxu0 0
      %3341 = vmatpush1.bf16.msra.mxu0 %v3323
      %3342 = vmatprep.subr.bf16.mxu0 0
      %3343 = vmatpush1.bf16.msra.mxu0 0
      %3344 = vmatprep.subr.bf16.mxu0 0
      %3345 = vmatpush1.bf16.msra.mxu0 0
      %3346 = vmatprep.subr.bf16.mxu0 0
      %3347 = vmatpush1.bf16.msra.mxu0 0
      %3348 = vmatprep.subr.bf16.mxu0 0
      %3349 = vmatpush1.bf16.msra.mxu0 0
      %3350 = vmatprep.subr.bf16.mxu0 0
      %3351 = vmatpush1.bf16.msra.mxu0 0
      %3352 = vmatprep.subr.bf16.mxu0 0
      %3353 = vmatpush1.bf16.msra.mxu0 0
      %3354 = vmatprep.subr.bf16.mxu0 0
      %3355 = vmatpush1.bf16.msra.mxu0 0
      %3356 = vmatprep.subr.bf16.mxu0 0
      %3357 = vmatpush1.bf16.msra.mxu0 0
      %3358 = vmatprep.subr.bf16.mxu0 0
      %3359 = vmatpush1.bf16.msra.mxu0 0
      %3360 = vmatprep.subr.bf16.mxu0 0
      %3361 = vmatpush1.bf16.msra.mxu0 0
      %3362 = vmatprep.subr.bf16.mxu0 0
      %3363 = vmatpush1.bf16.msra.mxu0 0
      %3364 = vmatprep.subr.bf16.mxu0 0
      %3365 = vmatpush1.bf16.msra.mxu0 0
      %3366 = vmatprep.mubr.bf16.mxu0 0
      %3367 = vmatmul.mubr.bf16.gmra.mrb[0].mxu0 %v3329
      %v3368 = vpop.f32.mrb[0].mxu0
      %v3369 = vadd.f32 0.0, %v3368
      %v3370 = vpop.f32.mrb[0].mxu0
      %v3371 = vpop.f32.mrb[0].mxu0
      %v3372 = vadd.f32 0.0, %v3371
      %v3373 = vpop.f32.mrb[0].mxu0
      %3374 = vmatprep.mubr.bf16.mxu0 0
      %3375 = vmatmul.mubr.bf16.gmra.mrb[0].mxu0 %v3332
      %v3376 = vpop.f32.mrb[0].mxu0
      %v3377 = vadd.f32 0.0, %v3376
      %v3378 = vpop.f32.mrb[0].mxu0
      %v3379 = vpop.f32.mrb[0].mxu0
      %v3380 = vadd.f32 0.0, %v3379
      %v3381 = vpop.f32.mrb[0].mxu0
      %3382 = vdwg.mxu0
      %v3383 = vadd.f32 %v3291, %v3369
      %v3384 = vadd.f32 %v3292, %v3372
      %v3385 = vadd.f32 %v3293, %v3377
      %v3386 = vadd.f32 %v3294, %v3380
      %s3387 = scalar_lea.vmem %s4, 192
      %v3388 = vld [vmem:[%s3387] sm:$0xf]
      %v3389 = vld [vmem:[%s3387 + $0x4] sm:$0xf]
      %v3390 = vld [vmem:[%s3387 + $0x8] sm:$0xf]
      %v3391 = vld [vmem:[%s3387 + $0xc] sm:$0xf]
      %v3392 = vld [vmem:[%s3387 + $0x10] sm:$0xf]
      %v3393 = vld [vmem:[%s3387 + $0x14] sm:$0xf]
      %v3394 = vld [vmem:[%s3387 + $0x18] sm:$0xf]
      %v3395 = vld [vmem:[%s3387 + $0x1c] sm:$0xf]
      %v3404 = vunpack.c.l.b16 %v3388
      %v3405 = vunpack.c.l.b16 %v3389
      %v3406 = vunpack.c.l.b16 %v3390
      %v3407 = vunpack.c.l.b16 %v3391
      %v3408 = vunpack.c.l.b16 %v3392
      %v3409 = vunpack.c.l.b16 %v3393
      %v3410 = vunpack.c.l.b16 %v3394
      %v3411 = vunpack.c.l.b16 %v3395
      %v3412 = vpack.c.b16 %v3405, %v3404
      %v3413 = vpack.c.b16 %v3407, %v3406
      %v3414 = vpack.c.b16 %v3409, %v3408
      %v3415 = vpack.c.b16 %v3411, %v3410
      %v3421 = vsel %vm2884, %v2837, 0
      %v3424 = vsel %vm2884, %v2838, 0
      %3426 = vmatprep.subr.bf16.mxu0 0
      %3427 = vmatpush1.bf16.msra.mxu0 %v3412
      %3428 = vmatprep.subr.bf16.mxu0 0
      %3429 = vmatpush1.bf16.msra.mxu0 %v3413
      %3430 = vmatprep.subr.bf16.mxu0 0
      %3431 = vmatpush1.bf16.msra.mxu0 %v3414
      %3432 = vmatprep.subr.bf16.mxu0 0
      %3433 = vmatpush1.bf16.msra.mxu0 %v3415
      %3434 = vmatprep.subr.bf16.mxu0 0
      %3435 = vmatpush1.bf16.msra.mxu0 0
      %3436 = vmatprep.subr.bf16.mxu0 0
      %3437 = vmatpush1.bf16.msra.mxu0 0
      %3438 = vmatprep.subr.bf16.mxu0 0
      %3439 = vmatpush1.bf16.msra.mxu0 0
      %3440 = vmatprep.subr.bf16.mxu0 0
      %3441 = vmatpush1.bf16.msra.mxu0 0
      %3442 = vmatprep.subr.bf16.mxu0 0
      %3443 = vmatpush1.bf16.msra.mxu0 0
      %3444 = vmatprep.subr.bf16.mxu0 0
      %3445 = vmatpush1.bf16.msra.mxu0 0
      %3446 = vmatprep.subr.bf16.mxu0 0
      %3447 = vmatpush1.bf16.msra.mxu0 0
      %3448 = vmatprep.subr.bf16.mxu0 0
      %3449 = vmatpush1.bf16.msra.mxu0 0
      %3450 = vmatprep.subr.bf16.mxu0 0
      %3451 = vmatpush1.bf16.msra.mxu0 0
      %3452 = vmatprep.subr.bf16.mxu0 0
      %3453 = vmatpush1.bf16.msra.mxu0 0
      %3454 = vmatprep.subr.bf16.mxu0 0
      %3455 = vmatpush1.bf16.msra.mxu0 0
      %3456 = vmatprep.subr.bf16.mxu0 0
      %3457 = vmatpush1.bf16.msra.mxu0 0
      %3458 = vmatprep.mubr.bf16.mxu0 0
      %3459 = vmatmul.mubr.bf16.gmra.mrb[0].mxu0 %v3421
      %v3460 = vpop.f32.mrb[0].mxu0
      %v3461 = vadd.f32 0.0, %v3460
      %v3462 = vpop.f32.mrb[0].mxu0
      %v3463 = vpop.f32.mrb[0].mxu0
      %v3464 = vadd.f32 0.0, %v3463
      %v3465 = vpop.f32.mrb[0].mxu0
      %3466 = vmatprep.mubr.bf16.mxu0 0
      %3467 = vmatmul.mubr.bf16.gmra.mrb[0].mxu0 %v3424
      %v3468 = vpop.f32.mrb[0].mxu0
      %v3469 = vadd.f32 0.0, %v3468
      %v3470 = vpop.f32.mrb[0].mxu0
      %v3471 = vpop.f32.mrb[0].mxu0
      %v3472 = vadd.f32 0.0, %v3471
      %v3473 = vpop.f32.mrb[0].mxu0
      %3474 = vdwg.mxu0
      %v3475 = vadd.f32 %v3383, %v3461
      %v3476 = vadd.f32 %v3384, %v3464
      %v3477 = vadd.f32 %v3385, %v3469
      %v3478 = vadd.f32 %v3386, %v3472
      %s3479 = scalar_lea.vmem %s4, 224
      %v3480 = vld [vmem:[%s3479] sm:$0xf]
      %v3481 = vld [vmem:[%s3479 + $0x4] sm:$0xf]
      %v3482 = vld [vmem:[%s3479 + $0x8] sm:$0xf]
      %v3483 = vld [vmem:[%s3479 + $0xc] sm:$0xf]
      %v3484 = vld [vmem:[%s3479 + $0x10] sm:$0xf]
      %v3485 = vld [vmem:[%s3479 + $0x14] sm:$0xf]
      %v3486 = vld [vmem:[%s3479 + $0x18] sm:$0xf]
      %v3487 = vld [vmem:[%s3479 + $0x1c] sm:$0xf]
      %v3496 = vunpack.c.l.b16 %v3480
      %v3497 = vunpack.c.l.b16 %v3481
      %v3498 = vunpack.c.l.b16 %v3482
      %v3499 = vunpack.c.l.b16 %v3483
      %v3500 = vunpack.c.l.b16 %v3484
      %v3501 = vunpack.c.l.b16 %v3485
      %v3502 = vunpack.c.l.b16 %v3486
      %v3503 = vunpack.c.l.b16 %v3487
      %v3504 = vpack.c.b16 %v3497, %v3496
      %v3505 = vpack.c.b16 %v3499, %v3498
      %v3506 = vpack.c.b16 %v3501, %v3500
      %v3507 = vpack.c.b16 %v3503, %v3502
      %v3513 = vsel %vm2884, %v2839, 0
      %v3516 = vsel %vm2884, %v2840, 0
      %3518 = vmatprep.subr.bf16.mxu0 0
      %3519 = vmatpush1.bf16.msra.mxu0 %v3504
      %3520 = vmatprep.subr.bf16.mxu0 0
      %3521 = vmatpush1.bf16.msra.mxu0 %v3505
      %3522 = vmatprep.subr.bf16.mxu0 0
      %3523 = vmatpush1.bf16.msra.mxu0 %v3506
      %3524 = vmatprep.subr.bf16.mxu0 0
      %3525 = vmatpush1.bf16.msra.mxu0 %v3507
      %3526 = vmatprep.subr.bf16.mxu0 0
      %3527 = vmatpush1.bf16.msra.mxu0 0
      %3528 = vmatprep.subr.bf16.mxu0 0
      %3529 = vmatpush1.bf16.msra.mxu0 0
      %3530 = vmatprep.subr.bf16.mxu0 0
      %3531 = vmatpush1.bf16.msra.mxu0 0
      %3532 = vmatprep.subr.bf16.mxu0 0
      %3533 = vmatpush1.bf16.msra.mxu0 0
      %3534 = vmatprep.subr.bf16.mxu0 0
      %3535 = vmatpush1.bf16.msra.mxu0 0
      %3536 = vmatprep.subr.bf16.mxu0 0
      %3537 = vmatpush1.bf16.msra.mxu0 0
      %3538 = vmatprep.subr.bf16.mxu0 0
      %3539 = vmatpush1.bf16.msra.mxu0 0
      %3540 = vmatprep.subr.bf16.mxu0 0
      %3541 = vmatpush1.bf16.msra.mxu0 0
      %3542 = vmatprep.subr.bf16.mxu0 0
      %3543 = vmatpush1.bf16.msra.mxu0 0
      %3544 = vmatprep.subr.bf16.mxu0 0
      %3545 = vmatpush1.bf16.msra.mxu0 0
      %3546 = vmatprep.subr.bf16.mxu0 0
      %3547 = vmatpush1.bf16.msra.mxu0 0
      %3548 = vmatprep.subr.bf16.mxu0 0
      %3549 = vmatpush1.bf16.msra.mxu0 0
      %3550 = vmatprep.mubr.bf16.mxu0 0
      %3551 = vmatmul.mubr.bf16.gmra.mrb[0].mxu0 %v3513
      %v3552 = vpop.f32.mrb[0].mxu0
      %v3553 = vadd.f32 0.0, %v3552
      %v3554 = vpop.f32.mrb[0].mxu0
      %v3555 = vpop.f32.mrb[0].mxu0
      %v3556 = vadd.f32 0.0, %v3555
      %v3557 = vpop.f32.mrb[0].mxu0
      %3558 = vmatprep.mubr.bf16.mxu0 0
      %3559 = vmatmul.mubr.bf16.gmra.mrb[0].mxu0 %v3516
      %v3560 = vpop.f32.mrb[0].mxu0
      %v3561 = vadd.f32 0.0, %v3560
      %v3562 = vpop.f32.mrb[0].mxu0
      %v3563 = vpop.f32.mrb[0].mxu0
      %v3564 = vadd.f32 0.0, %v3563
      %v3565 = vpop.f32.mrb[0].mxu0
      %3566 = vdwg.mxu0
      %v3567 = vadd.f32 %v3475, %v3553
      %v3568 = vadd.f32 %v3476, %v3556
      %v3569 = vadd.f32 %v3477, %v3561
      %v3570 = vadd.f32 %v3478, %v3564
      %s3571 = scalar_lea.vmem %s4, 256
      %v3572 = vld [vmem:[%s3571] sm:$0xf]
      %v3573 = vld [vmem:[%s3571 + $0x4] sm:$0xf]
      %v3574 = vld [vmem:[%s3571 + $0x8] sm:$0xf]
      %v3575 = vld [vmem:[%s3571 + $0xc] sm:$0xf]
      %v3576 = vld [vmem:[%s3571 + $0x10] sm:$0xf]
      %v3577 = vld [vmem:[%s3571 + $0x14] sm:$0xf]
      %v3578 = vld [vmem:[%s3571 + $0x18] sm:$0xf]
      %v3579 = vld [vmem:[%s3571 + $0x1c] sm:$0xf]
      %v3588 = vunpack.c.l.b16 %v3572
      %v3589 = vunpack.c.l.b16 %v3573
      %v3590 = vunpack.c.l.b16 %v3574
      %v3591 = vunpack.c.l.b16 %v3575
      %v3592 = vunpack.c.l.b16 %v3576
      %v3593 = vunpack.c.l.b16 %v3577
      %v3594 = vunpack.c.l.b16 %v3578
      %v3595 = vunpack.c.l.b16 %v3579
      %v3596 = vpack.c.b16 %v3589, %v3588
      %v3597 = vpack.c.b16 %v3591, %v3590
      %v3598 = vpack.c.b16 %v3593, %v3592
      %v3599 = vpack.c.b16 %v3595, %v3594
      %v3605 = vsel %vm2884, %v2841, 0
      %v3608 = vsel %vm2884, %v2842, 0
      %3610 = vmatprep.subr.bf16.mxu0 0
      %3611 = vmatpush1.bf16.msra.mxu0 %v3596
      %3612 = vmatprep.subr.bf16.mxu0 0
      %3613 = vmatpush1.bf16.msra.mxu0 %v3597
      %3614 = vmatprep.subr.bf16.mxu0 0
      %3615 = vmatpush1.bf16.msra.mxu0 %v3598
      %3616 = vmatprep.subr.bf16.mxu0 0
      %3617 = vmatpush1.bf16.msra.mxu0 %v3599
      %3618 = vmatprep.subr.bf16.mxu0 0
      %3619 = vmatpush1.bf16.msra.mxu0 0
      %3620 = vmatprep.subr.bf16.mxu0 0
      %3621 = vmatpush1.bf16.msra.mxu0 0
      %3622 = vmatprep.subr.bf16.mxu0 0
      %3623 = vmatpush1.bf16.msra.mxu0 0
      %3624 = vmatprep.subr.bf16.mxu0 0
      %3625 = vmatpush1.bf16.msra.mxu0 0
      %3626 = vmatprep.subr.bf16.mxu0 0
      %3627 = vmatpush1.bf16.msra.mxu0 0
      %3628 = vmatprep.subr.bf16.mxu0 0
      %3629 = vmatpush1.bf16.msra.mxu0 0
      %3630 = vmatprep.subr.bf16.mxu0 0
      %3631 = vmatpush1.bf16.msra.mxu0 0
      %3632 = vmatprep.subr.bf16.mxu0 0
      %3633 = vmatpush1.bf16.msra.mxu0 0
      %3634 = vmatprep.subr.bf16.mxu0 0
      %3635 = vmatpush1.bf16.msra.mxu0 0
      %3636 = vmatprep.subr.bf16.mxu0 0
      %3637 = vmatpush1.bf16.msra.mxu0 0
      %3638 = vmatprep.subr.bf16.mxu0 0
      %3639 = vmatpush1.bf16.msra.mxu0 0
      %3640 = vmatprep.subr.bf16.mxu0 0
      %3641 = vmatpush1.bf16.msra.mxu0 0
      %3642 = vmatprep.mubr.bf16.mxu0 0
      %3643 = vmatmul.mubr.bf16.gmra.mrb[0].mxu0 %v3605
      %v3644 = vpop.f32.mrb[0].mxu0
      %v3645 = vadd.f32 0.0, %v3644
      %v3646 = vpop.f32.mrb[0].mxu0
      %v3647 = vpop.f32.mrb[0].mxu0
      %v3648 = vadd.f32 0.0, %v3647
      %v3649 = vpop.f32.mrb[0].mxu0
      %3650 = vmatprep.mubr.bf16.mxu0 0
      %3651 = vmatmul.mubr.bf16.gmra.mrb[0].mxu0 %v3608
      %v3652 = vpop.f32.mrb[0].mxu0
      %v3653 = vadd.f32 0.0, %v3652
      %v3654 = vpop.f32.mrb[0].mxu0
      %v3655 = vpop.f32.mrb[0].mxu0
      %v3656 = vadd.f32 0.0, %v3655
      %v3657 = vpop.f32.mrb[0].mxu0
      %3658 = vdwg.mxu0
      %v3659 = vadd.f32 %v3567, %v3645
      %v3660 = vadd.f32 %v3568, %v3648
      %v3661 = vadd.f32 %v3569, %v3653
      %v3662 = vadd.f32 %v3570, %v3656
      %v3663 = vld [vmem:[%s6] sm:$0xff]
      %v3664 = vld [vmem:[%s6 + $0x8] sm:$0xff]
      %v3665 = vld [vmem:[%s6 + $0x10] sm:$0xff]
      %v3666 = vld [vmem:[%s6 + $0x18] sm:$0xff]
      %3668 = vset.pattern.permute.xlu0 0
      %3669 = vperm.xlu0 %3668, %v3663
      %v3670 = vpop.permute.xlu0 %3669
      %3673 = vset.pattern.permute.xlu0 0
      %3674 = vperm.xlu0 %3673, %v3664
      %v3675 = vpop.permute.xlu0 %3674
      %3678 = vset.pattern.permute.xlu0 0
      %3679 = vperm.xlu0 %3678, %v3665
      %v3680 = vpop.permute.xlu0 %3679
      %3683 = vset.pattern.permute.xlu0 0
      %3684 = vperm.xlu0 %3683, %v3666
      %v3685 = vpop.permute.xlu0 %3684
      %v3687 = vadd.f32 %v3659, %v3670
      %v3688 = vadd.f32 %v3660, %v3675
      %v3689 = vadd.f32 %v3661, %v3680
      %v3690 = vadd.f32 %v3662, %v3685
      %v3691 = vmax.f32 %v3687, 0.0
      %v3692 = vmax.f32 %v3688, 0.0
      %v3693 = vmax.f32 %v3689, 0.0
      %v3694 = vmax.f32 %v3690, 0.0
      %v3695 = vld [vmem:[%s8] sm:$0xff]
      %v3696 = vld [vmem:[%s8 + $0x8] sm:$0xff]
      %v3697 = vld [vmem:[%s8 + $0x10] sm:$0xff]
      %v3698 = vld [vmem:[%s8 + $0x18] sm:$0xff]
      %v3699 = vld [vmem:[%s8 + $0x20] sm:$0xff]
      %v3700 = vld [vmem:[%s8 + $0x28] sm:$0xff]
      %v3701 = vld [vmem:[%s8 + $0x30] sm:$0xff]
      %v3702 = vld [vmem:[%s8 + $0x38] sm:$0xff]
      %v3703 = vld [vmem:[%s8 + $0x40] sm:$0xff]
      %v3704 = vld [vmem:[%s8 + $0x48] sm:$0xff]
      %v3705 = vld [vmem:[%s8 + $0x50] sm:$0xff]
      %v3706 = vld [vmem:[%s8 + $0x58] sm:$0xff]
      %v3707 = vld [vmem:[%s8 + $0x60] sm:$0xff]
      %v3708 = vld [vmem:[%s8 + $0x68] sm:$0xff]
      %v3709 = vld [vmem:[%s8 + $0x70] sm:$0xff]
      %v3710 = vld [vmem:[%s8 + $0x78] sm:$0xff]
      %v3711 = vld [vmem:[%s8 + $0x80] sm:$0xff]
      %v3712 = vld [vmem:[%s8 + $0x88] sm:$0xff]
      %v3713 = vld [vmem:[%s8 + $0x90] sm:$0xff]
      %v3714 = vld [vmem:[%s8 + $0x98] sm:$0xff]
      %v3715 = vld [vmem:[%s8 + $0xa0] sm:$0xff]
      %v3716 = vld [vmem:[%s8 + $0xa8] sm:$0xff]
      %v3717 = vld [vmem:[%s8 + $0xb0] sm:$0xff]
      %v3718 = vld [vmem:[%s8 + $0xb8] sm:$0xff]
      %v3719 = vld [vmem:[%s8 + $0xc0] sm:$0xff]
      %v3720 = vld [vmem:[%s8 + $0xc8] sm:$0xff]
      %v3721 = vld [vmem:[%s8 + $0xd0] sm:$0xff]
      %v3722 = vld [vmem:[%s8 + $0xd8] sm:$0xff]
      %v3723 = vld [vmem:[%s8 + $0xe0] sm:$0xff]
      %v3724 = vld [vmem:[%s8 + $0xe8] sm:$0xff]
      %v3725 = vld [vmem:[%s8 + $0xf0] sm:$0xff]
      %v3726 = vld [vmem:[%s8 + $0xf8] sm:$0xff]
      %v3727 = vld [vmem:[%s8 + $0x100] sm:$0xff]
      %v3728 = vld [vmem:[%s8 + $0x108] sm:$0xff]
      %v3729 = vld [vmem:[%s8 + $0x110] sm:$0xff]
      %v3730 = vld [vmem:[%s8 + $0x118] sm:$0xff]
      %v3731 = vld [vmem:[%s8 + $0x120] sm:$0xff]
      %v3732 = vld [vmem:[%s8 + $0x128] sm:$0xff]
      %v3733 = vld [vmem:[%s8 + $0x130] sm:$0xff]
      %v3734 = vld [vmem:[%s8 + $0x138] sm:$0xff]
      %v3735 = vld [vmem:[%s8 + $0x140] sm:$0xff]
      %v3736 = vld [vmem:[%s8 + $0x148] sm:$0xff]
      %v3737 = vld [vmem:[%s8 + $0x150] sm:$0xff]
      %v3738 = vld [vmem:[%s8 + $0x158] sm:$0xff]
      %v3739 = vld [vmem:[%s8 + $0x160] sm:$0xff]
      %v3740 = vld [vmem:[%s8 + $0x168] sm:$0xff]
      %v3741 = vld [vmem:[%s8 + $0x170] sm:$0xff]
      %v3742 = vld [vmem:[%s8 + $0x178] sm:$0xff]
      %v3743 = vld [vmem:[%s8 + $0x180] sm:$0xff]
      %v3744 = vld [vmem:[%s8 + $0x188] sm:$0xff]
      %v3745 = vld [vmem:[%s8 + $0x190] sm:$0xff]
      %v3746 = vld [vmem:[%s8 + $0x198] sm:$0xff]
      %v3747 = vld [vmem:[%s8 + $0x1a0] sm:$0xff]
      %v3748 = vld [vmem:[%s8 + $0x1a8] sm:$0xff]
      %v3749 = vld [vmem:[%s8 + $0x1b0] sm:$0xff]
      %v3750 = vld [vmem:[%s8 + $0x1b8] sm:$0xff]
      %v3751 = vld [vmem:[%s8 + $0x1c0] sm:$0xff]
      %v3752 = vld [vmem:[%s8 + $0x1c8] sm:$0xff]
      %v3753 = vld [vmem:[%s8 + $0x1d0] sm:$0xff]
      %v3754 = vld [vmem:[%s8 + $0x1d8] sm:$0xff]
      %v3755 = vld [vmem:[%s8 + $0x1e0] sm:$0xff]
      %v3756 = vld [vmem:[%s8 + $0x1e8] sm:$0xff]
      %v3757 = vld [vmem:[%s8 + $0x1f0] sm:$0xff]
      %v3758 = vld [vmem:[%s8 + $0x1f8] sm:$0xff]
      %v3759 = vld [vmem:[%s8 + $0x200] sm:$0xff]
      %v3760 = vld [vmem:[%s8 + $0x208] sm:$0xff]
      %v3761 = vld [vmem:[%s8 + $0x210] sm:$0xff]
      %v3762 = vld [vmem:[%s8 + $0x218] sm:$0xff]
      %v3763 = vld [vmem:[%s8 + $0x220] sm:$0xff]
      %v3764 = vld [vmem:[%s8 + $0x228] sm:$0xff]
      %v3765 = vld [vmem:[%s8 + $0x230] sm:$0xff]
      %v3766 = vld [vmem:[%s8 + $0x238] sm:$0xff]
      %vm3767 = vcmask 261120
      %v3769 = vsel %vm3767, %v3695, 0
      %v3772 = vsel %vm3767, %v3696, 0
      %v3775 = vsel %vm3767, %v3697, 0
      %v3778 = vsel %vm3767, %v3698, 0
      %v3781 = vsel %vm3767, %v3699, 0
      %v3784 = vsel %vm3767, %v3700, 0
      %v3787 = vsel %vm3767, %v3701, 0
      %v3790 = vsel %vm3767, %v3702, 0
      %v3793 = vsel %vm3767, %v3703, 0
      %v3796 = vsel %vm3767, %v3704, 0
      %v3799 = vsel %vm3767, %v3705, 0
      %v3802 = vsel %vm3767, %v3706, 0
      %v3805 = vsel %vm3767, %v3707, 0
      %v3808 = vsel %vm3767, %v3708, 0
      %v3811 = vsel %vm3767, %v3709, 0
      %v3814 = vsel %vm3767, %v3710, 0
      %v3817 = vsel %vm3767, %v3711, 0
      %v3820 = vsel %vm3767, %v3712, 0
      %v3823 = vsel %vm3767, %v3713, 0
      %v3826 = vsel %vm3767, %v3714, 0
      %v3829 = vsel %vm3767, %v3715, 0
      %v3832 = vsel %vm3767, %v3716, 0
      %v3835 = vsel %vm3767, %v3717, 0
      %v3838 = vsel %vm3767, %v3718, 0
      %v3841 = vsel %vm3767, %v3719, 0
      %v3844 = vsel %vm3767, %v3720, 0
      %v3847 = vsel %vm3767, %v3721, 0
      %v3850 = vsel %vm3767, %v3722, 0
      %v3853 = vsel %vm3767, %v3723, 0
      %v3856 = vsel %vm3767, %v3724, 0
      %v3859 = vsel %vm3767, %v3725, 0
      %v3862 = vsel %vm3767, %v3726, 0
      %v3865 = vsel %vm3767, %v3727, 0
      %v3868 = vsel %vm3767, %v3728, 0
      %v3871 = vsel %vm3767, %v3729, 0
      %v3874 = vsel %vm3767, %v3730, 0
      %v3877 = vsel %vm3767, %v3731, 0
      %v3880 = vsel %vm3767, %v3732, 0
      %v3883 = vsel %vm3767, %v3733, 0
      %v3886 = vsel %vm3767, %v3734, 0
      %v3889 = vsel %vm3767, %v3735, 0
      %v3892 = vsel %vm3767, %v3736, 0
      %v3895 = vsel %vm3767, %v3737, 0
      %v3898 = vsel %vm3767, %v3738, 0
      %v3901 = vsel %vm3767, %v3739, 0
      %v3904 = vsel %vm3767, %v3740, 0
      %v3907 = vsel %vm3767, %v3741, 0
      %v3910 = vsel %vm3767, %v3742, 0
      %v3913 = vsel %vm3767, %v3743, 0
      %v3916 = vsel %vm3767, %v3744, 0
      %v3919 = vsel %vm3767, %v3745, 0
      %v3922 = vsel %vm3767, %v3746, 0
      %v3925 = vsel %vm3767, %v3747, 0
      %v3928 = vsel %vm3767, %v3748, 0
      %v3931 = vsel %vm3767, %v3749, 0
      %v3934 = vsel %vm3767, %v3750, 0
      %v3937 = vsel %vm3767, %v3751, 0
      %v3940 = vsel %vm3767, %v3752, 0
      %v3943 = vsel %vm3767, %v3753, 0
      %v3946 = vsel %vm3767, %v3754, 0
      %v3949 = vsel %vm3767, %v3755, 0
      %v3952 = vsel %vm3767, %v3756, 0
      %v3955 = vsel %vm3767, %v3757, 0
      %v3958 = vsel %vm3767, %v3758, 0
      %v3961 = vsel %vm3767, %v3759, 0
      %v3964 = vsel %vm3767, %v3760, 0
      %v3967 = vsel %vm3767, %v3761, 0
      %v3970 = vsel %vm3767, %v3762, 0
      %v3973 = vsel %vm3767, %v3763, 0
      %v3976 = vsel %vm3767, %v3764, 0
      %v3979 = vsel %vm3767, %v3765, 0
      %v3982 = vsel %vm3767, %v3766, 0
      %3984 = vmatprep.subr.mxu0 0.0
      %3985 = vmatpush1.msra.mxu0 %v3691
      %3986 = vmatprep.subr.mxu0 0.0
      %3987 = vmatpush1.msra.mxu0 %v3692
      %3988 = vmatprep.subr.mxu0 0.0
      %3989 = vmatpush1.msra.mxu0 %v3693
      %3990 = vmatprep.subr.mxu0 0.0
      %3991 = vmatpush1.msra.mxu0 %v3694
      %3992 = vmatprep.subr.mxu0 0.0
      %3993 = vmatpush1.msra.mxu0 0.0
      %3994 = vmatprep.subr.mxu0 0.0
      %3995 = vmatpush1.msra.mxu0 0.0
      %3996 = vmatprep.subr.mxu0 0.0
      %3997 = vmatpush1.msra.mxu0 0.0
      %3998 = vmatprep.subr.mxu0 0.0
      %3999 = vmatpush1.msra.mxu0 0.0
      %4000 = vmatprep.subr.mxu0 0.0
      %4001 = vmatpush1.msra.mxu0 0.0
      %4002 = vmatprep.subr.mxu0 0.0
      %4003 = vmatpush1.msra.mxu0 0.0
      %4004 = vmatprep.subr.mxu0 0.0
      %4005 = vmatpush1.msra.mxu0 0.0
      %4006 = vmatprep.subr.mxu0 0.0
      %4007 = vmatpush1.msra.mxu0 0.0
      %4008 = vmatprep.subr.mxu0 0.0
      %4009 = vmatpush1.msra.mxu0 0.0
      %4010 = vmatprep.subr.mxu0 0.0
      %4011 = vmatpush1.msra.mxu0 0.0
      %4012 = vmatprep.subr.mxu0 0.0
      %4013 = vmatpush1.msra.mxu0 0.0
      %4014 = vmatprep.subr.mxu0 0.0
      %4015 = vmatpush1.msra.mxu0 0.0
      %4016 = vmatprep.subr.mxu0 0.0
      %4017 = vmatpush1.msra.mxu0 0.0
      %4018 = vmatprep.subr.mxu0 0.0
      %4019 = vmatpush1.msra.mxu0 0.0
      %4020 = vmatprep.subr.mxu0 0.0
      %4021 = vmatpush1.msra.mxu0 0.0
      %4022 = vmatprep.subr.mxu0 0.0
      %4023 = vmatpush1.msra.mxu0 0.0
      %4024 = vmatprep.subr.mxu0 0.0
      %4025 = vmatpush1.msra.mxu0 0.0
      %4026 = vmatprep.subr.mxu0 0.0
      %4027 = vmatpush1.msra.mxu0 0.0
      %4028 = vmatprep.subr.mxu0 0.0
      %4029 = vmatpush1.msra.mxu0 0.0
      %4030 = vmatprep.subr.mxu0 0.0
      %4031 = vmatpush1.msra.mxu0 0.0
      %4032 = vmatprep.subr.mxu0 0.0
      %4033 = vmatpush1.msra.mxu0 0.0
      %4034 = vmatprep.subr.mxu0 0.0
      %4035 = vmatpush1.msra.mxu0 0.0
      %4036 = vmatprep.subr.mxu0 0.0
      %4037 = vmatpush1.msra.mxu0 0.0
      %4038 = vmatprep.subr.mxu0 0.0
      %4039 = vmatpush1.msra.mxu0 0.0
      %4040 = vmatprep.subr.mxu0 0.0
      %4041 = vmatpush1.msra.mxu0 0.0
      %4042 = vmatprep.subr.mxu0 0.0
      %4043 = vmatpush1.msra.mxu0 0.0
      %4044 = vmatprep.subr.mxu0 0.0
      %4045 = vmatpush1.msra.mxu0 0.0
      %4046 = vmatprep.subr.mxu0 0.0
      %4047 = vmatpush1.msra.mxu0 0.0
      %4048 = vmatprep.mubr.f32.mxu0 0.0
      %4049 = vmatmul.mubr.f32.gmra.mrb[0].mxu0 %v3769
      %v4050 = vpop.f32.mrb[0].mxu0
      %v4051 = vadd.f32 0.0, %v4050
      %v4052 = vpop.f32.mrb[0].mxu0
      %4053 = vmatprep.mubr.f32.mxu0 0.0
      %4054 = vmatmul.mubr.f32.gmra.mrb[0].mxu0 %v3772
      %v4055 = vpop.f32.mrb[0].mxu0
      %v4056 = vadd.f32 0.0, %v4055
      %v4057 = vpop.f32.mrb[0].mxu0
      %4058 = vmatprep.mubr.f32.mxu0 0.0
      %4059 = vmatmul.mubr.f32.gmra.mrb[0].mxu0 %v3775
      %v4060 = vpop.f32.mrb[0].mxu0
      %v4061 = vadd.f32 0.0, %v4060
      %v4062 = vpop.f32.mrb[0].mxu0
      %4063 = vmatprep.mubr.f32.mxu0 0.0
      %4064 = vmatmul.mubr.f32.gmra.mrb[0].mxu0 %v3778
      %v4065 = vpop.f32.mrb[0].mxu0
      %v4066 = vadd.f32 0.0, %v4065
      %v4067 = vpop.f32.mrb[0].mxu0
      %4068 = vmatprep.mubr.f32.mxu0 0.0
      %4069 = vmatmul.mubr.f32.gmra.mrb[0].mxu0 %v3781
      %v4070 = vpop.f32.mrb[0].mxu0
      %v4071 = vadd.f32 0.0, %v4070
      %v4072 = vpop.f32.mrb[0].mxu0
      %4073 = vmatprep.mubr.f32.mxu0 0.0
      %4074 = vmatmul.mubr.f32.gmra.mrb[0].mxu0 %v3784
      %v4075 = vpop.f32.mrb[0].mxu0
      %v4076 = vadd.f32 0.0, %v4075
      %v4077 = vpop.f32.mrb[0].mxu0
      %4078 = vmatprep.mubr.f32.mxu0 0.0
      %4079 = vmatmul.mubr.f32.gmra.mrb[0].mxu0 %v3787
      %v4080 = vpop.f32.mrb[0].mxu0
      %v4081 = vadd.f32 0.0, %v4080
      %v4082 = vpop.f32.mrb[0].mxu0
      %4083 = vmatprep.mubr.f32.mxu0 0.0
      %4084 = vmatmul.mubr.f32.gmra.mrb[0].mxu0 %v3790
      %v4085 = vpop.f32.mrb[0].mxu0
      %v4086 = vadd.f32 0.0, %v4085
      %v4087 = vpop.f32.mrb[0].mxu0
      %4088 = vmatprep.mubr.f32.mxu0 0.0
      %4089 = vmatmul.mubr.f32.gmra.mrb[0].mxu0 %v3793
      %v4090 = vpop.f32.mrb[0].mxu0
      %v4091 = vadd.f32 0.0, %v4090
      %v4092 = vpop.f32.mrb[0].mxu0
      %4093 = vmatprep.mubr.f32.mxu0 0.0
      %4094 = vmatmul.mubr.f32.gmra.mrb[0].mxu0 %v3796
      %v4095 = vpop.f32.mrb[0].mxu0
      %v4096 = vadd.f32 0.0, %v4095
      %v4097 = vpop.f32.mrb[0].mxu0
      %4098 = vmatprep.mubr.f32.mxu0 0.0
      %4099 = vmatmul.mubr.f32.gmra.mrb[0].mxu0 %v3799
      %v4100 = vpop.f32.mrb[0].mxu0
      %v4101 = vadd.f32 0.0, %v4100
      %v4102 = vpop.f32.mrb[0].mxu0
      %4103 = vmatprep.mubr.f32.mxu0 0.0
      %4104 = vmatmul.mubr.f32.gmra.mrb[0].mxu0 %v3802
      %v4105 = vpop.f32.mrb[0].mxu0
      %v4106 = vadd.f32 0.0, %v4105
      %v4107 = vpop.f32.mrb[0].mxu0
      %4108 = vmatprep.mubr.f32.mxu0 0.0
      %4109 = vmatmul.mubr.f32.gmra.mrb[0].mxu0 %v3805
      %v4110 = vpop.f32.mrb[0].mxu0
      %v4111 = vadd.f32 0.0, %v4110
      %v4112 = vpop.f32.mrb[0].mxu0
      %4113 = vmatprep.mubr.f32.mxu0 0.0
      %4114 = vmatmul.mubr.f32.gmra.mrb[0].mxu0 %v3808
      %v4115 = vpop.f32.mrb[0].mxu0
      %v4116 = vadd.f32 0.0, %v4115
      %v4117 = vpop.f32.mrb[0].mxu0
      %4118 = vmatprep.mubr.f32.mxu0 0.0
      %4119 = vmatmul.mubr.f32.gmra.mrb[0].mxu0 %v3811
      %v4120 = vpop.f32.mrb[0].mxu0
      %v4121 = vadd.f32 0.0, %v4120
      %v4122 = vpop.f32.mrb[0].mxu0
      %4123 = vmatprep.mubr.f32.mxu0 0.0
      %4124 = vmatmul.mubr.f32.gmra.mrb[0].mxu0 %v3814
      %v4125 = vpop.f32.mrb[0].mxu0
      %v4126 = vadd.f32 0.0, %v4125
      %v4127 = vpop.f32.mrb[0].mxu0
      %4128 = vmatprep.mubr.f32.mxu0 0.0
      %4129 = vmatmul.mubr.f32.gmra.mrb[0].mxu0 %v3817
      %v4130 = vpop.f32.mrb[0].mxu0
      %v4131 = vadd.f32 0.0, %v4130
      %v4132 = vpop.f32.mrb[0].mxu0
      %4133 = vmatprep.mubr.f32.mxu0 0.0
      %4134 = vmatmul.mubr.f32.gmra.mrb[0].mxu0 %v3820
      %v4135 = vpop.f32.mrb[0].mxu0
      %v4136 = vadd.f32 0.0, %v4135
      %v4137 = vpop.f32.mrb[0].mxu0
      %4138 = vmatprep.mubr.f32.mxu0 0.0
      %4139 = vmatmul.mubr.f32.gmra.mrb[0].mxu0 %v3823
      %v4140 = vpop.f32.mrb[0].mxu0
      %v4141 = vadd.f32 0.0, %v4140
      %v4142 = vpop.f32.mrb[0].mxu0
      %4143 = vmatprep.mubr.f32.mxu0 0.0
      %4144 = vmatmul.mubr.f32.gmra.mrb[0].mxu0 %v3826
      %v4145 = vpop.f32.mrb[0].mxu0
      %v4146 = vadd.f32 0.0, %v4145
      %v4147 = vpop.f32.mrb[0].mxu0
      %4148 = vmatprep.mubr.f32.mxu0 0.0
      %4149 = vmatmul.mubr.f32.gmra.mrb[0].mxu0 %v3829
      %v4150 = vpop.f32.mrb[0].mxu0
      %v4151 = vadd.f32 0.0, %v4150
      %v4152 = vpop.f32.mrb[0].mxu0
      %4153 = vmatprep.mubr.f32.mxu0 0.0
      %4154 = vmatmul.mubr.f32.gmra.mrb[0].mxu0 %v3832
      %v4155 = vpop.f32.mrb[0].mxu0
      %v4156 = vadd.f32 0.0, %v4155
      %v4157 = vpop.f32.mrb[0].mxu0
      %4158 = vmatprep.mubr.f32.mxu0 0.0
      %4159 = vmatmul.mubr.f32.gmra.mrb[0].mxu0 %v3835
      %v4160 = vpop.f32.mrb[0].mxu0
      %v4161 = vadd.f32 0.0, %v4160
      %v4162 = vpop.f32.mrb[0].mxu0
      %4163 = vmatprep.mubr.f32.mxu0 0.0
      %4164 = vmatmul.mubr.f32.gmra.mrb[0].mxu0 %v3838
      %v4165 = vpop.f32.mrb[0].mxu0
      %v4166 = vadd.f32 0.0, %v4165
      %v4167 = vpop.f32.mrb[0].mxu0
      %4168 = vmatprep.mubr.f32.mxu0 0.0
      %4169 = vmatmul.mubr.f32.gmra.mrb[0].mxu0 %v3841
      %v4170 = vpop.f32.mrb[0].mxu0
      %v4171 = vadd.f32 0.0, %v4170
      %v4172 = vpop.f32.mrb[0].mxu0
      %4173 = vmatprep.mubr.f32.mxu0 0.0
      %4174 = vmatmul.mubr.f32.gmra.mrb[0].mxu0 %v3844
      %v4175 = vpop.f32.mrb[0].mxu0
      %v4176 = vadd.f32 0.0, %v4175
      %v4177 = vpop.f32.mrb[0].mxu0
      %4178 = vmatprep.mubr.f32.mxu0 0.0
      %4179 = vmatmul.mubr.f32.gmra.mrb[0].mxu0 %v3847
      %v4180 = vpop.f32.mrb[0].mxu0
      %v4181 = vadd.f32 0.0, %v4180
      %v4182 = vpop.f32.mrb[0].mxu0
      %4183 = vmatprep.mubr.f32.mxu0 0.0
      %4184 = vmatmul.mubr.f32.gmra.mrb[0].mxu0 %v3850
      %v4185 = vpop.f32.mrb[0].mxu0
      %v4186 = vadd.f32 0.0, %v4185
      %v4187 = vpop.f32.mrb[0].mxu0
      %4188 = vmatprep.mubr.f32.mxu0 0.0
      %4189 = vmatmul.mubr.f32.gmra.mrb[0].mxu0 %v3853
      %v4190 = vpop.f32.mrb[0].mxu0
      %v4191 = vadd.f32 0.0, %v4190
      %v4192 = vpop.f32.mrb[0].mxu0
      %4193 = vmatprep.mubr.f32.mxu0 0.0
      %4194 = vmatmul.mubr.f32.gmra.mrb[0].mxu0 %v3856
      %v4195 = vpop.f32.mrb[0].mxu0
      %v4196 = vadd.f32 0.0, %v4195
      %v4197 = vpop.f32.mrb[0].mxu0
      %4198 = vmatprep.mubr.f32.mxu0 0.0
      %4199 = vmatmul.mubr.f32.gmra.mrb[0].mxu0 %v3859
      %v4200 = vpop.f32.mrb[0].mxu0
      %v4201 = vadd.f32 0.0, %v4200
      %v4202 = vpop.f32.mrb[0].mxu0
      %4203 = vmatprep.mubr.f32.mxu0 0.0
      %4204 = vmatmul.mubr.f32.gmra.mrb[0].mxu0 %v3862
      %v4205 = vpop.f32.mrb[0].mxu0
      %v4206 = vadd.f32 0.0, %v4205
      %v4207 = vpop.f32.mrb[0].mxu0
      %4208 = vmatprep.mubr.f32.mxu0 0.0
      %4209 = vmatmul.mubr.f32.gmra.mrb[0].mxu0 %v3865
      %v4210 = vpop.f32.mrb[0].mxu0
      %v4211 = vadd.f32 0.0, %v4210
      %v4212 = vpop.f32.mrb[0].mxu0
      %4213 = vmatprep.mubr.f32.mxu0 0.0
      %4214 = vmatmul.mubr.f32.gmra.mrb[0].mxu0 %v3868
      %v4215 = vpop.f32.mrb[0].mxu0
      %v4216 = vadd.f32 0.0, %v4215
      %v4217 = vpop.f32.mrb[0].mxu0
      %4218 = vmatprep.mubr.f32.mxu0 0.0
      %4219 = vmatmul.mubr.f32.gmra.mrb[0].mxu0 %v3871
      %v4220 = vpop.f32.mrb[0].mxu0
      %v4221 = vadd.f32 0.0, %v4220
      %v4222 = vpop.f32.mrb[0].mxu0
      %4223 = vmatprep.mubr.f32.mxu0 0.0
      %4224 = vmatmul.mubr.f32.gmra.mrb[0].mxu0 %v3874
      %v4225 = vpop.f32.mrb[0].mxu0
      %v4226 = vadd.f32 0.0, %v4225
      %v4227 = vpop.f32.mrb[0].mxu0
      %4228 = vmatprep.mubr.f32.mxu0 0.0
      %4229 = vmatmul.mubr.f32.gmra.mrb[0].mxu0 %v3877
      %v4230 = vpop.f32.mrb[0].mxu0
      %v4231 = vadd.f32 0.0, %v4230
      %v4232 = vpop.f32.mrb[0].mxu0
      %4233 = vmatprep.mubr.f32.mxu0 0.0
      %4234 = vmatmul.mubr.f32.gmra.mrb[0].mxu0 %v3880
      %v4235 = vpop.f32.mrb[0].mxu0
      %v4236 = vadd.f32 0.0, %v4235
      %v4237 = vpop.f32.mrb[0].mxu0
      %4238 = vmatprep.mubr.f32.mxu0 0.0
      %4239 = vmatmul.mubr.f32.gmra.mrb[0].mxu0 %v3883
      %v4240 = vpop.f32.mrb[0].mxu0
      %v4241 = vadd.f32 0.0, %v4240
      %v4242 = vpop.f32.mrb[0].mxu0
      %4243 = vmatprep.mubr.f32.mxu0 0.0
      %4244 = vmatmul.mubr.f32.gmra.mrb[0].mxu0 %v3886
      %v4245 = vpop.f32.mrb[0].mxu0
      %v4246 = vadd.f32 0.0, %v4245
      %v4247 = vpop.f32.mrb[0].mxu0
      %4248 = vmatprep.mubr.f32.mxu0 0.0
      %4249 = vmatmul.mubr.f32.gmra.mrb[0].mxu0 %v3889
      %v4250 = vpop.f32.mrb[0].mxu0
      %v4251 = vadd.f32 0.0, %v4250
      %v4252 = vpop.f32.mrb[0].mxu0
      %4253 = vmatprep.mubr.f32.mxu0 0.0
      %4254 = vmatmul.mubr.f32.gmra.mrb[0].mxu0 %v3892
      %v4255 = vpop.f32.mrb[0].mxu0
      %v4256 = vadd.f32 0.0, %v4255
      %v4257 = vpop.f32.mrb[0].mxu0
      %4258 = vmatprep.mubr.f32.mxu0 0.0
      %4259 = vmatmul.mubr.f32.gmra.mrb[0].mxu0 %v3895
      %v4260 = vpop.f32.mrb[0].mxu0
      %v4261 = vadd.f32 0.0, %v4260
      %v4262 = vpop.f32.mrb[0].mxu0
      %4263 = vmatprep.mubr.f32.mxu0 0.0
      %4264 = vmatmul.mubr.f32.gmra.mrb[0].mxu0 %v3898
      %v4265 = vpop.f32.mrb[0].mxu0
      %v4266 = vadd.f32 0.0, %v4265
      %v4267 = vpop.f32.mrb[0].mxu0
      %4268 = vmatprep.mubr.f32.mxu0 0.0
      %4269 = vmatmul.mubr.f32.gmra.mrb[0].mxu0 %v3901
      %v4270 = vpop.f32.mrb[0].mxu0
      %v4271 = vadd.f32 0.0, %v4270
      %v4272 = vpop.f32.mrb[0].mxu0
      %4273 = vmatprep.mubr.f32.mxu0 0.0
      %4274 = vmatmul.mubr.f32.gmra.mrb[0].mxu0 %v3904
      %v4275 = vpop.f32.mrb[0].mxu0
      %v4276 = vadd.f32 0.0, %v4275
      %v4277 = vpop.f32.mrb[0].mxu0
      %4278 = vmatprep.mubr.f32.mxu0 0.0
      %4279 = vmatmul.mubr.f32.gmra.mrb[0].mxu0 %v3907
      %v4280 = vpop.f32.mrb[0].mxu0
      %v4281 = vadd.f32 0.0, %v4280
      %v4282 = vpop.f32.mrb[0].mxu0
      %4283 = vmatprep.mubr.f32.mxu0 0.0
      %4284 = vmatmul.mubr.f32.gmra.mrb[0].mxu0 %v3910
      %v4285 = vpop.f32.mrb[0].mxu0
      %v4286 = vadd.f32 0.0, %v4285
      %v4287 = vpop.f32.mrb[0].mxu0
      %4288 = vmatprep.mubr.f32.mxu0 0.0
      %4289 = vmatmul.mubr.f32.gmra.mrb[0].mxu0 %v3913
      %v4290 = vpop.f32.mrb[0].mxu0
      %v4291 = vadd.f32 0.0, %v4290
      %v4292 = vpop.f32.mrb[0].mxu0
      %4293 = vmatprep.mubr.f32.mxu0 0.0
      %4294 = vmatmul.mubr.f32.gmra.mrb[0].mxu0 %v3916
      %v4295 = vpop.f32.mrb[0].mxu0
      %v4296 = vadd.f32 0.0, %v4295
      %v4297 = vpop.f32.mrb[0].mxu0
      %4298 = vmatprep.mubr.f32.mxu0 0.0
      %4299 = vmatmul.mubr.f32.gmra.mrb[0].mxu0 %v3919
      %v4300 = vpop.f32.mrb[0].mxu0
      %v4301 = vadd.f32 0.0, %v4300
      %v4302 = vpop.f32.mrb[0].mxu0
      %4303 = vmatprep.mubr.f32.mxu0 0.0
      %4304 = vmatmul.mubr.f32.gmra.mrb[0].mxu0 %v3922
      %v4305 = vpop.f32.mrb[0].mxu0
      %v4306 = vadd.f32 0.0, %v4305
      %v4307 = vpop.f32.mrb[0].mxu0
      %4308 = vmatprep.mubr.f32.mxu0 0.0
      %4309 = vmatmul.mubr.f32.gmra.mrb[0].mxu0 %v3925
      %v4310 = vpop.f32.mrb[0].mxu0
      %v4311 = vadd.f32 0.0, %v4310
      %v4312 = vpop.f32.mrb[0].mxu0
      %4313 = vmatprep.mubr.f32.mxu0 0.0
      %4314 = vmatmul.mubr.f32.gmra.mrb[0].mxu0 %v3928
      %v4315 = vpop.f32.mrb[0].mxu0
      %v4316 = vadd.f32 0.0, %v4315
      %v4317 = vpop.f32.mrb[0].mxu0
      %4318 = vmatprep.mubr.f32.mxu0 0.0
      %4319 = vmatmul.mubr.f32.gmra.mrb[0].mxu0 %v3931
      %v4320 = vpop.f32.mrb[0].mxu0
      %v4321 = vadd.f32 0.0, %v4320
      %v4322 = vpop.f32.mrb[0].mxu0
      %4323 = vmatprep.mubr.f32.mxu0 0.0
      %4324 = vmatmul.mubr.f32.gmra.mrb[0].mxu0 %v3934
      %v4325 = vpop.f32.mrb[0].mxu0
      %v4326 = vadd.f32 0.0, %v4325
      %v4327 = vpop.f32.mrb[0].mxu0
      %4328 = vmatprep.mubr.f32.mxu0 0.0
      %4329 = vmatmul.mubr.f32.gmra.mrb[0].mxu0 %v3937
      %v4330 = vpop.f32.mrb[0].mxu0
      %v4331 = vadd.f32 0.0, %v4330
      %v4332 = vpop.f32.mrb[0].mxu0
      %4333 = vmatprep.mubr.f32.mxu0 0.0
      %4334 = vmatmul.mubr.f32.gmra.mrb[0].mxu0 %v3940
      %v4335 = vpop.f32.mrb[0].mxu0
      %v4336 = vadd.f32 0.0, %v4335
      %v4337 = vpop.f32.mrb[0].mxu0
      %4338 = vmatprep.mubr.f32.mxu0 0.0
      %4339 = vmatmul.mubr.f32.gmra.mrb[0].mxu0 %v3943
      %v4340 = vpop.f32.mrb[0].mxu0
      %v4341 = vadd.f32 0.0, %v4340
      %v4342 = vpop.f32.mrb[0].mxu0
      %4343 = vmatprep.mubr.f32.mxu0 0.0
      %4344 = vmatmul.mubr.f32.gmra.mrb[0].mxu0 %v3946
      %v4345 = vpop.f32.mrb[0].mxu0
      %v4346 = vadd.f32 0.0, %v4345
      %v4347 = vpop.f32.mrb[0].mxu0
      %4348 = vmatprep.mubr.f32.mxu0 0.0
      %4349 = vmatmul.mubr.f32.gmra.mrb[0].mxu0 %v3949
      %v4350 = vpop.f32.mrb[0].mxu0
      %v4351 = vadd.f32 0.0, %v4350
      %v4352 = vpop.f32.mrb[0].mxu0
      %4353 = vmatprep.mubr.f32.mxu0 0.0
      %4354 = vmatmul.mubr.f32.gmra.mrb[0].mxu0 %v3952
      %v4355 = vpop.f32.mrb[0].mxu0
      %v4356 = vadd.f32 0.0, %v4355
      %v4357 = vpop.f32.mrb[0].mxu0
      %4358 = vmatprep.mubr.f32.mxu0 0.0
      %4359 = vmatmul.mubr.f32.gmra.mrb[0].mxu0 %v3955
      %v4360 = vpop.f32.mrb[0].mxu0
      %v4361 = vadd.f32 0.0, %v4360
      %v4362 = vpop.f32.mrb[0].mxu0
      %4363 = vmatprep.mubr.f32.mxu0 0.0
      %4364 = vmatmul.mubr.f32.gmra.mrb[0].mxu0 %v3958
      %v4365 = vpop.f32.mrb[0].mxu0
      %v4366 = vadd.f32 0.0, %v4365
      %v4367 = vpop.f32.mrb[0].mxu0
      %4368 = vmatprep.mubr.f32.mxu0 0.0
      %4369 = vmatmul.mubr.f32.gmra.mrb[0].mxu0 %v3961
      %v4370 = vpop.f32.mrb[0].mxu0
      %v4371 = vadd.f32 0.0, %v4370
      %v4372 = vpop.f32.mrb[0].mxu0
      %4373 = vmatprep.mubr.f32.mxu0 0.0
      %4374 = vmatmul.mubr.f32.gmra.mrb[0].mxu0 %v3964
      %v4375 = vpop.f32.mrb[0].mxu0
      %v4376 = vadd.f32 0.0, %v4375
      %v4377 = vpop.f32.mrb[0].mxu0
      %4378 = vmatprep.mubr.f32.mxu0 0.0
      %4379 = vmatmul.mubr.f32.gmra.mrb[0].mxu0 %v3967
      %v4380 = vpop.f32.mrb[0].mxu0
      %v4381 = vadd.f32 0.0, %v4380
      %v4382 = vpop.f32.mrb[0].mxu0
      %4383 = vmatprep.mubr.f32.mxu0 0.0
      %4384 = vmatmul.mubr.f32.gmra.mrb[0].mxu0 %v3970
      %v4385 = vpop.f32.mrb[0].mxu0
      %v4386 = vadd.f32 0.0, %v4385
      %v4387 = vpop.f32.mrb[0].mxu0
      %4388 = vmatprep.mubr.f32.mxu0 0.0
      %4389 = vmatmul.mubr.f32.gmra.mrb[0].mxu0 %v3973
      %v4390 = vpop.f32.mrb[0].mxu0
      %v4391 = vadd.f32 0.0, %v4390
      %v4392 = vpop.f32.mrb[0].mxu0
      %4393 = vmatprep.mubr.f32.mxu0 0.0
      %4394 = vmatmul.mubr.f32.gmra.mrb[0].mxu0 %v3976
      %v4395 = vpop.f32.mrb[0].mxu0
      %v4396 = vadd.f32 0.0, %v4395
      %v4397 = vpop.f32.mrb[0].mxu0
      %4398 = vmatprep.mubr.f32.mxu0 0.0
      %4399 = vmatmul.mubr.f32.gmra.mrb[0].mxu0 %v3979
      %v4400 = vpop.f32.mrb[0].mxu0
      %v4401 = vadd.f32 0.0, %v4400
      %v4402 = vpop.f32.mrb[0].mxu0
      %4403 = vmatprep.mubr.f32.mxu0 0.0
      %4404 = vmatmul.mubr.f32.gmra.mrb[0].mxu0 %v3982
      %v4405 = vpop.f32.mrb[0].mxu0
      %v4406 = vadd.f32 0.0, %v4405
      %v4407 = vpop.f32.mrb[0].mxu0
      %4408 = vdwg.mxu0
      %v4409 = vpack.c.bf16 %v4056, %v4051
      %v4410 = vpack.c.bf16 %v4066, %v4061
      %v4411 = vpack.c.bf16 %v4076, %v4071
      %v4412 = vpack.c.bf16 %v4086, %v4081
      %v4413 = vpack.c.bf16 %v4096, %v4091
      %v4414 = vpack.c.bf16 %v4106, %v4101
      %v4415 = vpack.c.bf16 %v4116, %v4111
      %v4416 = vpack.c.bf16 %v4126, %v4121
      %v4417 = vpack.c.bf16 %v4136, %v4131
      %v4418 = vpack.c.bf16 %v4146, %v4141
      %v4419 = vpack.c.bf16 %v4156, %v4151
      %v4420 = vpack.c.bf16 %v4166, %v4161
      %v4421 = vpack.c.bf16 %v4176, %v4171
      %v4422 = vpack.c.bf16 %v4186, %v4181
      %v4423 = vpack.c.bf16 %v4196, %v4191
      %v4424 = vpack.c.bf16 %v4206, %v4201
      %v4425 = vpack.c.bf16 %v4216, %v4211
      %v4426 = vpack.c.bf16 %v4226, %v4221
      %v4427 = vpack.c.bf16 %v4236, %v4231
      %v4428 = vpack.c.bf16 %v4246, %v4241
      %v4429 = vpack.c.bf16 %v4256, %v4251
      %v4430 = vpack.c.bf16 %v4266, %v4261
      %v4431 = vpack.c.bf16 %v4276, %v4271
      %v4432 = vpack.c.bf16 %v4286, %v4281
      %v4433 = vpack.c.bf16 %v4296, %v4291
      %v4434 = vpack.c.bf16 %v4306, %v4301
      %v4435 = vpack.c.bf16 %v4316, %v4311
      %v4436 = vpack.c.bf16 %v4326, %v4321
      %v4437 = vpack.c.bf16 %v4336, %v4331
      %v4438 = vpack.c.bf16 %v4346, %v4341
      %v4439 = vpack.c.bf16 %v4356, %v4351
      %v4440 = vpack.c.bf16 %v4366, %v4361
      %v4441 = vpack.c.bf16 %v4376, %v4371
      %v4442 = vpack.c.bf16 %v4386, %v4381
      %v4443 = vpack.c.bf16 %v4396, %v4391
      %v4444 = vpack.c.bf16 %v4406, %v4401
      %v4445 = vld [vmem:[%s7] sm:$0xf]
      %v4446 = vld [vmem:[%s7 + $0x4] sm:$0xf]
      %s4447 = scalar_lea.vmem %s7, 8
      %v4448 = vld [vmem:[%s4447] sm:$0xf]
      %v4449 = vld [vmem:[%s4447 + $0x4] sm:$0xf]
      %v4452 = vunpack.c.l.b16 %v4448
      %v4453 = vunpack.c.l.b16 %v4449
      %v4454 = vpack.c.b16 %v4453, %v4452
      %v4457 = vsel %vm2471, %v4413, 0
      %v4460 = vsel %vm2471, %v4414, 0
      %v4463 = vsel %vm2471, %v4415, 0
      %v4466 = vsel %vm2471, %v4416, 0
      %4468 = vmatprep.subr.bf16.mxu0 0
      %4469 = vmatpush1.bf16.msra.mxu0 %v4454
      %4470 = vmatprep.subr.bf16.mxu0 0
      %4471 = vmatpush1.bf16.msra.mxu0 0
      %4472 = vmatprep.subr.bf16.mxu0 0
      %4473 = vmatpush1.bf16.msra.mxu0 0
      %4474 = vmatprep.subr.bf16.mxu0 0
      %4475 = vmatpush1.bf16.msra.mxu0 0
      %4476 = vmatprep.subr.bf16.mxu0 0
      %4477 = vmatpush1.bf16.msra.mxu0 0
      %4478 = vmatprep.subr.bf16.mxu0 0
      %4479 = vmatpush1.bf16.msra.mxu0 0
      %4480 = vmatprep.subr.bf16.mxu0 0
      %4481 = vmatpush1.bf16.msra.mxu0 0
      %4482 = vmatprep.subr.bf16.mxu0 0
      %4483 = vmatpush1.bf16.msra.mxu0 0
      %4484 = vmatprep.subr.bf16.mxu0 0
      %4485 = vmatpush1.bf16.msra.mxu0 0
      %4486 = vmatprep.subr.bf16.mxu0 0
      %4487 = vmatpush1.bf16.msra.mxu0 0
      %4488 = vmatprep.subr.bf16.mxu0 0
      %4489 = vmatpush1.bf16.msra.mxu0 0
      %4490 = vmatprep.subr.bf16.mxu0 0
      %4491 = vmatpush1.bf16.msra.mxu0 0
      %4492 = vmatprep.subr.bf16.mxu0 0
      %4493 = vmatpush1.bf16.msra.mxu0 0
      %4494 = vmatprep.subr.bf16.mxu0 0
      %4495 = vmatpush1.bf16.msra.mxu0 0
      %4496 = vmatprep.subr.bf16.mxu0 0
      %4497 = vmatpush1.bf16.msra.mxu0 0
      %4498 = vmatprep.subr.bf16.mxu0 0
      %4499 = vmatpush1.bf16.msra.mxu0 0
      %4500 = vmatprep.mubr.bf16.mxu0 0
      %4501 = vmatmul.mubr.bf16.gmra.mrb[0].mxu0 %v4457
      %v4502 = vpop.f32.mrb[0].mxu0
      %v4503 = vadd.f32 0.0, %v4502
      %v4504 = vpop.f32.mrb[0].mxu0
      %v4505 = vpop.f32.mrb[0].mxu0
      %v4506 = vadd.f32 0.0, %v4505
      %v4507 = vpop.f32.mrb[0].mxu0
      %4508 = vmatprep.mubr.bf16.mxu0 0
      %4509 = vmatmul.mubr.bf16.gmra.mrb[0].mxu0 %v4460
      %v4510 = vpop.f32.mrb[0].mxu0
      %v4511 = vadd.f32 0.0, %v4510
      %v4512 = vpop.f32.mrb[0].mxu0
      %v4513 = vpop.f32.mrb[0].mxu0
      %v4514 = vadd.f32 0.0, %v4513
      %v4515 = vpop.f32.mrb[0].mxu0
      %4516 = vmatprep.mubr.bf16.mxu0 0
      %4517 = vmatmul.mubr.bf16.gmra.mrb[0].mxu0 %v4463
      %v4518 = vpop.f32.mrb[0].mxu0
      %v4519 = vadd.f32 0.0, %v4518
      %v4520 = vpop.f32.mrb[0].mxu0
      %v4521 = vpop.f32.mrb[0].mxu0
      %v4522 = vadd.f32 0.0, %v4521
      %v4523 = vpop.f32.mrb[0].mxu0
      %4524 = vmatprep.mubr.bf16.mxu0 0
      %4525 = vmatmul.mubr.bf16.gmra.mrb[0].mxu0 %v4466
      %v4526 = vpop.f32.mrb[0].mxu0
      %v4527 = vadd.f32 0.0, %v4526
      %v4528 = vpop.f32.mrb[0].mxu0
      %v4529 = vpop.f32.mrb[0].mxu0
      %v4530 = vadd.f32 0.0, %v4529
      %v4531 = vpop.f32.mrb[0].mxu0
      %4532 = vdwg.mxu0
      %v4535 = vunpack.c.l.b16 %v4445
      %v4536 = vunpack.c.l.b16 %v4446
      %v4537 = vpack.c.b16 %v4536, %v4535
      %v4540 = vsel %vm2471, %v4409, 0
      %v4543 = vsel %vm2471, %v4410, 0
      %v4546 = vsel %vm2471, %v4411, 0
      %v4549 = vsel %vm2471, %v4412, 0
      %4551 = vmatprep.subr.bf16.mxu0 0
      %4552 = vmatpush1.bf16.msra.mxu0 %v4537
      %4553 = vmatprep.subr.bf16.mxu0 0
      %4554 = vmatpush1.bf16.msra.mxu0 0
      %4555 = vmatprep.subr.bf16.mxu0 0
      %4556 = vmatpush1.bf16.msra.mxu0 0
      %4557 = vmatprep.subr.bf16.mxu0 0
      %4558 = vmatpush1.bf16.msra.mxu0 0
      %4559 = vmatprep.subr.bf16.mxu0 0
      %4560 = vmatpush1.bf16.msra.mxu0 0
      %4561 = vmatprep.subr.bf16.mxu0 0
      %4562 = vmatpush1.bf16.msra.mxu0 0
      %4563 = vmatprep.subr.bf16.mxu0 0
      %4564 = vmatpush1.bf16.msra.mxu0 0
      %4565 = vmatprep.subr.bf16.mxu0 0
      %4566 = vmatpush1.bf16.msra.mxu0 0
      %4567 = vmatprep.subr.bf16.mxu0 0
      %4568 = vmatpush1.bf16.msra.mxu0 0
      %4569 = vmatprep.subr.bf16.mxu0 0
      %4570 = vmatpush1.bf16.msra.mxu0 0
      %4571 = vmatprep.subr.bf16.mxu0 0
      %4572 = vmatpush1.bf16.msra.mxu0 0
      %4573 = vmatprep.subr.bf16.mxu0 0
      %4574 = vmatpush1.bf16.msra.mxu0 0
      %4575 = vmatprep.subr.bf16.mxu0 0
      %4576 = vmatpush1.bf16.msra.mxu0 0
      %4577 = vmatprep.subr.bf16.mxu0 0
      %4578 = vmatpush1.bf16.msra.mxu0 0
      %4579 = vmatprep.subr.bf16.mxu0 0
      %4580 = vmatpush1.bf16.msra.mxu0 0
      %4581 = vmatprep.subr.bf16.mxu0 0
      %4582 = vmatpush1.bf16.msra.mxu0 0
      %4583 = vmatprep.mubr.bf16.mxu0 0
      %4584 = vmatmul.mubr.bf16.gmra.mrb[0].mxu0 %v4540
      %v4585 = vpop.f32.mrb[0].mxu0
      %v4586 = vadd.f32 %v4503, %v4585
      %v4587 = vpop.f32.mrb[0].mxu0
      %v4588 = vpop.f32.mrb[0].mxu0
      %v4589 = vadd.f32 %v4506, %v4588
      %v4590 = vpop.f32.mrb[0].mxu0
      %4591 = vmatprep.mubr.bf16.mxu0 0
      %4592 = vmatmul.mubr.bf16.gmra.mrb[0].mxu0 %v4543
      %v4593 = vpop.f32.mrb[0].mxu0
      %v4594 = vadd.f32 %v4511, %v4593
      %v4595 = vpop.f32.mrb[0].mxu0
      %v4596 = vpop.f32.mrb[0].mxu0
      %v4597 = vadd.f32 %v4514, %v4596
      %v4598 = vpop.f32.mrb[0].mxu0
      %4599 = vmatprep.mubr.bf16.mxu0 0
      %4600 = vmatmul.mubr.bf16.gmra.mrb[0].mxu0 %v4546
      %v4601 = vpop.f32.mrb[0].mxu0
      %v4602 = vadd.f32 %v4519, %v4601
      %v4603 = vpop.f32.mrb[0].mxu0
      %v4604 = vpop.f32.mrb[0].mxu0
      %v4605 = vadd.f32 %v4522, %v4604
      %v4606 = vpop.f32.mrb[0].mxu0
      %4607 = vmatprep.mubr.bf16.mxu0 0
      %4608 = vmatmul.mubr.bf16.gmra.mrb[0].mxu0 %v4549
      %v4609 = vpop.f32.mrb[0].mxu0
      %v4610 = vadd.f32 %v4527, %v4609
      %v4611 = vpop.f32.mrb[0].mxu0
      %v4612 = vpop.f32.mrb[0].mxu0
      %v4613 = vadd.f32 %v4530, %v4612
      %v4614 = vpop.f32.mrb[0].mxu0
      %4615 = vdwg.mxu0
      %s4616 = scalar_lea.vmem %s7, 16
      %v4617 = vld [vmem:[%s4616] sm:$0xf]
      %v4618 = vld [vmem:[%s4616 + $0x4] sm:$0xf]
      %v4621 = vunpack.c.l.b16 %v4617
      %v4622 = vunpack.c.l.b16 %v4618
      %v4623 = vpack.c.b16 %v4622, %v4621
      %v4626 = vsel %vm2471, %v4417, 0
      %v4629 = vsel %vm2471, %v4418, 0
      %v4632 = vsel %vm2471, %v4419, 0
      %v4635 = vsel %vm2471, %v4420, 0
      %4637 = vmatprep.subr.bf16.mxu0 0
      %4638 = vmatpush1.bf16.msra.mxu0 %v4623
      %4639 = vmatprep.subr.bf16.mxu0 0
      %4640 = vmatpush1.bf16.msra.mxu0 0
      %4641 = vmatprep.subr.bf16.mxu0 0
      %4642 = vmatpush1.bf16.msra.mxu0 0
      %4643 = vmatprep.subr.bf16.mxu0 0
      %4644 = vmatpush1.bf16.msra.mxu0 0
      %4645 = vmatprep.subr.bf16.mxu0 0
      %4646 = vmatpush1.bf16.msra.mxu0 0
      %4647 = vmatprep.subr.bf16.mxu0 0
      %4648 = vmatpush1.bf16.msra.mxu0 0
      %4649 = vmatprep.subr.bf16.mxu0 0
      %4650 = vmatpush1.bf16.msra.mxu0 0
      %4651 = vmatprep.subr.bf16.mxu0 0
      %4652 = vmatpush1.bf16.msra.mxu0 0
      %4653 = vmatprep.subr.bf16.mxu0 0
      %4654 = vmatpush1.bf16.msra.mxu0 0
      %4655 = vmatprep.subr.bf16.mxu0 0
      %4656 = vmatpush1.bf16.msra.mxu0 0
      %4657 = vmatprep.subr.bf16.mxu0 0
      %4658 = vmatpush1.bf16.msra.mxu0 0
      %4659 = vmatprep.subr.bf16.mxu0 0
      %4660 = vmatpush1.bf16.msra.mxu0 0
      %4661 = vmatprep.subr.bf16.mxu0 0
      %4662 = vmatpush1.bf16.msra.mxu0 0
      %4663 = vmatprep.subr.bf16.mxu0 0
      %4664 = vmatpush1.bf16.msra.mxu0 0
      %4665 = vmatprep.subr.bf16.mxu0 0
      %4666 = vmatpush1.bf16.msra.mxu0 0
      %4667 = vmatprep.subr.bf16.mxu0 0
      %4668 = vmatpush1.bf16.msra.mxu0 0
      %4669 = vmatprep.mubr.bf16.mxu0 0
      %4670 = vmatmul.mubr.bf16.gmra.mrb[0].mxu0 %v4626
      %v4671 = vpop.f32.mrb[0].mxu0
      %v4672 = vadd.f32 0.0, %v4671
      %v4673 = vpop.f32.mrb[0].mxu0
      %v4674 = vpop.f32.mrb[0].mxu0
      %v4675 = vadd.f32 0.0, %v4674
      %v4676 = vpop.f32.mrb[0].mxu0
      %4677 = vmatprep.mubr.bf16.mxu0 0
      %4678 = vmatmul.mubr.bf16.gmra.mrb[0].mxu0 %v4629
      %v4679 = vpop.f32.mrb[0].mxu0
      %v4680 = vadd.f32 0.0, %v4679
      %v4681 = vpop.f32.mrb[0].mxu0
      %v4682 = vpop.f32.mrb[0].mxu0
      %v4683 = vadd.f32 0.0, %v4682
      %v4684 = vpop.f32.mrb[0].mxu0
      %4685 = vmatprep.mubr.bf16.mxu0 0
      %4686 = vmatmul.mubr.bf16.gmra.mrb[0].mxu0 %v4632
      %v4687 = vpop.f32.mrb[0].mxu0
      %v4688 = vadd.f32 0.0, %v4687
      %v4689 = vpop.f32.mrb[0].mxu0
      %v4690 = vpop.f32.mrb[0].mxu0
      %v4691 = vadd.f32 0.0, %v4690
      %v4692 = vpop.f32.mrb[0].mxu0
      %4693 = vmatprep.mubr.bf16.mxu0 0
      %4694 = vmatmul.mubr.bf16.gmra.mrb[0].mxu0 %v4635
      %v4695 = vpop.f32.mrb[0].mxu0
      %v4696 = vadd.f32 0.0, %v4695
      %v4697 = vpop.f32.mrb[0].mxu0
      %v4698 = vpop.f32.mrb[0].mxu0
      %v4699 = vadd.f32 0.0, %v4698
      %v4700 = vpop.f32.mrb[0].mxu0
      %4701 = vdwg.mxu0
      %v4702 = vadd.f32 %v4586, %v4672
      %v4703 = vadd.f32 %v4589, %v4675
      %v4704 = vadd.f32 %v4594, %v4680
      %v4705 = vadd.f32 %v4597, %v4683
      %v4706 = vadd.f32 %v4602, %v4688
      %v4707 = vadd.f32 %v4605, %v4691
      %v4708 = vadd.f32 %v4610, %v4696
      %v4709 = vadd.f32 %v4613, %v4699
      %s4710 = scalar_lea.vmem %s7, 24
      %v4711 = vld [vmem:[%s4710] sm:$0xf]
      %v4712 = vld [vmem:[%s4710 + $0x4] sm:$0xf]
      %v4715 = vunpack.c.l.b16 %v4711
      %v4716 = vunpack.c.l.b16 %v4712
      %v4717 = vpack.c.b16 %v4716, %v4715
      %v4720 = vsel %vm2471, %v4421, 0
      %v4723 = vsel %vm2471, %v4422, 0
      %v4726 = vsel %vm2471, %v4423, 0
      %v4729 = vsel %vm2471, %v4424, 0
      %4731 = vmatprep.subr.bf16.mxu0 0
      %4732 = vmatpush1.bf16.msra.mxu0 %v4717
      %4733 = vmatprep.subr.bf16.mxu0 0
      %4734 = vmatpush1.bf16.msra.mxu0 0
      %4735 = vmatprep.subr.bf16.mxu0 0
      %4736 = vmatpush1.bf16.msra.mxu0 0
      %4737 = vmatprep.subr.bf16.mxu0 0
      %4738 = vmatpush1.bf16.msra.mxu0 0
      %4739 = vmatprep.subr.bf16.mxu0 0
      %4740 = vmatpush1.bf16.msra.mxu0 0
      %4741 = vmatprep.subr.bf16.mxu0 0
      %4742 = vmatpush1.bf16.msra.mxu0 0
      %4743 = vmatprep.subr.bf16.mxu0 0
      %4744 = vmatpush1.bf16.msra.mxu0 0
      %4745 = vmatprep.subr.bf16.mxu0 0
      %4746 = vmatpush1.bf16.msra.mxu0 0
      %4747 = vmatprep.subr.bf16.mxu0 0
      %4748 = vmatpush1.bf16.msra.mxu0 0
      %4749 = vmatprep.subr.bf16.mxu0 0
      %4750 = vmatpush1.bf16.msra.mxu0 0
      %4751 = vmatprep.subr.bf16.mxu0 0
      %4752 = vmatpush1.bf16.msra.mxu0 0
      %4753 = vmatprep.subr.bf16.mxu0 0
      %4754 = vmatpush1.bf16.msra.mxu0 0
      %4755 = vmatprep.subr.bf16.mxu0 0
      %4756 = vmatpush1.bf16.msra.mxu0 0
      %4757 = vmatprep.subr.bf16.mxu0 0
      %4758 = vmatpush1.bf16.msra.mxu0 0
      %4759 = vmatprep.subr.bf16.mxu0 0
      %4760 = vmatpush1.bf16.msra.mxu0 0
      %4761 = vmatprep.subr.bf16.mxu0 0
      %4762 = vmatpush1.bf16.msra.mxu0 0
      %4763 = vmatprep.mubr.bf16.mxu0 0
      %4764 = vmatmul.mubr.bf16.gmra.mrb[0].mxu0 %v4720
      %v4765 = vpop.f32.mrb[0].mxu0
      %v4766 = vadd.f32 0.0, %v4765
      %v4767 = vpop.f32.mrb[0].mxu0
      %v4768 = vpop.f32.mrb[0].mxu0
      %v4769 = vadd.f32 0.0, %v4768
      %v4770 = vpop.f32.mrb[0].mxu0
      %4771 = vmatprep.mubr.bf16.mxu0 0
      %4772 = vmatmul.mubr.bf16.gmra.mrb[0].mxu0 %v4723
      %v4773 = vpop.f32.mrb[0].mxu0
      %v4774 = vadd.f32 0.0, %v4773
      %v4775 = vpop.f32.mrb[0].mxu0
      %v4776 = vpop.f32.mrb[0].mxu0
      %v4777 = vadd.f32 0.0, %v4776
      %v4778 = vpop.f32.mrb[0].mxu0
      %4779 = vmatprep.mubr.bf16.mxu0 0
      %4780 = vmatmul.mubr.bf16.gmra.mrb[0].mxu0 %v4726
      %v4781 = vpop.f32.mrb[0].mxu0
      %v4782 = vadd.f32 0.0, %v4781
      %v4783 = vpop.f32.mrb[0].mxu0
      %v4784 = vpop.f32.mrb[0].mxu0
      %v4785 = vadd.f32 0.0, %v4784
      %v4786 = vpop.f32.mrb[0].mxu0
      %4787 = vmatprep.mubr.bf16.mxu0 0
      %4788 = vmatmul.mubr.bf16.gmra.mrb[0].mxu0 %v4729
      %v4789 = vpop.f32.mrb[0].mxu0
      %v4790 = vadd.f32 0.0, %v4789
      %v4791 = vpop.f32.mrb[0].mxu0
      %v4792 = vpop.f32.mrb[0].mxu0
      %v4793 = vadd.f32 0.0, %v4792
      %v4794 = vpop.f32.mrb[0].mxu0
      %4795 = vdwg.mxu0
      %v4796 = vadd.f32 %v4702, %v4766
      %v4797 = vadd.f32 %v4703, %v4769
      %v4798 = vadd.f32 %v4704, %v4774
      %v4799 = vadd.f32 %v4705, %v4777
      %v4800 = vadd.f32 %v4706, %v4782
      %v4801 = vadd.f32 %v4707, %v4785
      %v4802 = vadd.f32 %v4708, %v4790
      %v4803 = vadd.f32 %v4709, %v4793
      %s4804 = scalar_lea.vmem %s7, 32
      %v4805 = vld [vmem:[%s4804] sm:$0xf]
      %v4806 = vld [vmem:[%s4804 + $0x4] sm:$0xf]
      %v4809 = vunpack.c.l.b16 %v4805
      %v4810 = vunpack.c.l.b16 %v4806
      %v4811 = vpack.c.b16 %v4810, %v4809
      %v4814 = vsel %vm2471, %v4425, 0
      %v4817 = vsel %vm2471, %v4426, 0
      %v4820 = vsel %vm2471, %v4427, 0
      %v4823 = vsel %vm2471, %v4428, 0
      %4825 = vmatprep.subr.bf16.mxu0 0
      %4826 = vmatpush1.bf16.msra.mxu0 %v4811
      %4827 = vmatprep.subr.bf16.mxu0 0
      %4828 = vmatpush1.bf16.msra.mxu0 0
      %4829 = vmatprep.subr.bf16.mxu0 0
      %4830 = vmatpush1.bf16.msra.mxu0 0
      %4831 = vmatprep.subr.bf16.mxu0 0
      %4832 = vmatpush1.bf16.msra.mxu0 0
      %4833 = vmatprep.subr.bf16.mxu0 0
      %4834 = vmatpush1.bf16.msra.mxu0 0
      %4835 = vmatprep.subr.bf16.mxu0 0
      %4836 = vmatpush1.bf16.msra.mxu0 0
      %4837 = vmatprep.subr.bf16.mxu0 0
      %4838 = vmatpush1.bf16.msra.mxu0 0
      %4839 = vmatprep.subr.bf16.mxu0 0
      %4840 = vmatpush1.bf16.msra.mxu0 0
      %4841 = vmatprep.subr.bf16.mxu0 0
      %4842 = vmatpush1.bf16.msra.mxu0 0
      %4843 = vmatprep.subr.bf16.mxu0 0
      %4844 = vmatpush1.bf16.msra.mxu0 0
      %4845 = vmatprep.subr.bf16.mxu0 0
      %4846 = vmatpush1.bf16.msra.mxu0 0
      %4847 = vmatprep.subr.bf16.mxu0 0
      %4848 = vmatpush1.bf16.msra.mxu0 0
      %4849 = vmatprep.subr.bf16.mxu0 0
      %4850 = vmatpush1.bf16.msra.mxu0 0
      %4851 = vmatprep.subr.bf16.mxu0 0
      %4852 = vmatpush1.bf16.msra.mxu0 0
      %4853 = vmatprep.subr.bf16.mxu0 0
      %4854 = vmatpush1.bf16.msra.mxu0 0
      %4855 = vmatprep.subr.bf16.mxu0 0
      %4856 = vmatpush1.bf16.msra.mxu0 0
      %4857 = vmatprep.mubr.bf16.mxu0 0
      %4858 = vmatmul.mubr.bf16.gmra.mrb[0].mxu0 %v4814
      %v4859 = vpop.f32.mrb[0].mxu0
      %v4860 = vadd.f32 0.0, %v4859
      %v4861 = vpop.f32.mrb[0].mxu0
      %v4862 = vpop.f32.mrb[0].mxu0
      %v4863 = vadd.f32 0.0, %v4862
      %v4864 = vpop.f32.mrb[0].mxu0
      %4865 = vmatprep.mubr.bf16.mxu0 0
      %4866 = vmatmul.mubr.bf16.gmra.mrb[0].mxu0 %v4817
      %v4867 = vpop.f32.mrb[0].mxu0
      %v4868 = vadd.f32 0.0, %v4867
      %v4869 = vpop.f32.mrb[0].mxu0
      %v4870 = vpop.f32.mrb[0].mxu0
      %v4871 = vadd.f32 0.0, %v4870
      %v4872 = vpop.f32.mrb[0].mxu0
      %4873 = vmatprep.mubr.bf16.mxu0 0
      %4874 = vmatmul.mubr.bf16.gmra.mrb[0].mxu0 %v4820
      %v4875 = vpop.f32.mrb[0].mxu0
      %v4876 = vadd.f32 0.0, %v4875
      %v4877 = vpop.f32.mrb[0].mxu0
      %v4878 = vpop.f32.mrb[0].mxu0
      %v4879 = vadd.f32 0.0, %v4878
      %v4880 = vpop.f32.mrb[0].mxu0
      %4881 = vmatprep.mubr.bf16.mxu0 0
      %4882 = vmatmul.mubr.bf16.gmra.mrb[0].mxu0 %v4823
      %v4883 = vpop.f32.mrb[0].mxu0
      %v4884 = vadd.f32 0.0, %v4883
      %v4885 = vpop.f32.mrb[0].mxu0
      %v4886 = vpop.f32.mrb[0].mxu0
      %v4887 = vadd.f32 0.0, %v4886
      %v4888 = vpop.f32.mrb[0].mxu0
      %4889 = vdwg.mxu0
      %v4890 = vadd.f32 %v4796, %v4860
      %v4891 = vadd.f32 %v4797, %v4863
      %v4892 = vadd.f32 %v4798, %v4868
      %v4893 = vadd.f32 %v4799, %v4871
      %v4894 = vadd.f32 %v4800, %v4876
      %v4895 = vadd.f32 %v4801, %v4879
      %v4896 = vadd.f32 %v4802, %v4884
      %v4897 = vadd.f32 %v4803, %v4887
      %s4898 = scalar_lea.vmem %s7, 40
      %v4899 = vld [vmem:[%s4898] sm:$0xf]
      %v4900 = vld [vmem:[%s4898 + $0x4] sm:$0xf]
      %v4903 = vunpack.c.l.b16 %v4899
      %v4904 = vunpack.c.l.b16 %v4900
      %v4905 = vpack.c.b16 %v4904, %v4903
      %v4908 = vsel %vm2471, %v4429, 0
      %v4911 = vsel %vm2471, %v4430, 0
      %v4914 = vsel %vm2471, %v4431, 0
      %v4917 = vsel %vm2471, %v4432, 0
      %4919 = vmatprep.subr.bf16.mxu0 0
      %4920 = vmatpush1.bf16.msra.mxu0 %v4905
      %4921 = vmatprep.subr.bf16.mxu0 0
      %4922 = vmatpush1.bf16.msra.mxu0 0
      %4923 = vmatprep.subr.bf16.mxu0 0
      %4924 = vmatpush1.bf16.msra.mxu0 0
      %4925 = vmatprep.subr.bf16.mxu0 0
      %4926 = vmatpush1.bf16.msra.mxu0 0
      %4927 = vmatprep.subr.bf16.mxu0 0
      %4928 = vmatpush1.bf16.msra.mxu0 0
      %4929 = vmatprep.subr.bf16.mxu0 0
      %4930 = vmatpush1.bf16.msra.mxu0 0
      %4931 = vmatprep.subr.bf16.mxu0 0
      %4932 = vmatpush1.bf16.msra.mxu0 0
      %4933 = vmatprep.subr.bf16.mxu0 0
      %4934 = vmatpush1.bf16.msra.mxu0 0
      %4935 = vmatprep.subr.bf16.mxu0 0
      %4936 = vmatpush1.bf16.msra.mxu0 0
      %4937 = vmatprep.subr.bf16.mxu0 0
      %4938 = vmatpush1.bf16.msra.mxu0 0
      %4939 = vmatprep.subr.bf16.mxu0 0
      %4940 = vmatpush1.bf16.msra.mxu0 0
      %4941 = vmatprep.subr.bf16.mxu0 0
      %4942 = vmatpush1.bf16.msra.mxu0 0
      %4943 = vmatprep.subr.bf16.mxu0 0
      %4944 = vmatpush1.bf16.msra.mxu0 0
      %4945 = vmatprep.subr.bf16.mxu0 0
      %4946 = vmatpush1.bf16.msra.mxu0 0
      %4947 = vmatprep.subr.bf16.mxu0 0
      %4948 = vmatpush1.bf16.msra.mxu0 0
      %4949 = vmatprep.subr.bf16.mxu0 0
      %4950 = vmatpush1.bf16.msra.mxu0 0
      %4951 = vmatprep.mubr.bf16.mxu0 0
      %4952 = vmatmul.mubr.bf16.gmra.mrb[0].mxu0 %v4908
      %v4953 = vpop.f32.mrb[0].mxu0
      %v4954 = vadd.f32 0.0, %v4953
      %v4955 = vpop.f32.mrb[0].mxu0
      %v4956 = vpop.f32.mrb[0].mxu0
      %v4957 = vadd.f32 0.0, %v4956
      %v4958 = vpop.f32.mrb[0].mxu0
      %4959 = vmatprep.mubr.bf16.mxu0 0
      %4960 = vmatmul.mubr.bf16.gmra.mrb[0].mxu0 %v4911
      %v4961 = vpop.f32.mrb[0].mxu0
      %v4962 = vadd.f32 0.0, %v4961
      %v4963 = vpop.f32.mrb[0].mxu0
      %v4964 = vpop.f32.mrb[0].mxu0
      %v4965 = vadd.f32 0.0, %v4964
      %v4966 = vpop.f32.mrb[0].mxu0
      %4967 = vmatprep.mubr.bf16.mxu0 0
      %4968 = vmatmul.mubr.bf16.gmra.mrb[0].mxu0 %v4914
      %v4969 = vpop.f32.mrb[0].mxu0
      %v4970 = vadd.f32 0.0, %v4969
      %v4971 = vpop.f32.mrb[0].mxu0
      %v4972 = vpop.f32.mrb[0].mxu0
      %v4973 = vadd.f32 0.0, %v4972
      %v4974 = vpop.f32.mrb[0].mxu0
      %4975 = vmatprep.mubr.bf16.mxu0 0
      %4976 = vmatmul.mubr.bf16.gmra.mrb[0].mxu0 %v4917
      %v4977 = vpop.f32.mrb[0].mxu0
      %v4978 = vadd.f32 0.0, %v4977
      %v4979 = vpop.f32.mrb[0].mxu0
      %v4980 = vpop.f32.mrb[0].mxu0
      %v4981 = vadd.f32 0.0, %v4980
      %v4982 = vpop.f32.mrb[0].mxu0
      %4983 = vdwg.mxu0
      %v4984 = vadd.f32 %v4890, %v4954
      %v4985 = vadd.f32 %v4891, %v4957
      %v4986 = vadd.f32 %v4892, %v4962
      %v4987 = vadd.f32 %v4893, %v4965
      %v4988 = vadd.f32 %v4894, %v4970
      %v4989 = vadd.f32 %v4895, %v4973
      %v4990 = vadd.f32 %v4896, %v4978
      %v4991 = vadd.f32 %v4897, %v4981
      %s4992 = scalar_lea.vmem %s7, 48
      %v4993 = vld [vmem:[%s4992] sm:$0xf]
      %v4994 = vld [vmem:[%s4992 + $0x4] sm:$0xf]
      %v4997 = vunpack.c.l.b16 %v4993
      %v4998 = vunpack.c.l.b16 %v4994
      %v4999 = vpack.c.b16 %v4998, %v4997
      %v5002 = vsel %vm2471, %v4433, 0
      %v5005 = vsel %vm2471, %v4434, 0
      %v5008 = vsel %vm2471, %v4435, 0
      %v5011 = vsel %vm2471, %v4436, 0
      %5013 = vmatprep.subr.bf16.mxu0 0
      %5014 = vmatpush1.bf16.msra.mxu0 %v4999
      %5015 = vmatprep.subr.bf16.mxu0 0
      %5016 = vmatpush1.bf16.msra.mxu0 0
      %5017 = vmatprep.subr.bf16.mxu0 0
      %5018 = vmatpush1.bf16.msra.mxu0 0
      %5019 = vmatprep.subr.bf16.mxu0 0
      %5020 = vmatpush1.bf16.msra.mxu0 0
      %5021 = vmatprep.subr.bf16.mxu0 0
      %5022 = vmatpush1.bf16.msra.mxu0 0
      %5023 = vmatprep.subr.bf16.mxu0 0
      %5024 = vmatpush1.bf16.msra.mxu0 0
      %5025 = vmatprep.subr.bf16.mxu0 0
      %5026 = vmatpush1.bf16.msra.mxu0 0
      %5027 = vmatprep.subr.bf16.mxu0 0
      %5028 = vmatpush1.bf16.msra.mxu0 0
      %5029 = vmatprep.subr.bf16.mxu0 0
      %5030 = vmatpush1.bf16.msra.mxu0 0
      %5031 = vmatprep.subr.bf16.mxu0 0
      %5032 = vmatpush1.bf16.msra.mxu0 0
      %5033 = vmatprep.subr.bf16.mxu0 0
      %5034 = vmatpush1.bf16.msra.mxu0 0
      %5035 = vmatprep.subr.bf16.mxu0 0
      %5036 = vmatpush1.bf16.msra.mxu0 0
      %5037 = vmatprep.subr.bf16.mxu0 0
      %5038 = vmatpush1.bf16.msra.mxu0 0
      %5039 = vmatprep.subr.bf16.mxu0 0
      %5040 = vmatpush1.bf16.msra.mxu0 0
      %5041 = vmatprep.subr.bf16.mxu0 0
      %5042 = vmatpush1.bf16.msra.mxu0 0
      %5043 = vmatprep.subr.bf16.mxu0 0
      %5044 = vmatpush1.bf16.msra.mxu0 0
      %5045 = vmatprep.mubr.bf16.mxu0 0
      %5046 = vmatmul.mubr.bf16.gmra.mrb[0].mxu0 %v5002
      %v5047 = vpop.f32.mrb[0].mxu0
      %v5048 = vadd.f32 0.0, %v5047
      %v5049 = vpop.f32.mrb[0].mxu0
      %v5050 = vpop.f32.mrb[0].mxu0
      %v5051 = vadd.f32 0.0, %v5050
      %v5052 = vpop.f32.mrb[0].mxu0
      %5053 = vmatprep.mubr.bf16.mxu0 0
      %5054 = vmatmul.mubr.bf16.gmra.mrb[0].mxu0 %v5005
      %v5055 = vpop.f32.mrb[0].mxu0
      %v5056 = vadd.f32 0.0, %v5055
      %v5057 = vpop.f32.mrb[0].mxu0
      %v5058 = vpop.f32.mrb[0].mxu0
      %v5059 = vadd.f32 0.0, %v5058
      %v5060 = vpop.f32.mrb[0].mxu0
      %5061 = vmatprep.mubr.bf16.mxu0 0
      %5062 = vmatmul.mubr.bf16.gmra.mrb[0].mxu0 %v5008
      %v5063 = vpop.f32.mrb[0].mxu0
      %v5064 = vadd.f32 0.0, %v5063
      %v5065 = vpop.f32.mrb[0].mxu0
      %v5066 = vpop.f32.mrb[0].mxu0
      %v5067 = vadd.f32 0.0, %v5066
      %v5068 = vpop.f32.mrb[0].mxu0
      %5069 = vmatprep.mubr.bf16.mxu0 0
      %5070 = vmatmul.mubr.bf16.gmra.mrb[0].mxu0 %v5011
      %v5071 = vpop.f32.mrb[0].mxu0
      %v5072 = vadd.f32 0.0, %v5071
      %v5073 = vpop.f32.mrb[0].mxu0
      %v5074 = vpop.f32.mrb[0].mxu0
      %v5075 = vadd.f32 0.0, %v5074
      %v5076 = vpop.f32.mrb[0].mxu0
      %5077 = vdwg.mxu0
      %v5078 = vadd.f32 %v4984, %v5048
      %v5079 = vadd.f32 %v4985, %v5051
      %v5080 = vadd.f32 %v4986, %v5056
      %v5081 = vadd.f32 %v4987, %v5059
      %v5082 = vadd.f32 %v4988, %v5064
      %v5083 = vadd.f32 %v4989, %v5067
      %v5084 = vadd.f32 %v4990, %v5072
      %v5085 = vadd.f32 %v4991, %v5075
      %s5086 = scalar_lea.vmem %s7, 56
      %v5087 = vld [vmem:[%s5086] sm:$0xf]
      %v5088 = vld [vmem:[%s5086 + $0x4] sm:$0xf]
      %v5091 = vunpack.c.l.b16 %v5087
      %v5092 = vunpack.c.l.b16 %v5088
      %v5093 = vpack.c.b16 %v5092, %v5091
      %v5096 = vsel %vm2471, %v4437, 0
      %v5099 = vsel %vm2471, %v4438, 0
      %v5102 = vsel %vm2471, %v4439, 0
      %v5105 = vsel %vm2471, %v4440, 0
      %5107 = vmatprep.subr.bf16.mxu0 0
      %5108 = vmatpush1.bf16.msra.mxu0 %v5093
      %5109 = vmatprep.subr.bf16.mxu0 0
      %5110 = vmatpush1.bf16.msra.mxu0 0
      %5111 = vmatprep.subr.bf16.mxu0 0
      %5112 = vmatpush1.bf16.msra.mxu0 0
      %5113 = vmatprep.subr.bf16.mxu0 0
      %5114 = vmatpush1.bf16.msra.mxu0 0
      %5115 = vmatprep.subr.bf16.mxu0 0
      %5116 = vmatpush1.bf16.msra.mxu0 0
      %5117 = vmatprep.subr.bf16.mxu0 0
      %5118 = vmatpush1.bf16.msra.mxu0 0
      %5119 = vmatprep.subr.bf16.mxu0 0
      %5120 = vmatpush1.bf16.msra.mxu0 0
      %5121 = vmatprep.subr.bf16.mxu0 0
      %5122 = vmatpush1.bf16.msra.mxu0 0
      %5123 = vmatprep.subr.bf16.mxu0 0
      %5124 = vmatpush1.bf16.msra.mxu0 0
      %5125 = vmatprep.subr.bf16.mxu0 0
      %5126 = vmatpush1.bf16.msra.mxu0 0
      %5127 = vmatprep.subr.bf16.mxu0 0
      %5128 = vmatpush1.bf16.msra.mxu0 0
      %5129 = vmatprep.subr.bf16.mxu0 0
      %5130 = vmatpush1.bf16.msra.mxu0 0
      %5131 = vmatprep.subr.bf16.mxu0 0
      %5132 = vmatpush1.bf16.msra.mxu0 0
      %5133 = vmatprep.subr.bf16.mxu0 0
      %5134 = vmatpush1.bf16.msra.mxu0 0
      %5135 = vmatprep.subr.bf16.mxu0 0
      %5136 = vmatpush1.bf16.msra.mxu0 0
      %5137 = vmatprep.subr.bf16.mxu0 0
      %5138 = vmatpush1.bf16.msra.mxu0 0
      %5139 = vmatprep.mubr.bf16.mxu0 0
      %5140 = vmatmul.mubr.bf16.gmra.mrb[0].mxu0 %v5096
      %v5141 = vpop.f32.mrb[0].mxu0
      %v5142 = vadd.f32 0.0, %v5141
      %v5143 = vpop.f32.mrb[0].mxu0
      %v5144 = vpop.f32.mrb[0].mxu0
      %v5145 = vadd.f32 0.0, %v5144
      %v5146 = vpop.f32.mrb[0].mxu0
      %5147 = vmatprep.mubr.bf16.mxu0 0
      %5148 = vmatmul.mubr.bf16.gmra.mrb[0].mxu0 %v5099
      %v5149 = vpop.f32.mrb[0].mxu0
      %v5150 = vadd.f32 0.0, %v5149
      %v5151 = vpop.f32.mrb[0].mxu0
      %v5152 = vpop.f32.mrb[0].mxu0
      %v5153 = vadd.f32 0.0, %v5152
      %v5154 = vpop.f32.mrb[0].mxu0
      %5155 = vmatprep.mubr.bf16.mxu0 0
      %5156 = vmatmul.mubr.bf16.gmra.mrb[0].mxu0 %v5102
      %v5157 = vpop.f32.mrb[0].mxu0
      %v5158 = vadd.f32 0.0, %v5157
      %v5159 = vpop.f32.mrb[0].mxu0
      %v5160 = vpop.f32.mrb[0].mxu0
      %v5161 = vadd.f32 0.0, %v5160
      %v5162 = vpop.f32.mrb[0].mxu0
      %5163 = vmatprep.mubr.bf16.mxu0 0
      %5164 = vmatmul.mubr.bf16.gmra.mrb[0].mxu0 %v5105
      %v5165 = vpop.f32.mrb[0].mxu0
      %v5166 = vadd.f32 0.0, %v5165
      %v5167 = vpop.f32.mrb[0].mxu0
      %v5168 = vpop.f32.mrb[0].mxu0
      %v5169 = vadd.f32 0.0, %v5168
      %v5170 = vpop.f32.mrb[0].mxu0
      %5171 = vdwg.mxu0
      %v5172 = vadd.f32 %v5078, %v5142
      %v5173 = vadd.f32 %v5079, %v5145
      %v5174 = vadd.f32 %v5080, %v5150
      %v5175 = vadd.f32 %v5081, %v5153
      %v5176 = vadd.f32 %v5082, %v5158
      %v5177 = vadd.f32 %v5083, %v5161
      %v5178 = vadd.f32 %v5084, %v5166
      %v5179 = vadd.f32 %v5085, %v5169
      %s5180 = scalar_lea.vmem %s7, 64
      %v5181 = vld [vmem:[%s5180] sm:$0xf]
      %v5182 = vld [vmem:[%s5180 + $0x4] sm:$0xf]
      %v5185 = vunpack.c.l.b16 %v5181
      %v5186 = vunpack.c.l.b16 %v5182
      %v5187 = vpack.c.b16 %v5186, %v5185
      %v5190 = vsel %vm2471, %v4441, 0
      %v5193 = vsel %vm2471, %v4442, 0
      %v5196 = vsel %vm2471, %v4443, 0
      %v5199 = vsel %vm2471, %v4444, 0
      %5201 = vmatprep.subr.bf16.mxu0 0
      %5202 = vmatpush1.bf16.msra.mxu0 %v5187
      %5203 = vmatprep.subr.bf16.mxu0 0
      %5204 = vmatpush1.bf16.msra.mxu0 0
      %5205 = vmatprep.subr.bf16.mxu0 0
      %5206 = vmatpush1.bf16.msra.mxu0 0
      %5207 = vmatprep.subr.bf16.mxu0 0
      %5208 = vmatpush1.bf16.msra.mxu0 0
      %5209 = vmatprep.subr.bf16.mxu0 0
      %5210 = vmatpush1.bf16.msra.mxu0 0
      %5211 = vmatprep.subr.bf16.mxu0 0
      %5212 = vmatpush1.bf16.msra.mxu0 0
      %5213 = vmatprep.subr.bf16.mxu0 0
      %5214 = vmatpush1.bf16.msra.mxu0 0
      %5215 = vmatprep.subr.bf16.mxu0 0
      %5216 = vmatpush1.bf16.msra.mxu0 0
      %5217 = vmatprep.subr.bf16.mxu0 0
      %5218 = vmatpush1.bf16.msra.mxu0 0
      %5219 = vmatprep.subr.bf16.mxu0 0
      %5220 = vmatpush1.bf16.msra.mxu0 0
      %5221 = vmatprep.subr.bf16.mxu0 0
      %5222 = vmatpush1.bf16.msra.mxu0 0
      %5223 = vmatprep.subr.bf16.mxu0 0
      %5224 = vmatpush1.bf16.msra.mxu0 0
      %5225 = vmatprep.subr.bf16.mxu0 0
      %5226 = vmatpush1.bf16.msra.mxu0 0
      %5227 = vmatprep.subr.bf16.mxu0 0
      %5228 = vmatpush1.bf16.msra.mxu0 0
      %5229 = vmatprep.subr.bf16.mxu0 0
      %5230 = vmatpush1.bf16.msra.mxu0 0
      %5231 = vmatprep.subr.bf16.mxu0 0
      %5232 = vmatpush1.bf16.msra.mxu0 0
      %5233 = vmatprep.mubr.bf16.mxu0 0
      %5234 = vmatmul.mubr.bf16.gmra.mrb[0].mxu0 %v5190
      %v5235 = vpop.f32.mrb[0].mxu0
      %v5236 = vadd.f32 0.0, %v5235
      %v5237 = vpop.f32.mrb[0].mxu0
      %v5238 = vpop.f32.mrb[0].mxu0
      %v5239 = vadd.f32 0.0, %v5238
      %v5240 = vpop.f32.mrb[0].mxu0
      %5241 = vmatprep.mubr.bf16.mxu0 0
      %5242 = vmatmul.mubr.bf16.gmra.mrb[0].mxu0 %v5193
      %v5243 = vpop.f32.mrb[0].mxu0
      %v5244 = vadd.f32 0.0, %v5243
      %v5245 = vpop.f32.mrb[0].mxu0
      %v5246 = vpop.f32.mrb[0].mxu0
      %v5247 = vadd.f32 0.0, %v5246
      %v5248 = vpop.f32.mrb[0].mxu0
      %5249 = vmatprep.mubr.bf16.mxu0 0
      %5250 = vmatmul.mubr.bf16.gmra.mrb[0].mxu0 %v5196
      %v5251 = vpop.f32.mrb[0].mxu0
      %v5252 = vadd.f32 0.0, %v5251
      %v5253 = vpop.f32.mrb[0].mxu0
      %v5254 = vpop.f32.mrb[0].mxu0
      %v5255 = vadd.f32 0.0, %v5254
      %v5256 = vpop.f32.mrb[0].mxu0
      %5257 = vmatprep.mubr.bf16.mxu0 0
      %5258 = vmatmul.mubr.bf16.gmra.mrb[0].mxu0 %v5199
      %v5259 = vpop.f32.mrb[0].mxu0
      %v5260 = vadd.f32 0.0, %v5259
      %v5261 = vpop.f32.mrb[0].mxu0
      %v5262 = vpop.f32.mrb[0].mxu0
      %v5263 = vadd.f32 0.0, %v5262
      %v5264 = vpop.f32.mrb[0].mxu0
      %5265 = vdwg.mxu0
      %v5266 = vadd.f32 %v5172, %v5236
      %v5267 = vadd.f32 %v5173, %v5239
      %v5268 = vadd.f32 %v5174, %v5244
      %v5269 = vadd.f32 %v5175, %v5247
      %v5270 = vadd.f32 %v5176, %v5252
      %v5271 = vadd.f32 %v5177, %v5255
      %v5272 = vadd.f32 %v5178, %v5260
      %v5273 = vadd.f32 %v5179, %v5263
      %v5274 = vld [vmem:[%s9] sm:$0xff]
      %v5275 = vld [vmem:[%s9 + $0x8] sm:$0xff]
      %v5276 = vld [vmem:[%s9 + $0x10] sm:$0xff]
      %v5277 = vld [vmem:[%s9 + $0x18] sm:$0xff]
      %v5278 = vld [vmem:[%s9 + $0x20] sm:$0xff]
      %v5279 = vld [vmem:[%s9 + $0x28] sm:$0xff]
      %v5280 = vld [vmem:[%s9 + $0x30] sm:$0xff]
      %v5281 = vld [vmem:[%s9 + $0x38] sm:$0xff]
      %5283 = vset.pattern.permute.xlu0 0
      %5284 = vperm.xlu0 %5283, %v5274
      %v5285 = vpop.permute.xlu0 %5284
      %5288 = vset.pattern.permute.xlu0 0
      %5289 = vperm.xlu0 %5288, %v5275
      %v5290 = vpop.permute.xlu0 %5289
      %5293 = vset.pattern.permute.xlu0 0
      %5294 = vperm.xlu0 %5293, %v5276
      %v5295 = vpop.permute.xlu0 %5294
      %5298 = vset.pattern.permute.xlu0 0
      %5299 = vperm.xlu0 %5298, %v5277
      %v5300 = vpop.permute.xlu0 %5299
      %5303 = vset.pattern.permute.xlu0 0
      %5304 = vperm.xlu0 %5303, %v5278
      %v5305 = vpop.permute.xlu0 %5304
      %5308 = vset.pattern.permute.xlu0 0
      %5309 = vperm.xlu0 %5308, %v5279
      %v5310 = vpop.permute.xlu0 %5309
      %5313 = vset.pattern.permute.xlu0 0
      %5314 = vperm.xlu0 %5313, %v5280
      %v5315 = vpop.permute.xlu0 %5314
      %5318 = vset.pattern.permute.xlu0 0
      %5319 = vperm.xlu0 %5318, %v5281
      %v5320 = vpop.permute.xlu0 %5319
      %v5322 = vadd.f32 %v5266, %v5285
      %v5323 = vadd.f32 %v5267, %v5290
      %v5324 = vadd.f32 %v5268, %v5295
      %v5325 = vadd.f32 %v5269, %v5300
      %v5326 = vadd.f32 %v5270, %v5305
      %v5327 = vadd.f32 %v5271, %v5310
      %v5328 = vadd.f32 %v5272, %v5315
      %v5329 = vadd.f32 %v5273, %v5320
      %v5330 = vmax.f32 %v5322, 0.0
      %v5331 = vmax.f32 %v5323, 0.0
      %v5332 = vmax.f32 %v5324, 0.0
      %v5333 = vmax.f32 %v5325, 0.0
      %v5334 = vmax.f32 %v5326, 0.0
      %v5335 = vmax.f32 %v5327, 0.0
      %v5336 = vmax.f32 %v5328, 0.0
      %v5337 = vmax.f32 %v5329, 0.0
      %v5338 = vld [vmem:[%s11] sm:$0xff]
      %v5339 = vld [vmem:[%s11 + $0x8] sm:$0xff]
      %v5340 = vld [vmem:[%s11 + $0x10] sm:$0xff]
      %v5341 = vld [vmem:[%s11 + $0x18] sm:$0xff]
      %v5342 = vld [vmem:[%s11 + $0x20] sm:$0xff]
      %v5343 = vld [vmem:[%s11 + $0x28] sm:$0xff]
      %v5344 = vld [vmem:[%s11 + $0x30] sm:$0xff]
      %v5345 = vld [vmem:[%s11 + $0x38] sm:$0xff]
      %v5346 = vld [vmem:[%s11 + $0x40] sm:$0xff]
      %v5347 = vld [vmem:[%s11 + $0x48] sm:$0xff]
      %v5348 = vld [vmem:[%s11 + $0x50] sm:$0xff]
      %v5349 = vld [vmem:[%s11 + $0x58] sm:$0xff]
      %v5350 = vld [vmem:[%s11 + $0x60] sm:$0xff]
      %v5351 = vld [vmem:[%s11 + $0x68] sm:$0xff]
      %v5352 = vld [vmem:[%s11 + $0x70] sm:$0xff]
      %v5353 = vld [vmem:[%s11 + $0x78] sm:$0xff]
      %v5354 = vld [vmem:[%s11 + $0x80] sm:$0xff]
      %v5355 = vld [vmem:[%s11 + $0x88] sm:$0xff]
      %v5356 = vld [vmem:[%s11 + $0x90] sm:$0xff]
      %v5357 = vld [vmem:[%s11 + $0x98] sm:$0xff]
      %v5358 = vld [vmem:[%s11 + $0xa0] sm:$0xff]
      %v5359 = vld [vmem:[%s11 + $0xa8] sm:$0xff]
      %v5360 = vld [vmem:[%s11 + $0xb0] sm:$0xff]
      %v5361 = vld [vmem:[%s11 + $0xb8] sm:$0xff]
      %v5362 = vld [vmem:[%s11 + $0xc0] sm:$0xff]
      %v5363 = vld [vmem:[%s11 + $0xc8] sm:$0xff]
      %v5364 = vld [vmem:[%s11 + $0xd0] sm:$0xff]
      %v5365 = vld [vmem:[%s11 + $0xd8] sm:$0xff]
      %v5366 = vld [vmem:[%s11 + $0xe0] sm:$0xff]
      %v5367 = vld [vmem:[%s11 + $0xe8] sm:$0xff]
      %v5368 = vld [vmem:[%s11 + $0xf0] sm:$0xff]
      %v5369 = vld [vmem:[%s11 + $0xf8] sm:$0xff]
      %v5370 = vld [vmem:[%s11 + $0x100] sm:$0xff]
      %v5371 = vld [vmem:[%s11 + $0x108] sm:$0xff]
      %v5372 = vld [vmem:[%s11 + $0x110] sm:$0xff]
      %v5373 = vld [vmem:[%s11 + $0x118] sm:$0xff]
      %v5375 = vsel %vm2884, %v5338, 0
      %v5378 = vsel %vm2884, %v5339, 0
      %v5381 = vsel %vm2884, %v5340, 0
      %v5384 = vsel %vm2884, %v5341, 0
      %v5387 = vsel %vm2884, %v5342, 0
      %v5390 = vsel %vm2884, %v5343, 0
      %v5393 = vsel %vm2884, %v5344, 0
      %v5396 = vsel %vm2884, %v5345, 0
      %v5399 = vsel %vm2884, %v5346, 0
      %v5402 = vsel %vm2884, %v5347, 0
      %v5405 = vsel %vm2884, %v5348, 0
      %v5408 = vsel %vm2884, %v5349, 0
      %v5411 = vsel %vm2884, %v5350, 0
      %v5414 = vsel %vm2884, %v5351, 0
      %v5417 = vsel %vm2884, %v5352, 0
      %v5420 = vsel %vm2884, %v5353, 0
      %v5423 = vsel %vm2884, %v5354, 0
      %v5426 = vsel %vm2884, %v5355, 0
      %v5429 = vsel %vm2884, %v5356, 0
      %v5432 = vsel %vm2884, %v5357, 0
      %v5435 = vsel %vm2884, %v5358, 0
      %v5438 = vsel %vm2884, %v5359, 0
      %v5441 = vsel %vm2884, %v5360, 0
      %v5444 = vsel %vm2884, %v5361, 0
      %v5447 = vsel %vm2884, %v5362, 0
      %v5450 = vsel %vm2884, %v5363, 0
      %v5453 = vsel %vm2884, %v5364, 0
      %v5456 = vsel %vm2884, %v5365, 0
      %v5459 = vsel %vm2884, %v5366, 0
      %v5462 = vsel %vm2884, %v5367, 0
      %v5465 = vsel %vm2884, %v5368, 0
      %v5468 = vsel %vm2884, %v5369, 0
      %v5471 = vsel %vm2884, %v5370, 0
      %v5474 = vsel %vm2884, %v5371, 0
      %v5477 = vsel %vm2884, %v5372, 0
      %v5480 = vsel %vm2884, %v5373, 0
      %5482 = vmatprep.subr.mxu0 0.0
      %5483 = vmatpush1.msra.mxu0 %v5330
      %5484 = vmatprep.subr.mxu0 0.0
      %5485 = vmatpush1.msra.mxu0 %v5331
      %5486 = vmatprep.subr.mxu0 0.0
      %5487 = vmatpush1.msra.mxu0 %v5332
      %5488 = vmatprep.subr.mxu0 0.0
      %5489 = vmatpush1.msra.mxu0 %v5333
      %5490 = vmatprep.subr.mxu0 0.0
      %5491 = vmatpush1.msra.mxu0 %v5334
      %5492 = vmatprep.subr.mxu0 0.0
      %5493 = vmatpush1.msra.mxu0 %v5335
      %5494 = vmatprep.subr.mxu0 0.0
      %5495 = vmatpush1.msra.mxu0 %v5336
      %5496 = vmatprep.subr.mxu0 0.0
      %5497 = vmatpush1.msra.mxu0 %v5337
      %5498 = vmatprep.subr.mxu0 0.0
      %5499 = vmatpush1.msra.mxu0 0.0
      %5500 = vmatprep.subr.mxu0 0.0
      %5501 = vmatpush1.msra.mxu0 0.0
      %5502 = vmatprep.subr.mxu0 0.0
      %5503 = vmatpush1.msra.mxu0 0.0
      %5504 = vmatprep.subr.mxu0 0.0
      %5505 = vmatpush1.msra.mxu0 0.0
      %5506 = vmatprep.subr.mxu0 0.0
      %5507 = vmatpush1.msra.mxu0 0.0
      %5508 = vmatprep.subr.mxu0 0.0
      %5509 = vmatpush1.msra.mxu0 0.0
      %5510 = vmatprep.subr.mxu0 0.0
      %5511 = vmatpush1.msra.mxu0 0.0
      %5512 = vmatprep.subr.mxu0 0.0
      %5513 = vmatpush1.msra.mxu0 0.0
      %5514 = vmatprep.subr.mxu0 0.0
      %5515 = vmatpush1.msra.mxu0 0.0
      %5516 = vmatprep.subr.mxu0 0.0
      %5517 = vmatpush1.msra.mxu0 0.0
      %5518 = vmatprep.subr.mxu0 0.0
      %5519 = vmatpush1.msra.mxu0 0.0
      %5520 = vmatprep.subr.mxu0 0.0
      %5521 = vmatpush1.msra.mxu0 0.0
      %5522 = vmatprep.subr.mxu0 0.0
      %5523 = vmatpush1.msra.mxu0 0.0
      %5524 = vmatprep.subr.mxu0 0.0
      %5525 = vmatpush1.msra.mxu0 0.0
      %5526 = vmatprep.subr.mxu0 0.0
      %5527 = vmatpush1.msra.mxu0 0.0
      %5528 = vmatprep.subr.mxu0 0.0
      %5529 = vmatpush1.msra.mxu0 0.0
      %5530 = vmatprep.subr.mxu0 0.0
      %5531 = vmatpush1.msra.mxu0 0.0
      %5532 = vmatprep.subr.mxu0 0.0
      %5533 = vmatpush1.msra.mxu0 0.0
      %5534 = vmatprep.subr.mxu0 0.0
      %5535 = vmatpush1.msra.mxu0 0.0
      %5536 = vmatprep.subr.mxu0 0.0
      %5537 = vmatpush1.msra.mxu0 0.0
      %5538 = vmatprep.subr.mxu0 0.0
      %5539 = vmatpush1.msra.mxu0 0.0
      %5540 = vmatprep.subr.mxu0 0.0
      %5541 = vmatpush1.msra.mxu0 0.0
      %5542 = vmatprep.subr.mxu0 0.0
      %5543 = vmatpush1.msra.mxu0 0.0
      %5544 = vmatprep.subr.mxu0 0.0
      %5545 = vmatpush1.msra.mxu0 0.0
      %5546 = vmatprep.mubr.f32.mxu0 0.0
      %5547 = vmatmul.mubr.f32.gmra.mrb[0].mxu0 %v5375
      %v5548 = vpop.f32.mrb[0].mxu0
      %v5549 = vadd.f32 0.0, %v5548
      %v5550 = vpop.f32.mrb[0].mxu0
      %5551 = vmatprep.mubr.f32.mxu0 0.0
      %5552 = vmatmul.mubr.f32.gmra.mrb[0].mxu0 %v5378
      %v5553 = vpop.f32.mrb[0].mxu0
      %v5554 = vadd.f32 0.0, %v5553
      %v5555 = vpop.f32.mrb[0].mxu0
      %5556 = vmatprep.mubr.f32.mxu0 0.0
      %5557 = vmatmul.mubr.f32.gmra.mrb[0].mxu0 %v5381
      %v5558 = vpop.f32.mrb[0].mxu0
      %v5559 = vadd.f32 0.0, %v5558
      %v5560 = vpop.f32.mrb[0].mxu0
      %5561 = vmatprep.mubr.f32.mxu0 0.0
      %5562 = vmatmul.mubr.f32.gmra.mrb[0].mxu0 %v5384
      %v5563 = vpop.f32.mrb[0].mxu0
      %v5564 = vadd.f32 0.0, %v5563
      %v5565 = vpop.f32.mrb[0].mxu0
      %5566 = vmatprep.mubr.f32.mxu0 0.0
      %5567 = vmatmul.mubr.f32.gmra.mrb[0].mxu0 %v5387
      %v5568 = vpop.f32.mrb[0].mxu0
      %v5569 = vadd.f32 0.0, %v5568
      %v5570 = vpop.f32.mrb[0].mxu0
      %5571 = vmatprep.mubr.f32.mxu0 0.0
      %5572 = vmatmul.mubr.f32.gmra.mrb[0].mxu0 %v5390
      %v5573 = vpop.f32.mrb[0].mxu0
      %v5574 = vadd.f32 0.0, %v5573
      %v5575 = vpop.f32.mrb[0].mxu0
      %5576 = vmatprep.mubr.f32.mxu0 0.0
      %5577 = vmatmul.mubr.f32.gmra.mrb[0].mxu0 %v5393
      %v5578 = vpop.f32.mrb[0].mxu0
      %v5579 = vadd.f32 0.0, %v5578
      %v5580 = vpop.f32.mrb[0].mxu0
      %5581 = vmatprep.mubr.f32.mxu0 0.0
      %5582 = vmatmul.mubr.f32.gmra.mrb[0].mxu0 %v5396
      %v5583 = vpop.f32.mrb[0].mxu0
      %v5584 = vadd.f32 0.0, %v5583
      %v5585 = vpop.f32.mrb[0].mxu0
      %5586 = vmatprep.mubr.f32.mxu0 0.0
      %5587 = vmatmul.mubr.f32.gmra.mrb[0].mxu0 %v5399
      %v5588 = vpop.f32.mrb[0].mxu0
      %v5589 = vadd.f32 0.0, %v5588
      %v5590 = vpop.f32.mrb[0].mxu0
      %5591 = vmatprep.mubr.f32.mxu0 0.0
      %5592 = vmatmul.mubr.f32.gmra.mrb[0].mxu0 %v5402
      %v5593 = vpop.f32.mrb[0].mxu0
      %v5594 = vadd.f32 0.0, %v5593
      %v5595 = vpop.f32.mrb[0].mxu0
      %5596 = vmatprep.mubr.f32.mxu0 0.0
      %5597 = vmatmul.mubr.f32.gmra.mrb[0].mxu0 %v5405
      %v5598 = vpop.f32.mrb[0].mxu0
      %v5599 = vadd.f32 0.0, %v5598
      %v5600 = vpop.f32.mrb[0].mxu0
      %5601 = vmatprep.mubr.f32.mxu0 0.0
      %5602 = vmatmul.mubr.f32.gmra.mrb[0].mxu0 %v5408
      %v5603 = vpop.f32.mrb[0].mxu0
      %v5604 = vadd.f32 0.0, %v5603
      %v5605 = vpop.f32.mrb[0].mxu0
      %5606 = vmatprep.mubr.f32.mxu0 0.0
      %5607 = vmatmul.mubr.f32.gmra.mrb[0].mxu0 %v5411
      %v5608 = vpop.f32.mrb[0].mxu0
      %v5609 = vadd.f32 0.0, %v5608
      %v5610 = vpop.f32.mrb[0].mxu0
      %5611 = vmatprep.mubr.f32.mxu0 0.0
      %5612 = vmatmul.mubr.f32.gmra.mrb[0].mxu0 %v5414
      %v5613 = vpop.f32.mrb[0].mxu0
      %v5614 = vadd.f32 0.0, %v5613
      %v5615 = vpop.f32.mrb[0].mxu0
      %5616 = vmatprep.mubr.f32.mxu0 0.0
      %5617 = vmatmul.mubr.f32.gmra.mrb[0].mxu0 %v5417
      %v5618 = vpop.f32.mrb[0].mxu0
      %v5619 = vadd.f32 0.0, %v5618
      %v5620 = vpop.f32.mrb[0].mxu0
      %5621 = vmatprep.mubr.f32.mxu0 0.0
      %5622 = vmatmul.mubr.f32.gmra.mrb[0].mxu0 %v5420
      %v5623 = vpop.f32.mrb[0].mxu0
      %v5624 = vadd.f32 0.0, %v5623
      %v5625 = vpop.f32.mrb[0].mxu0
      %5626 = vmatprep.mubr.f32.mxu0 0.0
      %5627 = vmatmul.mubr.f32.gmra.mrb[0].mxu0 %v5423
      %v5628 = vpop.f32.mrb[0].mxu0
      %v5629 = vadd.f32 0.0, %v5628
      %v5630 = vpop.f32.mrb[0].mxu0
      %5631 = vmatprep.mubr.f32.mxu0 0.0
      %5632 = vmatmul.mubr.f32.gmra.mrb[0].mxu0 %v5426
      %v5633 = vpop.f32.mrb[0].mxu0
      %v5634 = vadd.f32 0.0, %v5633
      %v5635 = vpop.f32.mrb[0].mxu0
      %5636 = vmatprep.mubr.f32.mxu0 0.0
      %5637 = vmatmul.mubr.f32.gmra.mrb[0].mxu0 %v5429
      %v5638 = vpop.f32.mrb[0].mxu0
      %v5639 = vadd.f32 0.0, %v5638
      %v5640 = vpop.f32.mrb[0].mxu0
      %5641 = vmatprep.mubr.f32.mxu0 0.0
      %5642 = vmatmul.mubr.f32.gmra.mrb[0].mxu0 %v5432
      %v5643 = vpop.f32.mrb[0].mxu0
      %v5644 = vadd.f32 0.0, %v5643
      %v5645 = vpop.f32.mrb[0].mxu0
      %5646 = vmatprep.mubr.f32.mxu0 0.0
      %5647 = vmatmul.mubr.f32.gmra.mrb[0].mxu0 %v5435
      %v5648 = vpop.f32.mrb[0].mxu0
      %v5649 = vadd.f32 0.0, %v5648
      %v5650 = vpop.f32.mrb[0].mxu0
      %5651 = vmatprep.mubr.f32.mxu0 0.0
      %5652 = vmatmul.mubr.f32.gmra.mrb[0].mxu0 %v5438
      %v5653 = vpop.f32.mrb[0].mxu0
      %v5654 = vadd.f32 0.0, %v5653
      %v5655 = vpop.f32.mrb[0].mxu0
      %5656 = vmatprep.mubr.f32.mxu0 0.0
      %5657 = vmatmul.mubr.f32.gmra.mrb[0].mxu0 %v5441
      %v5658 = vpop.f32.mrb[0].mxu0
      %v5659 = vadd.f32 0.0, %v5658
      %v5660 = vpop.f32.mrb[0].mxu0
      %5661 = vmatprep.mubr.f32.mxu0 0.0
      %5662 = vmatmul.mubr.f32.gmra.mrb[0].mxu0 %v5444
      %v5663 = vpop.f32.mrb[0].mxu0
      %v5664 = vadd.f32 0.0, %v5663
      %v5665 = vpop.f32.mrb[0].mxu0
      %5666 = vmatprep.mubr.f32.mxu0 0.0
      %5667 = vmatmul.mubr.f32.gmra.mrb[0].mxu0 %v5447
      %v5668 = vpop.f32.mrb[0].mxu0
      %v5669 = vadd.f32 0.0, %v5668
      %v5670 = vpop.f32.mrb[0].mxu0
      %5671 = vmatprep.mubr.f32.mxu0 0.0
      %5672 = vmatmul.mubr.f32.gmra.mrb[0].mxu0 %v5450
      %v5673 = vpop.f32.mrb[0].mxu0
      %v5674 = vadd.f32 0.0, %v5673
      %v5675 = vpop.f32.mrb[0].mxu0
      %5676 = vmatprep.mubr.f32.mxu0 0.0
      %5677 = vmatmul.mubr.f32.gmra.mrb[0].mxu0 %v5453
      %v5678 = vpop.f32.mrb[0].mxu0
      %v5679 = vadd.f32 0.0, %v5678
      %v5680 = vpop.f32.mrb[0].mxu0
      %5681 = vmatprep.mubr.f32.mxu0 0.0
      %5682 = vmatmul.mubr.f32.gmra.mrb[0].mxu0 %v5456
      %v5683 = vpop.f32.mrb[0].mxu0
      %v5684 = vadd.f32 0.0, %v5683
      %v5685 = vpop.f32.mrb[0].mxu0
      %5686 = vmatprep.mubr.f32.mxu0 0.0
      %5687 = vmatmul.mubr.f32.gmra.mrb[0].mxu0 %v5459
      %v5688 = vpop.f32.mrb[0].mxu0
      %v5689 = vadd.f32 0.0, %v5688
      %v5690 = vpop.f32.mrb[0].mxu0
      %5691 = vmatprep.mubr.f32.mxu0 0.0
      %5692 = vmatmul.mubr.f32.gmra.mrb[0].mxu0 %v5462
      %v5693 = vpop.f32.mrb[0].mxu0
      %v5694 = vadd.f32 0.0, %v5693
      %v5695 = vpop.f32.mrb[0].mxu0
      %5696 = vmatprep.mubr.f32.mxu0 0.0
      %5697 = vmatmul.mubr.f32.gmra.mrb[0].mxu0 %v5465
      %v5698 = vpop.f32.mrb[0].mxu0
      %v5699 = vadd.f32 0.0, %v5698
      %v5700 = vpop.f32.mrb[0].mxu0
      %5701 = vmatprep.mubr.f32.mxu0 0.0
      %5702 = vmatmul.mubr.f32.gmra.mrb[0].mxu0 %v5468
      %v5703 = vpop.f32.mrb[0].mxu0
      %v5704 = vadd.f32 0.0, %v5703
      %v5705 = vpop.f32.mrb[0].mxu0
      %5706 = vmatprep.mubr.f32.mxu0 0.0
      %5707 = vmatmul.mubr.f32.gmra.mrb[0].mxu0 %v5471
      %v5708 = vpop.f32.mrb[0].mxu0
      %v5709 = vadd.f32 0.0, %v5708
      %v5710 = vpop.f32.mrb[0].mxu0
      %5711 = vmatprep.mubr.f32.mxu0 0.0
      %5712 = vmatmul.mubr.f32.gmra.mrb[0].mxu0 %v5474
      %v5713 = vpop.f32.mrb[0].mxu0
      %v5714 = vadd.f32 0.0, %v5713
      %v5715 = vpop.f32.mrb[0].mxu0
      %5716 = vmatprep.mubr.f32.mxu0 0.0
      %5717 = vmatmul.mubr.f32.gmra.mrb[0].mxu0 %v5477
      %v5718 = vpop.f32.mrb[0].mxu0
      %v5719 = vadd.f32 0.0, %v5718
      %v5720 = vpop.f32.mrb[0].mxu0
      %5721 = vmatprep.mubr.f32.mxu0 0.0
      %5722 = vmatmul.mubr.f32.gmra.mrb[0].mxu0 %v5480
      %v5723 = vpop.f32.mrb[0].mxu0
      %v5724 = vadd.f32 0.0, %v5723
      %v5725 = vpop.f32.mrb[0].mxu0
      %5726 = vdwg.mxu0
      %v5727 = vpack.c.bf16 %v5554, %v5549
      %v5728 = vpack.c.bf16 %v5564, %v5559
      %v5729 = vpack.c.bf16 %v5574, %v5569
      %v5730 = vpack.c.bf16 %v5584, %v5579
      %v5731 = vpack.c.bf16 %v5594, %v5589
      %v5732 = vpack.c.bf16 %v5604, %v5599
      %v5733 = vpack.c.bf16 %v5614, %v5609
      %v5734 = vpack.c.bf16 %v5624, %v5619
      %v5735 = vpack.c.bf16 %v5634, %v5629
      %v5736 = vpack.c.bf16 %v5644, %v5639
      %v5737 = vpack.c.bf16 %v5654, %v5649
      %v5738 = vpack.c.bf16 %v5664, %v5659
      %v5739 = vpack.c.bf16 %v5674, %v5669
      %v5740 = vpack.c.bf16 %v5684, %v5679
      %v5741 = vpack.c.bf16 %v5694, %v5689
      %v5742 = vpack.c.bf16 %v5704, %v5699
      %v5743 = vpack.c.bf16 %v5714, %v5709
      %v5744 = vpack.c.bf16 %v5724, %v5719
      %v5745 = vld [vmem:[%s10] sm:$0x3]
      %s5746 = scalar_lea.vmem %s10, 2
      %v5747 = vld [vmem:[%s5746] sm:$0x3]
      %vm5748 = vcmask 31744
      %v5750 = vsel %vm5748, %v5729, 0
      %v5753 = vsel %vm5748, %v5730, 0
      %vm5755 = vcmask 1041408
      %v5757 = vsel %vm5755, %v5747, 0
      %5759 = vmatprep.subr.bf16.mxu0 0
      %5760 = vmatpush1.bf16.msra.mxu0 %v5757
      %5761 = vmatprep.subr.bf16.mxu0 0
      %5762 = vmatpush1.bf16.msra.mxu0 0
      %5763 = vmatprep.subr.bf16.mxu0 0
      %5764 = vmatpush1.bf16.msra.mxu0 0
      %5765 = vmatprep.subr.bf16.mxu0 0
      %5766 = vmatpush1.bf16.msra.mxu0 0
      %5767 = vmatprep.subr.bf16.mxu0 0
      %5768 = vmatpush1.bf16.msra.mxu0 0
      %5769 = vmatprep.subr.bf16.mxu0 0
      %5770 = vmatpush1.bf16.msra.mxu0 0
      %5771 = vmatprep.subr.bf16.mxu0 0
      %5772 = vmatpush1.bf16.msra.mxu0 0
      %5773 = vmatprep.subr.bf16.mxu0 0
      %5774 = vmatpush1.bf16.msra.mxu0 0
      %5775 = vmatprep.subr.bf16.mxu0 0
      %5776 = vmatpush1.bf16.msra.mxu0 0
      %5777 = vmatprep.subr.bf16.mxu0 0
      %5778 = vmatpush1.bf16.msra.mxu0 0
      %5779 = vmatprep.subr.bf16.mxu0 0
      %5780 = vmatpush1.bf16.msra.mxu0 0
      %5781 = vmatprep.subr.bf16.mxu0 0
      %5782 = vmatpush1.bf16.msra.mxu0 0
      %5783 = vmatprep.subr.bf16.mxu0 0
      %5784 = vmatpush1.bf16.msra.mxu0 0
      %5785 = vmatprep.subr.bf16.mxu0 0
      %5786 = vmatpush1.bf16.msra.mxu0 0
      %5787 = vmatprep.subr.bf16.mxu0 0
      %5788 = vmatpush1.bf16.msra.mxu0 0
      %5789 = vmatprep.subr.bf16.mxu0 0
      %5790 = vmatpush1.bf16.msra.mxu0 0
      %5791 = vmatprep.mubr.bf16.mxu0 0
      %5792 = vmatmul.mubr.bf16.gmra.mrb[0].mxu0 %v5750
      %v5793 = vpop.f32.mrb[0].mxu0
      %v5794 = vadd.f32 0.0, %v5793
      %v5795 = vpop.f32.mrb[0].mxu0
      %v5796 = vpop.f32.mrb[0].mxu0
      %v5797 = vadd.f32 0.0, %v5796
      %v5798 = vpop.f32.mrb[0].mxu0
      %5799 = vmatprep.mubr.bf16.mxu0 0
      %5800 = vmatmul.mubr.bf16.gmra.mrb[0].mxu0 %v5753
      %v5801 = vpop.f32.mrb[0].mxu0
      %v5802 = vadd.f32 0.0, %v5801
      %v5803 = vpop.f32.mrb[0].mxu0
      %v5804 = vpop.f32.mrb[0].mxu0
      %v5805 = vadd.f32 0.0, %v5804
      %v5806 = vpop.f32.mrb[0].mxu0
      %5807 = vdwg.mxu0
      %v5809 = vsel %vm5748, %v5727, 0
      %v5812 = vsel %vm5748, %v5728, 0
      %v5815 = vsel %vm5755, %v5745, 0
      %5817 = vmatprep.subr.bf16.mxu0 0
      %5818 = vmatpush1.bf16.msra.mxu0 %v5815
      %5819 = vmatprep.subr.bf16.mxu0 0
      %5820 = vmatpush1.bf16.msra.mxu0 0
      %5821 = vmatprep.subr.bf16.mxu0 0
      %5822 = vmatpush1.bf16.msra.mxu0 0
      %5823 = vmatprep.subr.bf16.mxu0 0
      %5824 = vmatpush1.bf16.msra.mxu0 0
      %5825 = vmatprep.subr.bf16.mxu0 0
      %5826 = vmatpush1.bf16.msra.mxu0 0
      %5827 = vmatprep.subr.bf16.mxu0 0
      %5828 = vmatpush1.bf16.msra.mxu0 0
      %5829 = vmatprep.subr.bf16.mxu0 0
      %5830 = vmatpush1.bf16.msra.mxu0 0
      %5831 = vmatprep.subr.bf16.mxu0 0
      %5832 = vmatpush1.bf16.msra.mxu0 0
      %5833 = vmatprep.subr.bf16.mxu0 0
      %5834 = vmatpush1.bf16.msra.mxu0 0
      %5835 = vmatprep.subr.bf16.mxu0 0
      %5836 = vmatpush1.bf16.msra.mxu0 0
      %5837 = vmatprep.subr.bf16.mxu0 0
      %5838 = vmatpush1.bf16.msra.mxu0 0
      %5839 = vmatprep.subr.bf16.mxu0 0
      %5840 = vmatpush1.bf16.msra.mxu0 0
      %5841 = vmatprep.subr.bf16.mxu0 0
      %5842 = vmatpush1.bf16.msra.mxu0 0
      %5843 = vmatprep.subr.bf16.mxu0 0
      %5844 = vmatpush1.bf16.msra.mxu0 0
      %5845 = vmatprep.subr.bf16.mxu0 0
      %5846 = vmatpush1.bf16.msra.mxu0 0
      %5847 = vmatprep.subr.bf16.mxu0 0
      %5848 = vmatpush1.bf16.msra.mxu0 0
      %5849 = vmatprep.mubr.bf16.mxu0 0
      %5850 = vmatmul.mubr.bf16.gmra.mrb[0].mxu0 %v5809
      %v5851 = vpop.f32.mrb[0].mxu0
      %v5852 = vadd.f32 %v5794, %v5851
      %v5853 = vpop.f32.mrb[0].mxu0
      %v5854 = vpop.f32.mrb[0].mxu0
      %v5855 = vadd.f32 %v5797, %v5854
      %v5856 = vpop.f32.mrb[0].mxu0
      %5857 = vmatprep.mubr.bf16.mxu0 0
      %5858 = vmatmul.mubr.bf16.gmra.mrb[0].mxu0 %v5812
      %v5859 = vpop.f32.mrb[0].mxu0
      %v5860 = vadd.f32 %v5802, %v5859
      %v5861 = vpop.f32.mrb[0].mxu0
      %v5862 = vpop.f32.mrb[0].mxu0
      %v5863 = vadd.f32 %v5805, %v5862
      %v5864 = vpop.f32.mrb[0].mxu0
      %5865 = vdwg.mxu0
      %s5866 = scalar_lea.vmem %s10, 4
      %v5867 = vld [vmem:[%s5866] sm:$0x3]
      %v5869 = vsel %vm5748, %v5731, 0
      %v5872 = vsel %vm5748, %v5732, 0
      %v5875 = vsel %vm5755, %v5867, 0
      %5877 = vmatprep.subr.bf16.mxu0 0
      %5878 = vmatpush1.bf16.msra.mxu0 %v5875
      %5879 = vmatprep.subr.bf16.mxu0 0
      %5880 = vmatpush1.bf16.msra.mxu0 0
      %5881 = vmatprep.subr.bf16.mxu0 0
      %5882 = vmatpush1.bf16.msra.mxu0 0
      %5883 = vmatprep.subr.bf16.mxu0 0
      %5884 = vmatpush1.bf16.msra.mxu0 0
      %5885 = vmatprep.subr.bf16.mxu0 0
      %5886 = vmatpush1.bf16.msra.mxu0 0
      %5887 = vmatprep.subr.bf16.mxu0 0
      %5888 = vmatpush1.bf16.msra.mxu0 0
      %5889 = vmatprep.subr.bf16.mxu0 0
      %5890 = vmatpush1.bf16.msra.mxu0 0
      %5891 = vmatprep.subr.bf16.mxu0 0
      %5892 = vmatpush1.bf16.msra.mxu0 0
      %5893 = vmatprep.subr.bf16.mxu0 0
      %5894 = vmatpush1.bf16.msra.mxu0 0
      %5895 = vmatprep.subr.bf16.mxu0 0
      %5896 = vmatpush1.bf16.msra.mxu0 0
      %5897 = vmatprep.subr.bf16.mxu0 0
      %5898 = vmatpush1.bf16.msra.mxu0 0
      %5899 = vmatprep.subr.bf16.mxu0 0
      %5900 = vmatpush1.bf16.msra.mxu0 0
      %5901 = vmatprep.subr.bf16.mxu0 0
      %5902 = vmatpush1.bf16.msra.mxu0 0
      %5903 = vmatprep.subr.bf16.mxu0 0
      %5904 = vmatpush1.bf16.msra.mxu0 0
      %5905 = vmatprep.subr.bf16.mxu0 0
      %5906 = vmatpush1.bf16.msra.mxu0 0
      %5907 = vmatprep.subr.bf16.mxu0 0
      %5908 = vmatpush1.bf16.msra.mxu0 0
      %5909 = vmatprep.mubr.bf16.mxu0 0
      %5910 = vmatmul.mubr.bf16.gmra.mrb[0].mxu0 %v5869
      %v5911 = vpop.f32.mrb[0].mxu0
      %v5912 = vadd.f32 0.0, %v5911
      %v5913 = vpop.f32.mrb[0].mxu0
      %v5914 = vpop.f32.mrb[0].mxu0
      %v5915 = vadd.f32 0.0, %v5914
      %v5916 = vpop.f32.mrb[0].mxu0
      %5917 = vmatprep.mubr.bf16.mxu0 0
      %5918 = vmatmul.mubr.bf16.gmra.mrb[0].mxu0 %v5872
      %v5919 = vpop.f32.mrb[0].mxu0
      %v5920 = vadd.f32 0.0, %v5919
      %v5921 = vpop.f32.mrb[0].mxu0
      %v5922 = vpop.f32.mrb[0].mxu0
      %v5923 = vadd.f32 0.0, %v5922
      %v5924 = vpop.f32.mrb[0].mxu0
      %5925 = vdwg.mxu0
      %v5926 = vadd.f32 %v5852, %v5912
      %v5927 = vadd.f32 %v5855, %v5915
      %v5928 = vadd.f32 %v5860, %v5920
      %v5929 = vadd.f32 %v5863, %v5923
      %s5930 = scalar_lea.vmem %s10, 6
      %v5931 = vld [vmem:[%s5930] sm:$0x3]
      %v5933 = vsel %vm5748, %v5733, 0
      %v5936 = vsel %vm5748, %v5734, 0
      %v5939 = vsel %vm5755, %v5931, 0
      %5941 = vmatprep.subr.bf16.mxu0 0
      %5942 = vmatpush1.bf16.msra.mxu0 %v5939
      %5943 = vmatprep.subr.bf16.mxu0 0
      %5944 = vmatpush1.bf16.msra.mxu0 0
      %5945 = vmatprep.subr.bf16.mxu0 0
      %5946 = vmatpush1.bf16.msra.mxu0 0
      %5947 = vmatprep.subr.bf16.mxu0 0
      %5948 = vmatpush1.bf16.msra.mxu0 0
      %5949 = vmatprep.subr.bf16.mxu0 0
      %5950 = vmatpush1.bf16.msra.mxu0 0
      %5951 = vmatprep.subr.bf16.mxu0 0
      %5952 = vmatpush1.bf16.msra.mxu0 0
      %5953 = vmatprep.subr.bf16.mxu0 0
      %5954 = vmatpush1.bf16.msra.mxu0 0
      %5955 = vmatprep.subr.bf16.mxu0 0
      %5956 = vmatpush1.bf16.msra.mxu0 0
      %5957 = vmatprep.subr.bf16.mxu0 0
      %5958 = vmatpush1.bf16.msra.mxu0 0
      %5959 = vmatprep.subr.bf16.mxu0 0
      %5960 = vmatpush1.bf16.msra.mxu0 0
      %5961 = vmatprep.subr.bf16.mxu0 0
      %5962 = vmatpush1.bf16.msra.mxu0 0
      %5963 = vmatprep.subr.bf16.mxu0 0
      %5964 = vmatpush1.bf16.msra.mxu0 0
      %5965 = vmatprep.subr.bf16.mxu0 0
      %5966 = vmatpush1.bf16.msra.mxu0 0
      %5967 = vmatprep.subr.bf16.mxu0 0
      %5968 = vmatpush1.bf16.msra.mxu0 0
      %5969 = vmatprep.subr.bf16.mxu0 0
      %5970 = vmatpush1.bf16.msra.mxu0 0
      %5971 = vmatprep.subr.bf16.mxu0 0
      %5972 = vmatpush1.bf16.msra.mxu0 0
      %5973 = vmatprep.mubr.bf16.mxu0 0
      %5974 = vmatmul.mubr.bf16.gmra.mrb[0].mxu0 %v5933
      %v5975 = vpop.f32.mrb[0].mxu0
      %v5976 = vadd.f32 0.0, %v5975
      %v5977 = vpop.f32.mrb[0].mxu0
      %v5978 = vpop.f32.mrb[0].mxu0
      %v5979 = vadd.f32 0.0, %v5978
      %v5980 = vpop.f32.mrb[0].mxu0
      %5981 = vmatprep.mubr.bf16.mxu0 0
      %5982 = vmatmul.mubr.bf16.gmra.mrb[0].mxu0 %v5936
      %v5983 = vpop.f32.mrb[0].mxu0
      %v5984 = vadd.f32 0.0, %v5983
      %v5985 = vpop.f32.mrb[0].mxu0
      %v5986 = vpop.f32.mrb[0].mxu0
      %v5987 = vadd.f32 0.0, %v5986
      %v5988 = vpop.f32.mrb[0].mxu0
      %5989 = vdwg.mxu0
      %v5990 = vadd.f32 %v5926, %v5976
      %v5991 = vadd.f32 %v5927, %v5979
      %v5992 = vadd.f32 %v5928, %v5984
      %v5993 = vadd.f32 %v5929, %v5987
      %s5994 = scalar_lea.vmem %s10, 8
      %v5995 = vld [vmem:[%s5994] sm:$0x3]
      %v5997 = vsel %vm5748, %v5735, 0
      %v6000 = vsel %vm5748, %v5736, 0
      %v6003 = vsel %vm5755, %v5995, 0
      %6005 = vmatprep.subr.bf16.mxu0 0
      %6006 = vmatpush1.bf16.msra.mxu0 %v6003
      %6007 = vmatprep.subr.bf16.mxu0 0
      %6008 = vmatpush1.bf16.msra.mxu0 0
      %6009 = vmatprep.subr.bf16.mxu0 0
      %6010 = vmatpush1.bf16.msra.mxu0 0
      %6011 = vmatprep.subr.bf16.mxu0 0
      %6012 = vmatpush1.bf16.msra.mxu0 0
      %6013 = vmatprep.subr.bf16.mxu0 0
      %6014 = vmatpush1.bf16.msra.mxu0 0
      %6015 = vmatprep.subr.bf16.mxu0 0
      %6016 = vmatpush1.bf16.msra.mxu0 0
      %6017 = vmatprep.subr.bf16.mxu0 0
      %6018 = vmatpush1.bf16.msra.mxu0 0
      %6019 = vmatprep.subr.bf16.mxu0 0
      %6020 = vmatpush1.bf16.msra.mxu0 0
      %6021 = vmatprep.subr.bf16.mxu0 0
      %6022 = vmatpush1.bf16.msra.mxu0 0
      %6023 = vmatprep.subr.bf16.mxu0 0
      %6024 = vmatpush1.bf16.msra.mxu0 0
      %6025 = vmatprep.subr.bf16.mxu0 0
      %6026 = vmatpush1.bf16.msra.mxu0 0
      %6027 = vmatprep.subr.bf16.mxu0 0
      %6028 = vmatpush1.bf16.msra.mxu0 0
      %6029 = vmatprep.subr.bf16.mxu0 0
      %6030 = vmatpush1.bf16.msra.mxu0 0
      %6031 = vmatprep.subr.bf16.mxu0 0
      %6032 = vmatpush1.bf16.msra.mxu0 0
      %6033 = vmatprep.subr.bf16.mxu0 0
      %6034 = vmatpush1.bf16.msra.mxu0 0
      %6035 = vmatprep.subr.bf16.mxu0 0
      %6036 = vmatpush1.bf16.msra.mxu0 0
      %6037 = vmatprep.mubr.bf16.mxu0 0
      %6038 = vmatmul.mubr.bf16.gmra.mrb[0].mxu0 %v5997
      %v6039 = vpop.f32.mrb[0].mxu0
      %v6040 = vadd.f32 0.0, %v6039
      %v6041 = vpop.f32.mrb[0].mxu0
      %v6042 = vpop.f32.mrb[0].mxu0
      %v6043 = vadd.f32 0.0, %v6042
      %v6044 = vpop.f32.mrb[0].mxu0
      %6045 = vmatprep.mubr.bf16.mxu0 0
      %6046 = vmatmul.mubr.bf16.gmra.mrb[0].mxu0 %v6000
      %v6047 = vpop.f32.mrb[0].mxu0
      %v6048 = vadd.f32 0.0, %v6047
      %v6049 = vpop.f32.mrb[0].mxu0
      %v6050 = vpop.f32.mrb[0].mxu0
      %v6051 = vadd.f32 0.0, %v6050
      %v6052 = vpop.f32.mrb[0].mxu0
      %6053 = vdwg.mxu0
      %v6054 = vadd.f32 %v5990, %v6040
      %v6055 = vadd.f32 %v5991, %v6043
      %v6056 = vadd.f32 %v5992, %v6048
      %v6057 = vadd.f32 %v5993, %v6051
      %s6058 = scalar_lea.vmem %s10, 10
      %v6059 = vld [vmem:[%s6058] sm:$0x3]
      %v6061 = vsel %vm5748, %v5737, 0
      %v6064 = vsel %vm5748, %v5738, 0
      %v6067 = vsel %vm5755, %v6059, 0
      %6069 = vmatprep.subr.bf16.mxu0 0
      %6070 = vmatpush1.bf16.msra.mxu0 %v6067
      %6071 = vmatprep.subr.bf16.mxu0 0
      %6072 = vmatpush1.bf16.msra.mxu0 0
      %6073 = vmatprep.subr.bf16.mxu0 0
      %6074 = vmatpush1.bf16.msra.mxu0 0
      %6075 = vmatprep.subr.bf16.mxu0 0
      %6076 = vmatpush1.bf16.msra.mxu0 0
      %6077 = vmatprep.subr.bf16.mxu0 0
      %6078 = vmatpush1.bf16.msra.mxu0 0
      %6079 = vmatprep.subr.bf16.mxu0 0
      %6080 = vmatpush1.bf16.msra.mxu0 0
      %6081 = vmatprep.subr.bf16.mxu0 0
      %6082 = vmatpush1.bf16.msra.mxu0 0
      %6083 = vmatprep.subr.bf16.mxu0 0
      %6084 = vmatpush1.bf16.msra.mxu0 0
      %6085 = vmatprep.subr.bf16.mxu0 0
      %6086 = vmatpush1.bf16.msra.mxu0 0
      %6087 = vmatprep.subr.bf16.mxu0 0
      %6088 = vmatpush1.bf16.msra.mxu0 0
      %6089 = vmatprep.subr.bf16.mxu0 0
      %6090 = vmatpush1.bf16.msra.mxu0 0
      %6091 = vmatprep.subr.bf16.mxu0 0
      %6092 = vmatpush1.bf16.msra.mxu0 0
      %6093 = vmatprep.subr.bf16.mxu0 0
      %6094 = vmatpush1.bf16.msra.mxu0 0
      %6095 = vmatprep.subr.bf16.mxu0 0
      %6096 = vmatpush1.bf16.msra.mxu0 0
      %6097 = vmatprep.subr.bf16.mxu0 0
      %6098 = vmatpush1.bf16.msra.mxu0 0
      %6099 = vmatprep.subr.bf16.mxu0 0
      %6100 = vmatpush1.bf16.msra.mxu0 0
      %6101 = vmatprep.mubr.bf16.mxu0 0
      %6102 = vmatmul.mubr.bf16.gmra.mrb[0].mxu0 %v6061
      %v6103 = vpop.f32.mrb[0].mxu0
      %v6104 = vadd.f32 0.0, %v6103
      %v6105 = vpop.f32.mrb[0].mxu0
      %v6106 = vpop.f32.mrb[0].mxu0
      %v6107 = vadd.f32 0.0, %v6106
      %v6108 = vpop.f32.mrb[0].mxu0
      %6109 = vmatprep.mubr.bf16.mxu0 0
      %6110 = vmatmul.mubr.bf16.gmra.mrb[0].mxu0 %v6064
      %v6111 = vpop.f32.mrb[0].mxu0
      %v6112 = vadd.f32 0.0, %v6111
      %v6113 = vpop.f32.mrb[0].mxu0
      %v6114 = vpop.f32.mrb[0].mxu0
      %v6115 = vadd.f32 0.0, %v6114
      %v6116 = vpop.f32.mrb[0].mxu0
      %6117 = vdwg.mxu0
      %v6118 = vadd.f32 %v6054, %v6104
      %v6119 = vadd.f32 %v6055, %v6107
      %v6120 = vadd.f32 %v6056, %v6112
      %v6121 = vadd.f32 %v6057, %v6115
      %s6122 = scalar_lea.vmem %s10, 12
      %v6123 = vld [vmem:[%s6122] sm:$0x3]
      %v6125 = vsel %vm5748, %v5739, 0
      %v6128 = vsel %vm5748, %v5740, 0
      %v6131 = vsel %vm5755, %v6123, 0
      %6133 = vmatprep.subr.bf16.mxu0 0
      %6134 = vmatpush1.bf16.msra.mxu0 %v6131
      %6135 = vmatprep.subr.bf16.mxu0 0
      %6136 = vmatpush1.bf16.msra.mxu0 0
      %6137 = vmatprep.subr.bf16.mxu0 0
      %6138 = vmatpush1.bf16.msra.mxu0 0
      %6139 = vmatprep.subr.bf16.mxu0 0
      %6140 = vmatpush1.bf16.msra.mxu0 0
      %6141 = vmatprep.subr.bf16.mxu0 0
      %6142 = vmatpush1.bf16.msra.mxu0 0
      %6143 = vmatprep.subr.bf16.mxu0 0
      %6144 = vmatpush1.bf16.msra.mxu0 0
      %6145 = vmatprep.subr.bf16.mxu0 0
      %6146 = vmatpush1.bf16.msra.mxu0 0
      %6147 = vmatprep.subr.bf16.mxu0 0
      %6148 = vmatpush1.bf16.msra.mxu0 0
      %6149 = vmatprep.subr.bf16.mxu0 0
      %6150 = vmatpush1.bf16.msra.mxu0 0
      %6151 = vmatprep.subr.bf16.mxu0 0
      %6152 = vmatpush1.bf16.msra.mxu0 0
      %6153 = vmatprep.subr.bf16.mxu0 0
      %6154 = vmatpush1.bf16.msra.mxu0 0
      %6155 = vmatprep.subr.bf16.mxu0 0
      %6156 = vmatpush1.bf16.msra.mxu0 0
      %6157 = vmatprep.subr.bf16.mxu0 0
      %6158 = vmatpush1.bf16.msra.mxu0 0
      %6159 = vmatprep.subr.bf16.mxu0 0
      %6160 = vmatpush1.bf16.msra.mxu0 0
      %6161 = vmatprep.subr.bf16.mxu0 0
      %6162 = vmatpush1.bf16.msra.mxu0 0
      %6163 = vmatprep.subr.bf16.mxu0 0
      %6164 = vmatpush1.bf16.msra.mxu0 0
      %6165 = vmatprep.mubr.bf16.mxu0 0
      %6166 = vmatmul.mubr.bf16.gmra.mrb[0].mxu0 %v6125
      %v6167 = vpop.f32.mrb[0].mxu0
      %v6168 = vadd.f32 0.0, %v6167
      %v6169 = vpop.f32.mrb[0].mxu0
      %v6170 = vpop.f32.mrb[0].mxu0
      %v6171 = vadd.f32 0.0, %v6170
      %v6172 = vpop.f32.mrb[0].mxu0
      %6173 = vmatprep.mubr.bf16.mxu0 0
      %6174 = vmatmul.mubr.bf16.gmra.mrb[0].mxu0 %v6128
      %v6175 = vpop.f32.mrb[0].mxu0
      %v6176 = vadd.f32 0.0, %v6175
      %v6177 = vpop.f32.mrb[0].mxu0
      %v6178 = vpop.f32.mrb[0].mxu0
      %v6179 = vadd.f32 0.0, %v6178
      %v6180 = vpop.f32.mrb[0].mxu0
      %6181 = vdwg.mxu0
      %v6182 = vadd.f32 %v6118, %v6168
      %v6183 = vadd.f32 %v6119, %v6171
      %v6184 = vadd.f32 %v6120, %v6176
      %v6185 = vadd.f32 %v6121, %v6179
      %s6186 = scalar_lea.vmem %s10, 14
      %v6187 = vld [vmem:[%s6186] sm:$0x3]
      %v6189 = vsel %vm5748, %v5741, 0
      %v6192 = vsel %vm5748, %v5742, 0
      %v6195 = vsel %vm5755, %v6187, 0
      %6197 = vmatprep.subr.bf16.mxu0 0
      %6198 = vmatpush1.bf16.msra.mxu0 %v6195
      %6199 = vmatprep.subr.bf16.mxu0 0
      %6200 = vmatpush1.bf16.msra.mxu0 0
      %6201 = vmatprep.subr.bf16.mxu0 0
      %6202 = vmatpush1.bf16.msra.mxu0 0
      %6203 = vmatprep.subr.bf16.mxu0 0
      %6204 = vmatpush1.bf16.msra.mxu0 0
      %6205 = vmatprep.subr.bf16.mxu0 0
      %6206 = vmatpush1.bf16.msra.mxu0 0
      %6207 = vmatprep.subr.bf16.mxu0 0
      %6208 = vmatpush1.bf16.msra.mxu0 0
      %6209 = vmatprep.subr.bf16.mxu0 0
      %6210 = vmatpush1.bf16.msra.mxu0 0
      %6211 = vmatprep.subr.bf16.mxu0 0
      %6212 = vmatpush1.bf16.msra.mxu0 0
      %6213 = vmatprep.subr.bf16.mxu0 0
      %6214 = vmatpush1.bf16.msra.mxu0 0
      %6215 = vmatprep.subr.bf16.mxu0 0
      %6216 = vmatpush1.bf16.msra.mxu0 0
      %6217 = vmatprep.subr.bf16.mxu0 0
      %6218 = vmatpush1.bf16.msra.mxu0 0
      %6219 = vmatprep.subr.bf16.mxu0 0
      %6220 = vmatpush1.bf16.msra.mxu0 0
      %6221 = vmatprep.subr.bf16.mxu0 0
      %6222 = vmatpush1.bf16.msra.mxu0 0
      %6223 = vmatprep.subr.bf16.mxu0 0
      %6224 = vmatpush1.bf16.msra.mxu0 0
      %6225 = vmatprep.subr.bf16.mxu0 0
      %6226 = vmatpush1.bf16.msra.mxu0 0
      %6227 = vmatprep.subr.bf16.mxu0 0
      %6228 = vmatpush1.bf16.msra.mxu0 0
      %6229 = vmatprep.mubr.bf16.mxu0 0
      %6230 = vmatmul.mubr.bf16.gmra.mrb[0].mxu0 %v6189
      %v6231 = vpop.f32.mrb[0].mxu0
      %v6232 = vadd.f32 0.0, %v6231
      %v6233 = vpop.f32.mrb[0].mxu0
      %v6234 = vpop.f32.mrb[0].mxu0
      %v6235 = vadd.f32 0.0, %v6234
      %v6236 = vpop.f32.mrb[0].mxu0
      %6237 = vmatprep.mubr.bf16.mxu0 0
      %6238 = vmatmul.mubr.bf16.gmra.mrb[0].mxu0 %v6192
      %v6239 = vpop.f32.mrb[0].mxu0
      %v6240 = vadd.f32 0.0, %v6239
      %v6241 = vpop.f32.mrb[0].mxu0
      %v6242 = vpop.f32.mrb[0].mxu0
      %v6243 = vadd.f32 0.0, %v6242
      %v6244 = vpop.f32.mrb[0].mxu0
      %6245 = vdwg.mxu0
      %v6246 = vadd.f32 %v6182, %v6232
      %v6247 = vadd.f32 %v6183, %v6235
      %v6248 = vadd.f32 %v6184, %v6240
      %v6249 = vadd.f32 %v6185, %v6243
      %s6250 = scalar_lea.vmem %s10, 16
      %v6251 = vld [vmem:[%s6250] sm:$0x3]
      %v6253 = vsel %vm5748, %v5743, 0
      %v6256 = vsel %vm5748, %v5744, 0
      %v6259 = vsel %vm5755, %v6251, 0
      %6261 = vmatprep.subr.bf16.mxu0 0
      %6262 = vmatpush1.bf16.msra.mxu0 %v6259
      %6263 = vmatprep.subr.bf16.mxu0 0
      %6264 = vmatpush1.bf16.msra.mxu0 0
      %6265 = vmatprep.subr.bf16.mxu0 0
      %6266 = vmatpush1.bf16.msra.mxu0 0
      %6267 = vmatprep.subr.bf16.mxu0 0
      %6268 = vmatpush1.bf16.msra.mxu0 0
      %6269 = vmatprep.subr.bf16.mxu0 0
      %6270 = vmatpush1.bf16.msra.mxu0 0
      %6271 = vmatprep.subr.bf16.mxu0 0
      %6272 = vmatpush1.bf16.msra.mxu0 0
      %6273 = vmatprep.subr.bf16.mxu0 0
      %6274 = vmatpush1.bf16.msra.mxu0 0
      %6275 = vmatprep.subr.bf16.mxu0 0
      %6276 = vmatpush1.bf16.msra.mxu0 0
      %6277 = vmatprep.subr.bf16.mxu0 0
      %6278 = vmatpush1.bf16.msra.mxu0 0
      %6279 = vmatprep.subr.bf16.mxu0 0
      %6280 = vmatpush1.bf16.msra.mxu0 0
      %6281 = vmatprep.subr.bf16.mxu0 0
      %6282 = vmatpush1.bf16.msra.mxu0 0
      %6283 = vmatprep.subr.bf16.mxu0 0
      %6284 = vmatpush1.bf16.msra.mxu0 0
      %6285 = vmatprep.subr.bf16.mxu0 0
      %6286 = vmatpush1.bf16.msra.mxu0 0
      %6287 = vmatprep.subr.bf16.mxu0 0
      %6288 = vmatpush1.bf16.msra.mxu0 0
      %6289 = vmatprep.subr.bf16.mxu0 0
      %6290 = vmatpush1.bf16.msra.mxu0 0
      %6291 = vmatprep.subr.bf16.mxu0 0
      %6292 = vmatpush1.bf16.msra.mxu0 0
      %6293 = vmatprep.mubr.bf16.mxu0 0
      %6294 = vmatmul.mubr.bf16.gmra.mrb[0].mxu0 %v6253
      %v6295 = vpop.f32.mrb[0].mxu0
      %v6296 = vadd.f32 0.0, %v6295
      %v6297 = vpop.f32.mrb[0].mxu0
      %v6298 = vpop.f32.mrb[0].mxu0
      %v6299 = vadd.f32 0.0, %v6298
      %v6300 = vpop.f32.mrb[0].mxu0
      %6301 = vmatprep.mubr.bf16.mxu0 0
      %6302 = vmatmul.mubr.bf16.gmra.mrb[0].mxu0 %v6256
      %v6303 = vpop.f32.mrb[0].mxu0
      %v6304 = vadd.f32 0.0, %v6303
      %v6305 = vpop.f32.mrb[0].mxu0
      %v6306 = vpop.f32.mrb[0].mxu0
      %v6307 = vadd.f32 0.0, %v6306
      %v6308 = vpop.f32.mrb[0].mxu0
      %6309 = vdwg.mxu0
      %v6310 = vadd.f32 %v6246, %v6296
      %v6311 = vadd.f32 %v6247, %v6299
      %v6312 = vadd.f32 %v6248, %v6304
      %v6313 = vadd.f32 %v6249, %v6307
      %v6314 = vld [vmem:[%s12] sm:$0xff]
      %v6315 = vld [vmem:[%s12 + $0x8] sm:$0xff]
      %v6316 = vld [vmem:[%s12 + $0x10] sm:$0xff]
      %v6317 = vld [vmem:[%s12 + $0x18] sm:$0xff]
      %6319 = vset.pattern.permute.xlu0 0
      %6320 = vperm.xlu0 %6319, %v6314
      %v6321 = vpop.permute.xlu0 %6320
      %6324 = vset.pattern.permute.xlu0 0
      %6325 = vperm.xlu0 %6324, %v6315
      %v6326 = vpop.permute.xlu0 %6325
      %6329 = vset.pattern.permute.xlu0 0
      %6330 = vperm.xlu0 %6329, %v6316
      %v6331 = vpop.permute.xlu0 %6330
      %6334 = vset.pattern.permute.xlu0 0
      %6335 = vperm.xlu0 %6334, %v6317
      %v6336 = vpop.permute.xlu0 %6335
      %v6338 = vadd.f32 %v6310, %v6321
      %v6339 = vadd.f32 %v6311, %v6326
      %v6340 = vadd.f32 %v6312, %v6331
      %v6341 = vadd.f32 %v6313, %v6336
      %v6342 = vmax.f32 %v6338, 0.0
      %v6343 = vmax.f32 %v6339, 0.0
      %v6344 = vmax.f32 %v6340, 0.0
      %v6345 = vmax.f32 %v6341, 0.0
      %v6346 = vld [vmem:[%s14] sm:$0xff]
      %v6347 = vld [vmem:[%s14 + $0x8] sm:$0xff]
      %v6348 = vld [vmem:[%s14 + $0x10] sm:$0xff]
      %v6349 = vld [vmem:[%s14 + $0x18] sm:$0xff]
      %v6350 = vld [vmem:[%s14 + $0x20] sm:$0xff]
      %v6351 = vld [vmem:[%s14 + $0x28] sm:$0xff]
      %v6352 = vld [vmem:[%s14 + $0x30] sm:$0xff]
      %v6353 = vld [vmem:[%s14 + $0x38] sm:$0xff]
      %v6354 = vld [vmem:[%s14 + $0x40] sm:$0xff]
      %v6355 = vld [vmem:[%s14 + $0x48] sm:$0xff]
      %v6356 = vld [vmem:[%s14 + $0x50] sm:$0xff]
      %v6357 = vld [vmem:[%s14 + $0x58] sm:$0xff]
      %v6358 = vld [vmem:[%s14 + $0x60] sm:$0xff]
      %v6359 = vld [vmem:[%s14 + $0x68] sm:$0xff]
      %v6360 = vld [vmem:[%s14 + $0x70] sm:$0xff]
      %v6361 = vld [vmem:[%s14 + $0x78] sm:$0xff]
      %v6362 = vld [vmem:[%s14 + $0x80] sm:$0xff]
      %v6363 = vld [vmem:[%s14 + $0x88] sm:$0xff]
      %v6365 = vsel %vm3767, %v6346, 0
      %v6368 = vsel %vm3767, %v6347, 0
      %v6371 = vsel %vm3767, %v6348, 0
      %v6374 = vsel %vm3767, %v6349, 0
      %v6377 = vsel %vm3767, %v6350, 0
      %v6380 = vsel %vm3767, %v6351, 0
      %v6383 = vsel %vm3767, %v6352, 0
      %v6386 = vsel %vm3767, %v6353, 0
      %v6389 = vsel %vm3767, %v6354, 0
      %v6392 = vsel %vm3767, %v6355, 0
      %v6395 = vsel %vm3767, %v6356, 0
      %v6398 = vsel %vm3767, %v6357, 0
      %v6401 = vsel %vm3767, %v6358, 0
      %v6404 = vsel %vm3767, %v6359, 0
      %v6407 = vsel %vm3767, %v6360, 0
      %v6410 = vsel %vm3767, %v6361, 0
      %v6413 = vsel %vm3767, %v6362, 0
      %v6416 = vsel %vm3767, %v6363, 0
      %6418 = vmatprep.subr.mxu0 0.0
      %6419 = vmatpush1.msra.mxu0 %v6342
      %6420 = vmatprep.subr.mxu0 0.0
      %6421 = vmatpush1.msra.mxu0 %v6343
      %6422 = vmatprep.subr.mxu0 0.0
      %6423 = vmatpush1.msra.mxu0 %v6344
      %6424 = vmatprep.subr.mxu0 0.0
      %6425 = vmatpush1.msra.mxu0 %v6345
      %6426 = vmatprep.subr.mxu0 0.0
      %6427 = vmatpush1.msra.mxu0 0.0
      %6428 = vmatprep.subr.mxu0 0.0
      %6429 = vmatpush1.msra.mxu0 0.0
      %6430 = vmatprep.subr.mxu0 0.0
      %6431 = vmatpush1.msra.mxu0 0.0
      %6432 = vmatprep.subr.mxu0 0.0
      %6433 = vmatpush1.msra.mxu0 0.0
      %6434 = vmatprep.subr.mxu0 0.0
      %6435 = vmatpush1.msra.mxu0 0.0
      %6436 = vmatprep.subr.mxu0 0.0
      %6437 = vmatpush1.msra.mxu0 0.0
      %6438 = vmatprep.subr.mxu0 0.0
      %6439 = vmatpush1.msra.mxu0 0.0
      %6440 = vmatprep.subr.mxu0 0.0
      %6441 = vmatpush1.msra.mxu0 0.0
      %6442 = vmatprep.subr.mxu0 0.0
      %6443 = vmatpush1.msra.mxu0 0.0
      %6444 = vmatprep.subr.mxu0 0.0
      %6445 = vmatpush1.msra.mxu0 0.0
      %6446 = vmatprep.subr.mxu0 0.0
      %6447 = vmatpush1.msra.mxu0 0.0
      %6448 = vmatprep.subr.mxu0 0.0
      %6449 = vmatpush1.msra.mxu0 0.0
      %6450 = vmatprep.subr.mxu0 0.0
      %6451 = vmatpush1.msra.mxu0 0.0
      %6452 = vmatprep.subr.mxu0 0.0
      %6453 = vmatpush1.msra.mxu0 0.0
      %6454 = vmatprep.subr.mxu0 0.0
      %6455 = vmatpush1.msra.mxu0 0.0
      %6456 = vmatprep.subr.mxu0 0.0
      %6457 = vmatpush1.msra.mxu0 0.0
      %6458 = vmatprep.subr.mxu0 0.0
      %6459 = vmatpush1.msra.mxu0 0.0
      %6460 = vmatprep.subr.mxu0 0.0
      %6461 = vmatpush1.msra.mxu0 0.0
      %6462 = vmatprep.subr.mxu0 0.0
      %6463 = vmatpush1.msra.mxu0 0.0
      %6464 = vmatprep.subr.mxu0 0.0
      %6465 = vmatpush1.msra.mxu0 0.0
      %6466 = vmatprep.subr.mxu0 0.0
      %6467 = vmatpush1.msra.mxu0 0.0
      %6468 = vmatprep.subr.mxu0 0.0
      %6469 = vmatpush1.msra.mxu0 0.0
      %6470 = vmatprep.subr.mxu0 0.0
      %6471 = vmatpush1.msra.mxu0 0.0
      %6472 = vmatprep.subr.mxu0 0.0
      %6473 = vmatpush1.msra.mxu0 0.0
      %6474 = vmatprep.subr.mxu0 0.0
      %6475 = vmatpush1.msra.mxu0 0.0
      %6476 = vmatprep.subr.mxu0 0.0
      %6477 = vmatpush1.msra.mxu0 0.0
      %6478 = vmatprep.subr.mxu0 0.0
      %6479 = vmatpush1.msra.mxu0 0.0
      %6480 = vmatprep.subr.mxu0 0.0
      %6481 = vmatpush1.msra.mxu0 0.0
      %6482 = vmatprep.mubr.f32.mxu0 0.0
      %6483 = vmatmul.mubr.f32.gmra.mrb[0].mxu0 %v6365
      %v6484 = vpop.f32.mrb[0].mxu0
      %v6485 = vadd.f32 0.0, %v6484
      %v6486 = vpop.f32.mrb[0].mxu0
      %6487 = vmatprep.mubr.f32.mxu0 0.0
      %6488 = vmatmul.mubr.f32.gmra.mrb[0].mxu0 %v6368
      %v6489 = vpop.f32.mrb[0].mxu0
      %v6490 = vadd.f32 0.0, %v6489
      %v6491 = vpop.f32.mrb[0].mxu0
      %6492 = vmatprep.mubr.f32.mxu0 0.0
      %6493 = vmatmul.mubr.f32.gmra.mrb[0].mxu0 %v6371
      %v6494 = vpop.f32.mrb[0].mxu0
      %v6495 = vadd.f32 0.0, %v6494
      %v6496 = vpop.f32.mrb[0].mxu0
      %6497 = vmatprep.mubr.f32.mxu0 0.0
      %6498 = vmatmul.mubr.f32.gmra.mrb[0].mxu0 %v6374
      %v6499 = vpop.f32.mrb[0].mxu0
      %v6500 = vadd.f32 0.0, %v6499
      %v6501 = vpop.f32.mrb[0].mxu0
      %6502 = vmatprep.mubr.f32.mxu0 0.0
      %6503 = vmatmul.mubr.f32.gmra.mrb[0].mxu0 %v6377
      %v6504 = vpop.f32.mrb[0].mxu0
      %v6505 = vadd.f32 0.0, %v6504
      %v6506 = vpop.f32.mrb[0].mxu0
      %6507 = vmatprep.mubr.f32.mxu0 0.0
      %6508 = vmatmul.mubr.f32.gmra.mrb[0].mxu0 %v6380
      %v6509 = vpop.f32.mrb[0].mxu0
      %v6510 = vadd.f32 0.0, %v6509
      %v6511 = vpop.f32.mrb[0].mxu0
      %6512 = vmatprep.mubr.f32.mxu0 0.0
      %6513 = vmatmul.mubr.f32.gmra.mrb[0].mxu0 %v6383
      %v6514 = vpop.f32.mrb[0].mxu0
      %v6515 = vadd.f32 0.0, %v6514
      %v6516 = vpop.f32.mrb[0].mxu0
      %6517 = vmatprep.mubr.f32.mxu0 0.0
      %6518 = vmatmul.mubr.f32.gmra.mrb[0].mxu0 %v6386
      %v6519 = vpop.f32.mrb[0].mxu0
      %v6520 = vadd.f32 0.0, %v6519
      %v6521 = vpop.f32.mrb[0].mxu0
      %6522 = vmatprep.mubr.f32.mxu0 0.0
      %6523 = vmatmul.mubr.f32.gmra.mrb[0].mxu0 %v6389
      %v6524 = vpop.f32.mrb[0].mxu0
      %v6525 = vadd.f32 0.0, %v6524
      %v6526 = vpop.f32.mrb[0].mxu0
      %6527 = vmatprep.mubr.f32.mxu0 0.0
      %6528 = vmatmul.mubr.f32.gmra.mrb[0].mxu0 %v6392
      %v6529 = vpop.f32.mrb[0].mxu0
      %v6530 = vadd.f32 0.0, %v6529
      %v6531 = vpop.f32.mrb[0].mxu0
      %6532 = vmatprep.mubr.f32.mxu0 0.0
      %6533 = vmatmul.mubr.f32.gmra.mrb[0].mxu0 %v6395
      %v6534 = vpop.f32.mrb[0].mxu0
      %v6535 = vadd.f32 0.0, %v6534
      %v6536 = vpop.f32.mrb[0].mxu0
      %6537 = vmatprep.mubr.f32.mxu0 0.0
      %6538 = vmatmul.mubr.f32.gmra.mrb[0].mxu0 %v6398
      %v6539 = vpop.f32.mrb[0].mxu0
      %v6540 = vadd.f32 0.0, %v6539
      %v6541 = vpop.f32.mrb[0].mxu0
      %6542 = vmatprep.mubr.f32.mxu0 0.0
      %6543 = vmatmul.mubr.f32.gmra.mrb[0].mxu0 %v6401
      %v6544 = vpop.f32.mrb[0].mxu0
      %v6545 = vadd.f32 0.0, %v6544
      %v6546 = vpop.f32.mrb[0].mxu0
      %6547 = vmatprep.mubr.f32.mxu0 0.0
      %6548 = vmatmul.mubr.f32.gmra.mrb[0].mxu0 %v6404
      %v6549 = vpop.f32.mrb[0].mxu0
      %v6550 = vadd.f32 0.0, %v6549
      %v6551 = vpop.f32.mrb[0].mxu0
      %6552 = vmatprep.mubr.f32.mxu0 0.0
      %6553 = vmatmul.mubr.f32.gmra.mrb[0].mxu0 %v6407
      %v6554 = vpop.f32.mrb[0].mxu0
      %v6555 = vadd.f32 0.0, %v6554
      %v6556 = vpop.f32.mrb[0].mxu0
      %6557 = vmatprep.mubr.f32.mxu0 0.0
      %6558 = vmatmul.mubr.f32.gmra.mrb[0].mxu0 %v6410
      %v6559 = vpop.f32.mrb[0].mxu0
      %v6560 = vadd.f32 0.0, %v6559
      %v6561 = vpop.f32.mrb[0].mxu0
      %6562 = vmatprep.mubr.f32.mxu0 0.0
      %6563 = vmatmul.mubr.f32.gmra.mrb[0].mxu0 %v6413
      %v6564 = vpop.f32.mrb[0].mxu0
      %v6565 = vadd.f32 0.0, %v6564
      %v6566 = vpop.f32.mrb[0].mxu0
      %6567 = vmatprep.mubr.f32.mxu0 0.0
      %6568 = vmatmul.mubr.f32.gmra.mrb[0].mxu0 %v6416
      %v6569 = vpop.f32.mrb[0].mxu0
      %v6570 = vadd.f32 0.0, %v6569
      %v6571 = vpop.f32.mrb[0].mxu0
      %6572 = vdwg.mxu0
      %v6573 = vpack.c.bf16 %v6490, %v6485
      %v6574 = vpack.c.bf16 %v6500, %v6495
      %v6575 = vpack.c.bf16 %v6510, %v6505
      %v6576 = vpack.c.bf16 %v6520, %v6515
      %v6577 = vpack.c.bf16 %v6530, %v6525
      %v6578 = vpack.c.bf16 %v6540, %v6535
      %v6579 = vpack.c.bf16 %v6550, %v6545
      %v6580 = vpack.c.bf16 %v6560, %v6555
      %v6581 = vpack.c.bf16 %v6570, %v6565
      %v6582 = vld [vmem:[%s13] sm:$0xf]
      %v6583 = vld [vmem:[%s13 + $0x4] sm:$0xf]
      %s6584 = scalar_lea.vmem %s13, 8
      %v6585 = vld [vmem:[%s6584] sm:$0xf]
      %v6586 = vld [vmem:[%s6584 + $0x4] sm:$0xf]
      %v6589 = vunpack.c.l.b16 %v6585
      %v6590 = vunpack.c.l.b16 %v6586
      %v6591 = vpack.c.b16 %v6590, %v6589
      %v6594 = vsel %vm2471, %v6574, 0
      %6596 = vmatprep.subr.bf16.mxu0 0
      %6597 = vmatpush1.bf16.msra.mxu0 %v6591
      %6598 = vmatprep.subr.bf16.mxu0 0
      %6599 = vmatpush1.bf16.msra.mxu0 0
      %6600 = vmatprep.subr.bf16.mxu0 0
      %6601 = vmatpush1.bf16.msra.mxu0 0
      %6602 = vmatprep.subr.bf16.mxu0 0
      %6603 = vmatpush1.bf16.msra.mxu0 0
      %6604 = vmatprep.subr.bf16.mxu0 0
      %6605 = vmatpush1.bf16.msra.mxu0 0
      %6606 = vmatprep.subr.bf16.mxu0 0
      %6607 = vmatpush1.bf16.msra.mxu0 0
      %6608 = vmatprep.subr.bf16.mxu0 0
      %6609 = vmatpush1.bf16.msra.mxu0 0
      %6610 = vmatprep.subr.bf16.mxu0 0
      %6611 = vmatpush1.bf16.msra.mxu0 0
      %6612 = vmatprep.subr.bf16.mxu0 0
      %6613 = vmatpush1.bf16.msra.mxu0 0
      %6614 = vmatprep.subr.bf16.mxu0 0
      %6615 = vmatpush1.bf16.msra.mxu0 0
      %6616 = vmatprep.subr.bf16.mxu0 0
      %6617 = vmatpush1.bf16.msra.mxu0 0
      %6618 = vmatprep.subr.bf16.mxu0 0
      %6619 = vmatpush1.bf16.msra.mxu0 0
      %6620 = vmatprep.subr.bf16.mxu0 0
      %6621 = vmatpush1.bf16.msra.mxu0 0
      %6622 = vmatprep.subr.bf16.mxu0 0
      %6623 = vmatpush1.bf16.msra.mxu0 0
      %6624 = vmatprep.subr.bf16.mxu0 0
      %6625 = vmatpush1.bf16.msra.mxu0 0
      %6626 = vmatprep.subr.bf16.mxu0 0
      %6627 = vmatpush1.bf16.msra.mxu0 0
      %6628 = vmatprep.mubr.bf16.mxu0 0
      %6629 = vmatmul.mubr.bf16.gmra.mrb[0].mxu0 %v6594
      %v6630 = vpop.f32.mrb[0].mxu0
      %v6631 = vadd.f32 0.0, %v6630
      %v6632 = vpop.f32.mrb[0].mxu0
      %v6633 = vpop.f32.mrb[0].mxu0
      %v6634 = vadd.f32 0.0, %v6633
      %v6635 = vpop.f32.mrb[0].mxu0
      %6636 = vdwg.mxu0
      %v6639 = vunpack.c.l.b16 %v6582
      %v6640 = vunpack.c.l.b16 %v6583
      %v6641 = vpack.c.b16 %v6640, %v6639
      %v6644 = vsel %vm2471, %v6573, 0
      %6646 = vmatprep.subr.bf16.mxu0 0
      %6647 = vmatpush1.bf16.msra.mxu0 %v6641
      %6648 = vmatprep.subr.bf16.mxu0 0
      %6649 = vmatpush1.bf16.msra.mxu0 0
      %6650 = vmatprep.subr.bf16.mxu0 0
      %6651 = vmatpush1.bf16.msra.mxu0 0
      %6652 = vmatprep.subr.bf16.mxu0 0
      %6653 = vmatpush1.bf16.msra.mxu0 0
      %6654 = vmatprep.subr.bf16.mxu0 0
      %6655 = vmatpush1.bf16.msra.mxu0 0
      %6656 = vmatprep.subr.bf16.mxu0 0
      %6657 = vmatpush1.bf16.msra.mxu0 0
      %6658 = vmatprep.subr.bf16.mxu0 0
      %6659 = vmatpush1.bf16.msra.mxu0 0
      %6660 = vmatprep.subr.bf16.mxu0 0
      %6661 = vmatpush1.bf16.msra.mxu0 0
      %6662 = vmatprep.subr.bf16.mxu0 0
      %6663 = vmatpush1.bf16.msra.mxu0 0
      %6664 = vmatprep.subr.bf16.mxu0 0
      %6665 = vmatpush1.bf16.msra.mxu0 0
      %6666 = vmatprep.subr.bf16.mxu0 0
      %6667 = vmatpush1.bf16.msra.mxu0 0
      %6668 = vmatprep.subr.bf16.mxu0 0
      %6669 = vmatpush1.bf16.msra.mxu0 0
      %6670 = vmatprep.subr.bf16.mxu0 0
      %6671 = vmatpush1.bf16.msra.mxu0 0
      %6672 = vmatprep.subr.bf16.mxu0 0
      %6673 = vmatpush1.bf16.msra.mxu0 0
      %6674 = vmatprep.subr.bf16.mxu0 0
      %6675 = vmatpush1.bf16.msra.mxu0 0
      %6676 = vmatprep.subr.bf16.mxu0 0
      %6677 = vmatpush1.bf16.msra.mxu0 0
      %6678 = vmatprep.mubr.bf16.mxu0 0
      %6679 = vmatmul.mubr.bf16.gmra.mrb[0].mxu0 %v6644
      %v6680 = vpop.f32.mrb[0].mxu0
      %v6681 = vadd.f32 %v6631, %v6680
      %v6682 = vpop.f32.mrb[0].mxu0
      %v6683 = vpop.f32.mrb[0].mxu0
      %v6684 = vadd.f32 %v6634, %v6683
      %v6685 = vpop.f32.mrb[0].mxu0
      %6686 = vdwg.mxu0
      %s6687 = scalar_lea.vmem %s13, 16
      %v6688 = vld [vmem:[%s6687] sm:$0xf]
      %v6689 = vld [vmem:[%s6687 + $0x4] sm:$0xf]
      %v6692 = vunpack.c.l.b16 %v6688
      %v6693 = vunpack.c.l.b16 %v6689
      %v6694 = vpack.c.b16 %v6693, %v6692
      %v6697 = vsel %vm2471, %v6575, 0
      %6699 = vmatprep.subr.bf16.mxu0 0
      %6700 = vmatpush1.bf16.msra.mxu0 %v6694
      %6701 = vmatprep.subr.bf16.mxu0 0
      %6702 = vmatpush1.bf16.msra.mxu0 0
      %6703 = vmatprep.subr.bf16.mxu0 0
      %6704 = vmatpush1.bf16.msra.mxu0 0
      %6705 = vmatprep.subr.bf16.mxu0 0
      %6706 = vmatpush1.bf16.msra.mxu0 0
      %6707 = vmatprep.subr.bf16.mxu0 0
      %6708 = vmatpush1.bf16.msra.mxu0 0
      %6709 = vmatprep.subr.bf16.mxu0 0
      %6710 = vmatpush1.bf16.msra.mxu0 0
      %6711 = vmatprep.subr.bf16.mxu0 0
      %6712 = vmatpush1.bf16.msra.mxu0 0
      %6713 = vmatprep.subr.bf16.mxu0 0
      %6714 = vmatpush1.bf16.msra.mxu0 0
      %6715 = vmatprep.subr.bf16.mxu0 0
      %6716 = vmatpush1.bf16.msra.mxu0 0
      %6717 = vmatprep.subr.bf16.mxu0 0
      %6718 = vmatpush1.bf16.msra.mxu0 0
      %6719 = vmatprep.subr.bf16.mxu0 0
      %6720 = vmatpush1.bf16.msra.mxu0 0
      %6721 = vmatprep.subr.bf16.mxu0 0
      %6722 = vmatpush1.bf16.msra.mxu0 0
      %6723 = vmatprep.subr.bf16.mxu0 0
      %6724 = vmatpush1.bf16.msra.mxu0 0
      %6725 = vmatprep.subr.bf16.mxu0 0
      %6726 = vmatpush1.bf16.msra.mxu0 0
      %6727 = vmatprep.subr.bf16.mxu0 0
      %6728 = vmatpush1.bf16.msra.mxu0 0
      %6729 = vmatprep.subr.bf16.mxu0 0
      %6730 = vmatpush1.bf16.msra.mxu0 0
      %6731 = vmatprep.mubr.bf16.mxu0 0
      %6732 = vmatmul.mubr.bf16.gmra.mrb[0].mxu0 %v6697
      %v6733 = vpop.f32.mrb[0].mxu0
      %v6734 = vadd.f32 0.0, %v6733
      %v6735 = vpop.f32.mrb[0].mxu0
      %v6736 = vpop.f32.mrb[0].mxu0
      %v6737 = vadd.f32 0.0, %v6736
      %v6738 = vpop.f32.mrb[0].mxu0
      %6739 = vdwg.mxu0
      %v6740 = vadd.f32 %v6681, %v6734
      %v6741 = vadd.f32 %v6684, %v6737
      %s6742 = scalar_lea.vmem %s13, 24
      %v6743 = vld [vmem:[%s6742] sm:$0xf]
      %v6744 = vld [vmem:[%s6742 + $0x4] sm:$0xf]
      %v6747 = vunpack.c.l.b16 %v6743
      %v6748 = vunpack.c.l.b16 %v6744
      %v6749 = vpack.c.b16 %v6748, %v6747
      %v6752 = vsel %vm2471, %v6576, 0
      %6754 = vmatprep.subr.bf16.mxu0 0
      %6755 = vmatpush1.bf16.msra.mxu0 %v6749
      %6756 = vmatprep.subr.bf16.mxu0 0
      %6757 = vmatpush1.bf16.msra.mxu0 0
      %6758 = vmatprep.subr.bf16.mxu0 0
      %6759 = vmatpush1.bf16.msra.mxu0 0
      %6760 = vmatprep.subr.bf16.mxu0 0
      %6761 = vmatpush1.bf16.msra.mxu0 0
      %6762 = vmatprep.subr.bf16.mxu0 0
      %6763 = vmatpush1.bf16.msra.mxu0 0
      %6764 = vmatprep.subr.bf16.mxu0 0
      %6765 = vmatpush1.bf16.msra.mxu0 0
      %6766 = vmatprep.subr.bf16.mxu0 0
      %6767 = vmatpush1.bf16.msra.mxu0 0
      %6768 = vmatprep.subr.bf16.mxu0 0
      %6769 = vmatpush1.bf16.msra.mxu0 0
      %6770 = vmatprep.subr.bf16.mxu0 0
      %6771 = vmatpush1.bf16.msra.mxu0 0
      %6772 = vmatprep.subr.bf16.mxu0 0
      %6773 = vmatpush1.bf16.msra.mxu0 0
      %6774 = vmatprep.subr.bf16.mxu0 0
      %6775 = vmatpush1.bf16.msra.mxu0 0
      %6776 = vmatprep.subr.bf16.mxu0 0
      %6777 = vmatpush1.bf16.msra.mxu0 0
      %6778 = vmatprep.subr.bf16.mxu0 0
      %6779 = vmatpush1.bf16.msra.mxu0 0
      %6780 = vmatprep.subr.bf16.mxu0 0
      %6781 = vmatpush1.bf16.msra.mxu0 0
      %6782 = vmatprep.subr.bf16.mxu0 0
      %6783 = vmatpush1.bf16.msra.mxu0 0
      %6784 = vmatprep.subr.bf16.mxu0 0
      %6785 = vmatpush1.bf16.msra.mxu0 0
      %6786 = vmatprep.mubr.bf16.mxu0 0
      %6787 = vmatmul.mubr.bf16.gmra.mrb[0].mxu0 %v6752
      %v6788 = vpop.f32.mrb[0].mxu0
      %v6789 = vadd.f32 0.0, %v6788
      %v6790 = vpop.f32.mrb[0].mxu0
      %v6791 = vpop.f32.mrb[0].mxu0
      %v6792 = vadd.f32 0.0, %v6791
      %v6793 = vpop.f32.mrb[0].mxu0
      %6794 = vdwg.mxu0
      %v6795 = vadd.f32 %v6740, %v6789
      %v6796 = vadd.f32 %v6741, %v6792
      %s6797 = scalar_lea.vmem %s13, 32
      %v6798 = vld [vmem:[%s6797] sm:$0xf]
      %v6799 = vld [vmem:[%s6797 + $0x4] sm:$0xf]
      %v6802 = vunpack.c.l.b16 %v6798
      %v6803 = vunpack.c.l.b16 %v6799
      %v6804 = vpack.c.b16 %v6803, %v6802
      %v6807 = vsel %vm2471, %v6577, 0
      %6809 = vmatprep.subr.bf16.mxu0 0
      %6810 = vmatpush1.bf16.msra.mxu0 %v6804
      %6811 = vmatprep.subr.bf16.mxu0 0
      %6812 = vmatpush1.bf16.msra.mxu0 0
      %6813 = vmatprep.subr.bf16.mxu0 0
      %6814 = vmatpush1.bf16.msra.mxu0 0
      %6815 = vmatprep.subr.bf16.mxu0 0
      %6816 = vmatpush1.bf16.msra.mxu0 0
      %6817 = vmatprep.subr.bf16.mxu0 0
      %6818 = vmatpush1.bf16.msra.mxu0 0
      %6819 = vmatprep.subr.bf16.mxu0 0
      %6820 = vmatpush1.bf16.msra.mxu0 0
      %6821 = vmatprep.subr.bf16.mxu0 0
      %6822 = vmatpush1.bf16.msra.mxu0 0
      %6823 = vmatprep.subr.bf16.mxu0 0
      %6824 = vmatpush1.bf16.msra.mxu0 0
      %6825 = vmatprep.subr.bf16.mxu0 0
      %6826 = vmatpush1.bf16.msra.mxu0 0
      %6827 = vmatprep.subr.bf16.mxu0 0
      %6828 = vmatpush1.bf16.msra.mxu0 0
      %6829 = vmatprep.subr.bf16.mxu0 0
      %6830 = vmatpush1.bf16.msra.mxu0 0
      %6831 = vmatprep.subr.bf16.mxu0 0
      %6832 = vmatpush1.bf16.msra.mxu0 0
      %6833 = vmatprep.subr.bf16.mxu0 0
      %6834 = vmatpush1.bf16.msra.mxu0 0
      %6835 = vmatprep.subr.bf16.mxu0 0
      %6836 = vmatpush1.bf16.msra.mxu0 0
      %6837 = vmatprep.subr.bf16.mxu0 0
      %6838 = vmatpush1.bf16.msra.mxu0 0
      %6839 = vmatprep.subr.bf16.mxu0 0
      %6840 = vmatpush1.bf16.msra.mxu0 0
      %6841 = vmatprep.mubr.bf16.mxu0 0
      %6842 = vmatmul.mubr.bf16.gmra.mrb[0].mxu0 %v6807
      %v6843 = vpop.f32.mrb[0].mxu0
      %v6844 = vadd.f32 0.0, %v6843
      %v6845 = vpop.f32.mrb[0].mxu0
      %v6846 = vpop.f32.mrb[0].mxu0
      %v6847 = vadd.f32 0.0, %v6846
      %v6848 = vpop.f32.mrb[0].mxu0
      %6849 = vdwg.mxu0
      %v6850 = vadd.f32 %v6795, %v6844
      %v6851 = vadd.f32 %v6796, %v6847
      %s6852 = scalar_lea.vmem %s13, 40
      %v6853 = vld [vmem:[%s6852] sm:$0xf]
      %v6854 = vld [vmem:[%s6852 + $0x4] sm:$0xf]
      %v6857 = vunpack.c.l.b16 %v6853
      %v6858 = vunpack.c.l.b16 %v6854
      %v6859 = vpack.c.b16 %v6858, %v6857
      %v6862 = vsel %vm2471, %v6578, 0
      %6864 = vmatprep.subr.bf16.mxu0 0
      %6865 = vmatpush1.bf16.msra.mxu0 %v6859
      %6866 = vmatprep.subr.bf16.mxu0 0
      %6867 = vmatpush1.bf16.msra.mxu0 0
      %6868 = vmatprep.subr.bf16.mxu0 0
      %6869 = vmatpush1.bf16.msra.mxu0 0
      %6870 = vmatprep.subr.bf16.mxu0 0
      %6871 = vmatpush1.bf16.msra.mxu0 0
      %6872 = vmatprep.subr.bf16.mxu0 0
      %6873 = vmatpush1.bf16.msra.mxu0 0
      %6874 = vmatprep.subr.bf16.mxu0 0
      %6875 = vmatpush1.bf16.msra.mxu0 0
      %6876 = vmatprep.subr.bf16.mxu0 0
      %6877 = vmatpush1.bf16.msra.mxu0 0
      %6878 = vmatprep.subr.bf16.mxu0 0
      %6879 = vmatpush1.bf16.msra.mxu0 0
      %6880 = vmatprep.subr.bf16.mxu0 0
      %6881 = vmatpush1.bf16.msra.mxu0 0
      %6882 = vmatprep.subr.bf16.mxu0 0
      %6883 = vmatpush1.bf16.msra.mxu0 0
      %6884 = vmatprep.subr.bf16.mxu0 0
      %6885 = vmatpush1.bf16.msra.mxu0 0
      %6886 = vmatprep.subr.bf16.mxu0 0
      %6887 = vmatpush1.bf16.msra.mxu0 0
      %6888 = vmatprep.subr.bf16.mxu0 0
      %6889 = vmatpush1.bf16.msra.mxu0 0
      %6890 = vmatprep.subr.bf16.mxu0 0
      %6891 = vmatpush1.bf16.msra.mxu0 0
      %6892 = vmatprep.subr.bf16.mxu0 0
      %6893 = vmatpush1.bf16.msra.mxu0 0
      %6894 = vmatprep.subr.bf16.mxu0 0
      %6895 = vmatpush1.bf16.msra.mxu0 0
      %6896 = vmatprep.mubr.bf16.mxu0 0
      %6897 = vmatmul.mubr.bf16.gmra.mrb[0].mxu0 %v6862
      %v6898 = vpop.f32.mrb[0].mxu0
      %v6899 = vadd.f32 0.0, %v6898
      %v6900 = vpop.f32.mrb[0].mxu0
      %v6901 = vpop.f32.mrb[0].mxu0
      %v6902 = vadd.f32 0.0, %v6901
      %v6903 = vpop.f32.mrb[0].mxu0
      %6904 = vdwg.mxu0
      %v6905 = vadd.f32 %v6850, %v6899
      %v6906 = vadd.f32 %v6851, %v6902
      %s6907 = scalar_lea.vmem %s13, 48
      %v6908 = vld [vmem:[%s6907] sm:$0xf]
      %v6909 = vld [vmem:[%s6907 + $0x4] sm:$0xf]
      %v6912 = vunpack.c.l.b16 %v6908
      %v6913 = vunpack.c.l.b16 %v6909
      %v6914 = vpack.c.b16 %v6913, %v6912
      %v6917 = vsel %vm2471, %v6579, 0
      %6919 = vmatprep.subr.bf16.mxu0 0
      %6920 = vmatpush1.bf16.msra.mxu0 %v6914
      %6921 = vmatprep.subr.bf16.mxu0 0
      %6922 = vmatpush1.bf16.msra.mxu0 0
      %6923 = vmatprep.subr.bf16.mxu0 0
      %6924 = vmatpush1.bf16.msra.mxu0 0
      %6925 = vmatprep.subr.bf16.mxu0 0
      %6926 = vmatpush1.bf16.msra.mxu0 0
      %6927 = vmatprep.subr.bf16.mxu0 0
      %6928 = vmatpush1.bf16.msra.mxu0 0
      %6929 = vmatprep.subr.bf16.mxu0 0
      %6930 = vmatpush1.bf16.msra.mxu0 0
      %6931 = vmatprep.subr.bf16.mxu0 0
      %6932 = vmatpush1.bf16.msra.mxu0 0
      %6933 = vmatprep.subr.bf16.mxu0 0
      %6934 = vmatpush1.bf16.msra.mxu0 0
      %6935 = vmatprep.subr.bf16.mxu0 0
      %6936 = vmatpush1.bf16.msra.mxu0 0
      %6937 = vmatprep.subr.bf16.mxu0 0
      %6938 = vmatpush1.bf16.msra.mxu0 0
      %6939 = vmatprep.subr.bf16.mxu0 0
      %6940 = vmatpush1.bf16.msra.mxu0 0
      %6941 = vmatprep.subr.bf16.mxu0 0
      %6942 = vmatpush1.bf16.msra.mxu0 0
      %6943 = vmatprep.subr.bf16.mxu0 0
      %6944 = vmatpush1.bf16.msra.mxu0 0
      %6945 = vmatprep.subr.bf16.mxu0 0
      %6946 = vmatpush1.bf16.msra.mxu0 0
      %6947 = vmatprep.subr.bf16.mxu0 0
      %6948 = vmatpush1.bf16.msra.mxu0 0
      %6949 = vmatprep.subr.bf16.mxu0 0
      %6950 = vmatpush1.bf16.msra.mxu0 0
      %6951 = vmatprep.mubr.bf16.mxu0 0
      %6952 = vmatmul.mubr.bf16.gmra.mrb[0].mxu0 %v6917
      %v6953 = vpop.f32.mrb[0].mxu0
      %v6954 = vadd.f32 0.0, %v6953
      %v6955 = vpop.f32.mrb[0].mxu0
      %v6956 = vpop.f32.mrb[0].mxu0
      %v6957 = vadd.f32 0.0, %v6956
      %v6958 = vpop.f32.mrb[0].mxu0
      %6959 = vdwg.mxu0
      %v6960 = vadd.f32 %v6905, %v6954
      %v6961 = vadd.f32 %v6906, %v6957
      %s6962 = scalar_lea.vmem %s13, 56
      %v6963 = vld [vmem:[%s6962] sm:$0xf]
      %v6964 = vld [vmem:[%s6962 + $0x4] sm:$0xf]
      %v6967 = vunpack.c.l.b16 %v6963
      %v6968 = vunpack.c.l.b16 %v6964
      %v6969 = vpack.c.b16 %v6968, %v6967
      %v6972 = vsel %vm2471, %v6580, 0
      %6974 = vmatprep.subr.bf16.mxu0 0
      %6975 = vmatpush1.bf16.msra.mxu0 %v6969
      %6976 = vmatprep.subr.bf16.mxu0 0
      %6977 = vmatpush1.bf16.msra.mxu0 0
      %6978 = vmatprep.subr.bf16.mxu0 0
      %6979 = vmatpush1.bf16.msra.mxu0 0
      %6980 = vmatprep.subr.bf16.mxu0 0
      %6981 = vmatpush1.bf16.msra.mxu0 0
      %6982 = vmatprep.subr.bf16.mxu0 0
      %6983 = vmatpush1.bf16.msra.mxu0 0
      %6984 = vmatprep.subr.bf16.mxu0 0
      %6985 = vmatpush1.bf16.msra.mxu0 0
      %6986 = vmatprep.subr.bf16.mxu0 0
      %6987 = vmatpush1.bf16.msra.mxu0 0
      %6988 = vmatprep.subr.bf16.mxu0 0
      %6989 = vmatpush1.bf16.msra.mxu0 0
      %6990 = vmatprep.subr.bf16.mxu0 0
      %6991 = vmatpush1.bf16.msra.mxu0 0
      %6992 = vmatprep.subr.bf16.mxu0 0
      %6993 = vmatpush1.bf16.msra.mxu0 0
      %6994 = vmatprep.subr.bf16.mxu0 0
      %6995 = vmatpush1.bf16.msra.mxu0 0
      %6996 = vmatprep.subr.bf16.mxu0 0
      %6997 = vmatpush1.bf16.msra.mxu0 0
      %6998 = vmatprep.subr.bf16.mxu0 0
      %6999 = vmatpush1.bf16.msra.mxu0 0
      %7000 = vmatprep.subr.bf16.mxu0 0
      %7001 = vmatpush1.bf16.msra.mxu0 0
      %7002 = vmatprep.subr.bf16.mxu0 0
      %7003 = vmatpush1.bf16.msra.mxu0 0
      %7004 = vmatprep.subr.bf16.mxu0 0
      %7005 = vmatpush1.bf16.msra.mxu0 0
      %7006 = vmatprep.mubr.bf16.mxu0 0
      %7007 = vmatmul.mubr.bf16.gmra.mrb[0].mxu0 %v6972
      %v7008 = vpop.f32.mrb[0].mxu0
      %v7009 = vadd.f32 0.0, %v7008
      %v7010 = vpop.f32.mrb[0].mxu0
      %v7011 = vpop.f32.mrb[0].mxu0
      %v7012 = vadd.f32 0.0, %v7011
      %v7013 = vpop.f32.mrb[0].mxu0
      %7014 = vdwg.mxu0
      %v7015 = vadd.f32 %v6960, %v7009
      %v7016 = vadd.f32 %v6961, %v7012
      %s7017 = scalar_lea.vmem %s13, 64
      %v7018 = vld [vmem:[%s7017] sm:$0xf]
      %v7019 = vld [vmem:[%s7017 + $0x4] sm:$0xf]
      %v7022 = vunpack.c.l.b16 %v7018
      %v7023 = vunpack.c.l.b16 %v7019
      %v7024 = vpack.c.b16 %v7023, %v7022
      %v7027 = vsel %vm2471, %v6581, 0
      %7029 = vmatprep.subr.bf16.mxu0 0
      %7030 = vmatpush1.bf16.msra.mxu0 %v7024
      %7031 = vmatprep.subr.bf16.mxu0 0
      %7032 = vmatpush1.bf16.msra.mxu0 0
      %7033 = vmatprep.subr.bf16.mxu0 0
      %7034 = vmatpush1.bf16.msra.mxu0 0
      %7035 = vmatprep.subr.bf16.mxu0 0
      %7036 = vmatpush1.bf16.msra.mxu0 0
      %7037 = vmatprep.subr.bf16.mxu0 0
      %7038 = vmatpush1.bf16.msra.mxu0 0
      %7039 = vmatprep.subr.bf16.mxu0 0
      %7040 = vmatpush1.bf16.msra.mxu0 0
      %7041 = vmatprep.subr.bf16.mxu0 0
      %7042 = vmatpush1.bf16.msra.mxu0 0
      %7043 = vmatprep.subr.bf16.mxu0 0
      %7044 = vmatpush1.bf16.msra.mxu0 0
      %7045 = vmatprep.subr.bf16.mxu0 0
      %7046 = vmatpush1.bf16.msra.mxu0 0
      %7047 = vmatprep.subr.bf16.mxu0 0
      %7048 = vmatpush1.bf16.msra.mxu0 0
      %7049 = vmatprep.subr.bf16.mxu0 0
      %7050 = vmatpush1.bf16.msra.mxu0 0
      %7051 = vmatprep.subr.bf16.mxu0 0
      %7052 = vmatpush1.bf16.msra.mxu0 0
      %7053 = vmatprep.subr.bf16.mxu0 0
      %7054 = vmatpush1.bf16.msra.mxu0 0
      %7055 = vmatprep.subr.bf16.mxu0 0
      %7056 = vmatpush1.bf16.msra.mxu0 0
      %7057 = vmatprep.subr.bf16.mxu0 0
      %7058 = vmatpush1.bf16.msra.mxu0 0
      %7059 = vmatprep.subr.bf16.mxu0 0
      %7060 = vmatpush1.bf16.msra.mxu0 0
      %7061 = vmatprep.mubr.bf16.mxu0 0
      %7062 = vmatmul.mubr.bf16.gmra.mrb[0].mxu0 %v7027
      %v7063 = vpop.f32.mrb[0].mxu0
      %v7064 = vadd.f32 0.0, %v7063
      %v7065 = vpop.f32.mrb[0].mxu0
      %v7066 = vpop.f32.mrb[0].mxu0
      %v7067 = vadd.f32 0.0, %v7066
      %v7068 = vpop.f32.mrb[0].mxu0
      %7069 = vdwg.mxu0
      %v7070 = vadd.f32 %v7015, %v7064
      %v7071 = vadd.f32 %v7016, %v7067
      %v7072 = vld [vmem:[%s15] sm:$0xff]
      %v7073 = vld [vmem:[%s15 + $0x8] sm:$0xff]
      %7075 = vset.pattern.permute.xlu0 0
      %7076 = vperm.xlu0 %7075, %v7072
      %v7077 = vpop.permute.xlu0 %7076
      %7080 = vset.pattern.permute.xlu0 0
      %7081 = vperm.xlu0 %7080, %v7073
      %v7082 = vpop.permute.xlu0 %7081
      %v7084 = vadd.f32 %v7070, %v7077
      %v7085 = vadd.f32 %v7071, %v7082
      %v7086 = vmax.f32 %v7084, 0.0
      %v7087 = vmax.f32 %v7085, 0.0
      %v7088 = vld [vmem:[%s17] sm:$0x7]
      %v7090 = vsel %vm2471, %v7088, 0
      %7092 = vmatprep.subr.mxu0 0.0
      %7093 = vmatpush1.msra.mxu0 %v7086
      %7094 = vmatprep.subr.mxu0 0.0
      %7095 = vmatpush1.msra.mxu0 %v7087
      %7096 = vmatprep.subr.mxu0 0.0
      %7097 = vmatpush1.msra.mxu0 0.0
      %7098 = vmatprep.subr.mxu0 0.0
      %7099 = vmatpush1.msra.mxu0 0.0
      %7100 = vmatprep.subr.mxu0 0.0
      %7101 = vmatpush1.msra.mxu0 0.0
      %7102 = vmatprep.subr.mxu0 0.0
      %7103 = vmatpush1.msra.mxu0 0.0
      %7104 = vmatprep.subr.mxu0 0.0
      %7105 = vmatpush1.msra.mxu0 0.0
      %7106 = vmatprep.subr.mxu0 0.0
      %7107 = vmatpush1.msra.mxu0 0.0
      %7108 = vmatprep.subr.mxu0 0.0
      %7109 = vmatpush1.msra.mxu0 0.0
      %7110 = vmatprep.subr.mxu0 0.0
      %7111 = vmatpush1.msra.mxu0 0.0
      %7112 = vmatprep.subr.mxu0 0.0
      %7113 = vmatpush1.msra.mxu0 0.0
      %7114 = vmatprep.subr.mxu0 0.0
      %7115 = vmatpush1.msra.mxu0 0.0
      %7116 = vmatprep.subr.mxu0 0.0
      %7117 = vmatpush1.msra.mxu0 0.0
      %7118 = vmatprep.subr.mxu0 0.0
      %7119 = vmatpush1.msra.mxu0 0.0
      %7120 = vmatprep.subr.mxu0 0.0
      %7121 = vmatpush1.msra.mxu0 0.0
      %7122 = vmatprep.subr.mxu0 0.0
      %7123 = vmatpush1.msra.mxu0 0.0
      %7124 = vmatprep.subr.mxu0 0.0
      %7125 = vmatpush1.msra.mxu0 0.0
      %7126 = vmatprep.subr.mxu0 0.0
      %7127 = vmatpush1.msra.mxu0 0.0
      %7128 = vmatprep.subr.mxu0 0.0
      %7129 = vmatpush1.msra.mxu0 0.0
      %7130 = vmatprep.subr.mxu0 0.0
      %7131 = vmatpush1.msra.mxu0 0.0
      %7132 = vmatprep.subr.mxu0 0.0
      %7133 = vmatpush1.msra.mxu0 0.0
      %7134 = vmatprep.subr.mxu0 0.0
      %7135 = vmatpush1.msra.mxu0 0.0
      %7136 = vmatprep.subr.mxu0 0.0
      %7137 = vmatpush1.msra.mxu0 0.0
      %7138 = vmatprep.subr.mxu0 0.0
      %7139 = vmatpush1.msra.mxu0 0.0
      %7140 = vmatprep.subr.mxu0 0.0
      %7141 = vmatpush1.msra.mxu0 0.0
      %7142 = vmatprep.subr.mxu0 0.0
      %7143 = vmatpush1.msra.mxu0 0.0
      %7144 = vmatprep.subr.mxu0 0.0
      %7145 = vmatpush1.msra.mxu0 0.0
      %7146 = vmatprep.subr.mxu0 0.0
      %7147 = vmatpush1.msra.mxu0 0.0
      %7148 = vmatprep.subr.mxu0 0.0
      %7149 = vmatpush1.msra.mxu0 0.0
      %7150 = vmatprep.subr.mxu0 0.0
      %7151 = vmatpush1.msra.mxu0 0.0
      %7152 = vmatprep.subr.mxu0 0.0
      %7153 = vmatpush1.msra.mxu0 0.0
      %7154 = vmatprep.subr.mxu0 0.0
      %7155 = vmatpush1.msra.mxu0 0.0
      %7156 = vmatprep.mubr.f32.mxu0 0.0
      %7157 = vmatmul.mubr.f32.gmra.mrb[0].mxu0 %v7090
      %v7158 = vpop.f32.mrb[0].mxu0
      %v7159 = vadd.f32 0.0, %v7158
      %v7160 = vpop.f32.mrb[0].mxu0
      %7161 = vdwg.mxu0
      %v7162 = vpack.c.bf16 %v7159, %v7159
      %v7163 = vld [vmem:[%s16] sm:$0xff]
      %v7164 = vld [vmem:[%s16 + $0x8] sm:$0xff]
      %v7165 = vld [vmem:[%s16 + $0x10] sm:$0xff]
      %v7166 = vld [vmem:[%s16 + $0x18] sm:$0xff]
      %v7167 = vld [vmem:[%s16 + $0x20] sm:$0xff]
      %v7168 = vld [vmem:[%s16 + $0x28] sm:$0xff]
      %v7169 = vld [vmem:[%s16 + $0x30] sm:$0xff]
      %v7170 = vld [vmem:[%s16 + $0x38] sm:$0xff]
      %s7171 = scalar_lea.vmem %s17, 4
      %v7172 = vld [vmem:[%s7171] sm:$0x7]
      %v7174 = vsel %vm2471, %v7172, 0
      %7176 = vmatprep.subr.mxu0 0.0
      %7177 = vmatpush1.msra.mxu0 %v7086
      %7178 = vmatprep.subr.mxu0 0.0
      %7179 = vmatpush1.msra.mxu0 %v7087
      %7180 = vmatprep.subr.mxu0 0.0
      %7181 = vmatpush1.msra.mxu0 0.0
      %7182 = vmatprep.subr.mxu0 0.0
      %7183 = vmatpush1.msra.mxu0 0.0
      %7184 = vmatprep.subr.mxu0 0.0
      %7185 = vmatpush1.msra.mxu0 0.0
      %7186 = vmatprep.subr.mxu0 0.0
      %7187 = vmatpush1.msra.mxu0 0.0
      %7188 = vmatprep.subr.mxu0 0.0
      %7189 = vmatpush1.msra.mxu0 0.0
      %7190 = vmatprep.subr.mxu0 0.0
      %7191 = vmatpush1.msra.mxu0 0.0
      %7192 = vmatprep.subr.mxu0 0.0
      %7193 = vmatpush1.msra.mxu0 0.0
      %7194 = vmatprep.subr.mxu0 0.0
      %7195 = vmatpush1.msra.mxu0 0.0
      %7196 = vmatprep.subr.mxu0 0.0
      %7197 = vmatpush1.msra.mxu0 0.0
      %7198 = vmatprep.subr.mxu0 0.0
      %7199 = vmatpush1.msra.mxu0 0.0
      %7200 = vmatprep.subr.mxu0 0.0
      %7201 = vmatpush1.msra.mxu0 0.0
      %7202 = vmatprep.subr.mxu0 0.0
      %7203 = vmatpush1.msra.mxu0 0.0
      %7204 = vmatprep.subr.mxu0 0.0
      %7205 = vmatpush1.msra.mxu0 0.0
      %7206 = vmatprep.subr.mxu0 0.0
      %7207 = vmatpush1.msra.mxu0 0.0
      %7208 = vmatprep.subr.mxu0 0.0
      %7209 = vmatpush1.msra.mxu0 0.0
      %7210 = vmatprep.subr.mxu0 0.0
      %7211 = vmatpush1.msra.mxu0 0.0
      %7212 = vmatprep.subr.mxu0 0.0
      %7213 = vmatpush1.msra.mxu0 0.0
      %7214 = vmatprep.subr.mxu0 0.0
      %7215 = vmatpush1.msra.mxu0 0.0
      %7216 = vmatprep.subr.mxu0 0.0
      %7217 = vmatpush1.msra.mxu0 0.0
      %7218 = vmatprep.subr.mxu0 0.0
      %7219 = vmatpush1.msra.mxu0 0.0
      %7220 = vmatprep.subr.mxu0 0.0
      %7221 = vmatpush1.msra.mxu0 0.0
      %7222 = vmatprep.subr.mxu0 0.0
      %7223 = vmatpush1.msra.mxu0 0.0
      %7224 = vmatprep.subr.mxu0 0.0
      %7225 = vmatpush1.msra.mxu0 0.0
      %7226 = vmatprep.subr.mxu0 0.0
      %7227 = vmatpush1.msra.mxu0 0.0
      %7228 = vmatprep.subr.mxu0 0.0
      %7229 = vmatpush1.msra.mxu0 0.0
      %7230 = vmatprep.subr.mxu0 0.0
      %7231 = vmatpush1.msra.mxu0 0.0
      %7232 = vmatprep.subr.mxu0 0.0
      %7233 = vmatpush1.msra.mxu0 0.0
      %7234 = vmatprep.subr.mxu0 0.0
      %7235 = vmatpush1.msra.mxu0 0.0
      %7236 = vmatprep.subr.mxu0 0.0
      %7237 = vmatpush1.msra.mxu0 0.0
      %7238 = vmatprep.subr.mxu0 0.0
      %7239 = vmatpush1.msra.mxu0 0.0
      %7240 = vmatprep.mubr.f32.mxu0 0.0
      %7241 = vmatmul.mubr.f32.gmra.mrb[0].mxu0 %v7174
      %v7242 = vpop.f32.mrb[0].mxu0
      %v7243 = vadd.f32 0.0, %v7242
      %v7244 = vpop.f32.mrb[0].mxu0
      %7245 = vdwg.mxu0
      %v7246 = vpack.c.bf16 %v7243, %v7243
      %s7247 = scalar_lea.vmem %s16, 64
      %v7248 = vld [vmem:[%s7247] sm:$0xff]
      %v7249 = vld [vmem:[%s7247 + $0x8] sm:$0xff]
      %v7250 = vld [vmem:[%s7247 + $0x10] sm:$0xff]
      %v7251 = vld [vmem:[%s7247 + $0x18] sm:$0xff]
      %v7252 = vld [vmem:[%s7247 + $0x20] sm:$0xff]
      %v7253 = vld [vmem:[%s7247 + $0x28] sm:$0xff]
      %v7254 = vld [vmem:[%s7247 + $0x30] sm:$0xff]
      %v7255 = vld [vmem:[%s7247 + $0x38] sm:$0xff]
      %v7264 = vunpack.c.l.b16 %v7248
      %v7265 = vunpack.c.h.b16 %v7248
      %v7266 = vunpack.c.l.b16 %v7249
      %v7267 = vunpack.c.h.b16 %v7249
      %v7268 = vunpack.c.l.b16 %v7250
      %v7269 = vunpack.c.h.b16 %v7250
      %v7270 = vunpack.c.l.b16 %v7251
      %v7271 = vunpack.c.h.b16 %v7251
      %v7272 = vunpack.c.l.b16 %v7252
      %v7273 = vunpack.c.h.b16 %v7252
      %v7274 = vunpack.c.l.b16 %v7253
      %v7275 = vunpack.c.h.b16 %v7253
      %v7276 = vunpack.c.l.b16 %v7254
      %v7277 = vunpack.c.h.b16 %v7254
      %v7278 = vunpack.c.l.b16 %v7255
      %v7279 = vunpack.c.h.b16 %v7255
      %v7280 = vpack.c.b16 %v7266, %v7264
      %v7281 = vpack.c.b16 %v7267, %v7265
      %v7282 = vpack.c.b16 %v7270, %v7268
      %v7283 = vpack.c.b16 %v7271, %v7269
      %v7284 = vpack.c.b16 %v7274, %v7272
      %v7285 = vpack.c.b16 %v7275, %v7273
      %v7286 = vpack.c.b16 %v7278, %v7276
      %v7287 = vpack.c.b16 %v7279, %v7277
      %v7297 = vsel %vm2884, %v7246, 0
      %7299 = vmatprep.subr.bf16.mxu0 %v7281
      %7300 = vmatpush1.bf16.msra.mxu0 %v7280
      %7301 = vmatprep.subr.bf16.mxu0 %v7283
      %7302 = vmatpush1.bf16.msra.mxu0 %v7282
      %7303 = vmatprep.subr.bf16.mxu0 %v7285
      %7304 = vmatpush1.bf16.msra.mxu0 %v7284
      %7305 = vmatprep.subr.bf16.mxu0 %v7287
      %7306 = vmatpush1.bf16.msra.mxu0 %v7286
      %7307 = vmatprep.subr.bf16.mxu0 0
      %7308 = vmatpush1.bf16.msra.mxu0 0
      %7309 = vmatprep.subr.bf16.mxu0 0
      %7310 = vmatpush1.bf16.msra.mxu0 0
      %7311 = vmatprep.subr.bf16.mxu0 0
      %7312 = vmatpush1.bf16.msra.mxu0 0
      %7313 = vmatprep.subr.bf16.mxu0 0
      %7314 = vmatpush1.bf16.msra.mxu0 0
      %7315 = vmatprep.subr.bf16.mxu0 0
      %7316 = vmatpush1.bf16.msra.mxu0 0
      %7317 = vmatprep.subr.bf16.mxu0 0
      %7318 = vmatpush1.bf16.msra.mxu0 0
      %7319 = vmatprep.subr.bf16.mxu0 0
      %7320 = vmatpush1.bf16.msra.mxu0 0
      %7321 = vmatprep.subr.bf16.mxu0 0
      %7322 = vmatpush1.bf16.msra.mxu0 0
      %7323 = vmatprep.subr.bf16.mxu0 0
      %7324 = vmatpush1.bf16.msra.mxu0 0
      %7325 = vmatprep.subr.bf16.mxu0 0
      %7326 = vmatpush1.bf16.msra.mxu0 0
      %7327 = vmatprep.subr.bf16.mxu0 0
      %7328 = vmatpush1.bf16.msra.mxu0 0
      %7329 = vmatprep.subr.bf16.mxu0 0
      %7330 = vmatpush1.bf16.msra.mxu0 0
      %7331 = vmatprep.mubr.bf16.mxu0 0
      %7332 = vmatmul.mubr.bf16.gmra.mrb[0].mxu0 %v7297
      %v7333 = vpop.f32.mrb[0].mxu0
      %v7334 = vadd.f32 0.0, %v7333
      %v7335 = vpop.f32.mrb[0].mxu0
      %v7336 = vadd.f32 0.0, %v7335
      %v7337 = vpop.f32.mrb[0].mxu0
      %v7338 = vpop.f32.mrb[0].mxu0
      %7339 = vdwg.mxu0
      %v7348 = vunpack.c.l.b16 %v7163
      %v7349 = vunpack.c.h.b16 %v7163
      %v7350 = vunpack.c.l.b16 %v7164
      %v7351 = vunpack.c.h.b16 %v7164
      %v7352 = vunpack.c.l.b16 %v7165
      %v7353 = vunpack.c.h.b16 %v7165
      %v7354 = vunpack.c.l.b16 %v7166
      %v7355 = vunpack.c.h.b16 %v7166
      %v7356 = vunpack.c.l.b16 %v7167
      %v7357 = vunpack.c.h.b16 %v7167
      %v7358 = vunpack.c.l.b16 %v7168
      %v7359 = vunpack.c.h.b16 %v7168
      %v7360 = vunpack.c.l.b16 %v7169
      %v7361 = vunpack.c.h.b16 %v7169
      %v7362 = vunpack.c.l.b16 %v7170
      %v7363 = vunpack.c.h.b16 %v7170
      %v7364 = vpack.c.b16 %v7350, %v7348
      %v7365 = vpack.c.b16 %v7351, %v7349
      %v7366 = vpack.c.b16 %v7354, %v7352
      %v7367 = vpack.c.b16 %v7355, %v7353
      %v7368 = vpack.c.b16 %v7358, %v7356
      %v7369 = vpack.c.b16 %v7359, %v7357
      %v7370 = vpack.c.b16 %v7362, %v7360
      %v7371 = vpack.c.b16 %v7363, %v7361
      %v7381 = vsel %vm2884, %v7162, 0
      %7383 = vmatprep.subr.bf16.mxu0 %v7365
      %7384 = vmatpush1.bf16.msra.mxu0 %v7364
      %7385 = vmatprep.subr.bf16.mxu0 %v7367
      %7386 = vmatpush1.bf16.msra.mxu0 %v7366
      %7387 = vmatprep.subr.bf16.mxu0 %v7369
      %7388 = vmatpush1.bf16.msra.mxu0 %v7368
      %7389 = vmatprep.subr.bf16.mxu0 %v7371
      %7390 = vmatpush1.bf16.msra.mxu0 %v7370
      %7391 = vmatprep.subr.bf16.mxu0 0
      %7392 = vmatpush1.bf16.msra.mxu0 0
      %7393 = vmatprep.subr.bf16.mxu0 0
      %7394 = vmatpush1.bf16.msra.mxu0 0
      %7395 = vmatprep.subr.bf16.mxu0 0
      %7396 = vmatpush1.bf16.msra.mxu0 0
      %7397 = vmatprep.subr.bf16.mxu0 0
      %7398 = vmatpush1.bf16.msra.mxu0 0
      %7399 = vmatprep.subr.bf16.mxu0 0
      %7400 = vmatpush1.bf16.msra.mxu0 0
      %7401 = vmatprep.subr.bf16.mxu0 0
      %7402 = vmatpush1.bf16.msra.mxu0 0
      %7403 = vmatprep.subr.bf16.mxu0 0
      %7404 = vmatpush1.bf16.msra.mxu0 0
      %7405 = vmatprep.subr.bf16.mxu0 0
      %7406 = vmatpush1.bf16.msra.mxu0 0
      %7407 = vmatprep.subr.bf16.mxu0 0
      %7408 = vmatpush1.bf16.msra.mxu0 0
      %7409 = vmatprep.subr.bf16.mxu0 0
      %7410 = vmatpush1.bf16.msra.mxu0 0
      %7411 = vmatprep.subr.bf16.mxu0 0
      %7412 = vmatpush1.bf16.msra.mxu0 0
      %7413 = vmatprep.subr.bf16.mxu0 0
      %7414 = vmatpush1.bf16.msra.mxu0 0
      %7415 = vmatprep.mubr.bf16.mxu0 0
      %7416 = vmatmul.mubr.bf16.gmra.mrb[0].mxu0 %v7381
      %v7417 = vpop.f32.mrb[0].mxu0
      %v7418 = vadd.f32 %v7334, %v7417
      %v7419 = vpop.f32.mrb[0].mxu0
      %v7420 = vadd.f32 %v7336, %v7419
      %v7421 = vpop.f32.mrb[0].mxu0
      %v7422 = vpop.f32.mrb[0].mxu0
      %7423 = vdwg.mxu0
      %s7424 = scalar_lea.vmem %s17, 8
      %v7425 = vld [vmem:[%s7424] sm:$0x7]
      %v7427 = vsel %vm2471, %v7425, 0
      %7429 = vmatprep.subr.mxu0 0.0
      %7430 = vmatpush1.msra.mxu0 %v7086
      %7431 = vmatprep.subr.mxu0 0.0
      %7432 = vmatpush1.msra.mxu0 %v7087
      %7433 = vmatprep.subr.mxu0 0.0
      %7434 = vmatpush1.msra.mxu0 0.0
      %7435 = vmatprep.subr.mxu0 0.0
      %7436 = vmatpush1.msra.mxu0 0.0
      %7437 = vmatprep.subr.mxu0 0.0
      %7438 = vmatpush1.msra.mxu0 0.0
      %7439 = vmatprep.subr.mxu0 0.0
      %7440 = vmatpush1.msra.mxu0 0.0
      %7441 = vmatprep.subr.mxu0 0.0
      %7442 = vmatpush1.msra.mxu0 0.0
      %7443 = vmatprep.subr.mxu0 0.0
      %7444 = vmatpush1.msra.mxu0 0.0
      %7445 = vmatprep.subr.mxu0 0.0
      %7446 = vmatpush1.msra.mxu0 0.0
      %7447 = vmatprep.subr.mxu0 0.0
      %7448 = vmatpush1.msra.mxu0 0.0
      %7449 = vmatprep.subr.mxu0 0.0
      %7450 = vmatpush1.msra.mxu0 0.0
      %7451 = vmatprep.subr.mxu0 0.0
      %7452 = vmatpush1.msra.mxu0 0.0
      %7453 = vmatprep.subr.mxu0 0.0
      %7454 = vmatpush1.msra.mxu0 0.0
      %7455 = vmatprep.subr.mxu0 0.0
      %7456 = vmatpush1.msra.mxu0 0.0
      %7457 = vmatprep.subr.mxu0 0.0
      %7458 = vmatpush1.msra.mxu0 0.0
      %7459 = vmatprep.subr.mxu0 0.0
      %7460 = vmatpush1.msra.mxu0 0.0
      %7461 = vmatprep.subr.mxu0 0.0
      %7462 = vmatpush1.msra.mxu0 0.0
      %7463 = vmatprep.subr.mxu0 0.0
      %7464 = vmatpush1.msra.mxu0 0.0
      %7465 = vmatprep.subr.mxu0 0.0
      %7466 = vmatpush1.msra.mxu0 0.0
      %7467 = vmatprep.subr.mxu0 0.0
      %7468 = vmatpush1.msra.mxu0 0.0
      %7469 = vmatprep.subr.mxu0 0.0
      %7470 = vmatpush1.msra.mxu0 0.0
      %7471 = vmatprep.subr.mxu0 0.0
      %7472 = vmatpush1.msra.mxu0 0.0
      %7473 = vmatprep.subr.mxu0 0.0
      %7474 = vmatpush1.msra.mxu0 0.0
      %7475 = vmatprep.subr.mxu0 0.0
      %7476 = vmatpush1.msra.mxu0 0.0
      %7477 = vmatprep.subr.mxu0 0.0
      %7478 = vmatpush1.msra.mxu0 0.0
      %7479 = vmatprep.subr.mxu0 0.0
      %7480 = vmatpush1.msra.mxu0 0.0
      %7481 = vmatprep.subr.mxu0 0.0
      %7482 = vmatpush1.msra.mxu0 0.0
      %7483 = vmatprep.subr.mxu0 0.0
      %7484 = vmatpush1.msra.mxu0 0.0
      %7485 = vmatprep.subr.mxu0 0.0
      %7486 = vmatpush1.msra.mxu0 0.0
      %7487 = vmatprep.subr.mxu0 0.0
      %7488 = vmatpush1.msra.mxu0 0.0
      %7489 = vmatprep.subr.mxu0 0.0
      %7490 = vmatpush1.msra.mxu0 0.0
      %7491 = vmatprep.subr.mxu0 0.0
      %7492 = vmatpush1.msra.mxu0 0.0
      %7493 = vmatprep.mubr.f32.mxu0 0.0
      %7494 = vmatmul.mubr.f32.gmra.mrb[0].mxu0 %v7427
      %v7495 = vpop.f32.mrb[0].mxu0
      %v7496 = vadd.f32 0.0, %v7495
      %v7497 = vpop.f32.mrb[0].mxu0
      %7498 = vdwg.mxu0
      %v7499 = vpack.c.bf16 %v7496, %v7496
      %s7500 = scalar_lea.vmem %s16, 128
      %v7501 = vld [vmem:[%s7500] sm:$0xff]
      %v7502 = vld [vmem:[%s7500 + $0x8] sm:$0xff]
      %v7503 = vld [vmem:[%s7500 + $0x10] sm:$0xff]
      %v7504 = vld [vmem:[%s7500 + $0x18] sm:$0xff]
      %v7505 = vld [vmem:[%s7500 + $0x20] sm:$0xff]
      %v7506 = vld [vmem:[%s7500 + $0x28] sm:$0xff]
      %v7507 = vld [vmem:[%s7500 + $0x30] sm:$0xff]
      %v7508 = vld [vmem:[%s7500 + $0x38] sm:$0xff]
      %v7517 = vunpack.c.l.b16 %v7501
      %v7518 = vunpack.c.h.b16 %v7501
      %v7519 = vunpack.c.l.b16 %v7502
      %v7520 = vunpack.c.h.b16 %v7502
      %v7521 = vunpack.c.l.b16 %v7503
      %v7522 = vunpack.c.h.b16 %v7503
      %v7523 = vunpack.c.l.b16 %v7504
      %v7524 = vunpack.c.h.b16 %v7504
      %v7525 = vunpack.c.l.b16 %v7505
      %v7526 = vunpack.c.h.b16 %v7505
      %v7527 = vunpack.c.l.b16 %v7506
      %v7528 = vunpack.c.h.b16 %v7506
      %v7529 = vunpack.c.l.b16 %v7507
      %v7530 = vunpack.c.h.b16 %v7507
      %v7531 = vunpack.c.l.b16 %v7508
      %v7532 = vunpack.c.h.b16 %v7508
      %v7533 = vpack.c.b16 %v7519, %v7517
      %v7534 = vpack.c.b16 %v7520, %v7518
      %v7535 = vpack.c.b16 %v7523, %v7521
      %v7536 = vpack.c.b16 %v7524, %v7522
      %v7537 = vpack.c.b16 %v7527, %v7525
      %v7538 = vpack.c.b16 %v7528, %v7526
      %v7539 = vpack.c.b16 %v7531, %v7529
      %v7540 = vpack.c.b16 %v7532, %v7530
      %v7550 = vsel %vm2884, %v7499, 0
      %7552 = vmatprep.subr.bf16.mxu0 %v7534
      %7553 = vmatpush1.bf16.msra.mxu0 %v7533
      %7554 = vmatprep.subr.bf16.mxu0 %v7536
      %7555 = vmatpush1.bf16.msra.mxu0 %v7535
      %7556 = vmatprep.subr.bf16.mxu0 %v7538
      %7557 = vmatpush1.bf16.msra.mxu0 %v7537
      %7558 = vmatprep.subr.bf16.mxu0 %v7540
      %7559 = vmatpush1.bf16.msra.mxu0 %v7539
      %7560 = vmatprep.subr.bf16.mxu0 0
      %7561 = vmatpush1.bf16.msra.mxu0 0
      %7562 = vmatprep.subr.bf16.mxu0 0
      %7563 = vmatpush1.bf16.msra.mxu0 0
      %7564 = vmatprep.subr.bf16.mxu0 0
      %7565 = vmatpush1.bf16.msra.mxu0 0
      %7566 = vmatprep.subr.bf16.mxu0 0
      %7567 = vmatpush1.bf16.msra.mxu0 0
      %7568 = vmatprep.subr.bf16.mxu0 0
      %7569 = vmatpush1.bf16.msra.mxu0 0
      %7570 = vmatprep.subr.bf16.mxu0 0
      %7571 = vmatpush1.bf16.msra.mxu0 0
      %7572 = vmatprep.subr.bf16.mxu0 0
      %7573 = vmatpush1.bf16.msra.mxu0 0
      %7574 = vmatprep.subr.bf16.mxu0 0
      %7575 = vmatpush1.bf16.msra.mxu0 0
      %7576 = vmatprep.subr.bf16.mxu0 0
      %7577 = vmatpush1.bf16.msra.mxu0 0
      %7578 = vmatprep.subr.bf16.mxu0 0
      %7579 = vmatpush1.bf16.msra.mxu0 0
      %7580 = vmatprep.subr.bf16.mxu0 0
      %7581 = vmatpush1.bf16.msra.mxu0 0
      %7582 = vmatprep.subr.bf16.mxu0 0
      %7583 = vmatpush1.bf16.msra.mxu0 0
      %7584 = vmatprep.mubr.bf16.mxu0 0
      %7585 = vmatmul.mubr.bf16.gmra.mrb[0].mxu0 %v7550
      %v7586 = vpop.f32.mrb[0].mxu0
      %v7587 = vadd.f32 0.0, %v7586
      %v7588 = vpop.f32.mrb[0].mxu0
      %v7589 = vadd.f32 0.0, %v7588
      %v7590 = vpop.f32.mrb[0].mxu0
      %v7591 = vpop.f32.mrb[0].mxu0
      %7592 = vdwg.mxu0
      %v7593 = vadd.f32 %v7418, %v7587
      %v7594 = vadd.f32 %v7420, %v7589
      %s7595 = scalar_lea.vmem %s17, 12
      %v7596 = vld [vmem:[%s7595] sm:$0x7]
      %v7598 = vsel %vm2471, %v7596, 0
      %7600 = vmatprep.subr.mxu0 0.0
      %7601 = vmatpush1.msra.mxu0 %v7086
      %7602 = vmatprep.subr.mxu0 0.0
      %7603 = vmatpush1.msra.mxu0 %v7087
      %7604 = vmatprep.subr.mxu0 0.0
      %7605 = vmatpush1.msra.mxu0 0.0
      %7606 = vmatprep.subr.mxu0 0.0
      %7607 = vmatpush1.msra.mxu0 0.0
      %7608 = vmatprep.subr.mxu0 0.0
      %7609 = vmatpush1.msra.mxu0 0.0
      %7610 = vmatprep.subr.mxu0 0.0
      %7611 = vmatpush1.msra.mxu0 0.0
      %7612 = vmatprep.subr.mxu0 0.0
      %7613 = vmatpush1.msra.mxu0 0.0
      %7614 = vmatprep.subr.mxu0 0.0
      %7615 = vmatpush1.msra.mxu0 0.0
      %7616 = vmatprep.subr.mxu0 0.0
      %7617 = vmatpush1.msra.mxu0 0.0
      %7618 = vmatprep.subr.mxu0 0.0
      %7619 = vmatpush1.msra.mxu0 0.0
      %7620 = vmatprep.subr.mxu0 0.0
      %7621 = vmatpush1.msra.mxu0 0.0
      %7622 = vmatprep.subr.mxu0 0.0
      %7623 = vmatpush1.msra.mxu0 0.0
      %7624 = vmatprep.subr.mxu0 0.0
      %7625 = vmatpush1.msra.mxu0 0.0
      %7626 = vmatprep.subr.mxu0 0.0
      %7627 = vmatpush1.msra.mxu0 0.0
      %7628 = vmatprep.subr.mxu0 0.0
      %7629 = vmatpush1.msra.mxu0 0.0
      %7630 = vmatprep.subr.mxu0 0.0
      %7631 = vmatpush1.msra.mxu0 0.0
      %7632 = vmatprep.subr.mxu0 0.0
      %7633 = vmatpush1.msra.mxu0 0.0
      %7634 = vmatprep.subr.mxu0 0.0
      %7635 = vmatpush1.msra.mxu0 0.0
      %7636 = vmatprep.subr.mxu0 0.0
      %7637 = vmatpush1.msra.mxu0 0.0
      %7638 = vmatprep.subr.mxu0 0.0
      %7639 = vmatpush1.msra.mxu0 0.0
      %7640 = vmatprep.subr.mxu0 0.0
      %7641 = vmatpush1.msra.mxu0 0.0
      %7642 = vmatprep.subr.mxu0 0.0
      %7643 = vmatpush1.msra.mxu0 0.0
      %7644 = vmatprep.subr.mxu0 0.0
      %7645 = vmatpush1.msra.mxu0 0.0
      %7646 = vmatprep.subr.mxu0 0.0
      %7647 = vmatpush1.msra.mxu0 0.0
      %7648 = vmatprep.subr.mxu0 0.0
      %7649 = vmatpush1.msra.mxu0 0.0
      %7650 = vmatprep.subr.mxu0 0.0
      %7651 = vmatpush1.msra.mxu0 0.0
      %7652 = vmatprep.subr.mxu0 0.0
      %7653 = vmatpush1.msra.mxu0 0.0
      %7654 = vmatprep.subr.mxu0 0.0
      %7655 = vmatpush1.msra.mxu0 0.0
      %7656 = vmatprep.subr.mxu0 0.0
      %7657 = vmatpush1.msra.mxu0 0.0
      %7658 = vmatprep.subr.mxu0 0.0
      %7659 = vmatpush1.msra.mxu0 0.0
      %7660 = vmatprep.subr.mxu0 0.0
      %7661 = vmatpush1.msra.mxu0 0.0
      %7662 = vmatprep.subr.mxu0 0.0
      %7663 = vmatpush1.msra.mxu0 0.0
      %7664 = vmatprep.mubr.f32.mxu0 0.0
      %7665 = vmatmul.mubr.f32.gmra.mrb[0].mxu0 %v7598
      %v7666 = vpop.f32.mrb[0].mxu0
      %v7667 = vadd.f32 0.0, %v7666
      %v7668 = vpop.f32.mrb[0].mxu0
      %7669 = vdwg.mxu0
      %v7670 = vpack.c.bf16 %v7667, %v7667
      %s7671 = scalar_lea.vmem %s16, 192
      %v7672 = vld [vmem:[%s7671] sm:$0xff]
      %v7673 = vld [vmem:[%s7671 + $0x8] sm:$0xff]
      %v7674 = vld [vmem:[%s7671 + $0x10] sm:$0xff]
      %v7675 = vld [vmem:[%s7671 + $0x18] sm:$0xff]
      %v7676 = vld [vmem:[%s7671 + $0x20] sm:$0xff]
      %v7677 = vld [vmem:[%s7671 + $0x28] sm:$0xff]
      %v7678 = vld [vmem:[%s7671 + $0x30] sm:$0xff]
      %v7679 = vld [vmem:[%s7671 + $0x38] sm:$0xff]
      %v7688 = vunpack.c.l.b16 %v7672
      %v7689 = vunpack.c.h.b16 %v7672
      %v7690 = vunpack.c.l.b16 %v7673
      %v7691 = vunpack.c.h.b16 %v7673
      %v7692 = vunpack.c.l.b16 %v7674
      %v7693 = vunpack.c.h.b16 %v7674
      %v7694 = vunpack.c.l.b16 %v7675
      %v7695 = vunpack.c.h.b16 %v7675
      %v7696 = vunpack.c.l.b16 %v7676
      %v7697 = vunpack.c.h.b16 %v7676
      %v7698 = vunpack.c.l.b16 %v7677
      %v7699 = vunpack.c.h.b16 %v7677
      %v7700 = vunpack.c.l.b16 %v7678
      %v7701 = vunpack.c.h.b16 %v7678
      %v7702 = vunpack.c.l.b16 %v7679
      %v7703 = vunpack.c.h.b16 %v7679
      %v7704 = vpack.c.b16 %v7690, %v7688
      %v7705 = vpack.c.b16 %v7691, %v7689
      %v7706 = vpack.c.b16 %v7694, %v7692
      %v7707 = vpack.c.b16 %v7695, %v7693
      %v7708 = vpack.c.b16 %v7698, %v7696
      %v7709 = vpack.c.b16 %v7699, %v7697
      %v7710 = vpack.c.b16 %v7702, %v7700
      %v7711 = vpack.c.b16 %v7703, %v7701
      %v7721 = vsel %vm2884, %v7670, 0
      %7723 = vmatprep.subr.bf16.mxu0 %v7705
      %7724 = vmatpush1.bf16.msra.mxu0 %v7704
      %7725 = vmatprep.subr.bf16.mxu0 %v7707
      %7726 = vmatpush1.bf16.msra.mxu0 %v7706
      %7727 = vmatprep.subr.bf16.mxu0 %v7709
      %7728 = vmatpush1.bf16.msra.mxu0 %v7708
      %7729 = vmatprep.subr.bf16.mxu0 %v7711
      %7730 = vmatpush1.bf16.msra.mxu0 %v7710
      %7731 = vmatprep.subr.bf16.mxu0 0
      %7732 = vmatpush1.bf16.msra.mxu0 0
      %7733 = vmatprep.subr.bf16.mxu0 0
      %7734 = vmatpush1.bf16.msra.mxu0 0
      %7735 = vmatprep.subr.bf16.mxu0 0
      %7736 = vmatpush1.bf16.msra.mxu0 0
      %7737 = vmatprep.subr.bf16.mxu0 0
      %7738 = vmatpush1.bf16.msra.mxu0 0
      %7739 = vmatprep.subr.bf16.mxu0 0
      %7740 = vmatpush1.bf16.msra.mxu0 0
      %7741 = vmatprep.subr.bf16.mxu0 0
      %7742 = vmatpush1.bf16.msra.mxu0 0
      %7743 = vmatprep.subr.bf16.mxu0 0
      %7744 = vmatpush1.bf16.msra.mxu0 0
      %7745 = vmatprep.subr.bf16.mxu0 0
      %7746 = vmatpush1.bf16.msra.mxu0 0
      %7747 = vmatprep.subr.bf16.mxu0 0
      %7748 = vmatpush1.bf16.msra.mxu0 0
      %7749 = vmatprep.subr.bf16.mxu0 0
      %7750 = vmatpush1.bf16.msra.mxu0 0
      %7751 = vmatprep.subr.bf16.mxu0 0
      %7752 = vmatpush1.bf16.msra.mxu0 0
      %7753 = vmatprep.subr.bf16.mxu0 0
      %7754 = vmatpush1.bf16.msra.mxu0 0
      %7755 = vmatprep.mubr.bf16.mxu0 0
      %7756 = vmatmul.mubr.bf16.gmra.mrb[0].mxu0 %v7721
      %v7757 = vpop.f32.mrb[0].mxu0
      %v7758 = vadd.f32 0.0, %v7757
      %v7759 = vpop.f32.mrb[0].mxu0
      %v7760 = vadd.f32 0.0, %v7759
      %v7761 = vpop.f32.mrb[0].mxu0
      %v7762 = vpop.f32.mrb[0].mxu0
      %7763 = vdwg.mxu0
      %v7764 = vadd.f32 %v7593, %v7758
      %v7765 = vadd.f32 %v7594, %v7760
      %s7766 = scalar_lea.vmem %s17, 16
      %v7767 = vld [vmem:[%s7766] sm:$0x7]
      %v7769 = vsel %vm2471, %v7767, 0
      %7771 = vmatprep.subr.mxu0 0.0
      %7772 = vmatpush1.msra.mxu0 %v7086
      %7773 = vmatprep.subr.mxu0 0.0
      %7774 = vmatpush1.msra.mxu0 %v7087
      %7775 = vmatprep.subr.mxu0 0.0
      %7776 = vmatpush1.msra.mxu0 0.0
      %7777 = vmatprep.subr.mxu0 0.0
      %7778 = vmatpush1.msra.mxu0 0.0
      %7779 = vmatprep.subr.mxu0 0.0
      %7780 = vmatpush1.msra.mxu0 0.0
      %7781 = vmatprep.subr.mxu0 0.0
      %7782 = vmatpush1.msra.mxu0 0.0
      %7783 = vmatprep.subr.mxu0 0.0
      %7784 = vmatpush1.msra.mxu0 0.0
      %7785 = vmatprep.subr.mxu0 0.0
      %7786 = vmatpush1.msra.mxu0 0.0
      %7787 = vmatprep.subr.mxu0 0.0
      %7788 = vmatpush1.msra.mxu0 0.0
      %7789 = vmatprep.subr.mxu0 0.0
      %7790 = vmatpush1.msra.mxu0 0.0
      %7791 = vmatprep.subr.mxu0 0.0
      %7792 = vmatpush1.msra.mxu0 0.0
      %7793 = vmatprep.subr.mxu0 0.0
      %7794 = vmatpush1.msra.mxu0 0.0
      %7795 = vmatprep.subr.mxu0 0.0
      %7796 = vmatpush1.msra.mxu0 0.0
      %7797 = vmatprep.subr.mxu0 0.0
      %7798 = vmatpush1.msra.mxu0 0.0
      %7799 = vmatprep.subr.mxu0 0.0
      %7800 = vmatpush1.msra.mxu0 0.0
      %7801 = vmatprep.subr.mxu0 0.0
      %7802 = vmatpush1.msra.mxu0 0.0
      %7803 = vmatprep.subr.mxu0 0.0
      %7804 = vmatpush1.msra.mxu0 0.0
      %7805 = vmatprep.subr.mxu0 0.0
      %7806 = vmatpush1.msra.mxu0 0.0
      %7807 = vmatprep.subr.mxu0 0.0
      %7808 = vmatpush1.msra.mxu0 0.0
      %7809 = vmatprep.subr.mxu0 0.0
      %7810 = vmatpush1.msra.mxu0 0.0
      %7811 = vmatprep.subr.mxu0 0.0
      %7812 = vmatpush1.msra.mxu0 0.0
      %7813 = vmatprep.subr.mxu0 0.0
      %7814 = vmatpush1.msra.mxu0 0.0
      %7815 = vmatprep.subr.mxu0 0.0
      %7816 = vmatpush1.msra.mxu0 0.0
      %7817 = vmatprep.subr.mxu0 0.0
      %7818 = vmatpush1.msra.mxu0 0.0
      %7819 = vmatprep.subr.mxu0 0.0
      %7820 = vmatpush1.msra.mxu0 0.0
      %7821 = vmatprep.subr.mxu0 0.0
      %7822 = vmatpush1.msra.mxu0 0.0
      %7823 = vmatprep.subr.mxu0 0.0
      %7824 = vmatpush1.msra.mxu0 0.0
      %7825 = vmatprep.subr.mxu0 0.0
      %7826 = vmatpush1.msra.mxu0 0.0
      %7827 = vmatprep.subr.mxu0 0.0
      %7828 = vmatpush1.msra.mxu0 0.0
      %7829 = vmatprep.subr.mxu0 0.0
      %7830 = vmatpush1.msra.mxu0 0.0
      %7831 = vmatprep.subr.mxu0 0.0
      %7832 = vmatpush1.msra.mxu0 0.0
      %7833 = vmatprep.subr.mxu0 0.0
      %7834 = vmatpush1.msra.mxu0 0.0
      %7835 = vmatprep.mubr.f32.mxu0 0.0
      %7836 = vmatmul.mubr.f32.gmra.mrb[0].mxu0 %v7769
      %v7837 = vpop.f32.mrb[0].mxu0
      %v7838 = vadd.f32 0.0, %v7837
      %v7839 = vpop.f32.mrb[0].mxu0
      %7840 = vdwg.mxu0
      %v7841 = vpack.c.bf16 %v7838, %v7838
      %s7842 = scalar_lea.vmem %s16, 256
      %v7843 = vld [vmem:[%s7842] sm:$0xff]
      %v7844 = vld [vmem:[%s7842 + $0x8] sm:$0xff]
      %v7845 = vld [vmem:[%s7842 + $0x10] sm:$0xff]
      %v7846 = vld [vmem:[%s7842 + $0x18] sm:$0xff]
      %v7847 = vld [vmem:[%s7842 + $0x20] sm:$0xff]
      %v7848 = vld [vmem:[%s7842 + $0x28] sm:$0xff]
      %v7849 = vld [vmem:[%s7842 + $0x30] sm:$0xff]
      %v7850 = vld [vmem:[%s7842 + $0x38] sm:$0xff]
      %v7859 = vunpack.c.l.b16 %v7843
      %v7860 = vunpack.c.h.b16 %v7843
      %v7861 = vunpack.c.l.b16 %v7844
      %v7862 = vunpack.c.h.b16 %v7844
      %v7863 = vunpack.c.l.b16 %v7845
      %v7864 = vunpack.c.h.b16 %v7845
      %v7865 = vunpack.c.l.b16 %v7846
      %v7866 = vunpack.c.h.b16 %v7846
      %v7867 = vunpack.c.l.b16 %v7847
      %v7868 = vunpack.c.h.b16 %v7847
      %v7869 = vunpack.c.l.b16 %v7848
      %v7870 = vunpack.c.h.b16 %v7848
      %v7871 = vunpack.c.l.b16 %v7849
      %v7872 = vunpack.c.h.b16 %v7849
      %v7873 = vunpack.c.l.b16 %v7850
      %v7874 = vunpack.c.h.b16 %v7850
      %v7875 = vpack.c.b16 %v7861, %v7859
      %v7876 = vpack.c.b16 %v7862, %v7860
      %v7877 = vpack.c.b16 %v7865, %v7863
      %v7878 = vpack.c.b16 %v7866, %v7864
      %v7879 = vpack.c.b16 %v7869, %v7867
      %v7880 = vpack.c.b16 %v7870, %v7868
      %v7881 = vpack.c.b16 %v7873, %v7871
      %v7882 = vpack.c.b16 %v7874, %v7872
      %v7892 = vsel %vm2884, %v7841, 0
      %7894 = vmatprep.subr.bf16.mxu0 %v7876
      %7895 = vmatpush1.bf16.msra.mxu0 %v7875
      %7896 = vmatprep.subr.bf16.mxu0 %v7878
      %7897 = vmatpush1.bf16.msra.mxu0 %v7877
      %7898 = vmatprep.subr.bf16.mxu0 %v7880
      %7899 = vmatpush1.bf16.msra.mxu0 %v7879
      %7900 = vmatprep.subr.bf16.mxu0 %v7882
      %7901 = vmatpush1.bf16.msra.mxu0 %v7881
      %7902 = vmatprep.subr.bf16.mxu0 0
      %7903 = vmatpush1.bf16.msra.mxu0 0
      %7904 = vmatprep.subr.bf16.mxu0 0
      %7905 = vmatpush1.bf16.msra.mxu0 0
      %7906 = vmatprep.subr.bf16.mxu0 0
      %7907 = vmatpush1.bf16.msra.mxu0 0
      %7908 = vmatprep.subr.bf16.mxu0 0
      %7909 = vmatpush1.bf16.msra.mxu0 0
      %7910 = vmatprep.subr.bf16.mxu0 0
      %7911 = vmatpush1.bf16.msra.mxu0 0
      %7912 = vmatprep.subr.bf16.mxu0 0
      %7913 = vmatpush1.bf16.msra.mxu0 0
      %7914 = vmatprep.subr.bf16.mxu0 0
      %7915 = vmatpush1.bf16.msra.mxu0 0
      %7916 = vmatprep.subr.bf16.mxu0 0
      %7917 = vmatpush1.bf16.msra.mxu0 0
      %7918 = vmatprep.subr.bf16.mxu0 0
      %7919 = vmatpush1.bf16.msra.mxu0 0
      %7920 = vmatprep.subr.bf16.mxu0 0
      %7921 = vmatpush1.bf16.msra.mxu0 0
      %7922 = vmatprep.subr.bf16.mxu0 0
      %7923 = vmatpush1.bf16.msra.mxu0 0
      %7924 = vmatprep.subr.bf16.mxu0 0
      %7925 = vmatpush1.bf16.msra.mxu0 0
      %7926 = vmatprep.mubr.bf16.mxu0 0
      %7927 = vmatmul.mubr.bf16.gmra.mrb[0].mxu0 %v7892
      %v7928 = vpop.f32.mrb[0].mxu0
      %v7929 = vadd.f32 0.0, %v7928
      %v7930 = vpop.f32.mrb[0].mxu0
      %v7931 = vadd.f32 0.0, %v7930
      %v7932 = vpop.f32.mrb[0].mxu0
      %v7933 = vpop.f32.mrb[0].mxu0
      %7934 = vdwg.mxu0
      %v7935 = vadd.f32 %v7764, %v7929
      %v7936 = vadd.f32 %v7765, %v7931
      %s7937 = scalar_lea.vmem %s17, 20
      %v7938 = vld [vmem:[%s7937] sm:$0x7]
      %v7940 = vsel %vm2471, %v7938, 0
      %7942 = vmatprep.subr.mxu0 0.0
      %7943 = vmatpush1.msra.mxu0 %v7086
      %7944 = vmatprep.subr.mxu0 0.0
      %7945 = vmatpush1.msra.mxu0 %v7087
      %7946 = vmatprep.subr.mxu0 0.0
      %7947 = vmatpush1.msra.mxu0 0.0
      %7948 = vmatprep.subr.mxu0 0.0
      %7949 = vmatpush1.msra.mxu0 0.0
      %7950 = vmatprep.subr.mxu0 0.0
      %7951 = vmatpush1.msra.mxu0 0.0
      %7952 = vmatprep.subr.mxu0 0.0
      %7953 = vmatpush1.msra.mxu0 0.0
      %7954 = vmatprep.subr.mxu0 0.0
      %7955 = vmatpush1.msra.mxu0 0.0
      %7956 = vmatprep.subr.mxu0 0.0
      %7957 = vmatpush1.msra.mxu0 0.0
      %7958 = vmatprep.subr.mxu0 0.0
      %7959 = vmatpush1.msra.mxu0 0.0
      %7960 = vmatprep.subr.mxu0 0.0
      %7961 = vmatpush1.msra.mxu0 0.0
      %7962 = vmatprep.subr.mxu0 0.0
      %7963 = vmatpush1.msra.mxu0 0.0
      %7964 = vmatprep.subr.mxu0 0.0
      %7965 = vmatpush1.msra.mxu0 0.0
      %7966 = vmatprep.subr.mxu0 0.0
      %7967 = vmatpush1.msra.mxu0 0.0
      %7968 = vmatprep.subr.mxu0 0.0
      %7969 = vmatpush1.msra.mxu0 0.0
      %7970 = vmatprep.subr.mxu0 0.0
      %7971 = vmatpush1.msra.mxu0 0.0
      %7972 = vmatprep.subr.mxu0 0.0
      %7973 = vmatpush1.msra.mxu0 0.0
      %7974 = vmatprep.subr.mxu0 0.0
      %7975 = vmatpush1.msra.mxu0 0.0
      %7976 = vmatprep.subr.mxu0 0.0
      %7977 = vmatpush1.msra.mxu0 0.0
      %7978 = vmatprep.subr.mxu0 0.0
      %7979 = vmatpush1.msra.mxu0 0.0
      %7980 = vmatprep.subr.mxu0 0.0
      %7981 = vmatpush1.msra.mxu0 0.0
      %7982 = vmatprep.subr.mxu0 0.0
      %7983 = vmatpush1.msra.mxu0 0.0
      %7984 = vmatprep.subr.mxu0 0.0
      %7985 = vmatpush1.msra.mxu0 0.0
      %7986 = vmatprep.subr.mxu0 0.0
      %7987 = vmatpush1.msra.mxu0 0.0
      %7988 = vmatprep.subr.mxu0 0.0
      %7989 = vmatpush1.msra.mxu0 0.0
      %7990 = vmatprep.subr.mxu0 0.0
      %7991 = vmatpush1.msra.mxu0 0.0
      %7992 = vmatprep.subr.mxu0 0.0
      %7993 = vmatpush1.msra.mxu0 0.0
      %7994 = vmatprep.subr.mxu0 0.0
      %7995 = vmatpush1.msra.mxu0 0.0
      %7996 = vmatprep.subr.mxu0 0.0
      %7997 = vmatpush1.msra.mxu0 0.0
      %7998 = vmatprep.subr.mxu0 0.0
      %7999 = vmatpush1.msra.mxu0 0.0
      %8000 = vmatprep.subr.mxu0 0.0
      %8001 = vmatpush1.msra.mxu0 0.0
      %8002 = vmatprep.subr.mxu0 0.0
      %8003 = vmatpush1.msra.mxu0 0.0
      %8004 = vmatprep.subr.mxu0 0.0
      %8005 = vmatpush1.msra.mxu0 0.0
      %8006 = vmatprep.mubr.f32.mxu0 0.0
      %8007 = vmatmul.mubr.f32.gmra.mrb[0].mxu0 %v7940
      %v8008 = vpop.f32.mrb[0].mxu0
      %v8009 = vadd.f32 0.0, %v8008
      %v8010 = vpop.f32.mrb[0].mxu0
      %8011 = vdwg.mxu0
      %v8012 = vpack.c.bf16 %v8009, %v8009
      %s8013 = scalar_lea.vmem %s16, 320
      %v8014 = vld [vmem:[%s8013] sm:$0xff]
      %v8015 = vld [vmem:[%s8013 + $0x8] sm:$0xff]
      %v8016 = vld [vmem:[%s8013 + $0x10] sm:$0xff]
      %v8017 = vld [vmem:[%s8013 + $0x18] sm:$0xff]
      %v8018 = vld [vmem:[%s8013 + $0x20] sm:$0xff]
      %v8019 = vld [vmem:[%s8013 + $0x28] sm:$0xff]
      %v8020 = vld [vmem:[%s8013 + $0x30] sm:$0xff]
      %v8021 = vld [vmem:[%s8013 + $0x38] sm:$0xff]
      %v8030 = vunpack.c.l.b16 %v8014
      %v8031 = vunpack.c.h.b16 %v8014
      %v8032 = vunpack.c.l.b16 %v8015
      %v8033 = vunpack.c.h.b16 %v8015
      %v8034 = vunpack.c.l.b16 %v8016
      %v8035 = vunpack.c.h.b16 %v8016
      %v8036 = vunpack.c.l.b16 %v8017
      %v8037 = vunpack.c.h.b16 %v8017
      %v8038 = vunpack.c.l.b16 %v8018
      %v8039 = vunpack.c.h.b16 %v8018
      %v8040 = vunpack.c.l.b16 %v8019
      %v8041 = vunpack.c.h.b16 %v8019
      %v8042 = vunpack.c.l.b16 %v8020
      %v8043 = vunpack.c.h.b16 %v8020
      %v8044 = vunpack.c.l.b16 %v8021
      %v8045 = vunpack.c.h.b16 %v8021
      %v8046 = vpack.c.b16 %v8032, %v8030
      %v8047 = vpack.c.b16 %v8033, %v8031
      %v8048 = vpack.c.b16 %v8036, %v8034
      %v8049 = vpack.c.b16 %v8037, %v8035
      %v8050 = vpack.c.b16 %v8040, %v8038
      %v8051 = vpack.c.b16 %v8041, %v8039
      %v8052 = vpack.c.b16 %v8044, %v8042
      %v8053 = vpack.c.b16 %v8045, %v8043
      %v8063 = vsel %vm2884, %v8012, 0
      %8065 = vmatprep.subr.bf16.mxu0 %v8047
      %8066 = vmatpush1.bf16.msra.mxu0 %v8046
      %8067 = vmatprep.subr.bf16.mxu0 %v8049
      %8068 = vmatpush1.bf16.msra.mxu0 %v8048
      %8069 = vmatprep.subr.bf16.mxu0 %v8051
      %8070 = vmatpush1.bf16.msra.mxu0 %v8050
      %8071 = vmatprep.subr.bf16.mxu0 %v8053
      %8072 = vmatpush1.bf16.msra.mxu0 %v8052
      %8073 = vmatprep.subr.bf16.mxu0 0
      %8074 = vmatpush1.bf16.msra.mxu0 0
      %8075 = vmatprep.subr.bf16.mxu0 0
      %8076 = vmatpush1.bf16.msra.mxu0 0
      %8077 = vmatprep.subr.bf16.mxu0 0
      %8078 = vmatpush1.bf16.msra.mxu0 0
      %8079 = vmatprep.subr.bf16.mxu0 0
      %8080 = vmatpush1.bf16.msra.mxu0 0
      %8081 = vmatprep.subr.bf16.mxu0 0
      %8082 = vmatpush1.bf16.msra.mxu0 0
      %8083 = vmatprep.subr.bf16.mxu0 0
      %8084 = vmatpush1.bf16.msra.mxu0 0
      %8085 = vmatprep.subr.bf16.mxu0 0
      %8086 = vmatpush1.bf16.msra.mxu0 0
      %8087 = vmatprep.subr.bf16.mxu0 0
      %8088 = vmatpush1.bf16.msra.mxu0 0
      %8089 = vmatprep.subr.bf16.mxu0 0
      %8090 = vmatpush1.bf16.msra.mxu0 0
      %8091 = vmatprep.subr.bf16.mxu0 0
      %8092 = vmatpush1.bf16.msra.mxu0 0
      %8093 = vmatprep.subr.bf16.mxu0 0
      %8094 = vmatpush1.bf16.msra.mxu0 0
      %8095 = vmatprep.subr.bf16.mxu0 0
      %8096 = vmatpush1.bf16.msra.mxu0 0
      %8097 = vmatprep.mubr.bf16.mxu0 0
      %8098 = vmatmul.mubr.bf16.gmra.mrb[0].mxu0 %v8063
      %v8099 = vpop.f32.mrb[0].mxu0
      %v8100 = vadd.f32 0.0, %v8099
      %v8101 = vpop.f32.mrb[0].mxu0
      %v8102 = vadd.f32 0.0, %v8101
      %v8103 = vpop.f32.mrb[0].mxu0
      %v8104 = vpop.f32.mrb[0].mxu0
      %8105 = vdwg.mxu0
      %v8106 = vadd.f32 %v7935, %v8100
      %v8107 = vadd.f32 %v7936, %v8102
      %s8108 = scalar_lea.vmem %s17, 24
      %v8109 = vld [vmem:[%s8108] sm:$0x7]
      %v8111 = vsel %vm2471, %v8109, 0
      %8113 = vmatprep.subr.mxu0 0.0
      %8114 = vmatpush1.msra.mxu0 %v7086
      %8115 = vmatprep.subr.mxu0 0.0
      %8116 = vmatpush1.msra.mxu0 %v7087
      %8117 = vmatprep.subr.mxu0 0.0
      %8118 = vmatpush1.msra.mxu0 0.0
      %8119 = vmatprep.subr.mxu0 0.0
      %8120 = vmatpush1.msra.mxu0 0.0
      %8121 = vmatprep.subr.mxu0 0.0
      %8122 = vmatpush1.msra.mxu0 0.0
      %8123 = vmatprep.subr.mxu0 0.0
      %8124 = vmatpush1.msra.mxu0 0.0
      %8125 = vmatprep.subr.mxu0 0.0
      %8126 = vmatpush1.msra.mxu0 0.0
      %8127 = vmatprep.subr.mxu0 0.0
      %8128 = vmatpush1.msra.mxu0 0.0
      %8129 = vmatprep.subr.mxu0 0.0
      %8130 = vmatpush1.msra.mxu0 0.0
      %8131 = vmatprep.subr.mxu0 0.0
      %8132 = vmatpush1.msra.mxu0 0.0
      %8133 = vmatprep.subr.mxu0 0.0
      %8134 = vmatpush1.msra.mxu0 0.0
      %8135 = vmatprep.subr.mxu0 0.0
      %8136 = vmatpush1.msra.mxu0 0.0
      %8137 = vmatprep.subr.mxu0 0.0
      %8138 = vmatpush1.msra.mxu0 0.0
      %8139 = vmatprep.subr.mxu0 0.0
      %8140 = vmatpush1.msra.mxu0 0.0
      %8141 = vmatprep.subr.mxu0 0.0
      %8142 = vmatpush1.msra.mxu0 0.0
      %8143 = vmatprep.subr.mxu0 0.0
      %8144 = vmatpush1.msra.mxu0 0.0
      %8145 = vmatprep.subr.mxu0 0.0
      %8146 = vmatpush1.msra.mxu0 0.0
      %8147 = vmatprep.subr.mxu0 0.0
      %8148 = vmatpush1.msra.mxu0 0.0
      %8149 = vmatprep.subr.mxu0 0.0
      %8150 = vmatpush1.msra.mxu0 0.0
      %8151 = vmatprep.subr.mxu0 0.0
      %8152 = vmatpush1.msra.mxu0 0.0
      %8153 = vmatprep.subr.mxu0 0.0
      %8154 = vmatpush1.msra.mxu0 0.0
      %8155 = vmatprep.subr.mxu0 0.0
      %8156 = vmatpush1.msra.mxu0 0.0
      %8157 = vmatprep.subr.mxu0 0.0
      %8158 = vmatpush1.msra.mxu0 0.0
      %8159 = vmatprep.subr.mxu0 0.0
      %8160 = vmatpush1.msra.mxu0 0.0
      %8161 = vmatprep.subr.mxu0 0.0
      %8162 = vmatpush1.msra.mxu0 0.0
      %8163 = vmatprep.subr.mxu0 0.0
      %8164 = vmatpush1.msra.mxu0 0.0
      %8165 = vmatprep.subr.mxu0 0.0
      %8166 = vmatpush1.msra.mxu0 0.0
      %8167 = vmatprep.subr.mxu0 0.0
      %8168 = vmatpush1.msra.mxu0 0.0
      %8169 = vmatprep.subr.mxu0 0.0
      %8170 = vmatpush1.msra.mxu0 0.0
      %8171 = vmatprep.subr.mxu0 0.0
      %8172 = vmatpush1.msra.mxu0 0.0
      %8173 = vmatprep.subr.mxu0 0.0
      %8174 = vmatpush1.msra.mxu0 0.0
      %8175 = vmatprep.subr.mxu0 0.0
      %8176 = vmatpush1.msra.mxu0 0.0
      %8177 = vmatprep.mubr.f32.mxu0 0.0
      %8178 = vmatmul.mubr.f32.gmra.mrb[0].mxu0 %v8111
      %v8179 = vpop.f32.mrb[0].mxu0
      %v8180 = vadd.f32 0.0, %v8179
      %v8181 = vpop.f32.mrb[0].mxu0
      %8182 = vdwg.mxu0
      %v8183 = vpack.c.bf16 %v8180, %v8180
      %s8184 = scalar_lea.vmem %s16, 384
      %v8185 = vld [vmem:[%s8184] sm:$0xff]
      %v8186 = vld [vmem:[%s8184 + $0x8] sm:$0xff]
      %v8187 = vld [vmem:[%s8184 + $0x10] sm:$0xff]
      %v8188 = vld [vmem:[%s8184 + $0x18] sm:$0xff]
      %v8189 = vld [vmem:[%s8184 + $0x20] sm:$0xff]
      %v8190 = vld [vmem:[%s8184 + $0x28] sm:$0xff]
      %v8191 = vld [vmem:[%s8184 + $0x30] sm:$0xff]
      %v8192 = vld [vmem:[%s8184 + $0x38] sm:$0xff]
      %v8201 = vunpack.c.l.b16 %v8185
      %v8202 = vunpack.c.h.b16 %v8185
      %v8203 = vunpack.c.l.b16 %v8186
      %v8204 = vunpack.c.h.b16 %v8186
      %v8205 = vunpack.c.l.b16 %v8187
      %v8206 = vunpack.c.h.b16 %v8187
      %v8207 = vunpack.c.l.b16 %v8188
      %v8208 = vunpack.c.h.b16 %v8188
      %v8209 = vunpack.c.l.b16 %v8189
      %v8210 = vunpack.c.h.b16 %v8189
      %v8211 = vunpack.c.l.b16 %v8190
      %v8212 = vunpack.c.h.b16 %v8190
      %v8213 = vunpack.c.l.b16 %v8191
      %v8214 = vunpack.c.h.b16 %v8191
      %v8215 = vunpack.c.l.b16 %v8192
      %v8216 = vunpack.c.h.b16 %v8192
      %v8217 = vpack.c.b16 %v8203, %v8201
      %v8218 = vpack.c.b16 %v8204, %v8202
      %v8219 = vpack.c.b16 %v8207, %v8205
      %v8220 = vpack.c.b16 %v8208, %v8206
      %v8221 = vpack.c.b16 %v8211, %v8209
      %v8222 = vpack.c.b16 %v8212, %v8210
      %v8223 = vpack.c.b16 %v8215, %v8213
      %v8224 = vpack.c.b16 %v8216, %v8214
      %v8234 = vsel %vm2884, %v8183, 0
      %8236 = vmatprep.subr.bf16.mxu0 %v8218
      %8237 = vmatpush1.bf16.msra.mxu0 %v8217
      %8238 = vmatprep.subr.bf16.mxu0 %v8220
      %8239 = vmatpush1.bf16.msra.mxu0 %v8219
      %8240 = vmatprep.subr.bf16.mxu0 %v8222
      %8241 = vmatpush1.bf16.msra.mxu0 %v8221
      %8242 = vmatprep.subr.bf16.mxu0 %v8224
      %8243 = vmatpush1.bf16.msra.mxu0 %v8223
      %8244 = vmatprep.subr.bf16.mxu0 0
      %8245 = vmatpush1.bf16.msra.mxu0 0
      %8246 = vmatprep.subr.bf16.mxu0 0
      %8247 = vmatpush1.bf16.msra.mxu0 0
      %8248 = vmatprep.subr.bf16.mxu0 0
      %8249 = vmatpush1.bf16.msra.mxu0 0
      %8250 = vmatprep.subr.bf16.mxu0 0
      %8251 = vmatpush1.bf16.msra.mxu0 0
      %8252 = vmatprep.subr.bf16.mxu0 0
      %8253 = vmatpush1.bf16.msra.mxu0 0
      %8254 = vmatprep.subr.bf16.mxu0 0
      %8255 = vmatpush1.bf16.msra.mxu0 0
      %8256 = vmatprep.subr.bf16.mxu0 0
      %8257 = vmatpush1.bf16.msra.mxu0 0
      %8258 = vmatprep.subr.bf16.mxu0 0
      %8259 = vmatpush1.bf16.msra.mxu0 0
      %8260 = vmatprep.subr.bf16.mxu0 0
      %8261 = vmatpush1.bf16.msra.mxu0 0
      %8262 = vmatprep.subr.bf16.mxu0 0
      %8263 = vmatpush1.bf16.msra.mxu0 0
      %8264 = vmatprep.subr.bf16.mxu0 0
      %8265 = vmatpush1.bf16.msra.mxu0 0
      %8266 = vmatprep.subr.bf16.mxu0 0
      %8267 = vmatpush1.bf16.msra.mxu0 0
      %8268 = vmatprep.mubr.bf16.mxu0 0
      %8269 = vmatmul.mubr.bf16.gmra.mrb[0].mxu0 %v8234
      %v8270 = vpop.f32.mrb[0].mxu0
      %v8271 = vadd.f32 0.0, %v8270
      %v8272 = vpop.f32.mrb[0].mxu0
      %v8273 = vadd.f32 0.0, %v8272
      %v8274 = vpop.f32.mrb[0].mxu0
      %v8275 = vpop.f32.mrb[0].mxu0
      %8276 = vdwg.mxu0
      %v8277 = vadd.f32 %v8106, %v8271
      %v8278 = vadd.f32 %v8107, %v8273
      %s8279 = scalar_lea.vmem %s17, 28
      %v8280 = vld [vmem:[%s8279] sm:$0x7]
      %v8282 = vsel %vm2471, %v8280, 0
      %8284 = vmatprep.subr.mxu0 0.0
      %8285 = vmatpush1.msra.mxu0 %v7086
      %8286 = vmatprep.subr.mxu0 0.0
      %8287 = vmatpush1.msra.mxu0 %v7087
      %8288 = vmatprep.subr.mxu0 0.0
      %8289 = vmatpush1.msra.mxu0 0.0
      %8290 = vmatprep.subr.mxu0 0.0
      %8291 = vmatpush1.msra.mxu0 0.0
      %8292 = vmatprep.subr.mxu0 0.0
      %8293 = vmatpush1.msra.mxu0 0.0
      %8294 = vmatprep.subr.mxu0 0.0
      %8295 = vmatpush1.msra.mxu0 0.0
      %8296 = vmatprep.subr.mxu0 0.0
      %8297 = vmatpush1.msra.mxu0 0.0
      %8298 = vmatprep.subr.mxu0 0.0
      %8299 = vmatpush1.msra.mxu0 0.0
      %8300 = vmatprep.subr.mxu0 0.0
      %8301 = vmatpush1.msra.mxu0 0.0
      %8302 = vmatprep.subr.mxu0 0.0
      %8303 = vmatpush1.msra.mxu0 0.0
      %8304 = vmatprep.subr.mxu0 0.0
      %8305 = vmatpush1.msra.mxu0 0.0
      %8306 = vmatprep.subr.mxu0 0.0
      %8307 = vmatpush1.msra.mxu0 0.0
      %8308 = vmatprep.subr.mxu0 0.0
      %8309 = vmatpush1.msra.mxu0 0.0
      %8310 = vmatprep.subr.mxu0 0.0
      %8311 = vmatpush1.msra.mxu0 0.0
      %8312 = vmatprep.subr.mxu0 0.0
      %8313 = vmatpush1.msra.mxu0 0.0
      %8314 = vmatprep.subr.mxu0 0.0
      %8315 = vmatpush1.msra.mxu0 0.0
      %8316 = vmatprep.subr.mxu0 0.0
      %8317 = vmatpush1.msra.mxu0 0.0
      %8318 = vmatprep.subr.mxu0 0.0
      %8319 = vmatpush1.msra.mxu0 0.0
      %8320 = vmatprep.subr.mxu0 0.0
      %8321 = vmatpush1.msra.mxu0 0.0
      %8322 = vmatprep.subr.mxu0 0.0
      %8323 = vmatpush1.msra.mxu0 0.0
      %8324 = vmatprep.subr.mxu0 0.0
      %8325 = vmatpush1.msra.mxu0 0.0
      %8326 = vmatprep.subr.mxu0 0.0
      %8327 = vmatpush1.msra.mxu0 0.0
      %8328 = vmatprep.subr.mxu0 0.0
      %8329 = vmatpush1.msra.mxu0 0.0
      %8330 = vmatprep.subr.mxu0 0.0
      %8331 = vmatpush1.msra.mxu0 0.0
      %8332 = vmatprep.subr.mxu0 0.0
      %8333 = vmatpush1.msra.mxu0 0.0
      %8334 = vmatprep.subr.mxu0 0.0
      %8335 = vmatpush1.msra.mxu0 0.0
      %8336 = vmatprep.subr.mxu0 0.0
      %8337 = vmatpush1.msra.mxu0 0.0
      %8338 = vmatprep.subr.mxu0 0.0
      %8339 = vmatpush1.msra.mxu0 0.0
      %8340 = vmatprep.subr.mxu0 0.0
      %8341 = vmatpush1.msra.mxu0 0.0
      %8342 = vmatprep.subr.mxu0 0.0
      %8343 = vmatpush1.msra.mxu0 0.0
      %8344 = vmatprep.subr.mxu0 0.0
      %8345 = vmatpush1.msra.mxu0 0.0
      %8346 = vmatprep.subr.mxu0 0.0
      %8347 = vmatpush1.msra.mxu0 0.0
      %8348 = vmatprep.mubr.f32.mxu0 0.0
      %8349 = vmatmul.mubr.f32.gmra.mrb[0].mxu0 %v8282
      %v8350 = vpop.f32.mrb[0].mxu0
      %v8351 = vadd.f32 0.0, %v8350
      %v8352 = vpop.f32.mrb[0].mxu0
      %8353 = vdwg.mxu0
      %v8354 = vpack.c.bf16 %v8351, %v8351
      %s8355 = scalar_lea.vmem %s16, 448
      %v8356 = vld [vmem:[%s8355] sm:$0xff]
      %v8357 = vld [vmem:[%s8355 + $0x8] sm:$0xff]
      %v8358 = vld [vmem:[%s8355 + $0x10] sm:$0xff]
      %v8359 = vld [vmem:[%s8355 + $0x18] sm:$0xff]
      %v8360 = vld [vmem:[%s8355 + $0x20] sm:$0xff]
      %v8361 = vld [vmem:[%s8355 + $0x28] sm:$0xff]
      %v8362 = vld [vmem:[%s8355 + $0x30] sm:$0xff]
      %v8363 = vld [vmem:[%s8355 + $0x38] sm:$0xff]
      %v8372 = vunpack.c.l.b16 %v8356
      %v8373 = vunpack.c.h.b16 %v8356
      %v8374 = vunpack.c.l.b16 %v8357
      %v8375 = vunpack.c.h.b16 %v8357
      %v8376 = vunpack.c.l.b16 %v8358
      %v8377 = vunpack.c.h.b16 %v8358
      %v8378 = vunpack.c.l.b16 %v8359
      %v8379 = vunpack.c.h.b16 %v8359
      %v8380 = vunpack.c.l.b16 %v8360
      %v8381 = vunpack.c.h.b16 %v8360
      %v8382 = vunpack.c.l.b16 %v8361
      %v8383 = vunpack.c.h.b16 %v8361
      %v8384 = vunpack.c.l.b16 %v8362
      %v8385 = vunpack.c.h.b16 %v8362
      %v8386 = vunpack.c.l.b16 %v8363
      %v8387 = vunpack.c.h.b16 %v8363
      %v8388 = vpack.c.b16 %v8374, %v8372
      %v8389 = vpack.c.b16 %v8375, %v8373
      %v8390 = vpack.c.b16 %v8378, %v8376
      %v8391 = vpack.c.b16 %v8379, %v8377
      %v8392 = vpack.c.b16 %v8382, %v8380
      %v8393 = vpack.c.b16 %v8383, %v8381
      %v8394 = vpack.c.b16 %v8386, %v8384
      %v8395 = vpack.c.b16 %v8387, %v8385
      %v8405 = vsel %vm2884, %v8354, 0
      %8407 = vmatprep.subr.bf16.mxu0 %v8389
      %8408 = vmatpush1.bf16.msra.mxu0 %v8388
      %8409 = vmatprep.subr.bf16.mxu0 %v8391
      %8410 = vmatpush1.bf16.msra.mxu0 %v8390
      %8411 = vmatprep.subr.bf16.mxu0 %v8393
      %8412 = vmatpush1.bf16.msra.mxu0 %v8392
      %8413 = vmatprep.subr.bf16.mxu0 %v8395
      %8414 = vmatpush1.bf16.msra.mxu0 %v8394
      %8415 = vmatprep.subr.bf16.mxu0 0
      %8416 = vmatpush1.bf16.msra.mxu0 0
      %8417 = vmatprep.subr.bf16.mxu0 0
      %8418 = vmatpush1.bf16.msra.mxu0 0
      %8419 = vmatprep.subr.bf16.mxu0 0
      %8420 = vmatpush1.bf16.msra.mxu0 0
      %8421 = vmatprep.subr.bf16.mxu0 0
      %8422 = vmatpush1.bf16.msra.mxu0 0
      %8423 = vmatprep.subr.bf16.mxu0 0
      %8424 = vmatpush1.bf16.msra.mxu0 0
      %8425 = vmatprep.subr.bf16.mxu0 0
      %8426 = vmatpush1.bf16.msra.mxu0 0
      %8427 = vmatprep.subr.bf16.mxu0 0
      %8428 = vmatpush1.bf16.msra.mxu0 0
      %8429 = vmatprep.subr.bf16.mxu0 0
      %8430 = vmatpush1.bf16.msra.mxu0 0
      %8431 = vmatprep.subr.bf16.mxu0 0
      %8432 = vmatpush1.bf16.msra.mxu0 0
      %8433 = vmatprep.subr.bf16.mxu0 0
      %8434 = vmatpush1.bf16.msra.mxu0 0
      %8435 = vmatprep.subr.bf16.mxu0 0
      %8436 = vmatpush1.bf16.msra.mxu0 0
      %8437 = vmatprep.subr.bf16.mxu0 0
      %8438 = vmatpush1.bf16.msra.mxu0 0
      %8439 = vmatprep.mubr.bf16.mxu0 0
      %8440 = vmatmul.mubr.bf16.gmra.mrb[0].mxu0 %v8405
      %v8441 = vpop.f32.mrb[0].mxu0
      %v8442 = vadd.f32 0.0, %v8441
      %v8443 = vpop.f32.mrb[0].mxu0
      %v8444 = vadd.f32 0.0, %v8443
      %v8445 = vpop.f32.mrb[0].mxu0
      %v8446 = vpop.f32.mrb[0].mxu0
      %8447 = vdwg.mxu0
      %v8448 = vadd.f32 %v8277, %v8442
      %v8449 = vadd.f32 %v8278, %v8444
      %s8450 = scalar_lea.vmem %s17, 32
      %v8451 = vld [vmem:[%s8450] sm:$0x7]
      %v8453 = vsel %vm2471, %v8451, 0
      %8455 = vmatprep.subr.mxu0 0.0
      %8456 = vmatpush1.msra.mxu0 %v7086
      %8457 = vmatprep.subr.mxu0 0.0
      %8458 = vmatpush1.msra.mxu0 %v7087
      %8459 = vmatprep.subr.mxu0 0.0
      %8460 = vmatpush1.msra.mxu0 0.0
      %8461 = vmatprep.subr.mxu0 0.0
      %8462 = vmatpush1.msra.mxu0 0.0
      %8463 = vmatprep.subr.mxu0 0.0
      %8464 = vmatpush1.msra.mxu0 0.0
      %8465 = vmatprep.subr.mxu0 0.0
      %8466 = vmatpush1.msra.mxu0 0.0
      %8467 = vmatprep.subr.mxu0 0.0
      %8468 = vmatpush1.msra.mxu0 0.0
      %8469 = vmatprep.subr.mxu0 0.0
      %8470 = vmatpush1.msra.mxu0 0.0
      %8471 = vmatprep.subr.mxu0 0.0
      %8472 = vmatpush1.msra.mxu0 0.0
      %8473 = vmatprep.subr.mxu0 0.0
      %8474 = vmatpush1.msra.mxu0 0.0
      %8475 = vmatprep.subr.mxu0 0.0
      %8476 = vmatpush1.msra.mxu0 0.0
      %8477 = vmatprep.subr.mxu0 0.0
      %8478 = vmatpush1.msra.mxu0 0.0
      %8479 = vmatprep.subr.mxu0 0.0
      %8480 = vmatpush1.msra.mxu0 0.0
      %8481 = vmatprep.subr.mxu0 0.0
      %8482 = vmatpush1.msra.mxu0 0.0
      %8483 = vmatprep.subr.mxu0 0.0
      %8484 = vmatpush1.msra.mxu0 0.0
      %8485 = vmatprep.subr.mxu0 0.0
      %8486 = vmatpush1.msra.mxu0 0.0
      %8487 = vmatprep.subr.mxu0 0.0
      %8488 = vmatpush1.msra.mxu0 0.0
      %8489 = vmatprep.subr.mxu0 0.0
      %8490 = vmatpush1.msra.mxu0 0.0
      %8491 = vmatprep.subr.mxu0 0.0
      %8492 = vmatpush1.msra.mxu0 0.0
      %8493 = vmatprep.subr.mxu0 0.0
      %8494 = vmatpush1.msra.mxu0 0.0
      %8495 = vmatprep.subr.mxu0 0.0
      %8496 = vmatpush1.msra.mxu0 0.0
      %8497 = vmatprep.subr.mxu0 0.0
      %8498 = vmatpush1.msra.mxu0 0.0
      %8499 = vmatprep.subr.mxu0 0.0
      %8500 = vmatpush1.msra.mxu0 0.0
      %8501 = vmatprep.subr.mxu0 0.0
      %8502 = vmatpush1.msra.mxu0 0.0
      %8503 = vmatprep.subr.mxu0 0.0
      %8504 = vmatpush1.msra.mxu0 0.0
      %8505 = vmatprep.subr.mxu0 0.0
      %8506 = vmatpush1.msra.mxu0 0.0
      %8507 = vmatprep.subr.mxu0 0.0
      %8508 = vmatpush1.msra.mxu0 0.0
      %8509 = vmatprep.subr.mxu0 0.0
      %8510 = vmatpush1.msra.mxu0 0.0
      %8511 = vmatprep.subr.mxu0 0.0
      %8512 = vmatpush1.msra.mxu0 0.0
      %8513 = vmatprep.subr.mxu0 0.0
      %8514 = vmatpush1.msra.mxu0 0.0
      %8515 = vmatprep.subr.mxu0 0.0
      %8516 = vmatpush1.msra.mxu0 0.0
      %8517 = vmatprep.subr.mxu0 0.0
      %8518 = vmatpush1.msra.mxu0 0.0
      %8519 = vmatprep.mubr.f32.mxu0 0.0
      %8520 = vmatmul.mubr.f32.gmra.mrb[0].mxu0 %v8453
      %v8521 = vpop.f32.mrb[0].mxu0
      %v8522 = vadd.f32 0.0, %v8521
      %v8523 = vpop.f32.mrb[0].mxu0
      %8524 = vdwg.mxu0
      %v8525 = vpack.c.bf16 %v8522, %v8522
      %s8526 = scalar_lea.vmem %s16, 512
      %v8527 = vld [vmem:[%s8526] sm:$0xff]
      %v8528 = vld [vmem:[%s8526 + $0x8] sm:$0xff]
      %v8529 = vld [vmem:[%s8526 + $0x10] sm:$0xff]
      %v8530 = vld [vmem:[%s8526 + $0x18] sm:$0xff]
      %v8531 = vld [vmem:[%s8526 + $0x20] sm:$0xff]
      %v8532 = vld [vmem:[%s8526 + $0x28] sm:$0xff]
      %v8533 = vld [vmem:[%s8526 + $0x30] sm:$0xff]
      %v8534 = vld [vmem:[%s8526 + $0x38] sm:$0xff]
      %v8543 = vunpack.c.l.b16 %v8527
      %v8544 = vunpack.c.h.b16 %v8527
      %v8545 = vunpack.c.l.b16 %v8528
      %v8546 = vunpack.c.h.b16 %v8528
      %v8547 = vunpack.c.l.b16 %v8529
      %v8548 = vunpack.c.h.b16 %v8529
      %v8549 = vunpack.c.l.b16 %v8530
      %v8550 = vunpack.c.h.b16 %v8530
      %v8551 = vunpack.c.l.b16 %v8531
      %v8552 = vunpack.c.h.b16 %v8531
      %v8553 = vunpack.c.l.b16 %v8532
      %v8554 = vunpack.c.h.b16 %v8532
      %v8555 = vunpack.c.l.b16 %v8533
      %v8556 = vunpack.c.h.b16 %v8533
      %v8557 = vunpack.c.l.b16 %v8534
      %v8558 = vunpack.c.h.b16 %v8534
      %v8559 = vpack.c.b16 %v8545, %v8543
      %v8560 = vpack.c.b16 %v8546, %v8544
      %v8561 = vpack.c.b16 %v8549, %v8547
      %v8562 = vpack.c.b16 %v8550, %v8548
      %v8563 = vpack.c.b16 %v8553, %v8551
      %v8564 = vpack.c.b16 %v8554, %v8552
      %v8565 = vpack.c.b16 %v8557, %v8555
      %v8566 = vpack.c.b16 %v8558, %v8556
      %v8576 = vsel %vm2884, %v8525, 0
      %8578 = vmatprep.subr.bf16.mxu0 %v8560
      %8579 = vmatpush1.bf16.msra.mxu0 %v8559
      %8580 = vmatprep.subr.bf16.mxu0 %v8562
      %8581 = vmatpush1.bf16.msra.mxu0 %v8561
      %8582 = vmatprep.subr.bf16.mxu0 %v8564
      %8583 = vmatpush1.bf16.msra.mxu0 %v8563
      %8584 = vmatprep.subr.bf16.mxu0 %v8566
      %8585 = vmatpush1.bf16.msra.mxu0 %v8565
      %8586 = vmatprep.subr.bf16.mxu0 0
      %8587 = vmatpush1.bf16.msra.mxu0 0
      %8588 = vmatprep.subr.bf16.mxu0 0
      %8589 = vmatpush1.bf16.msra.mxu0 0
      %8590 = vmatprep.subr.bf16.mxu0 0
      %8591 = vmatpush1.bf16.msra.mxu0 0
      %8592 = vmatprep.subr.bf16.mxu0 0
      %8593 = vmatpush1.bf16.msra.mxu0 0
      %8594 = vmatprep.subr.bf16.mxu0 0
      %8595 = vmatpush1.bf16.msra.mxu0 0
      %8596 = vmatprep.subr.bf16.mxu0 0
      %8597 = vmatpush1.bf16.msra.mxu0 0
      %8598 = vmatprep.subr.bf16.mxu0 0
      %8599 = vmatpush1.bf16.msra.mxu0 0
      %8600 = vmatprep.subr.bf16.mxu0 0
      %8601 = vmatpush1.bf16.msra.mxu0 0
      %8602 = vmatprep.subr.bf16.mxu0 0
      %8603 = vmatpush1.bf16.msra.mxu0 0
      %8604 = vmatprep.subr.bf16.mxu0 0
      %8605 = vmatpush1.bf16.msra.mxu0 0
      %8606 = vmatprep.subr.bf16.mxu0 0
      %8607 = vmatpush1.bf16.msra.mxu0 0
      %8608 = vmatprep.subr.bf16.mxu0 0
      %8609 = vmatpush1.bf16.msra.mxu0 0
      %8610 = vmatprep.mubr.bf16.mxu0 0
      %8611 = vmatmul.mubr.bf16.gmra.mrb[0].mxu0 %v8576
      %v8612 = vpop.f32.mrb[0].mxu0
      %v8613 = vadd.f32 0.0, %v8612
      %v8614 = vpop.f32.mrb[0].mxu0
      %v8615 = vadd.f32 0.0, %v8614
      %v8616 = vpop.f32.mrb[0].mxu0
      %v8617 = vpop.f32.mrb[0].mxu0
      %8618 = vdwg.mxu0
      %v8619 = vadd.f32 %v8448, %v8613
      %v8620 = vadd.f32 %v8449, %v8615
      %v8621 = vld [vmem:[%s18] sm:$0x7]
      %8623 = vset.pattern.permute.xlu0 0
      %8624 = vperm.xlu0 %8623, %v8621
      %v8625 = vpop.permute.xlu0 %8624
      %v8627 = vadd.f32 %v8619, %v8625
      %v8628 = vadd.f32 %v8620, %v8625
      %v8629 = vxor.u32 %v8627, 2147483648
      %v8630 = vxor.u32 %v8628, 2147483648
      %v8631 = vmul.f32 %v8629, 1.442695
      %v8632 = vpow.pop %v8631
      %v8633 = vmul.f32 %v8630, 1.442695
      %v8634 = vpow.pop %v8633
      %v8635 = vadd.f32 %v8632, 1.0
      %v8636 = vadd.f32 %v8634, 1.0
      %v8637 = vrcp.pop %v8635
      %v8638 = vmul.f32 1.0, %v8637
      %v8639 = vrcp.pop %v8636
      %v8640 = vmul.f32 1.0, %v8639
      %v8643 = vcombine.low %v8638, %v8640
      %8645 = vst [vmem:[%s602] sm:$0x77] %v8643
      %p8646 = scmp.lt.s32.totalorder %s30, 1
      %s8647 = scalar_select %p8646, %s30, 1
      %s8648 = smul.addr %s8647, 2
      %s8649 = smul.addr %s8648, 4
      %s8650 = scalar_lea.vmem %s19, %s8649
      // Predicated region
      $region97: #{autoencoder_forward.1} parent=95 // pred_check
        %p8651 = pneg %p452
      $region98: #{autoencoder_forward.1} parent=95 // pred_check_branch
        %8653 = sbr.rel (%p8651) target = $region100
      $region99: #{autoencoder_forward.1} parent=95 // pred_region
        _
      $region100: #{autoencoder_forward.1} parent=95 // pred_fallthru
        _
    $region96: #{autoencoder_forward.1} parent=5 // pred_fallthru
      _
    %p8654 = scmp.le.s32.totalorder 2, %s25
    // Predicated region
    $region101: #{autoencoder_forward.1} parent=5 // pred_check
      %p8655 = pneg %p8654
    $region102: #{autoencoder_forward.1} parent=5 // pred_check_branch
      %8657 = sbr.rel (%p8655) target = $region104
    $region103: #{autoencoder_forward.1} parent=5 // pred_region
      %s8658 = ssub.s32 %s25, 2
      // Predicated region
      $region105: #{autoencoder_forward.1} parent=103 // pred_check
        %p8659 = pneg %p458
      $region106: #{autoencoder_forward.1} parent=103 // pred_check_branch
        %8661 = sbr.rel (%p8659) target = $region108
      $region107: #{autoencoder_forward.1} parent=103 // pred_region
        %p8662 = scmp.lt.s32.totalorder %s31, 1
        %s8663 = scalar_select %p8662, %s31, 1
        %s8664 = smul.addr %s8663, 2
        %s8665 = smul.addr %s8664, 4
        %s8666 = scalar_lea.vmem %s19, %s8665
      $region108: #{autoencoder_forward.1} parent=103 // pred_fallthru
        _
    $region104: #{autoencoder_forward.1} parent=5 // pred_fallthru
      _
  $region6: #{autoencoder_forward.1} parent=0 // loop_footer
    %s29 = sadd.s32 1, %s25
  $region7: #{autoencoder_forward.1} parent=0 // loop_footer_branch
    %24 = sbr.rel target = $region3
  $region8: #{autoencoder_forward.1} parent=0 // loop_exit
    _

</llo_original>
